<compile_context>
chip_gen: v7x
topology: tpu7x:2x2x1
jax: 0.10.0
libtpu: 0.0.40
codegen_flags: <defaults>
</compile_context>

<pallas_src>
import functools

import jax
import jax.numpy as jnp
from jax.experimental import pallas as pl
from jax.experimental.pallas import tpu as pltpu

NEG_SLOPE = 0.01  # PyTorch F.leaky_relu default


def _leaky_relu(x):
    return jnp.where(x > 0, x, NEG_SLOPE * x)


def critic_kernel(x_ref, b_ref, *rest):
    """Fused MLP forward on one (TB, input_dim) batch tile.

    rest = (w0_ref, ..., wL_ref, out_ref). Weights are bf16 and resident in VMEM
    (constant index_map); biases are one f32 slab b_ref[layer, lane] zero-padded
    to the widest layer.
    """
    out_ref = rest[-1]
    w_refs = rest[:-1]
    n_layers = len(w_refs)

    h = x_ref[...].astype(jnp.float32)
    for li in range(n_layers):
        w = w_refs[li][...]                               # bf16 (d_in, d_out)
        d_out = w.shape[1]
        acc = jnp.dot(h.astype(jnp.bfloat16), w,
                      preferred_element_type=jnp.float32)  # MXU, f32 accumulate
        acc = acc + b_ref[li:li + 1, :d_out]               # f32 bias, broadcast over rows
        h = _leaky_relu(acc) if li < n_layers - 1 else acc  # no activation on output layer
    out_ref[...] = h.astype(out_ref.dtype)


def layer_dims(input_dim, output_dim):
    dims = [input_dim, 60 * input_dim]
    for i in range(2, 8):
        dims.append(int(60 * input_dim / i))
    dims.append(output_dim)
    return dims


def make_critic_params(key, input_dim, output_dim):
    """nn.Linear-style init. Returns (weights_bf16 tuple, bias_stack f32)."""
    dims = layer_dims(input_dim, output_dim)
    n_layers = len(dims) - 1
    max_w = max(dims[1:])

    weights = []
    bias_stack = jnp.zeros((n_layers, max_w), jnp.float32)
    for li, (d_in, d_out) in enumerate(zip(dims[:-1], dims[1:])):
        key, kw, kb = jax.random.split(key, 3)
        bound = 1.0 / float(d_in) ** 0.5                   # nn.Linear default range
        w = jax.random.uniform(kw, (d_in, d_out), jnp.float32, -bound, bound)
        b = jax.random.uniform(kb, (d_out,), jnp.float32, -bound, bound)
        weights.append(w.astype(jnp.bfloat16))             # bf16 at rest: half the HBM bytes
        bias_stack = bias_stack.at[li, :d_out].set(b)
    return tuple(weights), bias_stack


@functools.partial(jax.jit, static_argnames=("block_batch",))
def critic_forward(state, weights, bias_stack, *, block_batch=256):
    batch, in_dim = state.shape
    out_dim = weights[-1].shape[1]

    # Batch tile: full batch if small, else a multiple-of-8 tile (256 rows fills the MXU).
    tb = batch if batch <= block_batch else block_batch
    grid = (pl.cdiv(batch, tb),)

    x_spec = pl.BlockSpec((tb, in_dim), lambda i: (i, 0))
    b_spec = pl.BlockSpec(bias_stack.shape, lambda i: (0, 0))             # resident
    w_specs = [pl.BlockSpec(w.shape, lambda i: (0, 0)) for w in weights]  # resident
    out_spec = pl.BlockSpec((tb, out_dim), lambda i: (i, 0))

    flops = 2 * batch * sum(w.shape[0] * w.shape[1] for w in weights)
    bytes_accessed = (state.size * state.dtype.itemsize
                      + sum(w.size * w.dtype.itemsize for w in weights)
                      + bias_stack.size * bias_stack.dtype.itemsize
                      + batch * out_dim * 4)

    return pl.pallas_call(
        critic_kernel,
        out_shape=jax.ShapeDtypeStruct((batch, out_dim), jnp.float32),
        grid=grid,
        in_specs=[x_spec, b_spec] + w_specs,
        out_specs=out_spec,
        compiler_params=pltpu.CompilerParams(dimension_semantics=("parallel",)),
        cost_estimate=pl.CostEstimate(flops=flops, transcendentals=0,
                                      bytes_accessed=bytes_accessed),
    )(state, bias_stack, *weights)


def critic_reference(state, weights, bias_stack):
    """Plain-JAX reference with identical arithmetic (bf16 operands, f32 accumulate)."""
    h = state.astype(jnp.float32)
    n = len(weights)
    for li, w in enumerate(weights):
        d_out = w.shape[1]
        h = jnp.dot(h.astype(jnp.bfloat16), w,
                    preferred_element_type=jnp.float32) + bias_stack[li, :d_out]
        if li < n - 1:
            h = _leaky_relu(h)
    return h


if __name__ == "__main__":
    # input_dim=14 keeps every int(60*D/i) division exact: 840,420,280,210,168,140,120
    input_dim, output_dim = 14, 1
    batch = 512  # two grid steps at block_batch=256 to exercise pipelining / residency

    key = jax.random.PRNGKey(0)
    k_params, k_state = jax.random.split(key)

    weights, bias_stack = make_critic_params(k_params, input_dim, output_dim)
    state = jax.random.normal(k_state, (batch, input_dim), jnp.float32)

    out = critic_forward(state, weights, bias_stack)
    out = jax.block_until_ready(out)

    ref = critic_reference(state, weights, bias_stack)
    assert out.shape == (batch, output_dim), out.shape
    assert jnp.allclose(out, ref, atol=2e-3, rtol=2e-3), (
        f"max abs err {jnp.max(jnp.abs(out - ref))}"
    )

    print("KERNEL_OK")
</pallas_src>

<mosaic_0001>
module attributes {stable_mosaic.version = 11 : i64} {
  func.func @critic_kernel(%arg0: i32, %arg1: memref<256x14xf32, #tpu.memory_space<vmem>>, %arg2: memref<8x840xf32, #tpu.memory_space<vmem>>, %arg3: memref<14x840xbf16, #tpu.memory_space<vmem>>, %arg4: memref<840x420xbf16, #tpu.memory_space<vmem>>, %arg5: memref<420x280xbf16, #tpu.memory_space<vmem>>, %arg6: memref<280x210xbf16, #tpu.memory_space<vmem>>, %arg7: memref<210x168xbf16, #tpu.memory_space<vmem>>, %arg8: memref<168x140xbf16, #tpu.memory_space<vmem>>, %arg9: memref<140x120xbf16, #tpu.memory_space<vmem>>, %arg10: memref<120x1xbf16, #tpu.memory_space<vmem>>, %arg11: memref<256x1xf32, #tpu.memory_space<vmem>>) attributes {dimension_semantics = [#tpu.dimension_semantics<parallel>], iteration_bounds = array<i64: 2>, scalar_prefetch = 0 : i64, scratch_operands = 0 : i64, tpu.core_type = #tpu.core_type<tc>, window_params = [{transform_indices = @transform_0, window_bounds = array<i64: 256, 14>}, {pipeline_mode = #tpu.pipeline_mode<synchronous>, transform_indices = @transform_1, window_bounds = array<i64: 8, 840>}, {pipeline_mode = #tpu.pipeline_mode<synchronous>, transform_indices = @transform_2, window_bounds = array<i64: 14, 840>}, {pipeline_mode = #tpu.pipeline_mode<synchronous>, transform_indices = @transform_3, window_bounds = array<i64: 840, 420>}, {pipeline_mode = #tpu.pipeline_mode<synchronous>, transform_indices = @transform_4, window_bounds = array<i64: 420, 280>}, {pipeline_mode = #tpu.pipeline_mode<synchronous>, transform_indices = @transform_5, window_bounds = array<i64: 280, 210>}, {pipeline_mode = #tpu.pipeline_mode<synchronous>, transform_indices = @transform_6, window_bounds = array<i64: 210, 168>}, {pipeline_mode = #tpu.pipeline_mode<synchronous>, transform_indices = @transform_7, window_bounds = array<i64: 168, 140>}, {pipeline_mode = #tpu.pipeline_mode<synchronous>, transform_indices = @transform_8, window_bounds = array<i64: 140, 120>}, {pipeline_mode = #tpu.pipeline_mode<synchronous>, transform_indices = @transform_9, window_bounds = array<i64: 120, 1>}, {transform_indices = @transform_10, window_bounds = array<i64: 256, 1>}]} {
    %c0 = arith.constant 0 : index
    %c0_0 = arith.constant 0 : index
    %0 = vector.load %arg1[%c0, %c0_0] : memref<256x14xf32, #tpu.memory_space<vmem>>, vector<256x14xf32>
    %c0_1 = arith.constant 0 : index
    %c0_2 = arith.constant 0 : index
    %1 = vector.load %arg3[%c0_1, %c0_2] : memref<14x840xbf16, #tpu.memory_space<vmem>>, vector<14x840xbf16>
    %2 = arith.truncf %0 : vector<256x14xf32> to vector<256x14xbf16>
    %cst = arith.constant dense<0.000000e+00> : vector<256x840xf32>
    %3 = tpu.matmul %2, %1, %cst {dimension_numbers = #tpu.dot_dimension_numbers<[1], [0], [0], [1], [0, 0, 1, 1], [], []>} : vector<256x14xbf16>, vector<14x840xbf16>, vector<256x840xf32> -> vector<256x840xf32>
    %c0_3 = arith.constant 0 : index
    %c0_4 = arith.constant 0 : index
    %4 = vector.load %arg2[%c0_3, %c0_4] : memref<8x840xf32, #tpu.memory_space<vmem>>, vector<1x840xf32>
    %5 = vector.broadcast %4 : vector<1x840xf32> to vector<256x840xf32>
    %6 = arith.addf %3, %5 : vector<256x840xf32>
    %cst_5 = arith.constant 0.000000e+00 : f32
    %7 = vector.broadcast %cst_5 : f32 to vector<256x840xf32>
    %8 = arith.cmpf ogt, %6, %7 : vector<256x840xf32>
    %cst_6 = arith.constant 0.00999999977 : f32
    %9 = vector.broadcast %cst_6 : f32 to vector<256x840xf32>
    %10 = arith.mulf %9, %6 : vector<256x840xf32>
    %11 = arith.select %8, %6, %10 : vector<256x840xi1>, vector<256x840xf32>
    %c0_7 = arith.constant 0 : index
    %c0_8 = arith.constant 0 : index
    %12 = vector.load %arg4[%c0_7, %c0_8] : memref<840x420xbf16, #tpu.memory_space<vmem>>, vector<840x420xbf16>
    %13 = arith.truncf %11 : vector<256x840xf32> to vector<256x840xbf16>
    %cst_9 = arith.constant dense<0.000000e+00> : vector<256x420xf32>
    %14 = tpu.matmul %13, %12, %cst_9 {dimension_numbers = #tpu.dot_dimension_numbers<[1], [0], [0], [1], [0, 0, 1, 1], [], []>} : vector<256x840xbf16>, vector<840x420xbf16>, vector<256x420xf32> -> vector<256x420xf32>
    %c1 = arith.constant 1 : index
    %c0_10 = arith.constant 0 : index
    %15 = vector.load %arg2[%c1, %c0_10] : memref<8x840xf32, #tpu.memory_space<vmem>>, vector<1x420xf32>
    %16 = vector.broadcast %15 : vector<1x420xf32> to vector<256x420xf32>
    %17 = arith.addf %14, %16 : vector<256x420xf32>
    %cst_11 = arith.constant 0.000000e+00 : f32
    %18 = vector.broadcast %cst_11 : f32 to vector<256x420xf32>
    %19 = arith.cmpf ogt, %17, %18 : vector<256x420xf32>
    %cst_12 = arith.constant 0.00999999977 : f32
    %20 = vector.broadcast %cst_12 : f32 to vector<256x420xf32>
    %21 = arith.mulf %20, %17 : vector<256x420xf32>
    %22 = arith.select %19, %17, %21 : vector<256x420xi1>, vector<256x420xf32>
    %c0_13 = arith.constant 0 : index
    %c0_14 = arith.constant 0 : index
    %23 = vector.load %arg5[%c0_13, %c0_14] : memref<420x280xbf16, #tpu.memory_space<vmem>>, vector<420x280xbf16>
    %24 = arith.truncf %22 : vector<256x420xf32> to vector<256x420xbf16>
    %cst_15 = arith.constant dense<0.000000e+00> : vector<256x280xf32>
    %25 = tpu.matmul %24, %23, %cst_15 {dimension_numbers = #tpu.dot_dimension_numbers<[1], [0], [0], [1], [0, 0, 1, 1], [], []>} : vector<256x420xbf16>, vector<420x280xbf16>, vector<256x280xf32> -> vector<256x280xf32>
    %c2 = arith.constant 2 : index
    %c0_16 = arith.constant 0 : index
    %26 = vector.load %arg2[%c2, %c0_16] : memref<8x840xf32, #tpu.memory_space<vmem>>, vector<1x280xf32>
    %27 = vector.broadcast %26 : vector<1x280xf32> to vector<256x280xf32>
    %28 = arith.addf %25, %27 : vector<256x280xf32>
    %cst_17 = arith.constant 0.000000e+00 : f32
    %29 = vector.broadcast %cst_17 : f32 to vector<256x280xf32>
    %30 = arith.cmpf ogt, %28, %29 : vector<256x280xf32>
    %cst_18 = arith.constant 0.00999999977 : f32
    %31 = vector.broadcast %cst_18 : f32 to vector<256x280xf32>
    %32 = arith.mulf %31, %28 : vector<256x280xf32>
    %33 = arith.select %30, %28, %32 : vector<256x280xi1>, vector<256x280xf32>
    %c0_19 = arith.constant 0 : index
    %c0_20 = arith.constant 0 : index
    %34 = vector.load %arg6[%c0_19, %c0_20] : memref<280x210xbf16, #tpu.memory_space<vmem>>, vector<280x210xbf16>
    %35 = arith.truncf %33 : vector<256x280xf32> to vector<256x280xbf16>
    %cst_21 = arith.constant dense<0.000000e+00> : vector<256x210xf32>
    %36 = tpu.matmul %35, %34, %cst_21 {dimension_numbers = #tpu.dot_dimension_numbers<[1], [0], [0], [1], [0, 0, 1, 1], [], []>} : vector<256x280xbf16>, vector<280x210xbf16>, vector<256x210xf32> -> vector<256x210xf32>
    %c3 = arith.constant 3 : index
    %c0_22 = arith.constant 0 : index
    %37 = vector.load %arg2[%c3, %c0_22] : memref<8x840xf32, #tpu.memory_space<vmem>>, vector<1x210xf32>
    %38 = vector.broadcast %37 : vector<1x210xf32> to vector<256x210xf32>
    %39 = arith.addf %36, %38 : vector<256x210xf32>
    %cst_23 = arith.constant 0.000000e+00 : f32
    %40 = vector.broadcast %cst_23 : f32 to vector<256x210xf32>
    %41 = arith.cmpf ogt, %39, %40 : vector<256x210xf32>
    %cst_24 = arith.constant 0.00999999977 : f32
    %42 = vector.broadcast %cst_24 : f32 to vector<256x210xf32>
    %43 = arith.mulf %42, %39 : vector<256x210xf32>
    %44 = arith.select %41, %39, %43 : vector<256x210xi1>, vector<256x210xf32>
    %c0_25 = arith.constant 0 : index
    %c0_26 = arith.constant 0 : index
    %45 = vector.load %arg7[%c0_25, %c0_26] : memref<210x168xbf16, #tpu.memory_space<vmem>>, vector<210x168xbf16>
    %46 = arith.truncf %44 : vector<256x210xf32> to vector<256x210xbf16>
    %cst_27 = arith.constant dense<0.000000e+00> : vector<256x168xf32>
    %47 = tpu.matmul %46, %45, %cst_27 {dimension_numbers = #tpu.dot_dimension_numbers<[1], [0], [0], [1], [0, 0, 1, 1], [], []>} : vector<256x210xbf16>, vector<210x168xbf16>, vector<256x168xf32> -> vector<256x168xf32>
    %c4 = arith.constant 4 : index
    %c0_28 = arith.constant 0 : index
    %48 = vector.load %arg2[%c4, %c0_28] : memref<8x840xf32, #tpu.memory_space<vmem>>, vector<1x168xf32>
    %49 = vector.broadcast %48 : vector<1x168xf32> to vector<256x168xf32>
    %50 = arith.addf %47, %49 : vector<256x168xf32>
    %cst_29 = arith.constant 0.000000e+00 : f32
    %51 = vector.broadcast %cst_29 : f32 to vector<256x168xf32>
    %52 = arith.cmpf ogt, %50, %51 : vector<256x168xf32>
    %cst_30 = arith.constant 0.00999999977 : f32
    %53 = vector.broadcast %cst_30 : f32 to vector<256x168xf32>
    %54 = arith.mulf %53, %50 : vector<256x168xf32>
    %55 = arith.select %52, %50, %54 : vector<256x168xi1>, vector<256x168xf32>
    %c0_31 = arith.constant 0 : index
    %c0_32 = arith.constant 0 : index
    %56 = vector.load %arg8[%c0_31, %c0_32] : memref<168x140xbf16, #tpu.memory_space<vmem>>, vector<168x140xbf16>
    %57 = arith.truncf %55 : vector<256x168xf32> to vector<256x168xbf16>
    %cst_33 = arith.constant dense<0.000000e+00> : vector<256x140xf32>
    %58 = tpu.matmul %57, %56, %cst_33 {dimension_numbers = #tpu.dot_dimension_numbers<[1], [0], [0], [1], [0, 0, 1, 1], [], []>} : vector<256x168xbf16>, vector<168x140xbf16>, vector<256x140xf32> -> vector<256x140xf32>
    %c5 = arith.constant 5 : index
    %c0_34 = arith.constant 0 : index
    %59 = vector.load %arg2[%c5, %c0_34] : memref<8x840xf32, #tpu.memory_space<vmem>>, vector<1x140xf32>
    %60 = vector.broadcast %59 : vector<1x140xf32> to vector<256x140xf32>
    %61 = arith.addf %58, %60 : vector<256x140xf32>
    %cst_35 = arith.constant 0.000000e+00 : f32
    %62 = vector.broadcast %cst_35 : f32 to vector<256x140xf32>
    %63 = arith.cmpf ogt, %61, %62 : vector<256x140xf32>
    %cst_36 = arith.constant 0.00999999977 : f32
    %64 = vector.broadcast %cst_36 : f32 to vector<256x140xf32>
    %65 = arith.mulf %64, %61 : vector<256x140xf32>
    %66 = arith.select %63, %61, %65 : vector<256x140xi1>, vector<256x140xf32>
    %c0_37 = arith.constant 0 : index
    %c0_38 = arith.constant 0 : index
    %67 = vector.load %arg9[%c0_37, %c0_38] : memref<140x120xbf16, #tpu.memory_space<vmem>>, vector<140x120xbf16>
    %68 = arith.truncf %66 : vector<256x140xf32> to vector<256x140xbf16>
    %cst_39 = arith.constant dense<0.000000e+00> : vector<256x120xf32>
    %69 = tpu.matmul %68, %67, %cst_39 {dimension_numbers = #tpu.dot_dimension_numbers<[1], [0], [0], [1], [0, 0, 1, 1], [], []>} : vector<256x140xbf16>, vector<140x120xbf16>, vector<256x120xf32> -> vector<256x120xf32>
    %c6 = arith.constant 6 : index
    %c0_40 = arith.constant 0 : index
    %70 = vector.load %arg2[%c6, %c0_40] : memref<8x840xf32, #tpu.memory_space<vmem>>, vector<1x120xf32>
    %71 = vector.broadcast %70 : vector<1x120xf32> to vector<256x120xf32>
    %72 = arith.addf %69, %71 : vector<256x120xf32>
    %cst_41 = arith.constant 0.000000e+00 : f32
    %73 = vector.broadcast %cst_41 : f32 to vector<256x120xf32>
    %74 = arith.cmpf ogt, %72, %73 : vector<256x120xf32>
    %cst_42 = arith.constant 0.00999999977 : f32
    %75 = vector.broadcast %cst_42 : f32 to vector<256x120xf32>
    %76 = arith.mulf %75, %72 : vector<256x120xf32>
    %77 = arith.select %74, %72, %76 : vector<256x120xi1>, vector<256x120xf32>
    %c0_43 = arith.constant 0 : index
    %c0_44 = arith.constant 0 : index
    %78 = vector.load %arg10[%c0_43, %c0_44] : memref<120x1xbf16, #tpu.memory_space<vmem>>, vector<120x1xbf16>
    %79 = arith.truncf %77 : vector<256x120xf32> to vector<256x120xbf16>
    %cst_45 = arith.constant dense<0.000000e+00> : vector<256x1xf32>
    %80 = tpu.matmul %79, %78, %cst_45 {dimension_numbers = #tpu.dot_dimension_numbers<[1], [0], [0], [1], [0, 0, 1, 1], [], []>} : vector<256x120xbf16>, vector<120x1xbf16>, vector<256x1xf32> -> vector<256x1xf32>
    %c7 = arith.constant 7 : index
    %c0_46 = arith.constant 0 : index
    %81 = vector.load %arg2[%c7, %c0_46] : memref<8x840xf32, #tpu.memory_space<vmem>>, vector<1x1xf32>
    %82 = vector.broadcast %81 : vector<1x1xf32> to vector<256x1xf32>
    %83 = arith.addf %80, %82 : vector<256x1xf32>
    %c0_47 = arith.constant 0 : index
    %c0_48 = arith.constant 0 : index
    %84 = vector.load %arg11[%c0_47, %c0_48] : memref<256x1xf32, #tpu.memory_space<vmem>>, vector<256x1xf32>
    tpu.vector_store %arg11[%c0_47, %c0_48], %83 {strides = array<i32>} : memref<256x1xf32, #tpu.memory_space<vmem>>, vector<256x1xf32>,
    return
  }
  func.func @transform_0(%arg0: i32) -> (i32, i32) {
    %c0_i32 = arith.constant 0 : i32
    %c0_i32_0 = arith.constant 0 : i32
    return %arg0, %c0_i32 : i32, i32
  }
  func.func @transform_1(%arg0: i32) -> (i32, i32) {
    %c0_i32 = arith.constant 0 : i32
    %c0_i32_0 = arith.constant 0 : i32
    %c0_i32_1 = arith.constant 0 : i32
    return %c0_i32, %c0_i32_0 : i32, i32
  }
  func.func @transform_2(%arg0: i32) -> (i32, i32) {
    %c0_i32 = arith.constant 0 : i32
    %c0_i32_0 = arith.constant 0 : i32
    %c0_i32_1 = arith.constant 0 : i32
    return %c0_i32, %c0_i32_0 : i32, i32
  }
  func.func @transform_3(%arg0: i32) -> (i32, i32) {
    %c0_i32 = arith.constant 0 : i32
    %c0_i32_0 = arith.constant 0 : i32
    %c0_i32_1 = arith.constant 0 : i32
    return %c0_i32, %c0_i32_0 : i32, i32
  }
  func.func @transform_4(%arg0: i32) -> (i32, i32) {
    %c0_i32 = arith.constant 0 : i32
    %c0_i32_0 = arith.constant 0 : i32
    %c0_i32_1 = arith.constant 0 : i32
    return %c0_i32, %c0_i32_0 : i32, i32
  }
  func.func @transform_5(%arg0: i32) -> (i32, i32) {
    %c0_i32 = arith.constant 0 : i32
    %c0_i32_0 = arith.constant 0 : i32
    %c0_i32_1 = arith.constant 0 : i32
    return %c0_i32, %c0_i32_0 : i32, i32
  }
  func.func @transform_6(%arg0: i32) -> (i32, i32) {
    %c0_i32 = arith.constant 0 : i32
    %c0_i32_0 = arith.constant 0 : i32
    %c0_i32_1 = arith.constant 0 : i32
    return %c0_i32, %c0_i32_0 : i32, i32
  }
  func.func @transform_7(%arg0: i32) -> (i32, i32) {
    %c0_i32 = arith.constant 0 : i32
    %c0_i32_0 = arith.constant 0 : i32
    %c0_i32_1 = arith.constant 0 : i32
    return %c0_i32, %c0_i32_0 : i32, i32
  }
  func.func @transform_8(%arg0: i32) -> (i32, i32) {
    %c0_i32 = arith.constant 0 : i32
    %c0_i32_0 = arith.constant 0 : i32
    %c0_i32_1 = arith.constant 0 : i32
    return %c0_i32, %c0_i32_0 : i32, i32
  }
  func.func @transform_9(%arg0: i32) -> (i32, i32) {
    %c0_i32 = arith.constant 0 : i32
    %c0_i32_0 = arith.constant 0 : i32
    %c0_i32_1 = arith.constant 0 : i32
    return %c0_i32, %c0_i32_0 : i32, i32
  }
  func.func @transform_10(%arg0: i32) -> (i32, i32) {
    %c0_i32 = arith.constant 0 : i32
    %c0_i32_0 = arith.constant 0 : i32
    return %arg0, %c0_i32 : i32, i32
  }
}

</mosaic_0001>

<llo_original>
// kernel: critic_forward.1
$region0: #{critic_forward.1}
  #allocation0 [shape = 'u32[]', space=smem, size = 0x4, offset = 0x4, fixed_abs, tag = 'smem constant byte address 0x4 - core index']
  #allocation1 [shape = 'u32[144,128]{1,0:T(1,128)}', space=vmem, size = 0x12000, scoped, tag = 'internal scratch']
  %s0 = inlined_call_operand.vmem [shape: f32[512,14], index: 0, kind: input, shape index: {}]
  %s1 = inlined_call_operand.vmem [shape: f32[8,840], index: 1, kind: input, shape index: {}]
  %s2 = inlined_call_operand.vmem [shape: bf16[14,840], index: 2, kind: input, shape index: {}]
  %s3 = inlined_call_operand.vmem [shape: bf16[840,420], index: 3, kind: input, shape index: {}]
  %s4 = inlined_call_operand.vmem [shape: bf16[420,280], index: 4, kind: input, shape index: {}]
  %s5 = inlined_call_operand.vmem [shape: bf16[280,210], index: 5, kind: input, shape index: {}]
  %s6 = inlined_call_operand.vmem [shape: bf16[210,168], index: 6, kind: input, shape index: {}]
  %s7 = inlined_call_operand.vmem [shape: bf16[168,140], index: 7, kind: input, shape index: {}]
  %s8 = inlined_call_operand.vmem [shape: bf16[140,120], index: 8, kind: input, shape index: {}]
  %s9 = inlined_call_operand.vmem [shape: bf16[120,1], index: 9, kind: input, shape index: {}]
  %s10 = inlined_call_operand.vmem [shape: f32[512,1], index: 10, kind: output, shape index: {}]
  %s11 = sld [smem:[#allocation0]]
  $region73: #{critic_forward.1} parent=0
    _
  %s13 = ssub.s32 1, %s11
  %s14 = scalar_select 0, %s13, %s11
  loop: start=0, step=1, limit=4
  $region2: #{critic_forward.1} parent=0 // loop_pre_header
    _
  $region3: #{critic_forward.1} parent=0 // loop_header
    %s16 = sphi 0, %s20
    %p17 = scmp.ge.s32.totalorder %s16, 4
    %s26 = sphi 0, %s28
    %s29 = sphi 0, %s26
    %s30 = sphi 0, %s29
    %s46 = sphi 0, %s30
    %s50 = sphi 0, %s50
    %s52 = sphi 0, %s50
    %s53 = sphi 0, %s52
    %s67 = sphi 0, %s53
    %s71 = sphi 0, %s71
    %s73 = sphi 0, %s71
    %s74 = sphi 0, %s73
    %s88 = sphi 0, %s74
    %s92 = sphi 0, %s92
    %s94 = sphi 0, %s92
    %s95 = sphi 0, %s94
    %s109 = sphi 0, %s95
    %s113 = sphi 0, %s113
    %s115 = sphi 0, %s113
    %s116 = sphi 0, %s115
    %s130 = sphi 0, %s116
    %s134 = sphi 0, %s134
    %s136 = sphi 0, %s134
    %s137 = sphi 0, %s136
    %s151 = sphi 0, %s137
    %s155 = sphi 0, %s155
    %s157 = sphi 0, %s155
    %s158 = sphi 0, %s157
    %s172 = sphi 0, %s158
    %s176 = sphi 0, %s176
    %s178 = sphi 0, %s176
    %s179 = sphi 0, %s178
    %s193 = sphi 0, %s179
    %s197 = sphi 0, %s197
    %s199 = sphi 0, %s197
    %s200 = sphi 0, %s199
    %s214 = sphi 0, %s200
    %s218 = sphi 0, %s218
    %s220 = sphi 0, %s218
    %s221 = sphi 0, %s220
    %s235 = sphi 0, %s221
    %s241 = sphi 0, %s243
    %s244 = sphi 0, %s241
    %s245 = sphi 0, %s244
    %s261 = sphi 0, %s245
  $region4: #{critic_forward.1} parent=0 // loop_header_branch
    %19 = sbr.rel (%p17) target = $region8
  $region5: #{critic_forward.1} parent=0 // loop_body
    %s21 = ssub.s32 %s16, 1
    %s22 = ssub.s32 %s16, 2
    %s23 = sadd.s32 %s16, 1
    %s24 = ssub.s32 %s16, %s23
    %p25 = scmp.eq.s32.totalorder %s24, 0
    %s27 = sadd.s32 %s26, 1
    %s28 = scalar_select %p25, %s26, %s27
    %p31 = pneg %p25
    %p32 = scmp.eq.s32.totalorder %s16, 1
    %p33 = por %p31, %p32
    %p34 = scmp.ne.s32.totalorder %s26, %s29
    %p35 = scmp.eq.s32.totalorder %s16, 0
    %p36 = por %p34, %p35
    %p37 = scmp.ne.s32.totalorder %s26, %s29
    %p38 = scmp.eq.s32.totalorder %s21, 1
    %p39 = por %p37, %p38
    %p40 = scmp.ne.s32.totalorder %s29, %s30
    %p41 = scmp.eq.s32.totalorder %s21, 0
    %p42 = por %p40, %p41
    %p43 = scmp.ne.s32.totalorder %s29, %s30
    %p44 = scmp.eq.s32.totalorder %s22, 1
    %p45 = por %p43, %p44
    %p47 = scmp.ne.s32.totalorder %s30, %s46
    %p48 = scmp.eq.s32.totalorder %s22, 0
    %p49 = por %p47, %p48
    %s51 = sadd.s32 %s50, 1
    %p54 = scmp.eq.s32.totalorder %s16, 1
    %p55 = scmp.ne.s32.totalorder %s50, %s52
    %p56 = scmp.eq.s32.totalorder %s16, 0
    %p57 = por %p55, %p56
    %p58 = scmp.ne.s32.totalorder %s50, %s52
    %p59 = scmp.eq.s32.totalorder %s21, 1
    %p60 = por %p58, %p59
    %p61 = scmp.ne.s32.totalorder %s52, %s53
    %p62 = scmp.eq.s32.totalorder %s21, 0
    %p63 = por %p61, %p62
    %p64 = scmp.ne.s32.totalorder %s52, %s53
    %p65 = scmp.eq.s32.totalorder %s22, 1
    %p66 = por %p64, %p65
    %p68 = scmp.ne.s32.totalorder %s53, %s67
    %p69 = scmp.eq.s32.totalorder %s22, 0
    %p70 = por %p68, %p69
    %s72 = sadd.s32 %s71, 1
    %p75 = scmp.eq.s32.totalorder %s16, 1
    %p76 = scmp.ne.s32.totalorder %s71, %s73
    %p77 = scmp.eq.s32.totalorder %s16, 0
    %p78 = por %p76, %p77
    %p79 = scmp.ne.s32.totalorder %s71, %s73
    %p80 = scmp.eq.s32.totalorder %s21, 1
    %p81 = por %p79, %p80
    %p82 = scmp.ne.s32.totalorder %s73, %s74
    %p83 = scmp.eq.s32.totalorder %s21, 0
    %p84 = por %p82, %p83
    %p85 = scmp.ne.s32.totalorder %s73, %s74
    %p86 = scmp.eq.s32.totalorder %s22, 1
    %p87 = por %p85, %p86
    %p89 = scmp.ne.s32.totalorder %s74, %s88
    %p90 = scmp.eq.s32.totalorder %s22, 0
    %p91 = por %p89, %p90
    %s93 = sadd.s32 %s92, 1
    %p96 = scmp.eq.s32.totalorder %s16, 1
    %p97 = scmp.ne.s32.totalorder %s92, %s94
    %p98 = scmp.eq.s32.totalorder %s16, 0
    %p99 = por %p97, %p98
    %p100 = scmp.ne.s32.totalorder %s92, %s94
    %p101 = scmp.eq.s32.totalorder %s21, 1
    %p102 = por %p100, %p101
    %p103 = scmp.ne.s32.totalorder %s94, %s95
    %p104 = scmp.eq.s32.totalorder %s21, 0
    %p105 = por %p103, %p104
    %p106 = scmp.ne.s32.totalorder %s94, %s95
    %p107 = scmp.eq.s32.totalorder %s22, 1
    %p108 = por %p106, %p107
    %p110 = scmp.ne.s32.totalorder %s95, %s109
    %p111 = scmp.eq.s32.totalorder %s22, 0
    %p112 = por %p110, %p111
    %s114 = sadd.s32 %s113, 1
    %p117 = scmp.eq.s32.totalorder %s16, 1
    %p118 = scmp.ne.s32.totalorder %s113, %s115
    %p119 = scmp.eq.s32.totalorder %s16, 0
    %p120 = por %p118, %p119
    %p121 = scmp.ne.s32.totalorder %s113, %s115
    %p122 = scmp.eq.s32.totalorder %s21, 1
    %p123 = por %p121, %p122
    %p124 = scmp.ne.s32.totalorder %s115, %s116
    %p125 = scmp.eq.s32.totalorder %s21, 0
    %p126 = por %p124, %p125
    %p127 = scmp.ne.s32.totalorder %s115, %s116
    %p128 = scmp.eq.s32.totalorder %s22, 1
    %p129 = por %p127, %p128
    %p131 = scmp.ne.s32.totalorder %s116, %s130
    %p132 = scmp.eq.s32.totalorder %s22, 0
    %p133 = por %p131, %p132
    %s135 = sadd.s32 %s134, 1
    %p138 = scmp.eq.s32.totalorder %s16, 1
    %p139 = scmp.ne.s32.totalorder %s134, %s136
    %p140 = scmp.eq.s32.totalorder %s16, 0
    %p141 = por %p139, %p140
    %p142 = scmp.ne.s32.totalorder %s134, %s136
    %p143 = scmp.eq.s32.totalorder %s21, 1
    %p144 = por %p142, %p143
    %p145 = scmp.ne.s32.totalorder %s136, %s137
    %p146 = scmp.eq.s32.totalorder %s21, 0
    %p147 = por %p145, %p146
    %p148 = scmp.ne.s32.totalorder %s136, %s137
    %p149 = scmp.eq.s32.totalorder %s22, 1
    %p150 = por %p148, %p149
    %p152 = scmp.ne.s32.totalorder %s137, %s151
    %p153 = scmp.eq.s32.totalorder %s22, 0
    %p154 = por %p152, %p153
    %s156 = sadd.s32 %s155, 1
    %p159 = scmp.eq.s32.totalorder %s16, 1
    %p160 = scmp.ne.s32.totalorder %s155, %s157
    %p161 = scmp.eq.s32.totalorder %s16, 0
    %p162 = por %p160, %p161
    %p163 = scmp.ne.s32.totalorder %s155, %s157
    %p164 = scmp.eq.s32.totalorder %s21, 1
    %p165 = por %p163, %p164
    %p166 = scmp.ne.s32.totalorder %s157, %s158
    %p167 = scmp.eq.s32.totalorder %s21, 0
    %p168 = por %p166, %p167
    %p169 = scmp.ne.s32.totalorder %s157, %s158
    %p170 = scmp.eq.s32.totalorder %s22, 1
    %p171 = por %p169, %p170
    %p173 = scmp.ne.s32.totalorder %s158, %s172
    %p174 = scmp.eq.s32.totalorder %s22, 0
    %p175 = por %p173, %p174
    %s177 = sadd.s32 %s176, 1
    %p180 = scmp.eq.s32.totalorder %s16, 1
    %p181 = scmp.ne.s32.totalorder %s176, %s178
    %p182 = scmp.eq.s32.totalorder %s16, 0
    %p183 = por %p181, %p182
    %p184 = scmp.ne.s32.totalorder %s176, %s178
    %p185 = scmp.eq.s32.totalorder %s21, 1
    %p186 = por %p184, %p185
    %p187 = scmp.ne.s32.totalorder %s178, %s179
    %p188 = scmp.eq.s32.totalorder %s21, 0
    %p189 = por %p187, %p188
    %p190 = scmp.ne.s32.totalorder %s178, %s179
    %p191 = scmp.eq.s32.totalorder %s22, 1
    %p192 = por %p190, %p191
    %p194 = scmp.ne.s32.totalorder %s179, %s193
    %p195 = scmp.eq.s32.totalorder %s22, 0
    %p196 = por %p194, %p195
    %s198 = sadd.s32 %s197, 1
    %p201 = scmp.eq.s32.totalorder %s16, 1
    %p202 = scmp.ne.s32.totalorder %s197, %s199
    %p203 = scmp.eq.s32.totalorder %s16, 0
    %p204 = por %p202, %p203
    %p205 = scmp.ne.s32.totalorder %s197, %s199
    %p206 = scmp.eq.s32.totalorder %s21, 1
    %p207 = por %p205, %p206
    %p208 = scmp.ne.s32.totalorder %s199, %s200
    %p209 = scmp.eq.s32.totalorder %s21, 0
    %p210 = por %p208, %p209
    %p211 = scmp.ne.s32.totalorder %s199, %s200
    %p212 = scmp.eq.s32.totalorder %s22, 1
    %p213 = por %p211, %p212
    %p215 = scmp.ne.s32.totalorder %s200, %s214
    %p216 = scmp.eq.s32.totalorder %s22, 0
    %p217 = por %p215, %p216
    %s219 = sadd.s32 %s218, 1
    %p222 = scmp.eq.s32.totalorder %s16, 1
    %p223 = scmp.ne.s32.totalorder %s218, %s220
    %p224 = scmp.eq.s32.totalorder %s16, 0
    %p225 = por %p223, %p224
    %p226 = scmp.ne.s32.totalorder %s218, %s220
    %p227 = scmp.eq.s32.totalorder %s21, 1
    %p228 = por %p226, %p227
    %p229 = scmp.ne.s32.totalorder %s220, %s221
    %p230 = scmp.eq.s32.totalorder %s21, 0
    %p231 = por %p229, %p230
    %p232 = scmp.ne.s32.totalorder %s220, %s221
    %p233 = scmp.eq.s32.totalorder %s22, 1
    %p234 = por %p232, %p233
    %p236 = scmp.ne.s32.totalorder %s221, %s235
    %p237 = scmp.eq.s32.totalorder %s22, 0
    %p238 = por %p236, %p237
    %s239 = ssub.s32 %s16, %s23
    %p240 = scmp.eq.s32.totalorder %s239, 0
    %s242 = sadd.s32 %s241, 1
    %s243 = scalar_select %p240, %s241, %s242
    %p246 = pneg %p240
    %p247 = scmp.eq.s32.totalorder %s16, 1
    %p248 = por %p246, %p247
    %p249 = scmp.ne.s32.totalorder %s241, %s244
    %p250 = scmp.eq.s32.totalorder %s16, 0
    %p251 = por %p249, %p250
    %p252 = scmp.ne.s32.totalorder %s241, %s244
    %p253 = scmp.eq.s32.totalorder %s21, 1
    %p254 = por %p252, %p253
    %p255 = scmp.ne.s32.totalorder %s244, %s245
    %p256 = scmp.eq.s32.totalorder %s21, 0
    %p257 = por %p255, %p256
    %p258 = scmp.ne.s32.totalorder %s244, %s245
    %p259 = scmp.eq.s32.totalorder %s22, 1
    %p260 = por %p258, %p259
    %p262 = scmp.ne.s32.totalorder %s245, %s261
    %p263 = scmp.eq.s32.totalorder %s22, 0
    %p264 = por %p262, %p263
    %p265 = scmp.le.s32.totalorder 1, %s16
    %p266 = scmp.lt.s32.totalorder %s16, 3
    %p267 = pnand %p265, %p266
    %p268 = pneg %p267
    // Predicated region
    $region9: #{critic_forward.1} parent=5 // pred_check
      _
    $region10: #{critic_forward.1} parent=5 // pred_check_branch
      %270 = sbr.rel (%p267) target = $region12
    $region11: #{critic_forward.1} parent=5 // pred_region
      %s271 = ssub.s32 %s16, 1
      // Predicated region
      $region13: #{critic_forward.1} parent=11 // pred_check
        %p272 = pneg %p63
      $region14: #{critic_forward.1} parent=11 // pred_check_branch
        %274 = sbr.rel (%p272) target = $region16
      $region15: #{critic_forward.1} parent=11 // pred_region
        _
      $region16: #{critic_forward.1} parent=11 // pred_fallthru
        _
      // Predicated region
      $region17: #{critic_forward.1} parent=11 // pred_check
        %p275 = pneg %p84
      $region18: #{critic_forward.1} parent=11 // pred_check_branch
        %277 = sbr.rel (%p275) target = $region20
      $region19: #{critic_forward.1} parent=11 // pred_region
        _
      $region20: #{critic_forward.1} parent=11 // pred_fallthru
        _
      // Predicated region
      $region21: #{critic_forward.1} parent=11 // pred_check
        %p278 = pneg %p105
      $region22: #{critic_forward.1} parent=11 // pred_check_branch
        %280 = sbr.rel (%p278) target = $region24
      $region23: #{critic_forward.1} parent=11 // pred_region
        _
      $region24: #{critic_forward.1} parent=11 // pred_fallthru
        _
      // Predicated region
      $region25: #{critic_forward.1} parent=11 // pred_check
        %p281 = pneg %p126
      $region26: #{critic_forward.1} parent=11 // pred_check_branch
        %283 = sbr.rel (%p281) target = $region28
      $region27: #{critic_forward.1} parent=11 // pred_region
        _
      $region28: #{critic_forward.1} parent=11 // pred_fallthru
        _
      // Predicated region
      $region29: #{critic_forward.1} parent=11 // pred_check
        %p284 = pneg %p147
      $region30: #{critic_forward.1} parent=11 // pred_check_branch
        %286 = sbr.rel (%p284) target = $region32
      $region31: #{critic_forward.1} parent=11 // pred_region
        _
      $region32: #{critic_forward.1} parent=11 // pred_fallthru
        _
      // Predicated region
      $region33: #{critic_forward.1} parent=11 // pred_check
        %p287 = pneg %p168
      $region34: #{critic_forward.1} parent=11 // pred_check_branch
        %289 = sbr.rel (%p287) target = $region36
      $region35: #{critic_forward.1} parent=11 // pred_region
        _
      $region36: #{critic_forward.1} parent=11 // pred_fallthru
        _
      // Predicated region
      $region37: #{critic_forward.1} parent=11 // pred_check
        %p290 = pneg %p189
      $region38: #{critic_forward.1} parent=11 // pred_check_branch
        %292 = sbr.rel (%p290) target = $region40
      $region39: #{critic_forward.1} parent=11 // pred_region
        _
      $region40: #{critic_forward.1} parent=11 // pred_fallthru
        _
      // Predicated region
      $region41: #{critic_forward.1} parent=11 // pred_check
        %p293 = pneg %p210
      $region42: #{critic_forward.1} parent=11 // pred_check_branch
        %295 = sbr.rel (%p293) target = $region44
      $region43: #{critic_forward.1} parent=11 // pred_region
        _
      $region44: #{critic_forward.1} parent=11 // pred_fallthru
        _
      // Predicated region
      $region45: #{critic_forward.1} parent=11 // pred_check
        %p296 = pneg %p231
      $region46: #{critic_forward.1} parent=11 // pred_check_branch
        %298 = sbr.rel (%p296) target = $region48
      $region47: #{critic_forward.1} parent=11 // pred_region
        _
      $region48: #{critic_forward.1} parent=11 // pred_fallthru
        _
    $region12: #{critic_forward.1} parent=5 // pred_fallthru
      _
    %p299 = scmp.lt.s32.totalorder %s16, 2
    // Predicated region
    $region49: #{critic_forward.1} parent=5 // pred_check
      %p300 = pneg %p299
    $region50: #{critic_forward.1} parent=5 // pred_check_branch
      %302 = sbr.rel (%p300) target = $region52
    $region51: #{critic_forward.1} parent=5 // pred_region
      // Predicated region
      $region53: #{critic_forward.1} parent=51 // pred_check
        %p303 = pneg %p36
      $region54: #{critic_forward.1} parent=51 // pred_check_branch
        %305 = sbr.rel (%p303) target = $region56
      $region55: #{critic_forward.1} parent=51 // pred_region
        %s306 = smul.u32 32, %s16
        %p307 = scmp.lt.s32.totalorder %s306, 63
        %s308 = scalar_select %p307, %s306, 63
        %s309 = smul.addr %s308, 8
        %s310 = scalar_lea.vmem %s0, %s309
        %s311 = smul.u32 32, %s16
      $region56: #{critic_forward.1} parent=51 // pred_fallthru
        _
    $region52: #{critic_forward.1} parent=5 // pred_fallthru
      _
    %p312 = scmp.le.s32.totalorder 1, %s16
    %p313 = scmp.lt.s32.totalorder %s16, 3
    %p314 = pnand %p312, %p313
    %p315 = pneg %p314
    // Predicated region
    $region57: #{critic_forward.1} parent=5 // pred_check
      _
    $region58: #{critic_forward.1} parent=5 // pred_check_branch
      %317 = sbr.rel (%p314) target = $region60
    $region59: #{critic_forward.1} parent=5 // pred_region
      %s318 = ssub.s32 %s16, 1
      %s319 = smul.u32 32, %s21
      %p320 = scmp.lt.s32.totalorder %s319, 63
      %s321 = scalar_select %p320, %s319, 63
      %s322 = smul.addr %s321, 8
      %s323 = scalar_lea.vmem %s0, %s322
      %p324 = pneg %p42
      %p325 = pneg %p39
      %p326 = pneg %p63
      %p327 = pneg %p60
      %p328 = pneg %p84
      %p329 = pneg %p81
      %p330 = pneg %p105
      %p331 = pneg %p102
      %p332 = pneg %p126
      %p333 = pneg %p123
      %p334 = pneg %p147
      %p335 = pneg %p144
      %p336 = pneg %p168
      %p337 = pneg %p165
      %p338 = pneg %p189
      %p339 = pneg %p186
      %p340 = pneg %p210
      %p341 = pneg %p207
      %p342 = pneg %p231
      %p343 = pneg %p228
      %p344 = pneg %p257
      %p345 = pneg %p254
      %s346 = smul.u32 32, %s21
      %p347 = scmp.lt.s32.totalorder %s346, 63
      %s348 = scalar_select %p347, %s346, 63
      %s349 = smul.addr %s348, 8
      %s350 = scalar_lea.vmem %s10, %s349
      %s351 = smul.u32 32, %s21
      %p352 = scmp.lt.s32.totalorder %s351, 63
      %s353 = scalar_select %p352, %s351, 63
      %s354 = smul.addr %s353, 8
      %s355 = scalar_lea.vmem %s0, %s354
      %s356 = smul.u32 32, %s21
      %s357 = smul.u32 32, %s21
      %p358 = scmp.lt.s32.totalorder %s357, 63
      %s359 = scalar_select %p358, %s357, 63
      %s360 = smul.addr %s359, 8
      %s361 = scalar_lea.vmem %s10, %s360
      %s362 = smul.u32 32, %s21
      %v364 = vld [vmem:[%s355] sm:$0xff]
      %v365 = vld [vmem:[%s355 + $0x8] sm:$0xff]
      %v366 = vld [vmem:[%s355 + $0x10] sm:$0xff]
      %v367 = vld [vmem:[%s355 + $0x18] sm:$0xff]
      %v368 = vld [vmem:[%s355 + $0x20] sm:$0xff]
      %v369 = vld [vmem:[%s355 + $0x28] sm:$0xff]
      %v370 = vld [vmem:[%s355 + $0x30] sm:$0xff]
      %v371 = vld [vmem:[%s355 + $0x38] sm:$0xff]
      %v372 = vld [vmem:[%s355 + $0x40] sm:$0xff]
      %v373 = vld [vmem:[%s355 + $0x48] sm:$0xff]
      %v374 = vld [vmem:[%s355 + $0x50] sm:$0xff]
      %v375 = vld [vmem:[%s355 + $0x58] sm:$0xff]
      %v376 = vld [vmem:[%s355 + $0x60] sm:$0xff]
      %v377 = vld [vmem:[%s355 + $0x68] sm:$0xff]
      %v378 = vld [vmem:[%s355 + $0x70] sm:$0xff]
      %v379 = vld [vmem:[%s355 + $0x78] sm:$0xff]
      %v380 = vld [vmem:[%s355 + $0x80] sm:$0xff]
      %v381 = vld [vmem:[%s355 + $0x88] sm:$0xff]
      %v382 = vld [vmem:[%s355 + $0x90] sm:$0xff]
      %v383 = vld [vmem:[%s355 + $0x98] sm:$0xff]
      %v384 = vld [vmem:[%s355 + $0xa0] sm:$0xff]
      %v385 = vld [vmem:[%s355 + $0xa8] sm:$0xff]
      %v386 = vld [vmem:[%s355 + $0xb0] sm:$0xff]
      %v387 = vld [vmem:[%s355 + $0xb8] sm:$0xff]
      %v388 = vld [vmem:[%s355 + $0xc0] sm:$0xff]
      %v389 = vld [vmem:[%s355 + $0xc8] sm:$0xff]
      %v390 = vld [vmem:[%s355 + $0xd0] sm:$0xff]
      %v391 = vld [vmem:[%s355 + $0xd8] sm:$0xff]
      %v392 = vld [vmem:[%s355 + $0xe0] sm:$0xff]
      %v393 = vld [vmem:[%s355 + $0xe8] sm:$0xff]
      %v394 = vld [vmem:[%s355 + $0xf0] sm:$0xff]
      %v395 = vld [vmem:[%s355 + $0xf8] sm:$0xff]
      %v396 = vld [vmem:[%s2] sm:$0xff]
      %v397 = vld [vmem:[%s2 + $0x8] sm:$0xff]
      %v398 = vld [vmem:[%s2 + $0x10] sm:$0xff]
      %v399 = vld [vmem:[%s2 + $0x18] sm:$0xf]
      %v400 = vld [vmem:[%s2 + $0x1c] sm:$0x77]
      %v401 = vld [vmem:[%s2 + $0x24] sm:$0x77]
      %v402 = vld [vmem:[%s2 + $0x2c] sm:$0x77]
      %v403 = vld [vmem:[%s2 + $0x34] sm:$0x7]
      %v404 = vpack.c.bf16 %v365, %v364
      %v405 = vpack.c.bf16 %v367, %v366
      %v406 = vpack.c.bf16 %v369, %v368
      %v407 = vpack.c.bf16 %v371, %v370
      %v408 = vpack.c.bf16 %v373, %v372
      %v409 = vpack.c.bf16 %v375, %v374
      %v410 = vpack.c.bf16 %v377, %v376
      %v411 = vpack.c.bf16 %v379, %v378
      %v412 = vpack.c.bf16 %v381, %v380
      %v413 = vpack.c.bf16 %v383, %v382
      %v414 = vpack.c.bf16 %v385, %v384
      %v415 = vpack.c.bf16 %v387, %v386
      %v416 = vpack.c.bf16 %v389, %v388
      %v417 = vpack.c.bf16 %v391, %v390
      %v418 = vpack.c.bf16 %v393, %v392
      %v419 = vpack.c.bf16 %v395, %v394
      %v420 = vld [vmem:[%s1] ss:$8 sm:$0xf]
      %v421 = vld [vmem:[%s1] ss:$8 sm:$0x70]
      %v422 = vor.u32 %v420, %v421
      %v424 = vlaneseq
      %v425 = vshrl.u32 %v424, 7
      %v426 = vsub.s32 0, %v425
      %v427 = vrot.slane %v422, %v426
      %v428 = vlaneseq
      %v429 = vshrl.u32 %v428, 7
      %v430 = vsub.s32 1, %v429
      %v431 = vrot.slane %v422, %v430
      %v432 = vlaneseq
      %v433 = vshrl.u32 %v432, 7
      %v434 = vsub.s32 2, %v433
      %v435 = vrot.slane %v422, %v434
      %v436 = vlaneseq
      %v437 = vshrl.u32 %v436, 7
      %v438 = vsub.s32 3, %v437
      %v439 = vrot.slane %v422, %v438
      %v440 = vlaneseq
      %v441 = vshrl.u32 %v440, 7
      %v442 = vsub.s32 4, %v441
      %v443 = vrot.slane %v422, %v442
      %v444 = vlaneseq
      %v445 = vshrl.u32 %v444, 7
      %v446 = vsub.s32 5, %v445
      %v447 = vrot.slane %v422, %v446
      %v448 = vlaneseq
      %v449 = vshrl.u32 %v448, 7
      %v450 = vsub.s32 6, %v449
      %v451 = vrot.slane %v422, %v450
      %v467 = vunpack.c.l.b16 %v396
      %v468 = vunpack.c.h.b16 %v396
      %v469 = vunpack.c.l.b16 %v397
      %v470 = vunpack.c.h.b16 %v397
      %v471 = vunpack.c.l.b16 %v398
      %v472 = vunpack.c.h.b16 %v398
      %v473 = vunpack.c.l.b16 %v399
      %v474 = vunpack.c.l.b16 %v400
      %v475 = vunpack.c.h.b16 %v400
      %v476 = vunpack.c.l.b16 %v401
      %v477 = vunpack.c.h.b16 %v401
      %v478 = vunpack.c.l.b16 %v402
      %v479 = vunpack.c.h.b16 %v402
      %v480 = vunpack.c.l.b16 %v403
      %v481 = vpack.c.b16 %v474, %v467
      %v482 = vpack.c.b16 %v475, %v468
      %v483 = vpack.c.b16 %v476, %v469
      %v484 = vpack.c.b16 %v477, %v470
      %v485 = vpack.c.b16 %v478, %v471
      %v486 = vpack.c.b16 %v479, %v472
      %v487 = vpack.c.b16 %v480, %v473
      %vm488 = vcmask 113664
      %v490 = vsel %vm488, %v404, 0
      %v493 = vsel %vm488, %v405, 0
      %v496 = vsel %vm488, %v406, 0
      %v499 = vsel %vm488, %v407, 0
      %v502 = vsel %vm488, %v408, 0
      %v505 = vsel %vm488, %v409, 0
      %v508 = vsel %vm488, %v410, 0
      %v511 = vsel %vm488, %v411, 0
      %v514 = vsel %vm488, %v412, 0
      %v517 = vsel %vm488, %v413, 0
      %v520 = vsel %vm488, %v414, 0
      %v523 = vsel %vm488, %v415, 0
      %v526 = vsel %vm488, %v416, 0
      %v529 = vsel %vm488, %v417, 0
      %v532 = vsel %vm488, %v418, 0
      %v535 = vsel %vm488, %v419, 0
      %vm537 = vcmask 1046528
      %v539 = vsel %vm537, %v481, 0
      %v542 = vsel %vm537, %v482, 0
      %v545 = vsel %vm537, %v483, 0
      %v548 = vsel %vm537, %v484, 0
      %v551 = vsel %vm537, %v485, 0
      %v554 = vsel %vm537, %v486, 0
      %v557 = vsel %vm537, %v487, 0
      %559 = vmatprep.subr.bf16.mxu0 %v542
      %560 = vmatpush1.bf16.msra.mxu0 %v539
      %561 = vmatprep.subr.bf16.mxu0 0
      %562 = vmatpush1.bf16.msra.mxu0 0
      %563 = vmatprep.subr.bf16.mxu0 0
      %564 = vmatpush1.bf16.msra.mxu0 0
      %565 = vmatprep.subr.bf16.mxu0 0
      %566 = vmatpush1.bf16.msra.mxu0 0
      %567 = vmatprep.subr.bf16.mxu0 0
      %568 = vmatpush1.bf16.msra.mxu0 0
      %569 = vmatprep.subr.bf16.mxu0 0
      %570 = vmatpush1.bf16.msra.mxu0 0
      %571 = vmatprep.subr.bf16.mxu0 0
      %572 = vmatpush1.bf16.msra.mxu0 0
      %573 = vmatprep.subr.bf16.mxu0 0
      %574 = vmatpush1.bf16.msra.mxu0 0
      %575 = vmatprep.subr.bf16.mxu0 0
      %576 = vmatpush1.bf16.msra.mxu0 0
      %577 = vmatprep.subr.bf16.mxu0 0
      %578 = vmatpush1.bf16.msra.mxu0 0
      %579 = vmatprep.subr.bf16.mxu0 0
      %580 = vmatpush1.bf16.msra.mxu0 0
      %581 = vmatprep.subr.bf16.mxu0 0
      %582 = vmatpush1.bf16.msra.mxu0 0
      %583 = vmatprep.subr.bf16.mxu0 0
      %584 = vmatpush1.bf16.msra.mxu0 0
      %585 = vmatprep.subr.bf16.mxu0 0
      %586 = vmatpush1.bf16.msra.mxu0 0
      %587 = vmatprep.subr.bf16.mxu0 0
      %588 = vmatpush1.bf16.msra.mxu0 0
      %589 = vmatprep.subr.bf16.mxu0 0
      %590 = vmatpush1.bf16.msra.mxu0 0
      %591 = vmatprep.mubr.bf16.mxu0 0
      %592 = vmatmul.mubr.bf16.gmra.mrb[0].mxu0 %v490
      %v593 = vpop.f32.mrb[0].mxu0
      %v594 = vadd.f32 %v427, %v593
      %v595 = vpop.f32.mrb[0].mxu0
      %v596 = vadd.f32 %v431, %v595
      %v597 = vpop.f32.mrb[0].mxu0
      %v598 = vadd.f32 %v427, %v597
      %v599 = vpop.f32.mrb[0].mxu0
      %v600 = vadd.f32 %v431, %v599
      %601 = vmatprep.mubr.bf16.mxu0 0
      %602 = vmatmul.mubr.bf16.gmra.mrb[0].mxu0 %v493
      %v603 = vpop.f32.mrb[0].mxu0
      %v604 = vadd.f32 %v427, %v603
      %v605 = vpop.f32.mrb[0].mxu0
      %v606 = vadd.f32 %v431, %v605
      %v607 = vpop.f32.mrb[0].mxu0
      %v608 = vadd.f32 %v427, %v607
      %v609 = vpop.f32.mrb[0].mxu0
      %v610 = vadd.f32 %v431, %v609
      %611 = vmatprep.mubr.bf16.mxu0 0
      %612 = vmatmul.mubr.bf16.gmra.mrb[0].mxu0 %v496
      %v613 = vpop.f32.mrb[0].mxu0
      %v614 = vadd.f32 %v427, %v613
      %v615 = vpop.f32.mrb[0].mxu0
      %v616 = vadd.f32 %v431, %v615
      %v617 = vpop.f32.mrb[0].mxu0
      %v618 = vadd.f32 %v427, %v617
      %v619 = vpop.f32.mrb[0].mxu0
      %v620 = vadd.f32 %v431, %v619
      %621 = vmatprep.mubr.bf16.mxu0 0
      %622 = vmatmul.mubr.bf16.gmra.mrb[0].mxu0 %v499
      %v623 = vpop.f32.mrb[0].mxu0
      %v624 = vadd.f32 %v427, %v623
      %v625 = vpop.f32.mrb[0].mxu0
      %v626 = vadd.f32 %v431, %v625
      %v627 = vpop.f32.mrb[0].mxu0
      %v628 = vadd.f32 %v427, %v627
      %v629 = vpop.f32.mrb[0].mxu0
      %v630 = vadd.f32 %v431, %v629
      %631 = vmatprep.mubr.bf16.mxu0 0
      %632 = vmatmul.mubr.bf16.gmra.mrb[0].mxu0 %v502
      %v633 = vpop.f32.mrb[0].mxu0
      %v634 = vadd.f32 %v427, %v633
      %v635 = vpop.f32.mrb[0].mxu0
      %v636 = vadd.f32 %v431, %v635
      %v637 = vpop.f32.mrb[0].mxu0
      %v638 = vadd.f32 %v427, %v637
      %v639 = vpop.f32.mrb[0].mxu0
      %v640 = vadd.f32 %v431, %v639
      %641 = vmatprep.mubr.bf16.mxu0 0
      %642 = vmatmul.mubr.bf16.gmra.mrb[0].mxu0 %v505
      %v643 = vpop.f32.mrb[0].mxu0
      %v644 = vadd.f32 %v427, %v643
      %v645 = vpop.f32.mrb[0].mxu0
      %v646 = vadd.f32 %v431, %v645
      %v647 = vpop.f32.mrb[0].mxu0
      %v648 = vadd.f32 %v427, %v647
      %v649 = vpop.f32.mrb[0].mxu0
      %v650 = vadd.f32 %v431, %v649
      %651 = vmatprep.mubr.bf16.mxu0 0
      %652 = vmatmul.mubr.bf16.gmra.mrb[0].mxu0 %v508
      %v653 = vpop.f32.mrb[0].mxu0
      %v654 = vadd.f32 %v427, %v653
      %v655 = vpop.f32.mrb[0].mxu0
      %v656 = vadd.f32 %v431, %v655
      %v657 = vpop.f32.mrb[0].mxu0
      %v658 = vadd.f32 %v427, %v657
      %v659 = vpop.f32.mrb[0].mxu0
      %v660 = vadd.f32 %v431, %v659
      %661 = vmatprep.mubr.bf16.mxu0 0
      %662 = vmatmul.mubr.bf16.gmra.mrb[0].mxu0 %v511
      %v663 = vpop.f32.mrb[0].mxu0
      %v664 = vadd.f32 %v427, %v663
      %v665 = vpop.f32.mrb[0].mxu0
      %v666 = vadd.f32 %v431, %v665
      %v667 = vpop.f32.mrb[0].mxu0
      %v668 = vadd.f32 %v427, %v667
      %v669 = vpop.f32.mrb[0].mxu0
      %v670 = vadd.f32 %v431, %v669
      %671 = vmatprep.mubr.bf16.mxu0 0
      %672 = vmatmul.mubr.bf16.gmra.mrb[0].mxu0 %v514
      %v673 = vpop.f32.mrb[0].mxu0
      %v674 = vadd.f32 %v427, %v673
      %v675 = vpop.f32.mrb[0].mxu0
      %v676 = vadd.f32 %v431, %v675
      %v677 = vpop.f32.mrb[0].mxu0
      %v678 = vadd.f32 %v427, %v677
      %v679 = vpop.f32.mrb[0].mxu0
      %v680 = vadd.f32 %v431, %v679
      %681 = vmatprep.mubr.bf16.mxu0 0
      %682 = vmatmul.mubr.bf16.gmra.mrb[0].mxu0 %v517
      %v683 = vpop.f32.mrb[0].mxu0
      %v684 = vadd.f32 %v427, %v683
      %v685 = vpop.f32.mrb[0].mxu0
      %v686 = vadd.f32 %v431, %v685
      %v687 = vpop.f32.mrb[0].mxu0
      %v688 = vadd.f32 %v427, %v687
      %v689 = vpop.f32.mrb[0].mxu0
      %v690 = vadd.f32 %v431, %v689
      %691 = vmatprep.mubr.bf16.mxu0 0
      %692 = vmatmul.mubr.bf16.gmra.mrb[0].mxu0 %v520
      %v693 = vpop.f32.mrb[0].mxu0
      %v694 = vadd.f32 %v427, %v693
      %v695 = vpop.f32.mrb[0].mxu0
      %v696 = vadd.f32 %v431, %v695
      %v697 = vpop.f32.mrb[0].mxu0
      %v698 = vadd.f32 %v427, %v697
      %v699 = vpop.f32.mrb[0].mxu0
      %v700 = vadd.f32 %v431, %v699
      %701 = vmatprep.mubr.bf16.mxu0 0
      %702 = vmatmul.mubr.bf16.gmra.mrb[0].mxu0 %v523
      %v703 = vpop.f32.mrb[0].mxu0
      %v704 = vadd.f32 %v427, %v703
      %v705 = vpop.f32.mrb[0].mxu0
      %v706 = vadd.f32 %v431, %v705
      %v707 = vpop.f32.mrb[0].mxu0
      %v708 = vadd.f32 %v427, %v707
      %v709 = vpop.f32.mrb[0].mxu0
      %v710 = vadd.f32 %v431, %v709
      %711 = vmatprep.mubr.bf16.mxu0 0
      %712 = vmatmul.mubr.bf16.gmra.mrb[0].mxu0 %v526
      %v713 = vpop.f32.mrb[0].mxu0
      %v714 = vadd.f32 %v427, %v713
      %v715 = vpop.f32.mrb[0].mxu0
      %v716 = vadd.f32 %v431, %v715
      %v717 = vpop.f32.mrb[0].mxu0
      %v718 = vadd.f32 %v427, %v717
      %v719 = vpop.f32.mrb[0].mxu0
      %v720 = vadd.f32 %v431, %v719
      %721 = vmatprep.mubr.bf16.mxu0 0
      %722 = vmatmul.mubr.bf16.gmra.mrb[0].mxu0 %v529
      %v723 = vpop.f32.mrb[0].mxu0
      %v724 = vadd.f32 %v427, %v723
      %v725 = vpop.f32.mrb[0].mxu0
      %v726 = vadd.f32 %v431, %v725
      %v727 = vpop.f32.mrb[0].mxu0
      %v728 = vadd.f32 %v427, %v727
      %v729 = vpop.f32.mrb[0].mxu0
      %v730 = vadd.f32 %v431, %v729
      %731 = vmatprep.mubr.bf16.mxu0 0
      %732 = vmatmul.mubr.bf16.gmra.mrb[0].mxu0 %v532
      %v733 = vpop.f32.mrb[0].mxu0
      %v734 = vadd.f32 %v427, %v733
      %v735 = vpop.f32.mrb[0].mxu0
      %v736 = vadd.f32 %v431, %v735
      %v737 = vpop.f32.mrb[0].mxu0
      %v738 = vadd.f32 %v427, %v737
      %v739 = vpop.f32.mrb[0].mxu0
      %v740 = vadd.f32 %v431, %v739
      %741 = vmatprep.mubr.bf16.mxu0 0
      %742 = vmatmul.mubr.bf16.gmra.mrb[0].mxu0 %v535
      %v743 = vpop.f32.mrb[0].mxu0
      %v744 = vadd.f32 %v427, %v743
      %v745 = vpop.f32.mrb[0].mxu0
      %v746 = vadd.f32 %v431, %v745
      %v747 = vpop.f32.mrb[0].mxu0
      %v748 = vadd.f32 %v427, %v747
      %v749 = vpop.f32.mrb[0].mxu0
      %v750 = vadd.f32 %v431, %v749
      %751 = vdwg.mxu0
      %752 = vmatprep.subr.bf16.mxu0 %v548
      %753 = vmatpush1.bf16.msra.mxu0 %v545
      %754 = vmatprep.subr.bf16.mxu0 0
      %755 = vmatpush1.bf16.msra.mxu0 0
      %756 = vmatprep.subr.bf16.mxu0 0
      %757 = vmatpush1.bf16.msra.mxu0 0
      %758 = vmatprep.subr.bf16.mxu0 0
      %759 = vmatpush1.bf16.msra.mxu0 0
      %760 = vmatprep.subr.bf16.mxu0 0
      %761 = vmatpush1.bf16.msra.mxu0 0
      %762 = vmatprep.subr.bf16.mxu0 0
      %763 = vmatpush1.bf16.msra.mxu0 0
      %764 = vmatprep.subr.bf16.mxu0 0
      %765 = vmatpush1.bf16.msra.mxu0 0
      %766 = vmatprep.subr.bf16.mxu0 0
      %767 = vmatpush1.bf16.msra.mxu0 0
      %768 = vmatprep.subr.bf16.mxu0 0
      %769 = vmatpush1.bf16.msra.mxu0 0
      %770 = vmatprep.subr.bf16.mxu0 0
      %771 = vmatpush1.bf16.msra.mxu0 0
      %772 = vmatprep.subr.bf16.mxu0 0
      %773 = vmatpush1.bf16.msra.mxu0 0
      %774 = vmatprep.subr.bf16.mxu0 0
      %775 = vmatpush1.bf16.msra.mxu0 0
      %776 = vmatprep.subr.bf16.mxu0 0
      %777 = vmatpush1.bf16.msra.mxu0 0
      %778 = vmatprep.subr.bf16.mxu0 0
      %779 = vmatpush1.bf16.msra.mxu0 0
      %780 = vmatprep.subr.bf16.mxu0 0
      %781 = vmatpush1.bf16.msra.mxu0 0
      %782 = vmatprep.subr.bf16.mxu0 0
      %783 = vmatpush1.bf16.msra.mxu0 0
      %784 = vmatprep.mubr.bf16.mxu0 0
      %785 = vmatmul.mubr.bf16.gmra.mrb[0].mxu0 %v490
      %v786 = vpop.f32.mrb[0].mxu0
      %v787 = vadd.f32 %v435, %v786
      %v788 = vpop.f32.mrb[0].mxu0
      %v789 = vadd.f32 %v439, %v788
      %v790 = vpop.f32.mrb[0].mxu0
      %v791 = vadd.f32 %v435, %v790
      %v792 = vpop.f32.mrb[0].mxu0
      %v793 = vadd.f32 %v439, %v792
      %794 = vmatprep.mubr.bf16.mxu0 0
      %795 = vmatmul.mubr.bf16.gmra.mrb[0].mxu0 %v493
      %v796 = vpop.f32.mrb[0].mxu0
      %v797 = vadd.f32 %v435, %v796
      %v798 = vpop.f32.mrb[0].mxu0
      %v799 = vadd.f32 %v439, %v798
      %v800 = vpop.f32.mrb[0].mxu0
      %v801 = vadd.f32 %v435, %v800
      %v802 = vpop.f32.mrb[0].mxu0
      %v803 = vadd.f32 %v439, %v802
      %804 = vmatprep.mubr.bf16.mxu0 0
      %805 = vmatmul.mubr.bf16.gmra.mrb[0].mxu0 %v496
      %v806 = vpop.f32.mrb[0].mxu0
      %v807 = vadd.f32 %v435, %v806
      %v808 = vpop.f32.mrb[0].mxu0
      %v809 = vadd.f32 %v439, %v808
      %v810 = vpop.f32.mrb[0].mxu0
      %v811 = vadd.f32 %v435, %v810
      %v812 = vpop.f32.mrb[0].mxu0
      %v813 = vadd.f32 %v439, %v812
      %814 = vmatprep.mubr.bf16.mxu0 0
      %815 = vmatmul.mubr.bf16.gmra.mrb[0].mxu0 %v499
      %v816 = vpop.f32.mrb[0].mxu0
      %v817 = vadd.f32 %v435, %v816
      %v818 = vpop.f32.mrb[0].mxu0
      %v819 = vadd.f32 %v439, %v818
      %v820 = vpop.f32.mrb[0].mxu0
      %v821 = vadd.f32 %v435, %v820
      %v822 = vpop.f32.mrb[0].mxu0
      %v823 = vadd.f32 %v439, %v822
      %824 = vmatprep.mubr.bf16.mxu0 0
      %825 = vmatmul.mubr.bf16.gmra.mrb[0].mxu0 %v502
      %v826 = vpop.f32.mrb[0].mxu0
      %v827 = vadd.f32 %v435, %v826
      %v828 = vpop.f32.mrb[0].mxu0
      %v829 = vadd.f32 %v439, %v828
      %v830 = vpop.f32.mrb[0].mxu0
      %v831 = vadd.f32 %v435, %v830
      %v832 = vpop.f32.mrb[0].mxu0
      %v833 = vadd.f32 %v439, %v832
      %834 = vmatprep.mubr.bf16.mxu0 0
      %835 = vmatmul.mubr.bf16.gmra.mrb[0].mxu0 %v505
      %v836 = vpop.f32.mrb[0].mxu0
      %v837 = vadd.f32 %v435, %v836
      %v838 = vpop.f32.mrb[0].mxu0
      %v839 = vadd.f32 %v439, %v838
      %v840 = vpop.f32.mrb[0].mxu0
      %v841 = vadd.f32 %v435, %v840
      %v842 = vpop.f32.mrb[0].mxu0
      %v843 = vadd.f32 %v439, %v842
      %844 = vmatprep.mubr.bf16.mxu0 0
      %845 = vmatmul.mubr.bf16.gmra.mrb[0].mxu0 %v508
      %v846 = vpop.f32.mrb[0].mxu0
      %v847 = vadd.f32 %v435, %v846
      %v848 = vpop.f32.mrb[0].mxu0
      %v849 = vadd.f32 %v439, %v848
      %v850 = vpop.f32.mrb[0].mxu0
      %v851 = vadd.f32 %v435, %v850
      %v852 = vpop.f32.mrb[0].mxu0
      %v853 = vadd.f32 %v439, %v852
      %854 = vmatprep.mubr.bf16.mxu0 0
      %855 = vmatmul.mubr.bf16.gmra.mrb[0].mxu0 %v511
      %v856 = vpop.f32.mrb[0].mxu0
      %v857 = vadd.f32 %v435, %v856
      %v858 = vpop.f32.mrb[0].mxu0
      %v859 = vadd.f32 %v439, %v858
      %v860 = vpop.f32.mrb[0].mxu0
      %v861 = vadd.f32 %v435, %v860
      %v862 = vpop.f32.mrb[0].mxu0
      %v863 = vadd.f32 %v439, %v862
      %864 = vmatprep.mubr.bf16.mxu0 0
      %865 = vmatmul.mubr.bf16.gmra.mrb[0].mxu0 %v514
      %v866 = vpop.f32.mrb[0].mxu0
      %v867 = vadd.f32 %v435, %v866
      %v868 = vpop.f32.mrb[0].mxu0
      %v869 = vadd.f32 %v439, %v868
      %v870 = vpop.f32.mrb[0].mxu0
      %v871 = vadd.f32 %v435, %v870
      %v872 = vpop.f32.mrb[0].mxu0
      %v873 = vadd.f32 %v439, %v872
      %874 = vmatprep.mubr.bf16.mxu0 0
      %875 = vmatmul.mubr.bf16.gmra.mrb[0].mxu0 %v517
      %v876 = vpop.f32.mrb[0].mxu0
      %v877 = vadd.f32 %v435, %v876
      %v878 = vpop.f32.mrb[0].mxu0
      %v879 = vadd.f32 %v439, %v878
      %v880 = vpop.f32.mrb[0].mxu0
      %v881 = vadd.f32 %v435, %v880
      %v882 = vpop.f32.mrb[0].mxu0
      %v883 = vadd.f32 %v439, %v882
      %884 = vmatprep.mubr.bf16.mxu0 0
      %885 = vmatmul.mubr.bf16.gmra.mrb[0].mxu0 %v520
      %v886 = vpop.f32.mrb[0].mxu0
      %v887 = vadd.f32 %v435, %v886
      %v888 = vpop.f32.mrb[0].mxu0
      %v889 = vadd.f32 %v439, %v888
      %v890 = vpop.f32.mrb[0].mxu0
      %v891 = vadd.f32 %v435, %v890
      %v892 = vpop.f32.mrb[0].mxu0
      %v893 = vadd.f32 %v439, %v892
      %894 = vmatprep.mubr.bf16.mxu0 0
      %895 = vmatmul.mubr.bf16.gmra.mrb[0].mxu0 %v523
      %v896 = vpop.f32.mrb[0].mxu0
      %v897 = vadd.f32 %v435, %v896
      %v898 = vpop.f32.mrb[0].mxu0
      %v899 = vadd.f32 %v439, %v898
      %v900 = vpop.f32.mrb[0].mxu0
      %v901 = vadd.f32 %v435, %v900
      %v902 = vpop.f32.mrb[0].mxu0
      %v903 = vadd.f32 %v439, %v902
      %904 = vmatprep.mubr.bf16.mxu0 0
      %905 = vmatmul.mubr.bf16.gmra.mrb[0].mxu0 %v526
      %v906 = vpop.f32.mrb[0].mxu0
      %v907 = vadd.f32 %v435, %v906
      %v908 = vpop.f32.mrb[0].mxu0
      %v909 = vadd.f32 %v439, %v908
      %v910 = vpop.f32.mrb[0].mxu0
      %v911 = vadd.f32 %v435, %v910
      %v912 = vpop.f32.mrb[0].mxu0
      %v913 = vadd.f32 %v439, %v912
      %914 = vmatprep.mubr.bf16.mxu0 0
      %915 = vmatmul.mubr.bf16.gmra.mrb[0].mxu0 %v529
      %v916 = vpop.f32.mrb[0].mxu0
      %v917 = vadd.f32 %v435, %v916
      %v918 = vpop.f32.mrb[0].mxu0
      %v919 = vadd.f32 %v439, %v918
      %v920 = vpop.f32.mrb[0].mxu0
      %v921 = vadd.f32 %v435, %v920
      %v922 = vpop.f32.mrb[0].mxu0
      %v923 = vadd.f32 %v439, %v922
      %924 = vmatprep.mubr.bf16.mxu0 0
      %925 = vmatmul.mubr.bf16.gmra.mrb[0].mxu0 %v532
      %v926 = vpop.f32.mrb[0].mxu0
      %v927 = vadd.f32 %v435, %v926
      %v928 = vpop.f32.mrb[0].mxu0
      %v929 = vadd.f32 %v439, %v928
      %v930 = vpop.f32.mrb[0].mxu0
      %v931 = vadd.f32 %v435, %v930
      %v932 = vpop.f32.mrb[0].mxu0
      %v933 = vadd.f32 %v439, %v932
      %934 = vmatprep.mubr.bf16.mxu0 0
      %935 = vmatmul.mubr.bf16.gmra.mrb[0].mxu0 %v535
      %v936 = vpop.f32.mrb[0].mxu0
      %v937 = vadd.f32 %v435, %v936
      %v938 = vpop.f32.mrb[0].mxu0
      %v939 = vadd.f32 %v439, %v938
      %v940 = vpop.f32.mrb[0].mxu0
      %v941 = vadd.f32 %v435, %v940
      %v942 = vpop.f32.mrb[0].mxu0
      %v943 = vadd.f32 %v439, %v942
      %944 = vdwg.mxu0
      %945 = vmatprep.subr.bf16.mxu0 %v554
      %946 = vmatpush1.bf16.msra.mxu0 %v551
      %947 = vmatprep.subr.bf16.mxu0 0
      %948 = vmatpush1.bf16.msra.mxu0 0
      %949 = vmatprep.subr.bf16.mxu0 0
      %950 = vmatpush1.bf16.msra.mxu0 0
      %951 = vmatprep.subr.bf16.mxu0 0
      %952 = vmatpush1.bf16.msra.mxu0 0
      %953 = vmatprep.subr.bf16.mxu0 0
      %954 = vmatpush1.bf16.msra.mxu0 0
      %955 = vmatprep.subr.bf16.mxu0 0
      %956 = vmatpush1.bf16.msra.mxu0 0
      %957 = vmatprep.subr.bf16.mxu0 0
      %958 = vmatpush1.bf16.msra.mxu0 0
      %959 = vmatprep.subr.bf16.mxu0 0
      %960 = vmatpush1.bf16.msra.mxu0 0
      %961 = vmatprep.subr.bf16.mxu0 0
      %962 = vmatpush1.bf16.msra.mxu0 0
      %963 = vmatprep.subr.bf16.mxu0 0
      %964 = vmatpush1.bf16.msra.mxu0 0
      %965 = vmatprep.subr.bf16.mxu0 0
      %966 = vmatpush1.bf16.msra.mxu0 0
      %967 = vmatprep.subr.bf16.mxu0 0
      %968 = vmatpush1.bf16.msra.mxu0 0
      %969 = vmatprep.subr.bf16.mxu0 0
      %970 = vmatpush1.bf16.msra.mxu0 0
      %971 = vmatprep.subr.bf16.mxu0 0
      %972 = vmatpush1.bf16.msra.mxu0 0
      %973 = vmatprep.subr.bf16.mxu0 0
      %974 = vmatpush1.bf16.msra.mxu0 0
      %975 = vmatprep.subr.bf16.mxu0 0
      %976 = vmatpush1.bf16.msra.mxu0 0
      %977 = vmatprep.mubr.bf16.mxu0 0
      %978 = vmatmul.mubr.bf16.gmra.mrb[0].mxu0 %v490
      %v979 = vpop.f32.mrb[0].mxu0
      %v980 = vadd.f32 %v443, %v979
      %v981 = vpop.f32.mrb[0].mxu0
      %v982 = vadd.f32 %v447, %v981
      %v983 = vpop.f32.mrb[0].mxu0
      %v984 = vadd.f32 %v443, %v983
      %v985 = vpop.f32.mrb[0].mxu0
      %v986 = vadd.f32 %v447, %v985
      %987 = vmatprep.mubr.bf16.mxu0 0
      %988 = vmatmul.mubr.bf16.gmra.mrb[0].mxu0 %v493
      %v989 = vpop.f32.mrb[0].mxu0
      %v990 = vadd.f32 %v443, %v989
      %v991 = vpop.f32.mrb[0].mxu0
      %v992 = vadd.f32 %v447, %v991
      %v993 = vpop.f32.mrb[0].mxu0
      %v994 = vadd.f32 %v443, %v993
      %v995 = vpop.f32.mrb[0].mxu0
      %v996 = vadd.f32 %v447, %v995
      %997 = vmatprep.mubr.bf16.mxu0 0
      %998 = vmatmul.mubr.bf16.gmra.mrb[0].mxu0 %v496
      %v999 = vpop.f32.mrb[0].mxu0
      %v1000 = vadd.f32 %v443, %v999
      %v1001 = vpop.f32.mrb[0].mxu0
      %v1002 = vadd.f32 %v447, %v1001
      %v1003 = vpop.f32.mrb[0].mxu0
      %v1004 = vadd.f32 %v443, %v1003
      %v1005 = vpop.f32.mrb[0].mxu0
      %v1006 = vadd.f32 %v447, %v1005
      %1007 = vmatprep.mubr.bf16.mxu0 0
      %1008 = vmatmul.mubr.bf16.gmra.mrb[0].mxu0 %v499
      %v1009 = vpop.f32.mrb[0].mxu0
      %v1010 = vadd.f32 %v443, %v1009
      %v1011 = vpop.f32.mrb[0].mxu0
      %v1012 = vadd.f32 %v447, %v1011
      %v1013 = vpop.f32.mrb[0].mxu0
      %v1014 = vadd.f32 %v443, %v1013
      %v1015 = vpop.f32.mrb[0].mxu0
      %v1016 = vadd.f32 %v447, %v1015
      %1017 = vmatprep.mubr.bf16.mxu0 0
      %1018 = vmatmul.mubr.bf16.gmra.mrb[0].mxu0 %v502
      %v1019 = vpop.f32.mrb[0].mxu0
      %v1020 = vadd.f32 %v443, %v1019
      %v1021 = vpop.f32.mrb[0].mxu0
      %v1022 = vadd.f32 %v447, %v1021
      %v1023 = vpop.f32.mrb[0].mxu0
      %v1024 = vadd.f32 %v443, %v1023
      %v1025 = vpop.f32.mrb[0].mxu0
      %v1026 = vadd.f32 %v447, %v1025
      %1027 = vmatprep.mubr.bf16.mxu0 0
      %1028 = vmatmul.mubr.bf16.gmra.mrb[0].mxu0 %v505
      %v1029 = vpop.f32.mrb[0].mxu0
      %v1030 = vadd.f32 %v443, %v1029
      %v1031 = vpop.f32.mrb[0].mxu0
      %v1032 = vadd.f32 %v447, %v1031
      %v1033 = vpop.f32.mrb[0].mxu0
      %v1034 = vadd.f32 %v443, %v1033
      %v1035 = vpop.f32.mrb[0].mxu0
      %v1036 = vadd.f32 %v447, %v1035
      %1037 = vmatprep.mubr.bf16.mxu0 0
      %1038 = vmatmul.mubr.bf16.gmra.mrb[0].mxu0 %v508
      %v1039 = vpop.f32.mrb[0].mxu0
      %v1040 = vadd.f32 %v443, %v1039
      %v1041 = vpop.f32.mrb[0].mxu0
      %v1042 = vadd.f32 %v447, %v1041
      %v1043 = vpop.f32.mrb[0].mxu0
      %v1044 = vadd.f32 %v443, %v1043
      %v1045 = vpop.f32.mrb[0].mxu0
      %v1046 = vadd.f32 %v447, %v1045
      %1047 = vmatprep.mubr.bf16.mxu0 0
      %1048 = vmatmul.mubr.bf16.gmra.mrb[0].mxu0 %v511
      %v1049 = vpop.f32.mrb[0].mxu0
      %v1050 = vadd.f32 %v443, %v1049
      %v1051 = vpop.f32.mrb[0].mxu0
      %v1052 = vadd.f32 %v447, %v1051
      %v1053 = vpop.f32.mrb[0].mxu0
      %v1054 = vadd.f32 %v443, %v1053
      %v1055 = vpop.f32.mrb[0].mxu0
      %v1056 = vadd.f32 %v447, %v1055
      %1057 = vmatprep.mubr.bf16.mxu0 0
      %1058 = vmatmul.mubr.bf16.gmra.mrb[0].mxu0 %v514
      %v1059 = vpop.f32.mrb[0].mxu0
      %v1060 = vadd.f32 %v443, %v1059
      %v1061 = vpop.f32.mrb[0].mxu0
      %v1062 = vadd.f32 %v447, %v1061
      %v1063 = vpop.f32.mrb[0].mxu0
      %v1064 = vadd.f32 %v443, %v1063
      %v1065 = vpop.f32.mrb[0].mxu0
      %v1066 = vadd.f32 %v447, %v1065
      %1067 = vmatprep.mubr.bf16.mxu0 0
      %1068 = vmatmul.mubr.bf16.gmra.mrb[0].mxu0 %v517
      %v1069 = vpop.f32.mrb[0].mxu0
      %v1070 = vadd.f32 %v443, %v1069
      %v1071 = vpop.f32.mrb[0].mxu0
      %v1072 = vadd.f32 %v447, %v1071
      %v1073 = vpop.f32.mrb[0].mxu0
      %v1074 = vadd.f32 %v443, %v1073
      %v1075 = vpop.f32.mrb[0].mxu0
      %v1076 = vadd.f32 %v447, %v1075
      %1077 = vmatprep.mubr.bf16.mxu0 0
      %1078 = vmatmul.mubr.bf16.gmra.mrb[0].mxu0 %v520
      %v1079 = vpop.f32.mrb[0].mxu0
      %v1080 = vadd.f32 %v443, %v1079
      %v1081 = vpop.f32.mrb[0].mxu0
      %v1082 = vadd.f32 %v447, %v1081
      %v1083 = vpop.f32.mrb[0].mxu0
      %v1084 = vadd.f32 %v443, %v1083
      %v1085 = vpop.f32.mrb[0].mxu0
      %v1086 = vadd.f32 %v447, %v1085
      %1087 = vmatprep.mubr.bf16.mxu0 0
      %1088 = vmatmul.mubr.bf16.gmra.mrb[0].mxu0 %v523
      %v1089 = vpop.f32.mrb[0].mxu0
      %v1090 = vadd.f32 %v443, %v1089
      %v1091 = vpop.f32.mrb[0].mxu0
      %v1092 = vadd.f32 %v447, %v1091
      %v1093 = vpop.f32.mrb[0].mxu0
      %v1094 = vadd.f32 %v443, %v1093
      %v1095 = vpop.f32.mrb[0].mxu0
      %v1096 = vadd.f32 %v447, %v1095
      %1097 = vmatprep.mubr.bf16.mxu0 0
      %1098 = vmatmul.mubr.bf16.gmra.mrb[0].mxu0 %v526
      %v1099 = vpop.f32.mrb[0].mxu0
      %v1100 = vadd.f32 %v443, %v1099
      %v1101 = vpop.f32.mrb[0].mxu0
      %v1102 = vadd.f32 %v447, %v1101
      %v1103 = vpop.f32.mrb[0].mxu0
      %v1104 = vadd.f32 %v443, %v1103
      %v1105 = vpop.f32.mrb[0].mxu0
      %v1106 = vadd.f32 %v447, %v1105
      %1107 = vmatprep.mubr.bf16.mxu0 0
      %1108 = vmatmul.mubr.bf16.gmra.mrb[0].mxu0 %v529
      %v1109 = vpop.f32.mrb[0].mxu0
      %v1110 = vadd.f32 %v443, %v1109
      %v1111 = vpop.f32.mrb[0].mxu0
      %v1112 = vadd.f32 %v447, %v1111
      %v1113 = vpop.f32.mrb[0].mxu0
      %v1114 = vadd.f32 %v443, %v1113
      %v1115 = vpop.f32.mrb[0].mxu0
      %v1116 = vadd.f32 %v447, %v1115
      %1117 = vmatprep.mubr.bf16.mxu0 0
      %1118 = vmatmul.mubr.bf16.gmra.mrb[0].mxu0 %v532
      %v1119 = vpop.f32.mrb[0].mxu0
      %v1120 = vadd.f32 %v443, %v1119
      %v1121 = vpop.f32.mrb[0].mxu0
      %v1122 = vadd.f32 %v447, %v1121
      %v1123 = vpop.f32.mrb[0].mxu0
      %v1124 = vadd.f32 %v443, %v1123
      %v1125 = vpop.f32.mrb[0].mxu0
      %v1126 = vadd.f32 %v447, %v1125
      %1127 = vmatprep.mubr.bf16.mxu0 0
      %1128 = vmatmul.mubr.bf16.gmra.mrb[0].mxu0 %v535
      %v1129 = vpop.f32.mrb[0].mxu0
      %v1130 = vadd.f32 %v443, %v1129
      %v1131 = vpop.f32.mrb[0].mxu0
      %v1132 = vadd.f32 %v447, %v1131
      %v1133 = vpop.f32.mrb[0].mxu0
      %v1134 = vadd.f32 %v443, %v1133
      %v1135 = vpop.f32.mrb[0].mxu0
      %v1136 = vadd.f32 %v447, %v1135
      %1137 = vdwg.mxu0
      %1138 = vmatprep.subr.bf16.mxu0 0
      %1139 = vmatpush1.bf16.msra.mxu0 %v557
      %1140 = vmatprep.subr.bf16.mxu0 0
      %1141 = vmatpush1.bf16.msra.mxu0 0
      %1142 = vmatprep.subr.bf16.mxu0 0
      %1143 = vmatpush1.bf16.msra.mxu0 0
      %1144 = vmatprep.subr.bf16.mxu0 0
      %1145 = vmatpush1.bf16.msra.mxu0 0
      %1146 = vmatprep.subr.bf16.mxu0 0
      %1147 = vmatpush1.bf16.msra.mxu0 0
      %1148 = vmatprep.subr.bf16.mxu0 0
      %1149 = vmatpush1.bf16.msra.mxu0 0
      %1150 = vmatprep.subr.bf16.mxu0 0
      %1151 = vmatpush1.bf16.msra.mxu0 0
      %1152 = vmatprep.subr.bf16.mxu0 0
      %1153 = vmatpush1.bf16.msra.mxu0 0
      %1154 = vmatprep.subr.bf16.mxu0 0
      %1155 = vmatpush1.bf16.msra.mxu0 0
      %1156 = vmatprep.subr.bf16.mxu0 0
      %1157 = vmatpush1.bf16.msra.mxu0 0
      %1158 = vmatprep.subr.bf16.mxu0 0
      %1159 = vmatpush1.bf16.msra.mxu0 0
      %1160 = vmatprep.subr.bf16.mxu0 0
      %1161 = vmatpush1.bf16.msra.mxu0 0
      %1162 = vmatprep.subr.bf16.mxu0 0
      %1163 = vmatpush1.bf16.msra.mxu0 0
      %1164 = vmatprep.subr.bf16.mxu0 0
      %1165 = vmatpush1.bf16.msra.mxu0 0
      %1166 = vmatprep.subr.bf16.mxu0 0
      %1167 = vmatpush1.bf16.msra.mxu0 0
      %1168 = vmatprep.subr.bf16.mxu0 0
      %1169 = vmatpush1.bf16.msra.mxu0 0
      %1170 = vmatprep.mubr.bf16.mxu0 0
      %1171 = vmatmul.mubr.bf16.gmra.mrb[0].mxu0 %v490
      %v1172 = vpop.f32.mrb[0].mxu0
      %v1173 = vadd.f32 %v451, %v1172
      %v1174 = vpop.f32.mrb[0].mxu0
      %v1175 = vpop.f32.mrb[0].mxu0
      %v1176 = vadd.f32 %v451, %v1175
      %v1177 = vpop.f32.mrb[0].mxu0
      %1178 = vmatprep.mubr.bf16.mxu0 0
      %1179 = vmatmul.mubr.bf16.gmra.mrb[0].mxu0 %v493
      %v1180 = vpop.f32.mrb[0].mxu0
      %v1181 = vadd.f32 %v451, %v1180
      %v1182 = vpop.f32.mrb[0].mxu0
      %v1183 = vpop.f32.mrb[0].mxu0
      %v1184 = vadd.f32 %v451, %v1183
      %v1185 = vpop.f32.mrb[0].mxu0
      %1186 = vmatprep.mubr.bf16.mxu0 0
      %1187 = vmatmul.mubr.bf16.gmra.mrb[0].mxu0 %v496
      %v1188 = vpop.f32.mrb[0].mxu0
      %v1189 = vadd.f32 %v451, %v1188
      %v1190 = vpop.f32.mrb[0].mxu0
      %v1191 = vpop.f32.mrb[0].mxu0
      %v1192 = vadd.f32 %v451, %v1191
      %v1193 = vpop.f32.mrb[0].mxu0
      %1194 = vmatprep.mubr.bf16.mxu0 0
      %1195 = vmatmul.mubr.bf16.gmra.mrb[0].mxu0 %v499
      %v1196 = vpop.f32.mrb[0].mxu0
      %v1197 = vadd.f32 %v451, %v1196
      %v1198 = vpop.f32.mrb[0].mxu0
      %v1199 = vpop.f32.mrb[0].mxu0
      %v1200 = vadd.f32 %v451, %v1199
      %v1201 = vpop.f32.mrb[0].mxu0
      %1202 = vmatprep.mubr.bf16.mxu0 0
      %1203 = vmatmul.mubr.bf16.gmra.mrb[0].mxu0 %v502
      %v1204 = vpop.f32.mrb[0].mxu0
      %v1205 = vadd.f32 %v451, %v1204
      %v1206 = vpop.f32.mrb[0].mxu0
      %v1207 = vpop.f32.mrb[0].mxu0
      %v1208 = vadd.f32 %v451, %v1207
      %v1209 = vpop.f32.mrb[0].mxu0
      %1210 = vmatprep.mubr.bf16.mxu0 0
      %1211 = vmatmul.mubr.bf16.gmra.mrb[0].mxu0 %v505
      %v1212 = vpop.f32.mrb[0].mxu0
      %v1213 = vadd.f32 %v451, %v1212
      %v1214 = vpop.f32.mrb[0].mxu0
      %v1215 = vpop.f32.mrb[0].mxu0
      %v1216 = vadd.f32 %v451, %v1215
      %v1217 = vpop.f32.mrb[0].mxu0
      %1218 = vmatprep.mubr.bf16.mxu0 0
      %1219 = vmatmul.mubr.bf16.gmra.mrb[0].mxu0 %v508
      %v1220 = vpop.f32.mrb[0].mxu0
      %v1221 = vadd.f32 %v451, %v1220
      %v1222 = vpop.f32.mrb[0].mxu0
      %v1223 = vpop.f32.mrb[0].mxu0
      %v1224 = vadd.f32 %v451, %v1223
      %v1225 = vpop.f32.mrb[0].mxu0
      %1226 = vmatprep.mubr.bf16.mxu0 0
      %1227 = vmatmul.mubr.bf16.gmra.mrb[0].mxu0 %v511
      %v1228 = vpop.f32.mrb[0].mxu0
      %v1229 = vadd.f32 %v451, %v1228
      %v1230 = vpop.f32.mrb[0].mxu0
      %v1231 = vpop.f32.mrb[0].mxu0
      %v1232 = vadd.f32 %v451, %v1231
      %v1233 = vpop.f32.mrb[0].mxu0
      %1234 = vmatprep.mubr.bf16.mxu0 0
      %1235 = vmatmul.mubr.bf16.gmra.mrb[0].mxu0 %v514
      %v1236 = vpop.f32.mrb[0].mxu0
      %v1237 = vadd.f32 %v451, %v1236
      %v1238 = vpop.f32.mrb[0].mxu0
      %v1239 = vpop.f32.mrb[0].mxu0
      %v1240 = vadd.f32 %v451, %v1239
      %v1241 = vpop.f32.mrb[0].mxu0
      %1242 = vmatprep.mubr.bf16.mxu0 0
      %1243 = vmatmul.mubr.bf16.gmra.mrb[0].mxu0 %v517
      %v1244 = vpop.f32.mrb[0].mxu0
      %v1245 = vadd.f32 %v451, %v1244
      %v1246 = vpop.f32.mrb[0].mxu0
      %v1247 = vpop.f32.mrb[0].mxu0
      %v1248 = vadd.f32 %v451, %v1247
      %v1249 = vpop.f32.mrb[0].mxu0
      %1250 = vmatprep.mubr.bf16.mxu0 0
      %1251 = vmatmul.mubr.bf16.gmra.mrb[0].mxu0 %v520
      %v1252 = vpop.f32.mrb[0].mxu0
      %v1253 = vadd.f32 %v451, %v1252
      %v1254 = vpop.f32.mrb[0].mxu0
      %v1255 = vpop.f32.mrb[0].mxu0
      %v1256 = vadd.f32 %v451, %v1255
      %v1257 = vpop.f32.mrb[0].mxu0
      %1258 = vmatprep.mubr.bf16.mxu0 0
      %1259 = vmatmul.mubr.bf16.gmra.mrb[0].mxu0 %v523
      %v1260 = vpop.f32.mrb[0].mxu0
      %v1261 = vadd.f32 %v451, %v1260
      %v1262 = vpop.f32.mrb[0].mxu0
      %v1263 = vpop.f32.mrb[0].mxu0
      %v1264 = vadd.f32 %v451, %v1263
      %v1265 = vpop.f32.mrb[0].mxu0
      %1266 = vmatprep.mubr.bf16.mxu0 0
      %1267 = vmatmul.mubr.bf16.gmra.mrb[0].mxu0 %v526
      %v1268 = vpop.f32.mrb[0].mxu0
      %v1269 = vadd.f32 %v451, %v1268
      %v1270 = vpop.f32.mrb[0].mxu0
      %v1271 = vpop.f32.mrb[0].mxu0
      %v1272 = vadd.f32 %v451, %v1271
      %v1273 = vpop.f32.mrb[0].mxu0
      %1274 = vmatprep.mubr.bf16.mxu0 0
      %1275 = vmatmul.mubr.bf16.gmra.mrb[0].mxu0 %v529
      %v1276 = vpop.f32.mrb[0].mxu0
      %v1277 = vadd.f32 %v451, %v1276
      %v1278 = vpop.f32.mrb[0].mxu0
      %v1279 = vpop.f32.mrb[0].mxu0
      %v1280 = vadd.f32 %v451, %v1279
      %v1281 = vpop.f32.mrb[0].mxu0
      %1282 = vmatprep.mubr.bf16.mxu0 0
      %1283 = vmatmul.mubr.bf16.gmra.mrb[0].mxu0 %v532
      %v1284 = vpop.f32.mrb[0].mxu0
      %v1285 = vadd.f32 %v451, %v1284
      %v1286 = vpop.f32.mrb[0].mxu0
      %v1287 = vpop.f32.mrb[0].mxu0
      %v1288 = vadd.f32 %v451, %v1287
      %v1289 = vpop.f32.mrb[0].mxu0
      %1290 = vmatprep.mubr.bf16.mxu0 0
      %1291 = vmatmul.mubr.bf16.gmra.mrb[0].mxu0 %v535
      %v1292 = vpop.f32.mrb[0].mxu0
      %v1293 = vadd.f32 %v451, %v1292
      %v1294 = vpop.f32.mrb[0].mxu0
      %v1295 = vpop.f32.mrb[0].mxu0
      %v1296 = vadd.f32 %v451, %v1295
      %v1297 = vpop.f32.mrb[0].mxu0
      %1298 = vdwg.mxu0
      %vm1299 = vcmp.gt.f32.partialorder %v594, 0.0
      %vm1300 = vcmp.gt.f32.partialorder %v596, 0.0
      %vm1301 = vcmp.gt.f32.partialorder %v787, 0.0
      %vm1302 = vcmp.gt.f32.partialorder %v789, 0.0
      %vm1303 = vcmp.gt.f32.partialorder %v980, 0.0
      %vm1304 = vcmp.gt.f32.partialorder %v982, 0.0
      %vm1305 = vcmp.gt.f32.partialorder %v1173, 0.0
      %vm1306 = vcmp.gt.f32.partialorder %v598, 0.0
      %vm1307 = vcmp.gt.f32.partialorder %v600, 0.0
      %vm1308 = vcmp.gt.f32.partialorder %v791, 0.0
      %vm1309 = vcmp.gt.f32.partialorder %v793, 0.0
      %vm1310 = vcmp.gt.f32.partialorder %v984, 0.0
      %vm1311 = vcmp.gt.f32.partialorder %v986, 0.0
      %vm1312 = vcmp.gt.f32.partialorder %v1176, 0.0
      %vm1313 = vcmp.gt.f32.partialorder %v604, 0.0
      %vm1314 = vcmp.gt.f32.partialorder %v606, 0.0
      %vm1315 = vcmp.gt.f32.partialorder %v797, 0.0
      %vm1316 = vcmp.gt.f32.partialorder %v799, 0.0
      %vm1317 = vcmp.gt.f32.partialorder %v990, 0.0
      %vm1318 = vcmp.gt.f32.partialorder %v992, 0.0
      %vm1319 = vcmp.gt.f32.partialorder %v1181, 0.0
      %vm1320 = vcmp.gt.f32.partialorder %v608, 0.0
      %vm1321 = vcmp.gt.f32.partialorder %v610, 0.0
      %vm1322 = vcmp.gt.f32.partialorder %v801, 0.0
      %vm1323 = vcmp.gt.f32.partialorder %v803, 0.0
      %vm1324 = vcmp.gt.f32.partialorder %v994, 0.0
      %vm1325 = vcmp.gt.f32.partialorder %v996, 0.0
      %vm1326 = vcmp.gt.f32.partialorder %v1184, 0.0
      %vm1327 = vcmp.gt.f32.partialorder %v614, 0.0
      %vm1328 = vcmp.gt.f32.partialorder %v616, 0.0
      %vm1329 = vcmp.gt.f32.partialorder %v807, 0.0
      %vm1330 = vcmp.gt.f32.partialorder %v809, 0.0
      %vm1331 = vcmp.gt.f32.partialorder %v1000, 0.0
      %vm1332 = vcmp.gt.f32.partialorder %v1002, 0.0
      %vm1333 = vcmp.gt.f32.partialorder %v1189, 0.0
      %vm1334 = vcmp.gt.f32.partialorder %v618, 0.0
      %vm1335 = vcmp.gt.f32.partialorder %v620, 0.0
      %vm1336 = vcmp.gt.f32.partialorder %v811, 0.0
      %vm1337 = vcmp.gt.f32.partialorder %v813, 0.0
      %vm1338 = vcmp.gt.f32.partialorder %v1004, 0.0
      %vm1339 = vcmp.gt.f32.partialorder %v1006, 0.0
      %vm1340 = vcmp.gt.f32.partialorder %v1192, 0.0
      %vm1341 = vcmp.gt.f32.partialorder %v624, 0.0
      %vm1342 = vcmp.gt.f32.partialorder %v626, 0.0
      %vm1343 = vcmp.gt.f32.partialorder %v817, 0.0
      %vm1344 = vcmp.gt.f32.partialorder %v819, 0.0
      %vm1345 = vcmp.gt.f32.partialorder %v1010, 0.0
      %vm1346 = vcmp.gt.f32.partialorder %v1012, 0.0
      %vm1347 = vcmp.gt.f32.partialorder %v1197, 0.0
      %vm1348 = vcmp.gt.f32.partialorder %v628, 0.0
      %vm1349 = vcmp.gt.f32.partialorder %v630, 0.0
      %vm1350 = vcmp.gt.f32.partialorder %v821, 0.0
      %vm1351 = vcmp.gt.f32.partialorder %v823, 0.0
      %vm1352 = vcmp.gt.f32.partialorder %v1014, 0.0
      %vm1353 = vcmp.gt.f32.partialorder %v1016, 0.0
      %vm1354 = vcmp.gt.f32.partialorder %v1200, 0.0
      %vm1355 = vcmp.gt.f32.partialorder %v634, 0.0
      %vm1356 = vcmp.gt.f32.partialorder %v636, 0.0
      %vm1357 = vcmp.gt.f32.partialorder %v827, 0.0
      %vm1358 = vcmp.gt.f32.partialorder %v829, 0.0
      %vm1359 = vcmp.gt.f32.partialorder %v1020, 0.0
      %vm1360 = vcmp.gt.f32.partialorder %v1022, 0.0
      %vm1361 = vcmp.gt.f32.partialorder %v1205, 0.0
      %vm1362 = vcmp.gt.f32.partialorder %v638, 0.0
      %vm1363 = vcmp.gt.f32.partialorder %v640, 0.0
      %vm1364 = vcmp.gt.f32.partialorder %v831, 0.0
      %vm1365 = vcmp.gt.f32.partialorder %v833, 0.0
      %vm1366 = vcmp.gt.f32.partialorder %v1024, 0.0
      %vm1367 = vcmp.gt.f32.partialorder %v1026, 0.0
      %vm1368 = vcmp.gt.f32.partialorder %v1208, 0.0
      %vm1369 = vcmp.gt.f32.partialorder %v644, 0.0
      %vm1370 = vcmp.gt.f32.partialorder %v646, 0.0
      %vm1371 = vcmp.gt.f32.partialorder %v837, 0.0
      %vm1372 = vcmp.gt.f32.partialorder %v839, 0.0
      %vm1373 = vcmp.gt.f32.partialorder %v1030, 0.0
      %vm1374 = vcmp.gt.f32.partialorder %v1032, 0.0
      %vm1375 = vcmp.gt.f32.partialorder %v1213, 0.0
      %vm1376 = vcmp.gt.f32.partialorder %v648, 0.0
      %vm1377 = vcmp.gt.f32.partialorder %v650, 0.0
      %vm1378 = vcmp.gt.f32.partialorder %v841, 0.0
      %vm1379 = vcmp.gt.f32.partialorder %v843, 0.0
      %vm1380 = vcmp.gt.f32.partialorder %v1034, 0.0
      %vm1381 = vcmp.gt.f32.partialorder %v1036, 0.0
      %vm1382 = vcmp.gt.f32.partialorder %v1216, 0.0
      %vm1383 = vcmp.gt.f32.partialorder %v654, 0.0
      %vm1384 = vcmp.gt.f32.partialorder %v656, 0.0
      %vm1385 = vcmp.gt.f32.partialorder %v847, 0.0
      %vm1386 = vcmp.gt.f32.partialorder %v849, 0.0
      %vm1387 = vcmp.gt.f32.partialorder %v1040, 0.0
      %vm1388 = vcmp.gt.f32.partialorder %v1042, 0.0
      %vm1389 = vcmp.gt.f32.partialorder %v1221, 0.0
      %vm1390 = vcmp.gt.f32.partialorder %v658, 0.0
      %vm1391 = vcmp.gt.f32.partialorder %v660, 0.0
      %vm1392 = vcmp.gt.f32.partialorder %v851, 0.0
      %vm1393 = vcmp.gt.f32.partialorder %v853, 0.0
      %vm1394 = vcmp.gt.f32.partialorder %v1044, 0.0
      %vm1395 = vcmp.gt.f32.partialorder %v1046, 0.0
      %vm1396 = vcmp.gt.f32.partialorder %v1224, 0.0
      %vm1397 = vcmp.gt.f32.partialorder %v664, 0.0
      %vm1398 = vcmp.gt.f32.partialorder %v666, 0.0
      %vm1399 = vcmp.gt.f32.partialorder %v857, 0.0
      %vm1400 = vcmp.gt.f32.partialorder %v859, 0.0
      %vm1401 = vcmp.gt.f32.partialorder %v1050, 0.0
      %vm1402 = vcmp.gt.f32.partialorder %v1052, 0.0
      %vm1403 = vcmp.gt.f32.partialorder %v1229, 0.0
      %vm1404 = vcmp.gt.f32.partialorder %v668, 0.0
      %vm1405 = vcmp.gt.f32.partialorder %v670, 0.0
      %vm1406 = vcmp.gt.f32.partialorder %v861, 0.0
      %vm1407 = vcmp.gt.f32.partialorder %v863, 0.0
      %vm1408 = vcmp.gt.f32.partialorder %v1054, 0.0
      %vm1409 = vcmp.gt.f32.partialorder %v1056, 0.0
      %vm1410 = vcmp.gt.f32.partialorder %v1232, 0.0
      %vm1411 = vcmp.gt.f32.partialorder %v674, 0.0
      %vm1412 = vcmp.gt.f32.partialorder %v676, 0.0
      %vm1413 = vcmp.gt.f32.partialorder %v867, 0.0
      %vm1414 = vcmp.gt.f32.partialorder %v869, 0.0
      %vm1415 = vcmp.gt.f32.partialorder %v1060, 0.0
      %vm1416 = vcmp.gt.f32.partialorder %v1062, 0.0
      %vm1417 = vcmp.gt.f32.partialorder %v1237, 0.0
      %vm1418 = vcmp.gt.f32.partialorder %v678, 0.0
      %vm1419 = vcmp.gt.f32.partialorder %v680, 0.0
      %vm1420 = vcmp.gt.f32.partialorder %v871, 0.0
      %vm1421 = vcmp.gt.f32.partialorder %v873, 0.0
      %vm1422 = vcmp.gt.f32.partialorder %v1064, 0.0
      %vm1423 = vcmp.gt.f32.partialorder %v1066, 0.0
      %vm1424 = vcmp.gt.f32.partialorder %v1240, 0.0
      %vm1425 = vcmp.gt.f32.partialorder %v684, 0.0
      %vm1426 = vcmp.gt.f32.partialorder %v686, 0.0
      %vm1427 = vcmp.gt.f32.partialorder %v877, 0.0
      %vm1428 = vcmp.gt.f32.partialorder %v879, 0.0
      %vm1429 = vcmp.gt.f32.partialorder %v1070, 0.0
      %vm1430 = vcmp.gt.f32.partialorder %v1072, 0.0
      %vm1431 = vcmp.gt.f32.partialorder %v1245, 0.0
      %vm1432 = vcmp.gt.f32.partialorder %v688, 0.0
      %vm1433 = vcmp.gt.f32.partialorder %v690, 0.0
      %vm1434 = vcmp.gt.f32.partialorder %v881, 0.0
      %vm1435 = vcmp.gt.f32.partialorder %v883, 0.0
      %vm1436 = vcmp.gt.f32.partialorder %v1074, 0.0
      %vm1437 = vcmp.gt.f32.partialorder %v1076, 0.0
      %vm1438 = vcmp.gt.f32.partialorder %v1248, 0.0
      %vm1439 = vcmp.gt.f32.partialorder %v694, 0.0
      %vm1440 = vcmp.gt.f32.partialorder %v696, 0.0
      %vm1441 = vcmp.gt.f32.partialorder %v887, 0.0
      %vm1442 = vcmp.gt.f32.partialorder %v889, 0.0
      %vm1443 = vcmp.gt.f32.partialorder %v1080, 0.0
      %vm1444 = vcmp.gt.f32.partialorder %v1082, 0.0
      %vm1445 = vcmp.gt.f32.partialorder %v1253, 0.0
      %vm1446 = vcmp.gt.f32.partialorder %v698, 0.0
      %vm1447 = vcmp.gt.f32.partialorder %v700, 0.0
      %vm1448 = vcmp.gt.f32.partialorder %v891, 0.0
      %vm1449 = vcmp.gt.f32.partialorder %v893, 0.0
      %vm1450 = vcmp.gt.f32.partialorder %v1084, 0.0
      %vm1451 = vcmp.gt.f32.partialorder %v1086, 0.0
      %vm1452 = vcmp.gt.f32.partialorder %v1256, 0.0
      %vm1453 = vcmp.gt.f32.partialorder %v704, 0.0
      %vm1454 = vcmp.gt.f32.partialorder %v706, 0.0
      %vm1455 = vcmp.gt.f32.partialorder %v897, 0.0
      %vm1456 = vcmp.gt.f32.partialorder %v899, 0.0
      %vm1457 = vcmp.gt.f32.partialorder %v1090, 0.0
      %vm1458 = vcmp.gt.f32.partialorder %v1092, 0.0
      %vm1459 = vcmp.gt.f32.partialorder %v1261, 0.0
      %vm1460 = vcmp.gt.f32.partialorder %v708, 0.0
      %vm1461 = vcmp.gt.f32.partialorder %v710, 0.0
      %vm1462 = vcmp.gt.f32.partialorder %v901, 0.0
      %vm1463 = vcmp.gt.f32.partialorder %v903, 0.0
      %vm1464 = vcmp.gt.f32.partialorder %v1094, 0.0
      %vm1465 = vcmp.gt.f32.partialorder %v1096, 0.0
      %vm1466 = vcmp.gt.f32.partialorder %v1264, 0.0
      %vm1467 = vcmp.gt.f32.partialorder %v714, 0.0
      %vm1468 = vcmp.gt.f32.partialorder %v716, 0.0
      %vm1469 = vcmp.gt.f32.partialorder %v907, 0.0
      %vm1470 = vcmp.gt.f32.partialorder %v909, 0.0
      %vm1471 = vcmp.gt.f32.partialorder %v1100, 0.0
      %vm1472 = vcmp.gt.f32.partialorder %v1102, 0.0
      %vm1473 = vcmp.gt.f32.partialorder %v1269, 0.0
      %vm1474 = vcmp.gt.f32.partialorder %v718, 0.0
      %vm1475 = vcmp.gt.f32.partialorder %v720, 0.0
      %vm1476 = vcmp.gt.f32.partialorder %v911, 0.0
      %vm1477 = vcmp.gt.f32.partialorder %v913, 0.0
      %vm1478 = vcmp.gt.f32.partialorder %v1104, 0.0
      %vm1479 = vcmp.gt.f32.partialorder %v1106, 0.0
      %vm1480 = vcmp.gt.f32.partialorder %v1272, 0.0
      %vm1481 = vcmp.gt.f32.partialorder %v724, 0.0
      %vm1482 = vcmp.gt.f32.partialorder %v726, 0.0
      %vm1483 = vcmp.gt.f32.partialorder %v917, 0.0
      %vm1484 = vcmp.gt.f32.partialorder %v919, 0.0
      %vm1485 = vcmp.gt.f32.partialorder %v1110, 0.0
      %vm1486 = vcmp.gt.f32.partialorder %v1112, 0.0
      %vm1487 = vcmp.gt.f32.partialorder %v1277, 0.0
      %vm1488 = vcmp.gt.f32.partialorder %v728, 0.0
      %vm1489 = vcmp.gt.f32.partialorder %v730, 0.0
      %vm1490 = vcmp.gt.f32.partialorder %v921, 0.0
      %vm1491 = vcmp.gt.f32.partialorder %v923, 0.0
      %vm1492 = vcmp.gt.f32.partialorder %v1114, 0.0
      %vm1493 = vcmp.gt.f32.partialorder %v1116, 0.0
      %vm1494 = vcmp.gt.f32.partialorder %v1280, 0.0
      %vm1495 = vcmp.gt.f32.partialorder %v734, 0.0
      %vm1496 = vcmp.gt.f32.partialorder %v736, 0.0
      %vm1497 = vcmp.gt.f32.partialorder %v927, 0.0
      %vm1498 = vcmp.gt.f32.partialorder %v929, 0.0
      %vm1499 = vcmp.gt.f32.partialorder %v1120, 0.0
      %vm1500 = vcmp.gt.f32.partialorder %v1122, 0.0
      %vm1501 = vcmp.gt.f32.partialorder %v1285, 0.0
      %vm1502 = vcmp.gt.f32.partialorder %v738, 0.0
      %vm1503 = vcmp.gt.f32.partialorder %v740, 0.0
      %vm1504 = vcmp.gt.f32.partialorder %v931, 0.0
      %vm1505 = vcmp.gt.f32.partialorder %v933, 0.0
      %vm1506 = vcmp.gt.f32.partialorder %v1124, 0.0
      %vm1507 = vcmp.gt.f32.partialorder %v1126, 0.0
      %vm1508 = vcmp.gt.f32.partialorder %v1288, 0.0
      %vm1509 = vcmp.gt.f32.partialorder %v744, 0.0
      %vm1510 = vcmp.gt.f32.partialorder %v746, 0.0
      %vm1511 = vcmp.gt.f32.partialorder %v937, 0.0
      %vm1512 = vcmp.gt.f32.partialorder %v939, 0.0
      %vm1513 = vcmp.gt.f32.partialorder %v1130, 0.0
      %vm1514 = vcmp.gt.f32.partialorder %v1132, 0.0
      %vm1515 = vcmp.gt.f32.partialorder %v1293, 0.0
      %vm1516 = vcmp.gt.f32.partialorder %v748, 0.0
      %vm1517 = vcmp.gt.f32.partialorder %v750, 0.0
      %vm1518 = vcmp.gt.f32.partialorder %v941, 0.0
      %vm1519 = vcmp.gt.f32.partialorder %v943, 0.0
      %vm1520 = vcmp.gt.f32.partialorder %v1134, 0.0
      %vm1521 = vcmp.gt.f32.partialorder %v1136, 0.0
      %vm1522 = vcmp.gt.f32.partialorder %v1296, 0.0
      %v1523 = vmul.f32 %v594, 0.01
      %v1524 = vmul.f32 %v596, 0.01
      %v1525 = vmul.f32 %v787, 0.01
      %v1526 = vmul.f32 %v789, 0.01
      %v1527 = vmul.f32 %v980, 0.01
      %v1528 = vmul.f32 %v982, 0.01
      %v1529 = vmul.f32 %v1173, 0.01
      %v1530 = vmul.f32 %v598, 0.01
      %v1531 = vmul.f32 %v600, 0.01
      %v1532 = vmul.f32 %v791, 0.01
      %v1533 = vmul.f32 %v793, 0.01
      %v1534 = vmul.f32 %v984, 0.01
      %v1535 = vmul.f32 %v986, 0.01
      %v1536 = vmul.f32 %v1176, 0.01
      %v1537 = vmul.f32 %v604, 0.01
      %v1538 = vmul.f32 %v606, 0.01
      %v1539 = vmul.f32 %v797, 0.01
      %v1540 = vmul.f32 %v799, 0.01
      %v1541 = vmul.f32 %v990, 0.01
      %v1542 = vmul.f32 %v992, 0.01
      %v1543 = vmul.f32 %v1181, 0.01
      %v1544 = vmul.f32 %v608, 0.01
      %v1545 = vmul.f32 %v610, 0.01
      %v1546 = vmul.f32 %v801, 0.01
      %v1547 = vmul.f32 %v803, 0.01
      %v1548 = vmul.f32 %v994, 0.01
      %v1549 = vmul.f32 %v996, 0.01
      %v1550 = vmul.f32 %v1184, 0.01
      %v1551 = vmul.f32 %v614, 0.01
      %v1552 = vmul.f32 %v616, 0.01
      %v1553 = vmul.f32 %v807, 0.01
      %v1554 = vmul.f32 %v809, 0.01
      %v1555 = vmul.f32 %v1000, 0.01
      %v1556 = vmul.f32 %v1002, 0.01
      %v1557 = vmul.f32 %v1189, 0.01
      %v1558 = vmul.f32 %v618, 0.01
      %v1559 = vmul.f32 %v620, 0.01
      %v1560 = vmul.f32 %v811, 0.01
      %v1561 = vmul.f32 %v813, 0.01
      %v1562 = vmul.f32 %v1004, 0.01
      %v1563 = vmul.f32 %v1006, 0.01
      %v1564 = vmul.f32 %v1192, 0.01
      %v1565 = vmul.f32 %v624, 0.01
      %v1566 = vmul.f32 %v626, 0.01
      %v1567 = vmul.f32 %v817, 0.01
      %v1568 = vmul.f32 %v819, 0.01
      %v1569 = vmul.f32 %v1010, 0.01
      %v1570 = vmul.f32 %v1012, 0.01
      %v1571 = vmul.f32 %v1197, 0.01
      %v1572 = vmul.f32 %v628, 0.01
      %v1573 = vmul.f32 %v630, 0.01
      %v1574 = vmul.f32 %v821, 0.01
      %v1575 = vmul.f32 %v823, 0.01
      %v1576 = vmul.f32 %v1014, 0.01
      %v1577 = vmul.f32 %v1016, 0.01
      %v1578 = vmul.f32 %v1200, 0.01
      %v1579 = vmul.f32 %v634, 0.01
      %v1580 = vmul.f32 %v636, 0.01
      %v1581 = vmul.f32 %v827, 0.01
      %v1582 = vmul.f32 %v829, 0.01
      %v1583 = vmul.f32 %v1020, 0.01
      %v1584 = vmul.f32 %v1022, 0.01
      %v1585 = vmul.f32 %v1205, 0.01
      %v1586 = vmul.f32 %v638, 0.01
      %v1587 = vmul.f32 %v640, 0.01
      %v1588 = vmul.f32 %v831, 0.01
      %v1589 = vmul.f32 %v833, 0.01
      %v1590 = vmul.f32 %v1024, 0.01
      %v1591 = vmul.f32 %v1026, 0.01
      %v1592 = vmul.f32 %v1208, 0.01
      %v1593 = vmul.f32 %v644, 0.01
      %v1594 = vmul.f32 %v646, 0.01
      %v1595 = vmul.f32 %v837, 0.01
      %v1596 = vmul.f32 %v839, 0.01
      %v1597 = vmul.f32 %v1030, 0.01
      %v1598 = vmul.f32 %v1032, 0.01
      %v1599 = vmul.f32 %v1213, 0.01
      %v1600 = vmul.f32 %v648, 0.01
      %v1601 = vmul.f32 %v650, 0.01
      %v1602 = vmul.f32 %v841, 0.01
      %v1603 = vmul.f32 %v843, 0.01
      %v1604 = vmul.f32 %v1034, 0.01
      %v1605 = vmul.f32 %v1036, 0.01
      %v1606 = vmul.f32 %v1216, 0.01
      %v1607 = vmul.f32 %v654, 0.01
      %v1608 = vmul.f32 %v656, 0.01
      %v1609 = vmul.f32 %v847, 0.01
      %v1610 = vmul.f32 %v849, 0.01
      %v1611 = vmul.f32 %v1040, 0.01
      %v1612 = vmul.f32 %v1042, 0.01
      %v1613 = vmul.f32 %v1221, 0.01
      %v1614 = vmul.f32 %v658, 0.01
      %v1615 = vmul.f32 %v660, 0.01
      %v1616 = vmul.f32 %v851, 0.01
      %v1617 = vmul.f32 %v853, 0.01
      %v1618 = vmul.f32 %v1044, 0.01
      %v1619 = vmul.f32 %v1046, 0.01
      %v1620 = vmul.f32 %v1224, 0.01
      %v1621 = vmul.f32 %v664, 0.01
      %v1622 = vmul.f32 %v666, 0.01
      %v1623 = vmul.f32 %v857, 0.01
      %v1624 = vmul.f32 %v859, 0.01
      %v1625 = vmul.f32 %v1050, 0.01
      %v1626 = vmul.f32 %v1052, 0.01
      %v1627 = vmul.f32 %v1229, 0.01
      %v1628 = vmul.f32 %v668, 0.01
      %v1629 = vmul.f32 %v670, 0.01
      %v1630 = vmul.f32 %v861, 0.01
      %v1631 = vmul.f32 %v863, 0.01
      %v1632 = vmul.f32 %v1054, 0.01
      %v1633 = vmul.f32 %v1056, 0.01
      %v1634 = vmul.f32 %v1232, 0.01
      %v1635 = vmul.f32 %v674, 0.01
      %v1636 = vmul.f32 %v676, 0.01
      %v1637 = vmul.f32 %v867, 0.01
      %v1638 = vmul.f32 %v869, 0.01
      %v1639 = vmul.f32 %v1060, 0.01
      %v1640 = vmul.f32 %v1062, 0.01
      %v1641 = vmul.f32 %v1237, 0.01
      %v1642 = vmul.f32 %v678, 0.01
      %v1643 = vmul.f32 %v680, 0.01
      %v1644 = vmul.f32 %v871, 0.01
      %v1645 = vmul.f32 %v873, 0.01
      %v1646 = vmul.f32 %v1064, 0.01
      %v1647 = vmul.f32 %v1066, 0.01
      %v1648 = vmul.f32 %v1240, 0.01
      %v1649 = vmul.f32 %v684, 0.01
      %v1650 = vmul.f32 %v686, 0.01
      %v1651 = vmul.f32 %v877, 0.01
      %v1652 = vmul.f32 %v879, 0.01
      %v1653 = vmul.f32 %v1070, 0.01
      %v1654 = vmul.f32 %v1072, 0.01
      %v1655 = vmul.f32 %v1245, 0.01
      %v1656 = vmul.f32 %v688, 0.01
      %v1657 = vmul.f32 %v690, 0.01
      %v1658 = vmul.f32 %v881, 0.01
      %v1659 = vmul.f32 %v883, 0.01
      %v1660 = vmul.f32 %v1074, 0.01
      %v1661 = vmul.f32 %v1076, 0.01
      %v1662 = vmul.f32 %v1248, 0.01
      %v1663 = vmul.f32 %v694, 0.01
      %v1664 = vmul.f32 %v696, 0.01
      %v1665 = vmul.f32 %v887, 0.01
      %v1666 = vmul.f32 %v889, 0.01
      %v1667 = vmul.f32 %v1080, 0.01
      %v1668 = vmul.f32 %v1082, 0.01
      %v1669 = vmul.f32 %v1253, 0.01
      %v1670 = vmul.f32 %v698, 0.01
      %v1671 = vmul.f32 %v700, 0.01
      %v1672 = vmul.f32 %v891, 0.01
      %v1673 = vmul.f32 %v893, 0.01
      %v1674 = vmul.f32 %v1084, 0.01
      %v1675 = vmul.f32 %v1086, 0.01
      %v1676 = vmul.f32 %v1256, 0.01
      %v1677 = vmul.f32 %v704, 0.01
      %v1678 = vmul.f32 %v706, 0.01
      %v1679 = vmul.f32 %v897, 0.01
      %v1680 = vmul.f32 %v899, 0.01
      %v1681 = vmul.f32 %v1090, 0.01
      %v1682 = vmul.f32 %v1092, 0.01
      %v1683 = vmul.f32 %v1261, 0.01
      %v1684 = vmul.f32 %v708, 0.01
      %v1685 = vmul.f32 %v710, 0.01
      %v1686 = vmul.f32 %v901, 0.01
      %v1687 = vmul.f32 %v903, 0.01
      %v1688 = vmul.f32 %v1094, 0.01
      %v1689 = vmul.f32 %v1096, 0.01
      %v1690 = vmul.f32 %v1264, 0.01
      %v1691 = vmul.f32 %v714, 0.01
      %v1692 = vmul.f32 %v716, 0.01
      %v1693 = vmul.f32 %v907, 0.01
      %v1694 = vmul.f32 %v909, 0.01
      %v1695 = vmul.f32 %v1100, 0.01
      %v1696 = vmul.f32 %v1102, 0.01
      %v1697 = vmul.f32 %v1269, 0.01
      %v1698 = vmul.f32 %v718, 0.01
      %v1699 = vmul.f32 %v720, 0.01
      %v1700 = vmul.f32 %v911, 0.01
      %v1701 = vmul.f32 %v913, 0.01
      %v1702 = vmul.f32 %v1104, 0.01
      %v1703 = vmul.f32 %v1106, 0.01
      %v1704 = vmul.f32 %v1272, 0.01
      %v1705 = vmul.f32 %v724, 0.01
      %v1706 = vmul.f32 %v726, 0.01
      %v1707 = vmul.f32 %v917, 0.01
      %v1708 = vmul.f32 %v919, 0.01
      %v1709 = vmul.f32 %v1110, 0.01
      %v1710 = vmul.f32 %v1112, 0.01
      %v1711 = vmul.f32 %v1277, 0.01
      %v1712 = vmul.f32 %v728, 0.01
      %v1713 = vmul.f32 %v730, 0.01
      %v1714 = vmul.f32 %v921, 0.01
      %v1715 = vmul.f32 %v923, 0.01
      %v1716 = vmul.f32 %v1114, 0.01
      %v1717 = vmul.f32 %v1116, 0.01
      %v1718 = vmul.f32 %v1280, 0.01
      %v1719 = vmul.f32 %v734, 0.01
      %v1720 = vmul.f32 %v736, 0.01
      %v1721 = vmul.f32 %v927, 0.01
      %v1722 = vmul.f32 %v929, 0.01
      %v1723 = vmul.f32 %v1120, 0.01
      %v1724 = vmul.f32 %v1122, 0.01
      %v1725 = vmul.f32 %v1285, 0.01
      %v1726 = vmul.f32 %v738, 0.01
      %v1727 = vmul.f32 %v740, 0.01
      %v1728 = vmul.f32 %v931, 0.01
      %v1729 = vmul.f32 %v933, 0.01
      %v1730 = vmul.f32 %v1124, 0.01
      %v1731 = vmul.f32 %v1126, 0.01
      %v1732 = vmul.f32 %v1288, 0.01
      %v1733 = vmul.f32 %v744, 0.01
      %v1734 = vmul.f32 %v746, 0.01
      %v1735 = vmul.f32 %v937, 0.01
      %v1736 = vmul.f32 %v939, 0.01
      %v1737 = vmul.f32 %v1130, 0.01
      %v1738 = vmul.f32 %v1132, 0.01
      %v1739 = vmul.f32 %v1293, 0.01
      %v1740 = vmul.f32 %v748, 0.01
      %v1741 = vmul.f32 %v750, 0.01
      %v1742 = vmul.f32 %v941, 0.01
      %v1743 = vmul.f32 %v943, 0.01
      %v1744 = vmul.f32 %v1134, 0.01
      %v1745 = vmul.f32 %v1136, 0.01
      %v1746 = vmul.f32 %v1296, 0.01
      %v1747 = vsel %vm1299, %v594, %v1523
      %v1748 = vsel %vm1300, %v596, %v1524
      %v1749 = vsel %vm1301, %v787, %v1525
      %v1750 = vsel %vm1302, %v789, %v1526
      %v1751 = vsel %vm1303, %v980, %v1527
      %v1752 = vsel %vm1304, %v982, %v1528
      %v1753 = vsel %vm1305, %v1173, %v1529
      %v1754 = vsel %vm1306, %v598, %v1530
      %v1755 = vsel %vm1307, %v600, %v1531
      %v1756 = vsel %vm1308, %v791, %v1532
      %v1757 = vsel %vm1309, %v793, %v1533
      %v1758 = vsel %vm1310, %v984, %v1534
      %v1759 = vsel %vm1311, %v986, %v1535
      %v1760 = vsel %vm1312, %v1176, %v1536
      %v1761 = vsel %vm1313, %v604, %v1537
      %v1762 = vsel %vm1314, %v606, %v1538
      %v1763 = vsel %vm1315, %v797, %v1539
      %v1764 = vsel %vm1316, %v799, %v1540
      %v1765 = vsel %vm1317, %v990, %v1541
      %v1766 = vsel %vm1318, %v992, %v1542
      %v1767 = vsel %vm1319, %v1181, %v1543
      %v1768 = vsel %vm1320, %v608, %v1544
      %v1769 = vsel %vm1321, %v610, %v1545
      %v1770 = vsel %vm1322, %v801, %v1546
      %v1771 = vsel %vm1323, %v803, %v1547
      %v1772 = vsel %vm1324, %v994, %v1548
      %v1773 = vsel %vm1325, %v996, %v1549
      %v1774 = vsel %vm1326, %v1184, %v1550
      %v1775 = vsel %vm1327, %v614, %v1551
      %v1776 = vsel %vm1328, %v616, %v1552
      %v1777 = vsel %vm1329, %v807, %v1553
      %v1778 = vsel %vm1330, %v809, %v1554
      %v1779 = vsel %vm1331, %v1000, %v1555
      %v1780 = vsel %vm1332, %v1002, %v1556
      %v1781 = vsel %vm1333, %v1189, %v1557
      %v1782 = vsel %vm1334, %v618, %v1558
      %v1783 = vsel %vm1335, %v620, %v1559
      %v1784 = vsel %vm1336, %v811, %v1560
      %v1785 = vsel %vm1337, %v813, %v1561
      %v1786 = vsel %vm1338, %v1004, %v1562
      %v1787 = vsel %vm1339, %v1006, %v1563
      %v1788 = vsel %vm1340, %v1192, %v1564
      %v1789 = vsel %vm1341, %v624, %v1565
      %v1790 = vsel %vm1342, %v626, %v1566
      %v1791 = vsel %vm1343, %v817, %v1567
      %v1792 = vsel %vm1344, %v819, %v1568
      %v1793 = vsel %vm1345, %v1010, %v1569
      %v1794 = vsel %vm1346, %v1012, %v1570
      %v1795 = vsel %vm1347, %v1197, %v1571
      %v1796 = vsel %vm1348, %v628, %v1572
      %v1797 = vsel %vm1349, %v630, %v1573
      %v1798 = vsel %vm1350, %v821, %v1574
      %v1799 = vsel %vm1351, %v823, %v1575
      %v1800 = vsel %vm1352, %v1014, %v1576
      %v1801 = vsel %vm1353, %v1016, %v1577
      %v1802 = vsel %vm1354, %v1200, %v1578
      %v1803 = vsel %vm1355, %v634, %v1579
      %v1804 = vsel %vm1356, %v636, %v1580
      %v1805 = vsel %vm1357, %v827, %v1581
      %v1806 = vsel %vm1358, %v829, %v1582
      %v1807 = vsel %vm1359, %v1020, %v1583
      %v1808 = vsel %vm1360, %v1022, %v1584
      %v1809 = vsel %vm1361, %v1205, %v1585
      %v1810 = vsel %vm1362, %v638, %v1586
      %v1811 = vsel %vm1363, %v640, %v1587
      %v1812 = vsel %vm1364, %v831, %v1588
      %v1813 = vsel %vm1365, %v833, %v1589
      %v1814 = vsel %vm1366, %v1024, %v1590
      %v1815 = vsel %vm1367, %v1026, %v1591
      %v1816 = vsel %vm1368, %v1208, %v1592
      %v1817 = vsel %vm1369, %v644, %v1593
      %v1818 = vsel %vm1370, %v646, %v1594
      %v1819 = vsel %vm1371, %v837, %v1595
      %v1820 = vsel %vm1372, %v839, %v1596
      %v1821 = vsel %vm1373, %v1030, %v1597
      %v1822 = vsel %vm1374, %v1032, %v1598
      %v1823 = vsel %vm1375, %v1213, %v1599
      %v1824 = vsel %vm1376, %v648, %v1600
      %v1825 = vsel %vm1377, %v650, %v1601
      %v1826 = vsel %vm1378, %v841, %v1602
      %v1827 = vsel %vm1379, %v843, %v1603
      %v1828 = vsel %vm1380, %v1034, %v1604
      %v1829 = vsel %vm1381, %v1036, %v1605
      %v1830 = vsel %vm1382, %v1216, %v1606
      %v1831 = vsel %vm1383, %v654, %v1607
      %v1832 = vsel %vm1384, %v656, %v1608
      %v1833 = vsel %vm1385, %v847, %v1609
      %v1834 = vsel %vm1386, %v849, %v1610
      %v1835 = vsel %vm1387, %v1040, %v1611
      %v1836 = vsel %vm1388, %v1042, %v1612
      %v1837 = vsel %vm1389, %v1221, %v1613
      %v1838 = vsel %vm1390, %v658, %v1614
      %v1839 = vsel %vm1391, %v660, %v1615
      %v1840 = vsel %vm1392, %v851, %v1616
      %v1841 = vsel %vm1393, %v853, %v1617
      %v1842 = vsel %vm1394, %v1044, %v1618
      %v1843 = vsel %vm1395, %v1046, %v1619
      %v1844 = vsel %vm1396, %v1224, %v1620
      %v1845 = vsel %vm1397, %v664, %v1621
      %v1846 = vsel %vm1398, %v666, %v1622
      %v1847 = vsel %vm1399, %v857, %v1623
      %v1848 = vsel %vm1400, %v859, %v1624
      %v1849 = vsel %vm1401, %v1050, %v1625
      %v1850 = vsel %vm1402, %v1052, %v1626
      %v1851 = vsel %vm1403, %v1229, %v1627
      %v1852 = vsel %vm1404, %v668, %v1628
      %v1853 = vsel %vm1405, %v670, %v1629
      %v1854 = vsel %vm1406, %v861, %v1630
      %v1855 = vsel %vm1407, %v863, %v1631
      %v1856 = vsel %vm1408, %v1054, %v1632
      %v1857 = vsel %vm1409, %v1056, %v1633
      %v1858 = vsel %vm1410, %v1232, %v1634
      %v1859 = vsel %vm1411, %v674, %v1635
      %v1860 = vsel %vm1412, %v676, %v1636
      %v1861 = vsel %vm1413, %v867, %v1637
      %v1862 = vsel %vm1414, %v869, %v1638
      %v1863 = vsel %vm1415, %v1060, %v1639
      %v1864 = vsel %vm1416, %v1062, %v1640
      %v1865 = vsel %vm1417, %v1237, %v1641
      %v1866 = vsel %vm1418, %v678, %v1642
      %v1867 = vsel %vm1419, %v680, %v1643
      %v1868 = vsel %vm1420, %v871, %v1644
      %v1869 = vsel %vm1421, %v873, %v1645
      %v1870 = vsel %vm1422, %v1064, %v1646
      %v1871 = vsel %vm1423, %v1066, %v1647
      %v1872 = vsel %vm1424, %v1240, %v1648
      %v1873 = vsel %vm1425, %v684, %v1649
      %v1874 = vsel %vm1426, %v686, %v1650
      %v1875 = vsel %vm1427, %v877, %v1651
      %v1876 = vsel %vm1428, %v879, %v1652
      %v1877 = vsel %vm1429, %v1070, %v1653
      %v1878 = vsel %vm1430, %v1072, %v1654
      %v1879 = vsel %vm1431, %v1245, %v1655
      %v1880 = vsel %vm1432, %v688, %v1656
      %v1881 = vsel %vm1433, %v690, %v1657
      %v1882 = vsel %vm1434, %v881, %v1658
      %v1883 = vsel %vm1435, %v883, %v1659
      %v1884 = vsel %vm1436, %v1074, %v1660
      %v1885 = vsel %vm1437, %v1076, %v1661
      %v1886 = vsel %vm1438, %v1248, %v1662
      %v1887 = vsel %vm1439, %v694, %v1663
      %v1888 = vsel %vm1440, %v696, %v1664
      %v1889 = vsel %vm1441, %v887, %v1665
      %v1890 = vsel %vm1442, %v889, %v1666
      %v1891 = vsel %vm1443, %v1080, %v1667
      %v1892 = vsel %vm1444, %v1082, %v1668
      %v1893 = vsel %vm1445, %v1253, %v1669
      %v1894 = vsel %vm1446, %v698, %v1670
      %v1895 = vsel %vm1447, %v700, %v1671
      %v1896 = vsel %vm1448, %v891, %v1672
      %v1897 = vsel %vm1449, %v893, %v1673
      %v1898 = vsel %vm1450, %v1084, %v1674
      %v1899 = vsel %vm1451, %v1086, %v1675
      %v1900 = vsel %vm1452, %v1256, %v1676
      %v1901 = vsel %vm1453, %v704, %v1677
      %v1902 = vsel %vm1454, %v706, %v1678
      %v1903 = vsel %vm1455, %v897, %v1679
      %v1904 = vsel %vm1456, %v899, %v1680
      %v1905 = vsel %vm1457, %v1090, %v1681
      %v1906 = vsel %vm1458, %v1092, %v1682
      %v1907 = vsel %vm1459, %v1261, %v1683
      %v1908 = vsel %vm1460, %v708, %v1684
      %v1909 = vsel %vm1461, %v710, %v1685
      %v1910 = vsel %vm1462, %v901, %v1686
      %v1911 = vsel %vm1463, %v903, %v1687
      %v1912 = vsel %vm1464, %v1094, %v1688
      %v1913 = vsel %vm1465, %v1096, %v1689
      %v1914 = vsel %vm1466, %v1264, %v1690
      %v1915 = vsel %vm1467, %v714, %v1691
      %v1916 = vsel %vm1468, %v716, %v1692
      %v1917 = vsel %vm1469, %v907, %v1693
      %v1918 = vsel %vm1470, %v909, %v1694
      %v1919 = vsel %vm1471, %v1100, %v1695
      %v1920 = vsel %vm1472, %v1102, %v1696
      %v1921 = vsel %vm1473, %v1269, %v1697
      %v1922 = vsel %vm1474, %v718, %v1698
      %v1923 = vsel %vm1475, %v720, %v1699
      %v1924 = vsel %vm1476, %v911, %v1700
      %v1925 = vsel %vm1477, %v913, %v1701
      %v1926 = vsel %vm1478, %v1104, %v1702
      %v1927 = vsel %vm1479, %v1106, %v1703
      %v1928 = vsel %vm1480, %v1272, %v1704
      %v1929 = vsel %vm1481, %v724, %v1705
      %v1930 = vsel %vm1482, %v726, %v1706
      %v1931 = vsel %vm1483, %v917, %v1707
      %v1932 = vsel %vm1484, %v919, %v1708
      %v1933 = vsel %vm1485, %v1110, %v1709
      %v1934 = vsel %vm1486, %v1112, %v1710
      %v1935 = vsel %vm1487, %v1277, %v1711
      %v1936 = vsel %vm1488, %v728, %v1712
      %v1937 = vsel %vm1489, %v730, %v1713
      %v1938 = vsel %vm1490, %v921, %v1714
      %v1939 = vsel %vm1491, %v923, %v1715
      %v1940 = vsel %vm1492, %v1114, %v1716
      %v1941 = vsel %vm1493, %v1116, %v1717
      %v1942 = vsel %vm1494, %v1280, %v1718
      %v1943 = vsel %vm1495, %v734, %v1719
      %v1944 = vsel %vm1496, %v736, %v1720
      %v1945 = vsel %vm1497, %v927, %v1721
      %v1946 = vsel %vm1498, %v929, %v1722
      %v1947 = vsel %vm1499, %v1120, %v1723
      %v1948 = vsel %vm1500, %v1122, %v1724
      %v1949 = vsel %vm1501, %v1285, %v1725
      %v1950 = vsel %vm1502, %v738, %v1726
      %v1951 = vsel %vm1503, %v740, %v1727
      %v1952 = vsel %vm1504, %v931, %v1728
      %v1953 = vsel %vm1505, %v933, %v1729
      %v1954 = vsel %vm1506, %v1124, %v1730
      %v1955 = vsel %vm1507, %v1126, %v1731
      %v1956 = vsel %vm1508, %v1288, %v1732
      %v1957 = vsel %vm1509, %v744, %v1733
      %v1958 = vsel %vm1510, %v746, %v1734
      %v1959 = vsel %vm1511, %v937, %v1735
      %v1960 = vsel %vm1512, %v939, %v1736
      %v1961 = vsel %vm1513, %v1130, %v1737
      %v1962 = vsel %vm1514, %v1132, %v1738
      %v1963 = vsel %vm1515, %v1293, %v1739
      %v1964 = vsel %vm1516, %v748, %v1740
      %v1965 = vsel %vm1517, %v750, %v1741
      %v1966 = vsel %vm1518, %v941, %v1742
      %v1967 = vsel %vm1519, %v943, %v1743
      %v1968 = vsel %vm1520, %v1134, %v1744
      %v1969 = vsel %vm1521, %v1136, %v1745
      %v1970 = vsel %vm1522, %v1296, %v1746
      %v1971 = vld [vmem:[%s3] sm:$0xff]
      %v1972 = vld [vmem:[%s3 + $0x8] sm:$0xff]
      %v1973 = vld [vmem:[%s3 + $0x10] sm:$0xff]
      %v1974 = vld [vmem:[%s3 + $0x18] sm:$0xff]
      %v1975 = vld [vmem:[%s3 + $0x20] sm:$0xff]
      %v1976 = vld [vmem:[%s3 + $0x28] sm:$0xff]
      %v1977 = vld [vmem:[%s3 + $0x30] sm:$0xff]
      %v1978 = vld [vmem:[%s3 + $0x38] sm:$0xff]
      %v1979 = vld [vmem:[%s3 + $0x40] sm:$0xff]
      %v1980 = vld [vmem:[%s3 + $0x48] sm:$0xff]
      %v1981 = vld [vmem:[%s3 + $0x50] sm:$0xff]
      %v1982 = vld [vmem:[%s3 + $0x58] sm:$0xff]
      %v1983 = vld [vmem:[%s3 + $0x60] sm:$0xff]
      %v1984 = vld [vmem:[%s3 + $0x68] sm:$0xff]
      %v1985 = vld [vmem:[%s3 + $0x70] sm:$0xff]
      %v1986 = vld [vmem:[%s3 + $0x78] sm:$0xff]
      %v1987 = vld [vmem:[%s3 + $0x80] sm:$0xff]
      %v1988 = vld [vmem:[%s3 + $0x88] sm:$0xff]
      %v1989 = vld [vmem:[%s3 + $0x90] sm:$0xff]
      %v1990 = vld [vmem:[%s3 + $0x98] sm:$0xff]
      %v1991 = vld [vmem:[%s3 + $0xa0] sm:$0xff]
      %v1992 = vld [vmem:[%s3 + $0xa8] sm:$0xff]
      %v1993 = vld [vmem:[%s3 + $0xb0] sm:$0xff]
      %v1994 = vld [vmem:[%s3 + $0xb8] sm:$0xff]
      %v1995 = vld [vmem:[%s3 + $0xc0] sm:$0xff]
      %v1996 = vld [vmem:[%s3 + $0xc8] sm:$0xff]
      %v1997 = vld [vmem:[%s3 + $0xd0] sm:$0xff]
      %v1998 = vld [vmem:[%s3 + $0xd8] sm:$0xff]
      %v1999 = vld [vmem:[%s3 + $0xe0] sm:$0xff]
      %v2000 = vld [vmem:[%s3 + $0xe8] sm:$0xff]
      %v2001 = vld [vmem:[%s3 + $0xf0] sm:$0xff]
      %v2002 = vld [vmem:[%s3 + $0xf8] sm:$0xff]
      %v2003 = vld [vmem:[%s3 + $0x100] sm:$0xff]
      %v2004 = vld [vmem:[%s3 + $0x108] sm:$0xff]
      %v2005 = vld [vmem:[%s3 + $0x110] sm:$0xff]
      %v2006 = vld [vmem:[%s3 + $0x118] sm:$0xff]
      %v2007 = vld [vmem:[%s3 + $0x120] sm:$0xff]
      %v2008 = vld [vmem:[%s3 + $0x128] sm:$0xff]
      %v2009 = vld [vmem:[%s3 + $0x130] sm:$0xff]
      %v2010 = vld [vmem:[%s3 + $0x138] sm:$0xff]
      %v2011 = vld [vmem:[%s3 + $0x140] sm:$0xff]
      %v2012 = vld [vmem:[%s3 + $0x148] sm:$0xff]
      %v2013 = vld [vmem:[%s3 + $0x150] sm:$0xff]
      %v2014 = vld [vmem:[%s3 + $0x158] sm:$0xff]
      %v2015 = vld [vmem:[%s3 + $0x160] sm:$0xff]
      %v2016 = vld [vmem:[%s3 + $0x168] sm:$0xff]
      %v2017 = vld [vmem:[%s3 + $0x170] sm:$0xff]
      %v2018 = vld [vmem:[%s3 + $0x178] sm:$0xff]
      %v2019 = vld [vmem:[%s3 + $0x180] sm:$0xff]
      %v2020 = vld [vmem:[%s3 + $0x188] sm:$0xff]
      %v2021 = vld [vmem:[%s3 + $0x190] sm:$0xff]
      %v2022 = vld [vmem:[%s3 + $0x198] sm:$0xff]
      %v2023 = vld [vmem:[%s3 + $0x1a0] sm:$0xff]
      %v2024 = vld [vmem:[%s3 + $0x1a8] sm:$0xff]
      %v2025 = vld [vmem:[%s3 + $0x1b0] sm:$0xff]
      %v2026 = vld [vmem:[%s3 + $0x1b8] sm:$0xff]
      %v2027 = vld [vmem:[%s3 + $0x1c0] sm:$0xff]
      %v2028 = vld [vmem:[%s3 + $0x1c8] sm:$0xff]
      %v2029 = vld [vmem:[%s3 + $0x1d0] sm:$0xff]
      %v2030 = vld [vmem:[%s3 + $0x1d8] sm:$0xff]
      %v2031 = vld [vmem:[%s3 + $0x1e0] sm:$0xff]
      %v2032 = vld [vmem:[%s3 + $0x1e8] sm:$0xff]
      %v2033 = vld [vmem:[%s3 + $0x1f0] sm:$0xff]
      %v2034 = vld [vmem:[%s3 + $0x1f8] sm:$0xff]
      %v2035 = vld [vmem:[%s3 + $0x200] sm:$0xff]
      %v2036 = vld [vmem:[%s3 + $0x208] sm:$0xff]
      %v2037 = vld [vmem:[%s3 + $0x210] sm:$0xff]
      %v2038 = vld [vmem:[%s3 + $0x218] sm:$0xff]
      %v2039 = vld [vmem:[%s3 + $0x220] sm:$0xff]
      %v2040 = vld [vmem:[%s3 + $0x228] sm:$0xff]
      %v2041 = vld [vmem:[%s3 + $0x230] sm:$0xff]
      %v2042 = vld [vmem:[%s3 + $0x238] sm:$0xff]
      %v2043 = vld [vmem:[%s3 + $0x240] sm:$0xff]
      %v2044 = vld [vmem:[%s3 + $0x248] sm:$0xff]
      %v2045 = vld [vmem:[%s3 + $0x250] sm:$0xff]
      %v2046 = vld [vmem:[%s3 + $0x258] sm:$0xff]
      %v2047 = vld [vmem:[%s3 + $0x260] sm:$0xff]
      %v2048 = vld [vmem:[%s3 + $0x268] sm:$0xff]
      %v2049 = vld [vmem:[%s3 + $0x270] sm:$0xff]
      %v2050 = vld [vmem:[%s3 + $0x278] sm:$0xff]
      %v2051 = vld [vmem:[%s3 + $0x280] sm:$0xff]
      %v2052 = vld [vmem:[%s3 + $0x288] sm:$0xff]
      %v2053 = vld [vmem:[%s3 + $0x290] sm:$0xff]
      %v2054 = vld [vmem:[%s3 + $0x298] sm:$0xff]
      %v2055 = vld [vmem:[%s3 + $0x2a0] sm:$0xff]
      %v2056 = vld [vmem:[%s3 + $0x2a8] sm:$0xff]
      %v2057 = vld [vmem:[%s3 + $0x2b0] sm:$0xff]
      %v2058 = vld [vmem:[%s3 + $0x2b8] sm:$0xff]
      %v2059 = vld [vmem:[%s3 + $0x2c0] sm:$0xff]
      %v2060 = vld [vmem:[%s3 + $0x2c8] sm:$0xff]
      %v2061 = vld [vmem:[%s3 + $0x2d0] sm:$0xff]
      %v2062 = vld [vmem:[%s3 + $0x2d8] sm:$0xff]
      %v2063 = vld [vmem:[%s3 + $0x2e0] sm:$0xff]
      %v2064 = vld [vmem:[%s3 + $0x2e8] sm:$0xff]
      %v2065 = vld [vmem:[%s3 + $0x2f0] sm:$0xff]
      %v2066 = vld [vmem:[%s3 + $0x2f8] sm:$0xff]
      %v2067 = vld [vmem:[%s3 + $0x300] sm:$0xff]
      %v2068 = vld [vmem:[%s3 + $0x308] sm:$0xff]
      %v2069 = vld [vmem:[%s3 + $0x310] sm:$0xff]
      %v2070 = vld [vmem:[%s3 + $0x318] sm:$0xff]
      %v2071 = vld [vmem:[%s3 + $0x320] sm:$0xff]
      %v2072 = vld [vmem:[%s3 + $0x328] sm:$0xff]
      %v2073 = vld [vmem:[%s3 + $0x330] sm:$0xff]
      %v2074 = vld [vmem:[%s3 + $0x338] sm:$0xff]
      %v2075 = vld [vmem:[%s3 + $0x340] sm:$0xff]
      %v2076 = vld [vmem:[%s3 + $0x348] sm:$0xff]
      %v2077 = vld [vmem:[%s3 + $0x350] sm:$0xff]
      %v2078 = vld [vmem:[%s3 + $0x358] sm:$0xff]
      %v2079 = vld [vmem:[%s3 + $0x360] sm:$0xff]
      %v2080 = vld [vmem:[%s3 + $0x368] sm:$0xff]
      %v2081 = vld [vmem:[%s3 + $0x370] sm:$0xff]
      %v2082 = vld [vmem:[%s3 + $0x378] sm:$0xff]
      %v2083 = vld [vmem:[%s3 + $0x380] sm:$0xff]
      %v2084 = vld [vmem:[%s3 + $0x388] sm:$0xff]
      %v2085 = vld [vmem:[%s3 + $0x390] sm:$0xff]
      %v2086 = vld [vmem:[%s3 + $0x398] sm:$0xff]
      %v2087 = vld [vmem:[%s3 + $0x3a0] sm:$0xff]
      %v2088 = vld [vmem:[%s3 + $0x3a8] sm:$0xff]
      %v2089 = vld [vmem:[%s3 + $0x3b0] sm:$0xff]
      %v2090 = vld [vmem:[%s3 + $0x3b8] sm:$0xff]
      %v2091 = vld [vmem:[%s3 + $0x3c0] sm:$0xff]
      %v2092 = vld [vmem:[%s3 + $0x3c8] sm:$0xff]
      %v2093 = vld [vmem:[%s3 + $0x3d0] sm:$0xff]
      %v2094 = vld [vmem:[%s3 + $0x3d8] sm:$0xff]
      %v2095 = vld [vmem:[%s3 + $0x3e0] sm:$0xff]
      %v2096 = vld [vmem:[%s3 + $0x3e8] sm:$0xff]
      %v2097 = vld [vmem:[%s3 + $0x3f0] sm:$0xff]
      %v2098 = vld [vmem:[%s3 + $0x3f8] sm:$0xff]
      %v2099 = vld [vmem:[%s3 + $0x400] sm:$0xff]
      %v2100 = vld [vmem:[%s3 + $0x408] sm:$0xff]
      %v2101 = vld [vmem:[%s3 + $0x410] sm:$0xff]
      %v2102 = vld [vmem:[%s3 + $0x418] sm:$0xff]
      %v2103 = vld [vmem:[%s3 + $0x420] sm:$0xff]
      %v2104 = vld [vmem:[%s3 + $0x428] sm:$0xff]
      %v2105 = vld [vmem:[%s3 + $0x430] sm:$0xff]
      %v2106 = vld [vmem:[%s3 + $0x438] sm:$0xff]
      %v2107 = vld [vmem:[%s3 + $0x440] sm:$0xff]
      %v2108 = vld [vmem:[%s3 + $0x448] sm:$0xff]
      %v2109 = vld [vmem:[%s3 + $0x450] sm:$0xff]
      %v2110 = vld [vmem:[%s3 + $0x458] sm:$0xff]
      %v2111 = vld [vmem:[%s3 + $0x460] sm:$0xff]
      %v2112 = vld [vmem:[%s3 + $0x468] sm:$0xff]
      %v2113 = vld [vmem:[%s3 + $0x470] sm:$0xff]
      %v2114 = vld [vmem:[%s3 + $0x478] sm:$0xff]
      %v2115 = vld [vmem:[%s3 + $0x480] sm:$0xff]
      %v2116 = vld [vmem:[%s3 + $0x488] sm:$0xff]
      %v2117 = vld [vmem:[%s3 + $0x490] sm:$0xff]
      %v2118 = vld [vmem:[%s3 + $0x498] sm:$0xff]
      %v2119 = vld [vmem:[%s3 + $0x4a0] sm:$0xff]
      %v2120 = vld [vmem:[%s3 + $0x4a8] sm:$0xff]
      %v2121 = vld [vmem:[%s3 + $0x4b0] sm:$0xff]
      %v2122 = vld [vmem:[%s3 + $0x4b8] sm:$0xff]
      %v2123 = vld [vmem:[%s3 + $0x4c0] sm:$0xff]
      %v2124 = vld [vmem:[%s3 + $0x4c8] sm:$0xff]
      %v2125 = vld [vmem:[%s3 + $0x4d0] sm:$0xff]
      %v2126 = vld [vmem:[%s3 + $0x4d8] sm:$0xff]
      %v2127 = vld [vmem:[%s3 + $0x4e0] sm:$0xff]
      %v2128 = vld [vmem:[%s3 + $0x4e8] sm:$0xff]
      %v2129 = vld [vmem:[%s3 + $0x4f0] sm:$0xff]
      %v2130 = vld [vmem:[%s3 + $0x4f8] sm:$0xff]
      %v2131 = vld [vmem:[%s3 + $0x500] sm:$0xff]
      %v2132 = vld [vmem:[%s3 + $0x508] sm:$0xff]
      %v2133 = vld [vmem:[%s3 + $0x510] sm:$0xff]
      %v2134 = vld [vmem:[%s3 + $0x518] sm:$0xff]
      %v2135 = vld [vmem:[%s3 + $0x520] sm:$0xff]
      %v2136 = vld [vmem:[%s3 + $0x528] sm:$0xff]
      %v2137 = vld [vmem:[%s3 + $0x530] sm:$0xff]
      %v2138 = vld [vmem:[%s3 + $0x538] sm:$0xff]
      %v2139 = vld [vmem:[%s3 + $0x540] sm:$0xff]
      %v2140 = vld [vmem:[%s3 + $0x548] sm:$0xff]
      %v2141 = vld [vmem:[%s3 + $0x550] sm:$0xff]
      %v2142 = vld [vmem:[%s3 + $0x558] sm:$0xff]
      %v2143 = vld [vmem:[%s3 + $0x560] sm:$0xff]
      %v2144 = vld [vmem:[%s3 + $0x568] sm:$0xff]
      %v2145 = vld [vmem:[%s3 + $0x570] sm:$0xff]
      %v2146 = vld [vmem:[%s3 + $0x578] sm:$0xff]
      %v2147 = vld [vmem:[%s3 + $0x580] sm:$0xff]
      %v2148 = vld [vmem:[%s3 + $0x588] sm:$0xff]
      %v2149 = vld [vmem:[%s3 + $0x590] sm:$0xff]
      %v2150 = vld [vmem:[%s3 + $0x598] sm:$0xff]
      %v2151 = vld [vmem:[%s3 + $0x5a0] sm:$0xff]
      %v2152 = vld [vmem:[%s3 + $0x5a8] sm:$0xff]
      %v2153 = vld [vmem:[%s3 + $0x5b0] sm:$0xff]
      %v2154 = vld [vmem:[%s3 + $0x5b8] sm:$0xff]
      %v2155 = vld [vmem:[%s3 + $0x5c0] sm:$0xff]
      %v2156 = vld [vmem:[%s3 + $0x5c8] sm:$0xff]
      %v2157 = vld [vmem:[%s3 + $0x5d0] sm:$0xff]
      %v2158 = vld [vmem:[%s3 + $0x5d8] sm:$0xff]
      %v2159 = vld [vmem:[%s3 + $0x5e0] sm:$0xff]
      %v2160 = vld [vmem:[%s3 + $0x5e8] sm:$0xff]
      %v2161 = vld [vmem:[%s3 + $0x5f0] sm:$0xff]
      %v2162 = vld [vmem:[%s3 + $0x5f8] sm:$0xff]
      %v2163 = vld [vmem:[%s3 + $0x600] sm:$0xff]
      %v2164 = vld [vmem:[%s3 + $0x608] sm:$0xff]
      %v2165 = vld [vmem:[%s3 + $0x610] sm:$0xff]
      %v2166 = vld [vmem:[%s3 + $0x618] sm:$0xff]
      %v2167 = vld [vmem:[%s3 + $0x620] sm:$0xff]
      %v2168 = vld [vmem:[%s3 + $0x628] sm:$0xff]
      %v2169 = vld [vmem:[%s3 + $0x630] sm:$0xff]
      %v2170 = vld [vmem:[%s3 + $0x638] sm:$0xff]
      %v2171 = vld [vmem:[%s3 + $0x640] sm:$0xff]
      %v2172 = vld [vmem:[%s3 + $0x648] sm:$0xff]
      %v2173 = vld [vmem:[%s3 + $0x650] sm:$0xff]
      %v2174 = vld [vmem:[%s3 + $0x658] sm:$0xff]
      %v2175 = vld [vmem:[%s3 + $0x660] sm:$0xff]
      %v2176 = vld [vmem:[%s3 + $0x668] sm:$0xff]
      %v2177 = vld [vmem:[%s3 + $0x670] sm:$0xff]
      %v2178 = vld [vmem:[%s3 + $0x678] sm:$0xff]
      %v2179 = vld [vmem:[%s3 + $0x680] sm:$0xff]
      %v2180 = vld [vmem:[%s3 + $0x688] sm:$0xff]
      %v2181 = vpack.c.bf16 %v1754, %v1747
      %v2182 = vpack.c.bf16 %v1755, %v1748
      %v2183 = vpack.c.bf16 %v1756, %v1749
      %v2184 = vpack.c.bf16 %v1757, %v1750
      %v2185 = vpack.c.bf16 %v1758, %v1751
      %v2186 = vpack.c.bf16 %v1759, %v1752
      %v2187 = vpack.c.bf16 %v1760, %v1753
      %v2188 = vpack.c.bf16 %v1768, %v1761
      %v2189 = vpack.c.bf16 %v1769, %v1762
      %v2190 = vpack.c.bf16 %v1770, %v1763
      %v2191 = vpack.c.bf16 %v1771, %v1764
      %v2192 = vpack.c.bf16 %v1772, %v1765
      %v2193 = vpack.c.bf16 %v1773, %v1766
      %v2194 = vpack.c.bf16 %v1774, %v1767
      %v2195 = vpack.c.bf16 %v1782, %v1775
      %v2196 = vpack.c.bf16 %v1783, %v1776
      %v2197 = vpack.c.bf16 %v1784, %v1777
      %v2198 = vpack.c.bf16 %v1785, %v1778
      %v2199 = vpack.c.bf16 %v1786, %v1779
      %v2200 = vpack.c.bf16 %v1787, %v1780
      %v2201 = vpack.c.bf16 %v1788, %v1781
      %v2202 = vpack.c.bf16 %v1796, %v1789
      %v2203 = vpack.c.bf16 %v1797, %v1790
      %v2204 = vpack.c.bf16 %v1798, %v1791
      %v2205 = vpack.c.bf16 %v1799, %v1792
      %v2206 = vpack.c.bf16 %v1800, %v1793
      %v2207 = vpack.c.bf16 %v1801, %v1794
      %v2208 = vpack.c.bf16 %v1802, %v1795
      %v2209 = vpack.c.bf16 %v1810, %v1803
      %v2210 = vpack.c.bf16 %v1811, %v1804
      %v2211 = vpack.c.bf16 %v1812, %v1805
      %v2212 = vpack.c.bf16 %v1813, %v1806
      %v2213 = vpack.c.bf16 %v1814, %v1807
      %v2214 = vpack.c.bf16 %v1815, %v1808
      %v2215 = vpack.c.bf16 %v1816, %v1809
      %v2216 = vpack.c.bf16 %v1824, %v1817
      %v2217 = vpack.c.bf16 %v1825, %v1818
      %v2218 = vpack.c.bf16 %v1826, %v1819
      %v2219 = vpack.c.bf16 %v1827, %v1820
      %v2220 = vpack.c.bf16 %v1828, %v1821
      %v2221 = vpack.c.bf16 %v1829, %v1822
      %v2222 = vpack.c.bf16 %v1830, %v1823
      %v2223 = vpack.c.bf16 %v1838, %v1831
      %v2224 = vpack.c.bf16 %v1839, %v1832
      %v2225 = vpack.c.bf16 %v1840, %v1833
      %v2226 = vpack.c.bf16 %v1841, %v1834
      %v2227 = vpack.c.bf16 %v1842, %v1835
      %v2228 = vpack.c.bf16 %v1843, %v1836
      %v2229 = vpack.c.bf16 %v1844, %v1837
      %v2230 = vpack.c.bf16 %v1852, %v1845
      %v2231 = vpack.c.bf16 %v1853, %v1846
      %v2232 = vpack.c.bf16 %v1854, %v1847
      %v2233 = vpack.c.bf16 %v1855, %v1848
      %v2234 = vpack.c.bf16 %v1856, %v1849
      %v2235 = vpack.c.bf16 %v1857, %v1850
      %v2236 = vpack.c.bf16 %v1858, %v1851
      %v2237 = vpack.c.bf16 %v1866, %v1859
      %v2238 = vpack.c.bf16 %v1867, %v1860
      %v2239 = vpack.c.bf16 %v1868, %v1861
      %v2240 = vpack.c.bf16 %v1869, %v1862
      %v2241 = vpack.c.bf16 %v1870, %v1863
      %v2242 = vpack.c.bf16 %v1871, %v1864
      %v2243 = vpack.c.bf16 %v1872, %v1865
      %v2244 = vpack.c.bf16 %v1880, %v1873
      %v2245 = vpack.c.bf16 %v1881, %v1874
      %v2246 = vpack.c.bf16 %v1882, %v1875
      %v2247 = vpack.c.bf16 %v1883, %v1876
      %v2248 = vpack.c.bf16 %v1884, %v1877
      %v2249 = vpack.c.bf16 %v1885, %v1878
      %v2250 = vpack.c.bf16 %v1886, %v1879
      %v2251 = vpack.c.bf16 %v1894, %v1887
      %v2252 = vpack.c.bf16 %v1895, %v1888
      %v2253 = vpack.c.bf16 %v1896, %v1889
      %v2254 = vpack.c.bf16 %v1897, %v1890
      %v2255 = vpack.c.bf16 %v1898, %v1891
      %v2256 = vpack.c.bf16 %v1899, %v1892
      %v2257 = vpack.c.bf16 %v1900, %v1893
      %v2258 = vpack.c.bf16 %v1908, %v1901
      %v2259 = vpack.c.bf16 %v1909, %v1902
      %v2260 = vpack.c.bf16 %v1910, %v1903
      %v2261 = vpack.c.bf16 %v1911, %v1904
      %v2262 = vpack.c.bf16 %v1912, %v1905
      %v2263 = vpack.c.bf16 %v1913, %v1906
      %v2264 = vpack.c.bf16 %v1914, %v1907
      %v2265 = vpack.c.bf16 %v1922, %v1915
      %v2266 = vpack.c.bf16 %v1923, %v1916
      %v2267 = vpack.c.bf16 %v1924, %v1917
      %v2268 = vpack.c.bf16 %v1925, %v1918
      %v2269 = vpack.c.bf16 %v1926, %v1919
      %v2270 = vpack.c.bf16 %v1927, %v1920
      %v2271 = vpack.c.bf16 %v1928, %v1921
      %v2272 = vpack.c.bf16 %v1936, %v1929
      %v2273 = vpack.c.bf16 %v1937, %v1930
      %v2274 = vpack.c.bf16 %v1938, %v1931
      %v2275 = vpack.c.bf16 %v1939, %v1932
      %v2276 = vpack.c.bf16 %v1940, %v1933
      %v2277 = vpack.c.bf16 %v1941, %v1934
      %v2278 = vpack.c.bf16 %v1942, %v1935
      %v2279 = vpack.c.bf16 %v1950, %v1943
      %v2280 = vpack.c.bf16 %v1951, %v1944
      %v2281 = vpack.c.bf16 %v1952, %v1945
      %v2282 = vpack.c.bf16 %v1953, %v1946
      %v2283 = vpack.c.bf16 %v1954, %v1947
      %v2284 = vpack.c.bf16 %v1955, %v1948
      %v2285 = vpack.c.bf16 %v1956, %v1949
      %v2286 = vpack.c.bf16 %v1964, %v1957
      %v2287 = vpack.c.bf16 %v1965, %v1958
      %v2288 = vpack.c.bf16 %v1966, %v1959
      %v2289 = vpack.c.bf16 %v1967, %v1960
      %v2290 = vpack.c.bf16 %v1968, %v1961
      %v2291 = vpack.c.bf16 %v1969, %v1962
      %v2292 = vpack.c.bf16 %v1970, %v1963
      %s2293 = scalar_lea.vmem %s1, 1
      %v2294 = vld [vmem:[%s2293] ss:$8 sm:$0xf]
      %v2296 = vlaneseq
      %v2297 = vshrl.u32 %v2296, 7
      %v2298 = vsub.s32 0, %v2297
      %v2299 = vrot.slane %v2294, %v2298
      %v2300 = vlaneseq
      %v2301 = vshrl.u32 %v2300, 7
      %v2302 = vsub.s32 1, %v2301
      %v2303 = vrot.slane %v2294, %v2302
      %v2304 = vlaneseq
      %v2305 = vshrl.u32 %v2304, 7
      %v2306 = vsub.s32 2, %v2305
      %v2307 = vrot.slane %v2294, %v2306
      %v2308 = vlaneseq
      %v2309 = vshrl.u32 %v2308, 7
      %v2310 = vsub.s32 3, %v2309
      %v2311 = vrot.slane %v2294, %v2310
      %v2526 = vunpack.c.l.b16 %v1971
      %v2527 = vunpack.c.h.b16 %v1971
      %v2528 = vunpack.c.l.b16 %v1972
      %v2529 = vunpack.c.h.b16 %v1972
      %v2530 = vunpack.c.l.b16 %v1973
      %v2531 = vunpack.c.h.b16 %v1973
      %v2532 = vunpack.c.l.b16 %v1974
      %v2533 = vunpack.c.h.b16 %v1974
      %v2534 = vunpack.c.l.b16 %v1975
      %v2535 = vunpack.c.h.b16 %v1975
      %v2536 = vunpack.c.l.b16 %v1976
      %v2537 = vunpack.c.h.b16 %v1976
      %v2538 = vunpack.c.l.b16 %v1977
      %v2539 = vunpack.c.h.b16 %v1977
      %v2540 = vunpack.c.l.b16 %v1978
      %v2541 = vunpack.c.h.b16 %v1978
      %v2542 = vunpack.c.l.b16 %v1979
      %v2543 = vunpack.c.h.b16 %v1979
      %v2544 = vunpack.c.l.b16 %v1980
      %v2545 = vunpack.c.h.b16 %v1980
      %v2546 = vunpack.c.l.b16 %v1981
      %v2547 = vunpack.c.h.b16 %v1981
      %v2548 = vunpack.c.l.b16 %v1982
      %v2549 = vunpack.c.h.b16 %v1982
      %v2550 = vunpack.c.l.b16 %v1983
      %v2551 = vunpack.c.h.b16 %v1983
      %v2552 = vunpack.c.l.b16 %v1984
      %v2553 = vunpack.c.h.b16 %v1984
      %v2554 = vunpack.c.l.b16 %v1985
      %v2555 = vunpack.c.h.b16 %v1985
      %v2556 = vunpack.c.l.b16 %v1986
      %v2557 = vunpack.c.h.b16 %v1986
      %v2558 = vunpack.c.l.b16 %v1987
      %v2559 = vunpack.c.h.b16 %v1987
      %v2560 = vunpack.c.l.b16 %v1988
      %v2561 = vunpack.c.h.b16 %v1988
      %v2562 = vunpack.c.l.b16 %v1989
      %v2563 = vunpack.c.h.b16 %v1989
      %v2564 = vunpack.c.l.b16 %v1990
      %v2565 = vunpack.c.h.b16 %v1990
      %v2566 = vunpack.c.l.b16 %v1991
      %v2567 = vunpack.c.h.b16 %v1991
      %v2568 = vunpack.c.l.b16 %v1992
      %v2569 = vunpack.c.h.b16 %v1992
      %v2570 = vunpack.c.l.b16 %v1993
      %v2571 = vunpack.c.h.b16 %v1993
      %v2572 = vunpack.c.l.b16 %v1994
      %v2573 = vunpack.c.h.b16 %v1994
      %v2574 = vunpack.c.l.b16 %v1995
      %v2575 = vunpack.c.h.b16 %v1995
      %v2576 = vunpack.c.l.b16 %v1996
      %v2577 = vunpack.c.h.b16 %v1996
      %v2578 = vunpack.c.l.b16 %v1997
      %v2579 = vunpack.c.h.b16 %v1997
      %v2580 = vunpack.c.l.b16 %v1998
      %v2581 = vunpack.c.h.b16 %v1998
      %v2582 = vunpack.c.l.b16 %v1999
      %v2583 = vunpack.c.h.b16 %v1999
      %v2584 = vunpack.c.l.b16 %v2000
      %v2585 = vunpack.c.h.b16 %v2000
      %v2586 = vunpack.c.l.b16 %v2001
      %v2587 = vunpack.c.h.b16 %v2001
      %v2588 = vunpack.c.l.b16 %v2002
      %v2589 = vunpack.c.h.b16 %v2002
      %v2590 = vunpack.c.l.b16 %v2003
      %v2591 = vunpack.c.h.b16 %v2003
      %v2592 = vunpack.c.l.b16 %v2004
      %v2593 = vunpack.c.h.b16 %v2004
      %v2594 = vunpack.c.l.b16 %v2005
      %v2595 = vunpack.c.h.b16 %v2005
      %v2596 = vunpack.c.l.b16 %v2006
      %v2597 = vunpack.c.h.b16 %v2006
      %v2598 = vunpack.c.l.b16 %v2007
      %v2599 = vunpack.c.h.b16 %v2007
      %v2600 = vunpack.c.l.b16 %v2008
      %v2601 = vunpack.c.h.b16 %v2008
      %v2602 = vunpack.c.l.b16 %v2009
      %v2603 = vunpack.c.h.b16 %v2009
      %v2604 = vunpack.c.l.b16 %v2010
      %v2605 = vunpack.c.h.b16 %v2010
      %v2606 = vunpack.c.l.b16 %v2011
      %v2607 = vunpack.c.h.b16 %v2011
      %v2608 = vunpack.c.l.b16 %v2012
      %v2609 = vunpack.c.h.b16 %v2012
      %v2610 = vunpack.c.l.b16 %v2013
      %v2611 = vunpack.c.h.b16 %v2013
      %v2612 = vunpack.c.l.b16 %v2014
      %v2613 = vunpack.c.h.b16 %v2014
      %v2614 = vunpack.c.l.b16 %v2015
      %v2615 = vunpack.c.h.b16 %v2015
      %v2616 = vunpack.c.l.b16 %v2016
      %v2617 = vunpack.c.h.b16 %v2016
      %v2618 = vunpack.c.l.b16 %v2017
      %v2619 = vunpack.c.h.b16 %v2017
      %v2620 = vunpack.c.l.b16 %v2018
      %v2621 = vunpack.c.h.b16 %v2018
      %v2622 = vunpack.c.l.b16 %v2019
      %v2623 = vunpack.c.h.b16 %v2019
      %v2624 = vunpack.c.l.b16 %v2020
      %v2625 = vunpack.c.h.b16 %v2020
      %v2626 = vunpack.c.l.b16 %v2021
      %v2627 = vunpack.c.h.b16 %v2021
      %v2628 = vunpack.c.l.b16 %v2022
      %v2629 = vunpack.c.h.b16 %v2022
      %v2630 = vunpack.c.l.b16 %v2023
      %v2631 = vunpack.c.h.b16 %v2023
      %v2632 = vunpack.c.l.b16 %v2024
      %v2633 = vunpack.c.h.b16 %v2024
      %v2634 = vunpack.c.l.b16 %v2025
      %v2635 = vunpack.c.h.b16 %v2025
      %v2636 = vunpack.c.l.b16 %v2026
      %v2637 = vunpack.c.h.b16 %v2026
      %v2638 = vunpack.c.l.b16 %v2027
      %v2639 = vunpack.c.h.b16 %v2027
      %v2640 = vunpack.c.l.b16 %v2028
      %v2641 = vunpack.c.h.b16 %v2028
      %v2642 = vunpack.c.l.b16 %v2029
      %v2643 = vunpack.c.h.b16 %v2029
      %v2644 = vunpack.c.l.b16 %v2030
      %v2645 = vunpack.c.h.b16 %v2030
      %v2646 = vunpack.c.l.b16 %v2031
      %v2647 = vunpack.c.h.b16 %v2031
      %v2648 = vunpack.c.l.b16 %v2032
      %v2649 = vunpack.c.h.b16 %v2032
      %v2650 = vunpack.c.l.b16 %v2033
      %v2651 = vunpack.c.h.b16 %v2033
      %v2652 = vunpack.c.l.b16 %v2034
      %v2653 = vunpack.c.h.b16 %v2034
      %v2654 = vunpack.c.l.b16 %v2035
      %v2655 = vunpack.c.h.b16 %v2035
      %v2656 = vunpack.c.l.b16 %v2036
      %v2657 = vunpack.c.h.b16 %v2036
      %v2658 = vunpack.c.l.b16 %v2037
      %v2659 = vunpack.c.h.b16 %v2037
      %v2660 = vunpack.c.l.b16 %v2038
      %v2661 = vunpack.c.h.b16 %v2038
      %v2662 = vunpack.c.l.b16 %v2039
      %v2663 = vunpack.c.h.b16 %v2039
      %v2664 = vunpack.c.l.b16 %v2040
      %v2665 = vunpack.c.h.b16 %v2040
      %v2666 = vunpack.c.l.b16 %v2041
      %v2667 = vunpack.c.h.b16 %v2041
      %v2668 = vunpack.c.l.b16 %v2042
      %v2669 = vunpack.c.h.b16 %v2042
      %v2670 = vunpack.c.l.b16 %v2043
      %v2671 = vunpack.c.h.b16 %v2043
      %v2672 = vunpack.c.l.b16 %v2044
      %v2673 = vunpack.c.h.b16 %v2044
      %v2674 = vunpack.c.l.b16 %v2045
      %v2675 = vunpack.c.h.b16 %v2045
      %v2676 = vunpack.c.l.b16 %v2046
      %v2677 = vunpack.c.h.b16 %v2046
      %v2678 = vunpack.c.l.b16 %v2047
      %v2679 = vunpack.c.h.b16 %v2047
      %v2680 = vunpack.c.l.b16 %v2048
      %v2681 = vunpack.c.h.b16 %v2048
      %v2682 = vunpack.c.l.b16 %v2049
      %v2683 = vunpack.c.h.b16 %v2049
      %v2684 = vunpack.c.l.b16 %v2050
      %v2685 = vunpack.c.h.b16 %v2050
      %v2686 = vunpack.c.l.b16 %v2051
      %v2687 = vunpack.c.h.b16 %v2051
      %v2688 = vunpack.c.l.b16 %v2052
      %v2689 = vunpack.c.h.b16 %v2052
      %v2690 = vunpack.c.l.b16 %v2053
      %v2691 = vunpack.c.h.b16 %v2053
      %v2692 = vunpack.c.l.b16 %v2054
      %v2693 = vunpack.c.h.b16 %v2054
      %v2694 = vunpack.c.l.b16 %v2055
      %v2695 = vunpack.c.h.b16 %v2055
      %v2696 = vunpack.c.l.b16 %v2056
      %v2697 = vunpack.c.h.b16 %v2056
      %v2698 = vunpack.c.l.b16 %v2057
      %v2699 = vunpack.c.h.b16 %v2057
      %v2700 = vunpack.c.l.b16 %v2058
      %v2701 = vunpack.c.h.b16 %v2058
      %v2702 = vunpack.c.l.b16 %v2059
      %v2703 = vunpack.c.h.b16 %v2059
      %v2704 = vunpack.c.l.b16 %v2060
      %v2705 = vunpack.c.h.b16 %v2060
      %v2706 = vunpack.c.l.b16 %v2061
      %v2707 = vunpack.c.h.b16 %v2061
      %v2708 = vunpack.c.l.b16 %v2062
      %v2709 = vunpack.c.h.b16 %v2062
      %v2710 = vunpack.c.l.b16 %v2063
      %v2711 = vunpack.c.h.b16 %v2063
      %v2712 = vunpack.c.l.b16 %v2064
      %v2713 = vunpack.c.h.b16 %v2064
      %v2714 = vunpack.c.l.b16 %v2065
      %v2715 = vunpack.c.h.b16 %v2065
      %v2716 = vunpack.c.l.b16 %v2066
      %v2717 = vunpack.c.h.b16 %v2066
      %v2718 = vunpack.c.l.b16 %v2067
      %v2719 = vunpack.c.h.b16 %v2067
      %v2720 = vunpack.c.l.b16 %v2068
      %v2721 = vunpack.c.h.b16 %v2068
      %v2722 = vunpack.c.l.b16 %v2069
      %v2723 = vunpack.c.h.b16 %v2069
      %v2724 = vunpack.c.l.b16 %v2070
      %v2725 = vunpack.c.h.b16 %v2070
      %v2726 = vunpack.c.l.b16 %v2071
      %v2727 = vunpack.c.h.b16 %v2071
      %v2728 = vunpack.c.l.b16 %v2072
      %v2729 = vunpack.c.h.b16 %v2072
      %v2730 = vunpack.c.l.b16 %v2073
      %v2731 = vunpack.c.h.b16 %v2073
      %v2732 = vunpack.c.l.b16 %v2074
      %v2733 = vunpack.c.h.b16 %v2074
      %v2734 = vunpack.c.l.b16 %v2075
      %v2735 = vunpack.c.h.b16 %v2075
      %v2736 = vunpack.c.l.b16 %v2076
      %v2737 = vunpack.c.h.b16 %v2076
      %v2738 = vunpack.c.l.b16 %v2077
      %v2739 = vunpack.c.h.b16 %v2077
      %v2740 = vunpack.c.l.b16 %v2078
      %v2741 = vunpack.c.h.b16 %v2078
      %v2742 = vunpack.c.l.b16 %v2079
      %v2743 = vunpack.c.h.b16 %v2079
      %v2744 = vunpack.c.l.b16 %v2080
      %v2745 = vunpack.c.h.b16 %v2080
      %v2746 = vunpack.c.l.b16 %v2081
      %v2747 = vunpack.c.h.b16 %v2081
      %v2748 = vunpack.c.l.b16 %v2082
      %v2749 = vunpack.c.h.b16 %v2082
      %v2750 = vunpack.c.l.b16 %v2083
      %v2751 = vunpack.c.h.b16 %v2083
      %v2752 = vunpack.c.l.b16 %v2084
      %v2753 = vunpack.c.h.b16 %v2084
      %v2754 = vunpack.c.l.b16 %v2085
      %v2755 = vunpack.c.h.b16 %v2085
      %v2756 = vunpack.c.l.b16 %v2086
      %v2757 = vunpack.c.h.b16 %v2086
      %v2758 = vunpack.c.l.b16 %v2087
      %v2759 = vunpack.c.h.b16 %v2087
      %v2760 = vunpack.c.l.b16 %v2088
      %v2761 = vunpack.c.h.b16 %v2088
      %v2762 = vunpack.c.l.b16 %v2089
      %v2763 = vunpack.c.h.b16 %v2089
      %v2764 = vunpack.c.l.b16 %v2090
      %v2765 = vunpack.c.h.b16 %v2090
      %v2766 = vunpack.c.l.b16 %v2091
      %v2767 = vunpack.c.h.b16 %v2091
      %v2768 = vunpack.c.l.b16 %v2092
      %v2769 = vunpack.c.h.b16 %v2092
      %v2770 = vunpack.c.l.b16 %v2093
      %v2771 = vunpack.c.h.b16 %v2093
      %v2772 = vunpack.c.l.b16 %v2094
      %v2773 = vunpack.c.h.b16 %v2094
      %v2774 = vunpack.c.l.b16 %v2095
      %v2775 = vunpack.c.h.b16 %v2095
      %v2776 = vunpack.c.l.b16 %v2096
      %v2777 = vunpack.c.h.b16 %v2096
      %v2778 = vunpack.c.l.b16 %v2097
      %v2779 = vunpack.c.h.b16 %v2097
      %v2780 = vunpack.c.l.b16 %v2098
      %v2781 = vunpack.c.h.b16 %v2098
      %v2782 = vunpack.c.l.b16 %v2099
      %v2783 = vunpack.c.h.b16 %v2099
      %v2784 = vunpack.c.l.b16 %v2100
      %v2785 = vunpack.c.h.b16 %v2100
      %v2786 = vunpack.c.l.b16 %v2101
      %v2787 = vunpack.c.h.b16 %v2101
      %v2788 = vunpack.c.l.b16 %v2102
      %v2789 = vunpack.c.h.b16 %v2102
      %v2790 = vunpack.c.l.b16 %v2103
      %v2791 = vunpack.c.h.b16 %v2103
      %v2792 = vunpack.c.l.b16 %v2104
      %v2793 = vunpack.c.h.b16 %v2104
      %v2794 = vunpack.c.l.b16 %v2105
      %v2795 = vunpack.c.h.b16 %v2105
      %v2796 = vunpack.c.l.b16 %v2106
      %v2797 = vunpack.c.h.b16 %v2106
      %v2798 = vunpack.c.l.b16 %v2107
      %v2799 = vunpack.c.h.b16 %v2107
      %v2800 = vunpack.c.l.b16 %v2108
      %v2801 = vunpack.c.h.b16 %v2108
      %v2802 = vunpack.c.l.b16 %v2109
      %v2803 = vunpack.c.h.b16 %v2109
      %v2804 = vunpack.c.l.b16 %v2110
      %v2805 = vunpack.c.h.b16 %v2110
      %v2806 = vunpack.c.l.b16 %v2111
      %v2807 = vunpack.c.h.b16 %v2111
      %v2808 = vunpack.c.l.b16 %v2112
      %v2809 = vunpack.c.h.b16 %v2112
      %v2810 = vunpack.c.l.b16 %v2113
      %v2811 = vunpack.c.h.b16 %v2113
      %v2812 = vunpack.c.l.b16 %v2114
      %v2813 = vunpack.c.h.b16 %v2114
      %v2814 = vunpack.c.l.b16 %v2115
      %v2815 = vunpack.c.h.b16 %v2115
      %v2816 = vunpack.c.l.b16 %v2116
      %v2817 = vunpack.c.h.b16 %v2116
      %v2818 = vunpack.c.l.b16 %v2117
      %v2819 = vunpack.c.h.b16 %v2117
      %v2820 = vunpack.c.l.b16 %v2118
      %v2821 = vunpack.c.h.b16 %v2118
      %v2822 = vunpack.c.l.b16 %v2119
      %v2823 = vunpack.c.h.b16 %v2119
      %v2824 = vunpack.c.l.b16 %v2120
      %v2825 = vunpack.c.h.b16 %v2120
      %v2826 = vunpack.c.l.b16 %v2121
      %v2827 = vunpack.c.h.b16 %v2121
      %v2828 = vunpack.c.l.b16 %v2122
      %v2829 = vunpack.c.h.b16 %v2122
      %v2830 = vunpack.c.l.b16 %v2123
      %v2831 = vunpack.c.h.b16 %v2123
      %v2832 = vunpack.c.l.b16 %v2124
      %v2833 = vunpack.c.h.b16 %v2124
      %v2834 = vunpack.c.l.b16 %v2125
      %v2835 = vunpack.c.h.b16 %v2125
      %v2836 = vunpack.c.l.b16 %v2126
      %v2837 = vunpack.c.h.b16 %v2126
      %v2838 = vunpack.c.l.b16 %v2127
      %v2839 = vunpack.c.h.b16 %v2127
      %v2840 = vunpack.c.l.b16 %v2128
      %v2841 = vunpack.c.h.b16 %v2128
      %v2842 = vunpack.c.l.b16 %v2129
      %v2843 = vunpack.c.h.b16 %v2129
      %v2844 = vunpack.c.l.b16 %v2130
      %v2845 = vunpack.c.h.b16 %v2130
      %v2846 = vunpack.c.l.b16 %v2131
      %v2847 = vunpack.c.h.b16 %v2131
      %v2848 = vunpack.c.l.b16 %v2132
      %v2849 = vunpack.c.h.b16 %v2132
      %v2850 = vunpack.c.l.b16 %v2133
      %v2851 = vunpack.c.h.b16 %v2133
      %v2852 = vunpack.c.l.b16 %v2134
      %v2853 = vunpack.c.h.b16 %v2134
      %v2854 = vunpack.c.l.b16 %v2135
      %v2855 = vunpack.c.h.b16 %v2135
      %v2856 = vunpack.c.l.b16 %v2136
      %v2857 = vunpack.c.h.b16 %v2136
      %v2858 = vunpack.c.l.b16 %v2137
      %v2859 = vunpack.c.h.b16 %v2137
      %v2860 = vunpack.c.l.b16 %v2138
      %v2861 = vunpack.c.h.b16 %v2138
      %v2862 = vunpack.c.l.b16 %v2139
      %v2863 = vunpack.c.h.b16 %v2139
      %v2864 = vunpack.c.l.b16 %v2140
      %v2865 = vunpack.c.h.b16 %v2140
      %v2866 = vunpack.c.l.b16 %v2141
      %v2867 = vunpack.c.h.b16 %v2141
      %v2868 = vunpack.c.l.b16 %v2142
      %v2869 = vunpack.c.h.b16 %v2142
      %v2870 = vunpack.c.l.b16 %v2143
      %v2871 = vunpack.c.h.b16 %v2143
      %v2872 = vunpack.c.l.b16 %v2144
      %v2873 = vunpack.c.h.b16 %v2144
      %v2874 = vunpack.c.l.b16 %v2145
      %v2875 = vunpack.c.h.b16 %v2145
      %v2876 = vunpack.c.l.b16 %v2146
      %v2877 = vunpack.c.h.b16 %v2146
      %v2878 = vunpack.c.l.b16 %v2147
      %v2879 = vunpack.c.h.b16 %v2147
      %v2880 = vunpack.c.l.b16 %v2148
      %v2881 = vunpack.c.h.b16 %v2148
      %v2882 = vunpack.c.l.b16 %v2149
      %v2883 = vunpack.c.h.b16 %v2149
      %v2884 = vunpack.c.l.b16 %v2150
      %v2885 = vunpack.c.h.b16 %v2150
      %v2886 = vunpack.c.l.b16 %v2151
      %v2887 = vunpack.c.h.b16 %v2151
      %v2888 = vunpack.c.l.b16 %v2152
      %v2889 = vunpack.c.h.b16 %v2152
      %v2890 = vunpack.c.l.b16 %v2153
      %v2891 = vunpack.c.h.b16 %v2153
      %v2892 = vunpack.c.l.b16 %v2154
      %v2893 = vunpack.c.h.b16 %v2154
      %v2894 = vunpack.c.l.b16 %v2155
      %v2895 = vunpack.c.h.b16 %v2155
      %v2896 = vunpack.c.l.b16 %v2156
      %v2897 = vunpack.c.h.b16 %v2156
      %v2898 = vunpack.c.l.b16 %v2157
      %v2899 = vunpack.c.h.b16 %v2157
      %v2900 = vunpack.c.l.b16 %v2158
      %v2901 = vunpack.c.h.b16 %v2158
      %v2902 = vunpack.c.l.b16 %v2159
      %v2903 = vunpack.c.h.b16 %v2159
      %v2904 = vunpack.c.l.b16 %v2160
      %v2905 = vunpack.c.h.b16 %v2160
      %v2906 = vunpack.c.l.b16 %v2161
      %v2907 = vunpack.c.h.b16 %v2161
      %v2908 = vunpack.c.l.b16 %v2162
      %v2909 = vunpack.c.h.b16 %v2162
      %v2910 = vunpack.c.l.b16 %v2163
      %v2911 = vunpack.c.h.b16 %v2163
      %v2912 = vunpack.c.l.b16 %v2164
      %v2913 = vunpack.c.h.b16 %v2164
      %v2914 = vunpack.c.l.b16 %v2165
      %v2915 = vunpack.c.h.b16 %v2165
      %v2916 = vunpack.c.l.b16 %v2166
      %v2917 = vunpack.c.h.b16 %v2166
      %v2918 = vunpack.c.l.b16 %v2167
      %v2919 = vunpack.c.h.b16 %v2167
      %v2920 = vunpack.c.l.b16 %v2168
      %v2921 = vunpack.c.h.b16 %v2168
      %v2922 = vunpack.c.l.b16 %v2169
      %v2923 = vunpack.c.h.b16 %v2169
      %v2924 = vunpack.c.l.b16 %v2170
      %v2925 = vunpack.c.h.b16 %v2170
      %v2926 = vunpack.c.l.b16 %v2171
      %v2927 = vunpack.c.h.b16 %v2171
      %v2928 = vunpack.c.l.b16 %v2172
      %v2929 = vunpack.c.h.b16 %v2172
      %v2930 = vunpack.c.l.b16 %v2173
      %v2931 = vunpack.c.h.b16 %v2173
      %v2932 = vunpack.c.l.b16 %v2174
      %v2933 = vunpack.c.h.b16 %v2174
      %v2934 = vunpack.c.l.b16 %v2175
      %v2935 = vunpack.c.h.b16 %v2175
      %v2936 = vunpack.c.l.b16 %v2176
      %v2937 = vunpack.c.h.b16 %v2176
      %v2938 = vunpack.c.l.b16 %v2177
      %v2939 = vunpack.c.h.b16 %v2177
      %v2940 = vunpack.c.l.b16 %v2178
      %v2941 = vunpack.c.h.b16 %v2178
      %v2942 = vunpack.c.l.b16 %v2179
      %v2943 = vunpack.c.h.b16 %v2179
      %v2944 = vunpack.c.l.b16 %v2180
      %v2945 = vunpack.c.h.b16 %v2180
      %v2946 = vpack.c.b16 %v2530, %v2526
      %v2947 = vpack.c.b16 %v2531, %v2527
      %v2948 = vpack.c.b16 %v2532, %v2528
      %v2949 = vpack.c.b16 %v2533, %v2529
      %v2950 = vpack.c.b16 %v2538, %v2534
      %v2951 = vpack.c.b16 %v2539, %v2535
      %v2952 = vpack.c.b16 %v2540, %v2536
      %v2953 = vpack.c.b16 %v2541, %v2537
      %v2954 = vpack.c.b16 %v2546, %v2542
      %v2955 = vpack.c.b16 %v2547, %v2543
      %v2956 = vpack.c.b16 %v2548, %v2544
      %v2957 = vpack.c.b16 %v2549, %v2545
      %v2958 = vpack.c.b16 %v2554, %v2550
      %v2959 = vpack.c.b16 %v2555, %v2551
      %v2960 = vpack.c.b16 %v2556, %v2552
      %v2961 = vpack.c.b16 %v2557, %v2553
      %v2962 = vpack.c.b16 %v2562, %v2558
      %v2963 = vpack.c.b16 %v2563, %v2559
      %v2964 = vpack.c.b16 %v2564, %v2560
      %v2965 = vpack.c.b16 %v2565, %v2561
      %v2966 = vpack.c.b16 %v2570, %v2566
      %v2967 = vpack.c.b16 %v2571, %v2567
      %v2968 = vpack.c.b16 %v2572, %v2568
      %v2969 = vpack.c.b16 %v2573, %v2569
      %v2970 = vpack.c.b16 %v2578, %v2574
      %v2971 = vpack.c.b16 %v2579, %v2575
      %v2972 = vpack.c.b16 %v2580, %v2576
      %v2973 = vpack.c.b16 %v2581, %v2577
      %v2974 = vpack.c.b16 %v2586, %v2582
      %v2975 = vpack.c.b16 %v2587, %v2583
      %v2976 = vpack.c.b16 %v2588, %v2584
      %v2977 = vpack.c.b16 %v2589, %v2585
      %v2978 = vpack.c.b16 %v2594, %v2590
      %v2979 = vpack.c.b16 %v2595, %v2591
      %v2980 = vpack.c.b16 %v2596, %v2592
      %v2981 = vpack.c.b16 %v2597, %v2593
      %v2982 = vpack.c.b16 %v2602, %v2598
      %v2983 = vpack.c.b16 %v2603, %v2599
      %v2984 = vpack.c.b16 %v2604, %v2600
      %v2985 = vpack.c.b16 %v2605, %v2601
      %v2986 = vpack.c.b16 %v2610, %v2606
      %v2987 = vpack.c.b16 %v2611, %v2607
      %v2988 = vpack.c.b16 %v2612, %v2608
      %v2989 = vpack.c.b16 %v2613, %v2609
      %v2990 = vpack.c.b16 %v2618, %v2614
      %v2991 = vpack.c.b16 %v2619, %v2615
      %v2992 = vpack.c.b16 %v2620, %v2616
      %v2993 = vpack.c.b16 %v2621, %v2617
      %v2994 = vpack.c.b16 %v2626, %v2622
      %v2995 = vpack.c.b16 %v2627, %v2623
      %v2996 = vpack.c.b16 %v2628, %v2624
      %v2997 = vpack.c.b16 %v2629, %v2625
      %v2998 = vpack.c.b16 %v2634, %v2630
      %v2999 = vpack.c.b16 %v2635, %v2631
      %v3000 = vpack.c.b16 %v2636, %v2632
      %v3001 = vpack.c.b16 %v2637, %v2633
      %v3002 = vpack.c.b16 %v2642, %v2638
      %v3003 = vpack.c.b16 %v2643, %v2639
      %v3004 = vpack.c.b16 %v2644, %v2640
      %v3005 = vpack.c.b16 %v2645, %v2641
      %v3006 = vpack.c.b16 %v2650, %v2646
      %v3007 = vpack.c.b16 %v2651, %v2647
      %v3008 = vpack.c.b16 %v2652, %v2648
      %v3009 = vpack.c.b16 %v2653, %v2649
      %v3010 = vpack.c.b16 %v2658, %v2654
      %v3011 = vpack.c.b16 %v2659, %v2655
      %v3012 = vpack.c.b16 %v2660, %v2656
      %v3013 = vpack.c.b16 %v2661, %v2657
      %v3014 = vpack.c.b16 %v2666, %v2662
      %v3015 = vpack.c.b16 %v2667, %v2663
      %v3016 = vpack.c.b16 %v2668, %v2664
      %v3017 = vpack.c.b16 %v2669, %v2665
      %v3018 = vpack.c.b16 %v2674, %v2670
      %v3019 = vpack.c.b16 %v2675, %v2671
      %v3020 = vpack.c.b16 %v2676, %v2672
      %v3021 = vpack.c.b16 %v2677, %v2673
      %v3022 = vpack.c.b16 %v2682, %v2678
      %v3023 = vpack.c.b16 %v2683, %v2679
      %v3024 = vpack.c.b16 %v2684, %v2680
      %v3025 = vpack.c.b16 %v2685, %v2681
      %v3026 = vpack.c.b16 %v2690, %v2686
      %v3027 = vpack.c.b16 %v2691, %v2687
      %v3028 = vpack.c.b16 %v2692, %v2688
      %v3029 = vpack.c.b16 %v2693, %v2689
      %v3030 = vpack.c.b16 %v2698, %v2694
      %v3031 = vpack.c.b16 %v2699, %v2695
      %v3032 = vpack.c.b16 %v2700, %v2696
      %v3033 = vpack.c.b16 %v2701, %v2697
      %v3034 = vpack.c.b16 %v2706, %v2702
      %v3035 = vpack.c.b16 %v2707, %v2703
      %v3036 = vpack.c.b16 %v2708, %v2704
      %v3037 = vpack.c.b16 %v2709, %v2705
      %v3038 = vpack.c.b16 %v2714, %v2710
      %v3039 = vpack.c.b16 %v2715, %v2711
      %v3040 = vpack.c.b16 %v2716, %v2712
      %v3041 = vpack.c.b16 %v2717, %v2713
      %v3042 = vpack.c.b16 %v2722, %v2718
      %v3043 = vpack.c.b16 %v2723, %v2719
      %v3044 = vpack.c.b16 %v2724, %v2720
      %v3045 = vpack.c.b16 %v2725, %v2721
      %v3046 = vpack.c.b16 %v2730, %v2726
      %v3047 = vpack.c.b16 %v2731, %v2727
      %v3048 = vpack.c.b16 %v2732, %v2728
      %v3049 = vpack.c.b16 %v2733, %v2729
      %v3050 = vpack.c.b16 %v2738, %v2734
      %v3051 = vpack.c.b16 %v2739, %v2735
      %v3052 = vpack.c.b16 %v2740, %v2736
      %v3053 = vpack.c.b16 %v2741, %v2737
      %v3054 = vpack.c.b16 %v2746, %v2742
      %v3055 = vpack.c.b16 %v2747, %v2743
      %v3056 = vpack.c.b16 %v2748, %v2744
      %v3057 = vpack.c.b16 %v2749, %v2745
      %v3058 = vpack.c.b16 %v2754, %v2750
      %v3059 = vpack.c.b16 %v2755, %v2751
      %v3060 = vpack.c.b16 %v2756, %v2752
      %v3061 = vpack.c.b16 %v2757, %v2753
      %v3062 = vpack.c.b16 %v2762, %v2758
      %v3063 = vpack.c.b16 %v2763, %v2759
      %v3064 = vpack.c.b16 %v2764, %v2760
      %v3065 = vpack.c.b16 %v2765, %v2761
      %v3066 = vpack.c.b16 %v2770, %v2766
      %v3067 = vpack.c.b16 %v2771, %v2767
      %v3068 = vpack.c.b16 %v2772, %v2768
      %v3069 = vpack.c.b16 %v2773, %v2769
      %v3070 = vpack.c.b16 %v2778, %v2774
      %v3071 = vpack.c.b16 %v2779, %v2775
      %v3072 = vpack.c.b16 %v2780, %v2776
      %v3073 = vpack.c.b16 %v2781, %v2777
      %v3074 = vpack.c.b16 %v2786, %v2782
      %v3075 = vpack.c.b16 %v2787, %v2783
      %v3076 = vpack.c.b16 %v2788, %v2784
      %v3077 = vpack.c.b16 %v2789, %v2785
      %v3078 = vpack.c.b16 %v2794, %v2790
      %v3079 = vpack.c.b16 %v2795, %v2791
      %v3080 = vpack.c.b16 %v2796, %v2792
      %v3081 = vpack.c.b16 %v2797, %v2793
      %v3082 = vpack.c.b16 %v2802, %v2798
      %v3083 = vpack.c.b16 %v2803, %v2799
      %v3084 = vpack.c.b16 %v2804, %v2800
      %v3085 = vpack.c.b16 %v2805, %v2801
      %v3086 = vpack.c.b16 %v2810, %v2806
      %v3087 = vpack.c.b16 %v2811, %v2807
      %v3088 = vpack.c.b16 %v2812, %v2808
      %v3089 = vpack.c.b16 %v2813, %v2809
      %v3090 = vpack.c.b16 %v2818, %v2814
      %v3091 = vpack.c.b16 %v2819, %v2815
      %v3092 = vpack.c.b16 %v2820, %v2816
      %v3093 = vpack.c.b16 %v2821, %v2817
      %v3094 = vpack.c.b16 %v2826, %v2822
      %v3095 = vpack.c.b16 %v2827, %v2823
      %v3096 = vpack.c.b16 %v2828, %v2824
      %v3097 = vpack.c.b16 %v2829, %v2825
      %v3098 = vpack.c.b16 %v2834, %v2830
      %v3099 = vpack.c.b16 %v2835, %v2831
      %v3100 = vpack.c.b16 %v2836, %v2832
      %v3101 = vpack.c.b16 %v2837, %v2833
      %v3102 = vpack.c.b16 %v2842, %v2838
      %v3103 = vpack.c.b16 %v2843, %v2839
      %v3104 = vpack.c.b16 %v2844, %v2840
      %v3105 = vpack.c.b16 %v2845, %v2841
      %v3106 = vpack.c.b16 %v2850, %v2846
      %v3107 = vpack.c.b16 %v2851, %v2847
      %v3108 = vpack.c.b16 %v2852, %v2848
      %v3109 = vpack.c.b16 %v2853, %v2849
      %v3110 = vpack.c.b16 %v2858, %v2854
      %v3111 = vpack.c.b16 %v2859, %v2855
      %v3112 = vpack.c.b16 %v2860, %v2856
      %v3113 = vpack.c.b16 %v2861, %v2857
      %v3114 = vpack.c.b16 %v2866, %v2862
      %v3115 = vpack.c.b16 %v2867, %v2863
      %v3116 = vpack.c.b16 %v2868, %v2864
      %v3117 = vpack.c.b16 %v2869, %v2865
      %v3118 = vpack.c.b16 %v2874, %v2870
      %v3119 = vpack.c.b16 %v2875, %v2871
      %v3120 = vpack.c.b16 %v2876, %v2872
      %v3121 = vpack.c.b16 %v2877, %v2873
      %v3122 = vpack.c.b16 %v2882, %v2878
      %v3123 = vpack.c.b16 %v2883, %v2879
      %v3124 = vpack.c.b16 %v2884, %v2880
      %v3125 = vpack.c.b16 %v2885, %v2881
      %v3126 = vpack.c.b16 %v2890, %v2886
      %v3127 = vpack.c.b16 %v2891, %v2887
      %v3128 = vpack.c.b16 %v2892, %v2888
      %v3129 = vpack.c.b16 %v2893, %v2889
      %v3130 = vpack.c.b16 %v2898, %v2894
      %v3131 = vpack.c.b16 %v2899, %v2895
      %v3132 = vpack.c.b16 %v2900, %v2896
      %v3133 = vpack.c.b16 %v2901, %v2897
      %v3134 = vpack.c.b16 %v2906, %v2902
      %v3135 = vpack.c.b16 %v2907, %v2903
      %v3136 = vpack.c.b16 %v2908, %v2904
      %v3137 = vpack.c.b16 %v2909, %v2905
      %v3138 = vpack.c.b16 %v2914, %v2910
      %v3139 = vpack.c.b16 %v2915, %v2911
      %v3140 = vpack.c.b16 %v2916, %v2912
      %v3141 = vpack.c.b16 %v2917, %v2913
      %v3142 = vpack.c.b16 %v2922, %v2918
      %v3143 = vpack.c.b16 %v2923, %v2919
      %v3144 = vpack.c.b16 %v2924, %v2920
      %v3145 = vpack.c.b16 %v2925, %v2921
      %v3146 = vpack.c.b16 %v2930, %v2926
      %v3147 = vpack.c.b16 %v2931, %v2927
      %v3148 = vpack.c.b16 %v2932, %v2928
      %v3149 = vpack.c.b16 %v2933, %v2929
      %v3150 = vpack.c.b16 %v2938, %v2934
      %v3151 = vpack.c.b16 %v2939, %v2935
      %v3152 = vpack.c.b16 %v2940, %v2936
      %v3153 = vpack.c.b16 %v2941, %v2937
      %v3154 = vpack.c.b16 %v2942, %v2942
      %v3155 = vpack.c.b16 %v2943, %v2943
      %v3156 = vpack.c.b16 %v2944, %v2944
      %v3157 = vpack.c.b16 %v2945, %v2945
      %vm3366 = vcmask 588800
      %v3368 = vsel %vm3366, %v2187, 0
      %v3371 = vsel %vm3366, %v2194, 0
      %v3374 = vsel %vm3366, %v2201, 0
      %v3377 = vsel %vm3366, %v2208, 0
      %v3380 = vsel %vm3366, %v2215, 0
      %v3383 = vsel %vm3366, %v2222, 0
      %v3386 = vsel %vm3366, %v2229, 0
      %v3389 = vsel %vm3366, %v2236, 0
      %v3392 = vsel %vm3366, %v2243, 0
      %v3395 = vsel %vm3366, %v2250, 0
      %v3398 = vsel %vm3366, %v2257, 0
      %v3401 = vsel %vm3366, %v2264, 0
      %v3404 = vsel %vm3366, %v2271, 0
      %v3407 = vsel %vm3366, %v2278, 0
      %v3410 = vsel %vm3366, %v2285, 0
      %v3413 = vsel %vm3366, %v2292, 0
      %vm3415 = vcmask 1043456
      %v3417 = vsel %vm3415, %v3154, 0
      %v3420 = vsel %vm3415, %v3155, 0
      %v3423 = vsel %vm3415, %v3156, 0
      %v3426 = vsel %vm3415, %v3157, 0
      %3428 = vmatprep.subr.bf16.mxu0 %v2947
      %3429 = vmatpush1.bf16.msra.mxu0 %v2946
      %3430 = vmatprep.subr.bf16.mxu0 %v2951
      %3431 = vmatpush1.bf16.msra.mxu0 %v2950
      %3432 = vmatprep.subr.bf16.mxu0 %v2955
      %3433 = vmatpush1.bf16.msra.mxu0 %v2954
      %3434 = vmatprep.subr.bf16.mxu0 %v2959
      %3435 = vmatpush1.bf16.msra.mxu0 %v2958
      %3436 = vmatprep.subr.bf16.mxu0 %v2963
      %3437 = vmatpush1.bf16.msra.mxu0 %v2962
      %3438 = vmatprep.subr.bf16.mxu0 %v2967
      %3439 = vmatpush1.bf16.msra.mxu0 %v2966
      %3440 = vmatprep.subr.bf16.mxu0 %v2971
      %3441 = vmatpush1.bf16.msra.mxu0 %v2970
      %3442 = vmatprep.subr.bf16.mxu0 %v2975
      %3443 = vmatpush1.bf16.msra.mxu0 %v2974
      %3444 = vmatprep.subr.bf16.mxu0 %v2979
      %3445 = vmatpush1.bf16.msra.mxu0 %v2978
      %3446 = vmatprep.subr.bf16.mxu0 %v2983
      %3447 = vmatpush1.bf16.msra.mxu0 %v2982
      %3448 = vmatprep.subr.bf16.mxu0 %v2987
      %3449 = vmatpush1.bf16.msra.mxu0 %v2986
      %3450 = vmatprep.subr.bf16.mxu0 %v2991
      %3451 = vmatpush1.bf16.msra.mxu0 %v2990
      %3452 = vmatprep.subr.bf16.mxu0 %v2995
      %3453 = vmatpush1.bf16.msra.mxu0 %v2994
      %3454 = vmatprep.subr.bf16.mxu0 %v2999
      %3455 = vmatpush1.bf16.msra.mxu0 %v2998
      %3456 = vmatprep.subr.bf16.mxu0 %v3003
      %3457 = vmatpush1.bf16.msra.mxu0 %v3002
      %3458 = vmatprep.subr.bf16.mxu0 %v3007
      %3459 = vmatpush1.bf16.msra.mxu0 %v3006
      %3460 = vmatprep.mubr.bf16.mxu0 %v2182
      %3461 = vmatmul.mubr.bf16.gmra.mrb[0].mxu0 %v2181
      %v3462 = vpop.f32.mrb[0].mxu0
      %v3463 = vadd.f32 %v2299, %v3462
      %v3464 = vpop.f32.mrb[0].mxu0
      %v3465 = vadd.f32 %v2303, %v3464
      %v3466 = vpop.f32.mrb[0].mxu0
      %v3467 = vadd.f32 %v2299, %v3466
      %v3468 = vpop.f32.mrb[0].mxu0
      %v3469 = vadd.f32 %v2303, %v3468
      %3470 = vmatprep.mubr.bf16.mxu0 %v2189
      %3471 = vmatmul.mubr.bf16.gmra.mrb[0].mxu0 %v2188
      %v3472 = vpop.f32.mrb[0].mxu0
      %v3473 = vadd.f32 %v2299, %v3472
      %v3474 = vpop.f32.mrb[0].mxu0
      %v3475 = vadd.f32 %v2303, %v3474
      %v3476 = vpop.f32.mrb[0].mxu0
      %v3477 = vadd.f32 %v2299, %v3476
      %v3478 = vpop.f32.mrb[0].mxu0
      %v3479 = vadd.f32 %v2303, %v3478
      %3480 = vmatprep.mubr.bf16.mxu0 %v2196
      %3481 = vmatmul.mubr.bf16.gmra.mrb[0].mxu0 %v2195
      %v3482 = vpop.f32.mrb[0].mxu0
      %v3483 = vadd.f32 %v2299, %v3482
      %v3484 = vpop.f32.mrb[0].mxu0
      %v3485 = vadd.f32 %v2303, %v3484
      %v3486 = vpop.f32.mrb[0].mxu0
      %v3487 = vadd.f32 %v2299, %v3486
      %v3488 = vpop.f32.mrb[0].mxu0
      %v3489 = vadd.f32 %v2303, %v3488
      %3490 = vmatprep.mubr.bf16.mxu0 %v2203
      %3491 = vmatmul.mubr.bf16.gmra.mrb[0].mxu0 %v2202
      %v3492 = vpop.f32.mrb[0].mxu0
      %v3493 = vadd.f32 %v2299, %v3492
      %v3494 = vpop.f32.mrb[0].mxu0
      %v3495 = vadd.f32 %v2303, %v3494
      %v3496 = vpop.f32.mrb[0].mxu0
      %v3497 = vadd.f32 %v2299, %v3496
      %v3498 = vpop.f32.mrb[0].mxu0
      %v3499 = vadd.f32 %v2303, %v3498
      %3500 = vmatprep.mubr.bf16.mxu0 %v2210
      %3501 = vmatmul.mubr.bf16.gmra.mrb[0].mxu0 %v2209
      %v3502 = vpop.f32.mrb[0].mxu0
      %v3503 = vadd.f32 %v2299, %v3502
      %v3504 = vpop.f32.mrb[0].mxu0
      %v3505 = vadd.f32 %v2303, %v3504
      %v3506 = vpop.f32.mrb[0].mxu0
      %v3507 = vadd.f32 %v2299, %v3506
      %v3508 = vpop.f32.mrb[0].mxu0
      %v3509 = vadd.f32 %v2303, %v3508
      %3510 = vmatprep.mubr.bf16.mxu0 %v2217
      %3511 = vmatmul.mubr.bf16.gmra.mrb[0].mxu0 %v2216
      %v3512 = vpop.f32.mrb[0].mxu0
      %v3513 = vadd.f32 %v2299, %v3512
      %v3514 = vpop.f32.mrb[0].mxu0
      %v3515 = vadd.f32 %v2303, %v3514
      %v3516 = vpop.f32.mrb[0].mxu0
      %v3517 = vadd.f32 %v2299, %v3516
      %v3518 = vpop.f32.mrb[0].mxu0
      %v3519 = vadd.f32 %v2303, %v3518
      %3520 = vmatprep.mubr.bf16.mxu0 %v2224
      %3521 = vmatmul.mubr.bf16.gmra.mrb[0].mxu0 %v2223
      %v3522 = vpop.f32.mrb[0].mxu0
      %v3523 = vadd.f32 %v2299, %v3522
      %v3524 = vpop.f32.mrb[0].mxu0
      %v3525 = vadd.f32 %v2303, %v3524
      %v3526 = vpop.f32.mrb[0].mxu0
      %v3527 = vadd.f32 %v2299, %v3526
      %v3528 = vpop.f32.mrb[0].mxu0
      %v3529 = vadd.f32 %v2303, %v3528
      %3530 = vmatprep.mubr.bf16.mxu0 %v2231
      %3531 = vmatmul.mubr.bf16.gmra.mrb[0].mxu0 %v2230
      %v3532 = vpop.f32.mrb[0].mxu0
      %v3533 = vadd.f32 %v2299, %v3532
      %v3534 = vpop.f32.mrb[0].mxu0
      %v3535 = vadd.f32 %v2303, %v3534
      %v3536 = vpop.f32.mrb[0].mxu0
      %v3537 = vadd.f32 %v2299, %v3536
      %v3538 = vpop.f32.mrb[0].mxu0
      %v3539 = vadd.f32 %v2303, %v3538
      %3540 = vmatprep.mubr.bf16.mxu0 %v2238
      %3541 = vmatmul.mubr.bf16.gmra.mrb[0].mxu0 %v2237
      %v3542 = vpop.f32.mrb[0].mxu0
      %v3543 = vadd.f32 %v2299, %v3542
      %v3544 = vpop.f32.mrb[0].mxu0
      %v3545 = vadd.f32 %v2303, %v3544
      %v3546 = vpop.f32.mrb[0].mxu0
      %v3547 = vadd.f32 %v2299, %v3546
      %v3548 = vpop.f32.mrb[0].mxu0
      %v3549 = vadd.f32 %v2303, %v3548
      %3550 = vmatprep.mubr.bf16.mxu0 %v2245
      %3551 = vmatmul.mubr.bf16.gmra.mrb[0].mxu0 %v2244
      %v3552 = vpop.f32.mrb[0].mxu0
      %v3553 = vadd.f32 %v2299, %v3552
      %v3554 = vpop.f32.mrb[0].mxu0
      %v3555 = vadd.f32 %v2303, %v3554
      %v3556 = vpop.f32.mrb[0].mxu0
      %v3557 = vadd.f32 %v2299, %v3556
      %v3558 = vpop.f32.mrb[0].mxu0
      %v3559 = vadd.f32 %v2303, %v3558
      %3560 = vmatprep.mubr.bf16.mxu0 %v2252
      %3561 = vmatmul.mubr.bf16.gmra.mrb[0].mxu0 %v2251
      %v3562 = vpop.f32.mrb[0].mxu0
      %v3563 = vadd.f32 %v2299, %v3562
      %v3564 = vpop.f32.mrb[0].mxu0
      %v3565 = vadd.f32 %v2303, %v3564
      %v3566 = vpop.f32.mrb[0].mxu0
      %v3567 = vadd.f32 %v2299, %v3566
      %v3568 = vpop.f32.mrb[0].mxu0
      %v3569 = vadd.f32 %v2303, %v3568
      %3570 = vmatprep.mubr.bf16.mxu0 %v2259
      %3571 = vmatmul.mubr.bf16.gmra.mrb[0].mxu0 %v2258
      %v3572 = vpop.f32.mrb[0].mxu0
      %v3573 = vadd.f32 %v2299, %v3572
      %v3574 = vpop.f32.mrb[0].mxu0
      %v3575 = vadd.f32 %v2303, %v3574
      %v3576 = vpop.f32.mrb[0].mxu0
      %v3577 = vadd.f32 %v2299, %v3576
      %v3578 = vpop.f32.mrb[0].mxu0
      %v3579 = vadd.f32 %v2303, %v3578
      %3580 = vmatprep.mubr.bf16.mxu0 %v2266
      %3581 = vmatmul.mubr.bf16.gmra.mrb[0].mxu0 %v2265
      %v3582 = vpop.f32.mrb[0].mxu0
      %v3583 = vadd.f32 %v2299, %v3582
      %v3584 = vpop.f32.mrb[0].mxu0
      %v3585 = vadd.f32 %v2303, %v3584
      %v3586 = vpop.f32.mrb[0].mxu0
      %v3587 = vadd.f32 %v2299, %v3586
      %v3588 = vpop.f32.mrb[0].mxu0
      %v3589 = vadd.f32 %v2303, %v3588
      %3590 = vmatprep.mubr.bf16.mxu0 %v2273
      %3591 = vmatmul.mubr.bf16.gmra.mrb[0].mxu0 %v2272
      %v3592 = vpop.f32.mrb[0].mxu0
      %v3593 = vadd.f32 %v2299, %v3592
      %v3594 = vpop.f32.mrb[0].mxu0
      %v3595 = vadd.f32 %v2303, %v3594
      %v3596 = vpop.f32.mrb[0].mxu0
      %v3597 = vadd.f32 %v2299, %v3596
      %v3598 = vpop.f32.mrb[0].mxu0
      %v3599 = vadd.f32 %v2303, %v3598
      %3600 = vmatprep.mubr.bf16.mxu0 %v2280
      %3601 = vmatmul.mubr.bf16.gmra.mrb[0].mxu0 %v2279
      %v3602 = vpop.f32.mrb[0].mxu0
      %v3603 = vadd.f32 %v2299, %v3602
      %v3604 = vpop.f32.mrb[0].mxu0
      %v3605 = vadd.f32 %v2303, %v3604
      %v3606 = vpop.f32.mrb[0].mxu0
      %v3607 = vadd.f32 %v2299, %v3606
      %v3608 = vpop.f32.mrb[0].mxu0
      %v3609 = vadd.f32 %v2303, %v3608
      %3610 = vmatprep.mubr.bf16.mxu0 %v2287
      %3611 = vmatmul.mubr.bf16.gmra.mrb[0].mxu0 %v2286
      %v3612 = vpop.f32.mrb[0].mxu0
      %v3613 = vadd.f32 %v2299, %v3612
      %v3614 = vpop.f32.mrb[0].mxu0
      %v3615 = vadd.f32 %v2303, %v3614
      %v3616 = vpop.f32.mrb[0].mxu0
      %v3617 = vadd.f32 %v2299, %v3616
      %v3618 = vpop.f32.mrb[0].mxu0
      %v3619 = vadd.f32 %v2303, %v3618
      %3620 = vdwg.mxu0
      %3621 = vmatprep.subr.bf16.mxu0 %v3011
      %3622 = vmatpush1.bf16.msra.mxu0 %v3010
      %3623 = vmatprep.subr.bf16.mxu0 %v3015
      %3624 = vmatpush1.bf16.msra.mxu0 %v3014
      %3625 = vmatprep.subr.bf16.mxu0 %v3019
      %3626 = vmatpush1.bf16.msra.mxu0 %v3018
      %3627 = vmatprep.subr.bf16.mxu0 %v3023
      %3628 = vmatpush1.bf16.msra.mxu0 %v3022
      %3629 = vmatprep.subr.bf16.mxu0 %v3027
      %3630 = vmatpush1.bf16.msra.mxu0 %v3026
      %3631 = vmatprep.subr.bf16.mxu0 %v3031
      %3632 = vmatpush1.bf16.msra.mxu0 %v3030
      %3633 = vmatprep.subr.bf16.mxu0 %v3035
      %3634 = vmatpush1.bf16.msra.mxu0 %v3034
      %3635 = vmatprep.subr.bf16.mxu0 %v3039
      %3636 = vmatpush1.bf16.msra.mxu0 %v3038
      %3637 = vmatprep.subr.bf16.mxu0 %v3043
      %3638 = vmatpush1.bf16.msra.mxu0 %v3042
      %3639 = vmatprep.subr.bf16.mxu0 %v3047
      %3640 = vmatpush1.bf16.msra.mxu0 %v3046
      %3641 = vmatprep.subr.bf16.mxu0 %v3051
      %3642 = vmatpush1.bf16.msra.mxu0 %v3050
      %3643 = vmatprep.subr.bf16.mxu0 %v3055
      %3644 = vmatpush1.bf16.msra.mxu0 %v3054
      %3645 = vmatprep.subr.bf16.mxu0 %v3059
      %3646 = vmatpush1.bf16.msra.mxu0 %v3058
      %3647 = vmatprep.subr.bf16.mxu0 %v3063
      %3648 = vmatpush1.bf16.msra.mxu0 %v3062
      %3649 = vmatprep.subr.bf16.mxu0 %v3067
      %3650 = vmatpush1.bf16.msra.mxu0 %v3066
      %3651 = vmatprep.subr.bf16.mxu0 %v3071
      %3652 = vmatpush1.bf16.msra.mxu0 %v3070
      %3653 = vmatprep.mubr.bf16.mxu0 %v2184
      %3654 = vmatmul.mubr.bf16.gmra.mrb[0].mxu0 %v2183
      %v3655 = vpop.f32.mrb[0].mxu0
      %v3656 = vadd.f32 %v3463, %v3655
      %v3657 = vpop.f32.mrb[0].mxu0
      %v3658 = vadd.f32 %v3465, %v3657
      %v3659 = vpop.f32.mrb[0].mxu0
      %v3660 = vadd.f32 %v3467, %v3659
      %v3661 = vpop.f32.mrb[0].mxu0
      %v3662 = vadd.f32 %v3469, %v3661
      %3663 = vmatprep.mubr.bf16.mxu0 %v2191
      %3664 = vmatmul.mubr.bf16.gmra.mrb[0].mxu0 %v2190
      %v3665 = vpop.f32.mrb[0].mxu0
      %v3666 = vadd.f32 %v3473, %v3665
      %v3667 = vpop.f32.mrb[0].mxu0
      %v3668 = vadd.f32 %v3475, %v3667
      %v3669 = vpop.f32.mrb[0].mxu0
      %v3670 = vadd.f32 %v3477, %v3669
      %v3671 = vpop.f32.mrb[0].mxu0
      %v3672 = vadd.f32 %v3479, %v3671
      %3673 = vmatprep.mubr.bf16.mxu0 %v2198
      %3674 = vmatmul.mubr.bf16.gmra.mrb[0].mxu0 %v2197
      %v3675 = vpop.f32.mrb[0].mxu0
      %v3676 = vadd.f32 %v3483, %v3675
      %v3677 = vpop.f32.mrb[0].mxu0
      %v3678 = vadd.f32 %v3485, %v3677
      %v3679 = vpop.f32.mrb[0].mxu0
      %v3680 = vadd.f32 %v3487, %v3679
      %v3681 = vpop.f32.mrb[0].mxu0
      %v3682 = vadd.f32 %v3489, %v3681
      %3683 = vmatprep.mubr.bf16.mxu0 %v2205
      %3684 = vmatmul.mubr.bf16.gmra.mrb[0].mxu0 %v2204
      %v3685 = vpop.f32.mrb[0].mxu0
      %v3686 = vadd.f32 %v3493, %v3685
      %v3687 = vpop.f32.mrb[0].mxu0
      %v3688 = vadd.f32 %v3495, %v3687
      %v3689 = vpop.f32.mrb[0].mxu0
      %v3690 = vadd.f32 %v3497, %v3689
      %v3691 = vpop.f32.mrb[0].mxu0
      %v3692 = vadd.f32 %v3499, %v3691
      %3693 = vmatprep.mubr.bf16.mxu0 %v2212
      %3694 = vmatmul.mubr.bf16.gmra.mrb[0].mxu0 %v2211
      %v3695 = vpop.f32.mrb[0].mxu0
      %v3696 = vadd.f32 %v3503, %v3695
      %v3697 = vpop.f32.mrb[0].mxu0
      %v3698 = vadd.f32 %v3505, %v3697
      %v3699 = vpop.f32.mrb[0].mxu0
      %v3700 = vadd.f32 %v3507, %v3699
      %v3701 = vpop.f32.mrb[0].mxu0
      %v3702 = vadd.f32 %v3509, %v3701
      %3703 = vmatprep.mubr.bf16.mxu0 %v2219
      %3704 = vmatmul.mubr.bf16.gmra.mrb[0].mxu0 %v2218
      %v3705 = vpop.f32.mrb[0].mxu0
      %v3706 = vadd.f32 %v3513, %v3705
      %v3707 = vpop.f32.mrb[0].mxu0
      %v3708 = vadd.f32 %v3515, %v3707
      %v3709 = vpop.f32.mrb[0].mxu0
      %v3710 = vadd.f32 %v3517, %v3709
      %v3711 = vpop.f32.mrb[0].mxu0
      %v3712 = vadd.f32 %v3519, %v3711
      %3713 = vmatprep.mubr.bf16.mxu0 %v2226
      %3714 = vmatmul.mubr.bf16.gmra.mrb[0].mxu0 %v2225
      %v3715 = vpop.f32.mrb[0].mxu0
      %v3716 = vadd.f32 %v3523, %v3715
      %v3717 = vpop.f32.mrb[0].mxu0
      %v3718 = vadd.f32 %v3525, %v3717
      %v3719 = vpop.f32.mrb[0].mxu0
      %v3720 = vadd.f32 %v3527, %v3719
      %v3721 = vpop.f32.mrb[0].mxu0
      %v3722 = vadd.f32 %v3529, %v3721
      %3723 = vmatprep.mubr.bf16.mxu0 %v2233
      %3724 = vmatmul.mubr.bf16.gmra.mrb[0].mxu0 %v2232
      %v3725 = vpop.f32.mrb[0].mxu0
      %v3726 = vadd.f32 %v3533, %v3725
      %v3727 = vpop.f32.mrb[0].mxu0
      %v3728 = vadd.f32 %v3535, %v3727
      %v3729 = vpop.f32.mrb[0].mxu0
      %v3730 = vadd.f32 %v3537, %v3729
      %v3731 = vpop.f32.mrb[0].mxu0
      %v3732 = vadd.f32 %v3539, %v3731
      %3733 = vmatprep.mubr.bf16.mxu0 %v2240
      %3734 = vmatmul.mubr.bf16.gmra.mrb[0].mxu0 %v2239
      %v3735 = vpop.f32.mrb[0].mxu0
      %v3736 = vadd.f32 %v3543, %v3735
      %v3737 = vpop.f32.mrb[0].mxu0
      %v3738 = vadd.f32 %v3545, %v3737
      %v3739 = vpop.f32.mrb[0].mxu0
      %v3740 = vadd.f32 %v3547, %v3739
      %v3741 = vpop.f32.mrb[0].mxu0
      %v3742 = vadd.f32 %v3549, %v3741
      %3743 = vmatprep.mubr.bf16.mxu0 %v2247
      %3744 = vmatmul.mubr.bf16.gmra.mrb[0].mxu0 %v2246
      %v3745 = vpop.f32.mrb[0].mxu0
      %v3746 = vadd.f32 %v3553, %v3745
      %v3747 = vpop.f32.mrb[0].mxu0
      %v3748 = vadd.f32 %v3555, %v3747
      %v3749 = vpop.f32.mrb[0].mxu0
      %v3750 = vadd.f32 %v3557, %v3749
      %v3751 = vpop.f32.mrb[0].mxu0
      %v3752 = vadd.f32 %v3559, %v3751
      %3753 = vmatprep.mubr.bf16.mxu0 %v2254
      %3754 = vmatmul.mubr.bf16.gmra.mrb[0].mxu0 %v2253
      %v3755 = vpop.f32.mrb[0].mxu0
      %v3756 = vadd.f32 %v3563, %v3755
      %v3757 = vpop.f32.mrb[0].mxu0
      %v3758 = vadd.f32 %v3565, %v3757
      %v3759 = vpop.f32.mrb[0].mxu0
      %v3760 = vadd.f32 %v3567, %v3759
      %v3761 = vpop.f32.mrb[0].mxu0
      %v3762 = vadd.f32 %v3569, %v3761
      %3763 = vmatprep.mubr.bf16.mxu0 %v2261
      %3764 = vmatmul.mubr.bf16.gmra.mrb[0].mxu0 %v2260
      %v3765 = vpop.f32.mrb[0].mxu0
      %v3766 = vadd.f32 %v3573, %v3765
      %v3767 = vpop.f32.mrb[0].mxu0
      %v3768 = vadd.f32 %v3575, %v3767
      %v3769 = vpop.f32.mrb[0].mxu0
      %v3770 = vadd.f32 %v3577, %v3769
      %v3771 = vpop.f32.mrb[0].mxu0
      %v3772 = vadd.f32 %v3579, %v3771
      %3773 = vmatprep.mubr.bf16.mxu0 %v2268
      %3774 = vmatmul.mubr.bf16.gmra.mrb[0].mxu0 %v2267
      %v3775 = vpop.f32.mrb[0].mxu0
      %v3776 = vadd.f32 %v3583, %v3775
      %v3777 = vpop.f32.mrb[0].mxu0
      %v3778 = vadd.f32 %v3585, %v3777
      %v3779 = vpop.f32.mrb[0].mxu0
      %v3780 = vadd.f32 %v3587, %v3779
      %v3781 = vpop.f32.mrb[0].mxu0
      %v3782 = vadd.f32 %v3589, %v3781
      %3783 = vmatprep.mubr.bf16.mxu0 %v2275
      %3784 = vmatmul.mubr.bf16.gmra.mrb[0].mxu0 %v2274
      %v3785 = vpop.f32.mrb[0].mxu0
      %v3786 = vadd.f32 %v3593, %v3785
      %v3787 = vpop.f32.mrb[0].mxu0
      %v3788 = vadd.f32 %v3595, %v3787
      %v3789 = vpop.f32.mrb[0].mxu0
      %v3790 = vadd.f32 %v3597, %v3789
      %v3791 = vpop.f32.mrb[0].mxu0
      %v3792 = vadd.f32 %v3599, %v3791
      %3793 = vmatprep.mubr.bf16.mxu0 %v2282
      %3794 = vmatmul.mubr.bf16.gmra.mrb[0].mxu0 %v2281
      %v3795 = vpop.f32.mrb[0].mxu0
      %v3796 = vadd.f32 %v3603, %v3795
      %v3797 = vpop.f32.mrb[0].mxu0
      %v3798 = vadd.f32 %v3605, %v3797
      %v3799 = vpop.f32.mrb[0].mxu0
      %v3800 = vadd.f32 %v3607, %v3799
      %v3801 = vpop.f32.mrb[0].mxu0
      %v3802 = vadd.f32 %v3609, %v3801
      %3803 = vmatprep.mubr.bf16.mxu0 %v2289
      %3804 = vmatmul.mubr.bf16.gmra.mrb[0].mxu0 %v2288
      %v3805 = vpop.f32.mrb[0].mxu0
      %v3806 = vadd.f32 %v3613, %v3805
      %v3807 = vpop.f32.mrb[0].mxu0
      %v3808 = vadd.f32 %v3615, %v3807
      %v3809 = vpop.f32.mrb[0].mxu0
      %v3810 = vadd.f32 %v3617, %v3809
      %v3811 = vpop.f32.mrb[0].mxu0
      %v3812 = vadd.f32 %v3619, %v3811
      %3813 = vdwg.mxu0
      %3814 = vmatprep.subr.bf16.mxu0 %v3075
      %3815 = vmatpush1.bf16.msra.mxu0 %v3074
      %3816 = vmatprep.subr.bf16.mxu0 %v3079
      %3817 = vmatpush1.bf16.msra.mxu0 %v3078
      %3818 = vmatprep.subr.bf16.mxu0 %v3083
      %3819 = vmatpush1.bf16.msra.mxu0 %v3082
      %3820 = vmatprep.subr.bf16.mxu0 %v3087
      %3821 = vmatpush1.bf16.msra.mxu0 %v3086
      %3822 = vmatprep.subr.bf16.mxu0 %v3091
      %3823 = vmatpush1.bf16.msra.mxu0 %v3090
      %3824 = vmatprep.subr.bf16.mxu0 %v3095
      %3825 = vmatpush1.bf16.msra.mxu0 %v3094
      %3826 = vmatprep.subr.bf16.mxu0 %v3099
      %3827 = vmatpush1.bf16.msra.mxu0 %v3098
      %3828 = vmatprep.subr.bf16.mxu0 %v3103
      %3829 = vmatpush1.bf16.msra.mxu0 %v3102
      %3830 = vmatprep.subr.bf16.mxu0 %v3107
      %3831 = vmatpush1.bf16.msra.mxu0 %v3106
      %3832 = vmatprep.subr.bf16.mxu0 %v3111
      %3833 = vmatpush1.bf16.msra.mxu0 %v3110
      %3834 = vmatprep.subr.bf16.mxu0 %v3115
      %3835 = vmatpush1.bf16.msra.mxu0 %v3114
      %3836 = vmatprep.subr.bf16.mxu0 %v3119
      %3837 = vmatpush1.bf16.msra.mxu0 %v3118
      %3838 = vmatprep.subr.bf16.mxu0 %v3123
      %3839 = vmatpush1.bf16.msra.mxu0 %v3122
      %3840 = vmatprep.subr.bf16.mxu0 %v3127
      %3841 = vmatpush1.bf16.msra.mxu0 %v3126
      %3842 = vmatprep.subr.bf16.mxu0 %v3131
      %3843 = vmatpush1.bf16.msra.mxu0 %v3130
      %3844 = vmatprep.subr.bf16.mxu0 %v3135
      %3845 = vmatpush1.bf16.msra.mxu0 %v3134
      %3846 = vmatprep.mubr.bf16.mxu0 %v2186
      %3847 = vmatmul.mubr.bf16.gmra.mrb[0].mxu0 %v2185
      %v3848 = vpop.f32.mrb[0].mxu0
      %v3849 = vadd.f32 %v3656, %v3848
      %v3850 = vpop.f32.mrb[0].mxu0
      %v3851 = vadd.f32 %v3658, %v3850
      %v3852 = vpop.f32.mrb[0].mxu0
      %v3853 = vadd.f32 %v3660, %v3852
      %v3854 = vpop.f32.mrb[0].mxu0
      %v3855 = vadd.f32 %v3662, %v3854
      %3856 = vmatprep.mubr.bf16.mxu0 %v2193
      %3857 = vmatmul.mubr.bf16.gmra.mrb[0].mxu0 %v2192
      %v3858 = vpop.f32.mrb[0].mxu0
      %v3859 = vadd.f32 %v3666, %v3858
      %v3860 = vpop.f32.mrb[0].mxu0
      %v3861 = vadd.f32 %v3668, %v3860
      %v3862 = vpop.f32.mrb[0].mxu0
      %v3863 = vadd.f32 %v3670, %v3862
      %v3864 = vpop.f32.mrb[0].mxu0
      %v3865 = vadd.f32 %v3672, %v3864
      %3866 = vmatprep.mubr.bf16.mxu0 %v2200
      %3867 = vmatmul.mubr.bf16.gmra.mrb[0].mxu0 %v2199
      %v3868 = vpop.f32.mrb[0].mxu0
      %v3869 = vadd.f32 %v3676, %v3868
      %v3870 = vpop.f32.mrb[0].mxu0
      %v3871 = vadd.f32 %v3678, %v3870
      %v3872 = vpop.f32.mrb[0].mxu0
      %v3873 = vadd.f32 %v3680, %v3872
      %v3874 = vpop.f32.mrb[0].mxu0
      %v3875 = vadd.f32 %v3682, %v3874
      %3876 = vmatprep.mubr.bf16.mxu0 %v2207
      %3877 = vmatmul.mubr.bf16.gmra.mrb[0].mxu0 %v2206
      %v3878 = vpop.f32.mrb[0].mxu0
      %v3879 = vadd.f32 %v3686, %v3878
      %v3880 = vpop.f32.mrb[0].mxu0
      %v3881 = vadd.f32 %v3688, %v3880
      %v3882 = vpop.f32.mrb[0].mxu0
      %v3883 = vadd.f32 %v3690, %v3882
      %v3884 = vpop.f32.mrb[0].mxu0
      %v3885 = vadd.f32 %v3692, %v3884
      %3886 = vmatprep.mubr.bf16.mxu0 %v2214
      %3887 = vmatmul.mubr.bf16.gmra.mrb[0].mxu0 %v2213
      %v3888 = vpop.f32.mrb[0].mxu0
      %v3889 = vadd.f32 %v3696, %v3888
      %v3890 = vpop.f32.mrb[0].mxu0
      %v3891 = vadd.f32 %v3698, %v3890
      %v3892 = vpop.f32.mrb[0].mxu0
      %v3893 = vadd.f32 %v3700, %v3892
      %v3894 = vpop.f32.mrb[0].mxu0
      %v3895 = vadd.f32 %v3702, %v3894
      %3896 = vmatprep.mubr.bf16.mxu0 %v2221
      %3897 = vmatmul.mubr.bf16.gmra.mrb[0].mxu0 %v2220
      %v3898 = vpop.f32.mrb[0].mxu0
      %v3899 = vadd.f32 %v3706, %v3898
      %v3900 = vpop.f32.mrb[0].mxu0
      %v3901 = vadd.f32 %v3708, %v3900
      %v3902 = vpop.f32.mrb[0].mxu0
      %v3903 = vadd.f32 %v3710, %v3902
      %v3904 = vpop.f32.mrb[0].mxu0
      %v3905 = vadd.f32 %v3712, %v3904
      %3906 = vmatprep.mubr.bf16.mxu0 %v2228
      %3907 = vmatmul.mubr.bf16.gmra.mrb[0].mxu0 %v2227
      %v3908 = vpop.f32.mrb[0].mxu0
      %v3909 = vadd.f32 %v3716, %v3908
      %v3910 = vpop.f32.mrb[0].mxu0
      %v3911 = vadd.f32 %v3718, %v3910
      %v3912 = vpop.f32.mrb[0].mxu0
      %v3913 = vadd.f32 %v3720, %v3912
      %v3914 = vpop.f32.mrb[0].mxu0
      %v3915 = vadd.f32 %v3722, %v3914
      %3916 = vmatprep.mubr.bf16.mxu0 %v2235
      %3917 = vmatmul.mubr.bf16.gmra.mrb[0].mxu0 %v2234
      %v3918 = vpop.f32.mrb[0].mxu0
      %v3919 = vadd.f32 %v3726, %v3918
      %v3920 = vpop.f32.mrb[0].mxu0
      %v3921 = vadd.f32 %v3728, %v3920
      %v3922 = vpop.f32.mrb[0].mxu0
      %v3923 = vadd.f32 %v3730, %v3922
      %v3924 = vpop.f32.mrb[0].mxu0
      %v3925 = vadd.f32 %v3732, %v3924
      %3926 = vmatprep.mubr.bf16.mxu0 %v2242
      %3927 = vmatmul.mubr.bf16.gmra.mrb[0].mxu0 %v2241
      %v3928 = vpop.f32.mrb[0].mxu0
      %v3929 = vadd.f32 %v3736, %v3928
      %v3930 = vpop.f32.mrb[0].mxu0
      %v3931 = vadd.f32 %v3738, %v3930
      %v3932 = vpop.f32.mrb[0].mxu0
      %v3933 = vadd.f32 %v3740, %v3932
      %v3934 = vpop.f32.mrb[0].mxu0
      %v3935 = vadd.f32 %v3742, %v3934
      %3936 = vmatprep.mubr.bf16.mxu0 %v2249
      %3937 = vmatmul.mubr.bf16.gmra.mrb[0].mxu0 %v2248
      %v3938 = vpop.f32.mrb[0].mxu0
      %v3939 = vadd.f32 %v3746, %v3938
      %v3940 = vpop.f32.mrb[0].mxu0
      %v3941 = vadd.f32 %v3748, %v3940
      %v3942 = vpop.f32.mrb[0].mxu0
      %v3943 = vadd.f32 %v3750, %v3942
      %v3944 = vpop.f32.mrb[0].mxu0
      %v3945 = vadd.f32 %v3752, %v3944
      %3946 = vmatprep.mubr.bf16.mxu0 %v2256
      %3947 = vmatmul.mubr.bf16.gmra.mrb[0].mxu0 %v2255
      %v3948 = vpop.f32.mrb[0].mxu0
      %v3949 = vadd.f32 %v3756, %v3948
      %v3950 = vpop.f32.mrb[0].mxu0
      %v3951 = vadd.f32 %v3758, %v3950
      %v3952 = vpop.f32.mrb[0].mxu0
      %v3953 = vadd.f32 %v3760, %v3952
      %v3954 = vpop.f32.mrb[0].mxu0
      %v3955 = vadd.f32 %v3762, %v3954
      %3956 = vmatprep.mubr.bf16.mxu0 %v2263
      %3957 = vmatmul.mubr.bf16.gmra.mrb[0].mxu0 %v2262
      %v3958 = vpop.f32.mrb[0].mxu0
      %v3959 = vadd.f32 %v3766, %v3958
      %v3960 = vpop.f32.mrb[0].mxu0
      %v3961 = vadd.f32 %v3768, %v3960
      %v3962 = vpop.f32.mrb[0].mxu0
      %v3963 = vadd.f32 %v3770, %v3962
      %v3964 = vpop.f32.mrb[0].mxu0
      %v3965 = vadd.f32 %v3772, %v3964
      %3966 = vmatprep.mubr.bf16.mxu0 %v2270
      %3967 = vmatmul.mubr.bf16.gmra.mrb[0].mxu0 %v2269
      %v3968 = vpop.f32.mrb[0].mxu0
      %v3969 = vadd.f32 %v3776, %v3968
      %v3970 = vpop.f32.mrb[0].mxu0
      %v3971 = vadd.f32 %v3778, %v3970
      %v3972 = vpop.f32.mrb[0].mxu0
      %v3973 = vadd.f32 %v3780, %v3972
      %v3974 = vpop.f32.mrb[0].mxu0
      %v3975 = vadd.f32 %v3782, %v3974
      %3976 = vmatprep.mubr.bf16.mxu0 %v2277
      %3977 = vmatmul.mubr.bf16.gmra.mrb[0].mxu0 %v2276
      %v3978 = vpop.f32.mrb[0].mxu0
      %v3979 = vadd.f32 %v3786, %v3978
      %v3980 = vpop.f32.mrb[0].mxu0
      %v3981 = vadd.f32 %v3788, %v3980
      %v3982 = vpop.f32.mrb[0].mxu0
      %v3983 = vadd.f32 %v3790, %v3982
      %v3984 = vpop.f32.mrb[0].mxu0
      %v3985 = vadd.f32 %v3792, %v3984
      %3986 = vmatprep.mubr.bf16.mxu0 %v2284
      %3987 = vmatmul.mubr.bf16.gmra.mrb[0].mxu0 %v2283
      %v3988 = vpop.f32.mrb[0].mxu0
      %v3989 = vadd.f32 %v3796, %v3988
      %v3990 = vpop.f32.mrb[0].mxu0
      %v3991 = vadd.f32 %v3798, %v3990
      %v3992 = vpop.f32.mrb[0].mxu0
      %v3993 = vadd.f32 %v3800, %v3992
      %v3994 = vpop.f32.mrb[0].mxu0
      %v3995 = vadd.f32 %v3802, %v3994
      %3996 = vmatprep.mubr.bf16.mxu0 %v2291
      %3997 = vmatmul.mubr.bf16.gmra.mrb[0].mxu0 %v2290
      %v3998 = vpop.f32.mrb[0].mxu0
      %v3999 = vadd.f32 %v3806, %v3998
      %v4000 = vpop.f32.mrb[0].mxu0
      %v4001 = vadd.f32 %v3808, %v4000
      %v4002 = vpop.f32.mrb[0].mxu0
      %v4003 = vadd.f32 %v3810, %v4002
      %v4004 = vpop.f32.mrb[0].mxu0
      %v4005 = vadd.f32 %v3812, %v4004
      %4006 = vdwg.mxu0
      %4007 = vmatprep.subr.bf16.mxu0 %v3139
      %4008 = vmatpush1.bf16.msra.mxu0 %v3138
      %4009 = vmatprep.subr.bf16.mxu0 %v3143
      %4010 = vmatpush1.bf16.msra.mxu0 %v3142
      %4011 = vmatprep.subr.bf16.mxu0 %v3147
      %4012 = vmatpush1.bf16.msra.mxu0 %v3146
      %4013 = vmatprep.subr.bf16.mxu0 %v3151
      %4014 = vmatpush1.bf16.msra.mxu0 %v3150
      %4015 = vmatprep.subr.bf16.mxu0 %v3420
      %4016 = vmatpush1.bf16.msra.mxu0 %v3417
      %4017 = vmatprep.subr.bf16.mxu0 0
      %4018 = vmatpush1.bf16.msra.mxu0 0
      %4019 = vmatprep.subr.bf16.mxu0 0
      %4020 = vmatpush1.bf16.msra.mxu0 0
      %4021 = vmatprep.subr.bf16.mxu0 0
      %4022 = vmatpush1.bf16.msra.mxu0 0
      %4023 = vmatprep.subr.bf16.mxu0 0
      %4024 = vmatpush1.bf16.msra.mxu0 0
      %4025 = vmatprep.subr.bf16.mxu0 0
      %4026 = vmatpush1.bf16.msra.mxu0 0
      %4027 = vmatprep.subr.bf16.mxu0 0
      %4028 = vmatpush1.bf16.msra.mxu0 0
      %4029 = vmatprep.subr.bf16.mxu0 0
      %4030 = vmatpush1.bf16.msra.mxu0 0
      %4031 = vmatprep.subr.bf16.mxu0 0
      %4032 = vmatpush1.bf16.msra.mxu0 0
      %4033 = vmatprep.subr.bf16.mxu0 0
      %4034 = vmatpush1.bf16.msra.mxu0 0
      %4035 = vmatprep.subr.bf16.mxu0 0
      %4036 = vmatpush1.bf16.msra.mxu0 0
      %4037 = vmatprep.subr.bf16.mxu0 0
      %4038 = vmatpush1.bf16.msra.mxu0 0
      %4039 = vmatprep.mubr.bf16.mxu0 0
      %4040 = vmatmul.mubr.bf16.gmra.mrb[0].mxu0 %v3368
      %v4041 = vpop.f32.mrb[0].mxu0
      %v4042 = vadd.f32 %v3849, %v4041
      %v4043 = vpop.f32.mrb[0].mxu0
      %v4044 = vadd.f32 %v3851, %v4043
      %v4045 = vpop.f32.mrb[0].mxu0
      %v4046 = vadd.f32 %v3853, %v4045
      %v4047 = vpop.f32.mrb[0].mxu0
      %v4048 = vadd.f32 %v3855, %v4047
      %4049 = vmatprep.mubr.bf16.mxu0 0
      %4050 = vmatmul.mubr.bf16.gmra.mrb[0].mxu0 %v3371
      %v4051 = vpop.f32.mrb[0].mxu0
      %v4052 = vadd.f32 %v3859, %v4051
      %v4053 = vpop.f32.mrb[0].mxu0
      %v4054 = vadd.f32 %v3861, %v4053
      %v4055 = vpop.f32.mrb[0].mxu0
      %v4056 = vadd.f32 %v3863, %v4055
      %v4057 = vpop.f32.mrb[0].mxu0
      %v4058 = vadd.f32 %v3865, %v4057
      %4059 = vmatprep.mubr.bf16.mxu0 0
      %4060 = vmatmul.mubr.bf16.gmra.mrb[0].mxu0 %v3374
      %v4061 = vpop.f32.mrb[0].mxu0
      %v4062 = vadd.f32 %v3869, %v4061
      %v4063 = vpop.f32.mrb[0].mxu0
      %v4064 = vadd.f32 %v3871, %v4063
      %v4065 = vpop.f32.mrb[0].mxu0
      %v4066 = vadd.f32 %v3873, %v4065
      %v4067 = vpop.f32.mrb[0].mxu0
      %v4068 = vadd.f32 %v3875, %v4067
      %4069 = vmatprep.mubr.bf16.mxu0 0
      %4070 = vmatmul.mubr.bf16.gmra.mrb[0].mxu0 %v3377
      %v4071 = vpop.f32.mrb[0].mxu0
      %v4072 = vadd.f32 %v3879, %v4071
      %v4073 = vpop.f32.mrb[0].mxu0
      %v4074 = vadd.f32 %v3881, %v4073
      %v4075 = vpop.f32.mrb[0].mxu0
      %v4076 = vadd.f32 %v3883, %v4075
      %v4077 = vpop.f32.mrb[0].mxu0
      %v4078 = vadd.f32 %v3885, %v4077
      %4079 = vmatprep.mubr.bf16.mxu0 0
      %4080 = vmatmul.mubr.bf16.gmra.mrb[0].mxu0 %v3380
      %v4081 = vpop.f32.mrb[0].mxu0
      %v4082 = vadd.f32 %v3889, %v4081
      %v4083 = vpop.f32.mrb[0].mxu0
      %v4084 = vadd.f32 %v3891, %v4083
      %v4085 = vpop.f32.mrb[0].mxu0
      %v4086 = vadd.f32 %v3893, %v4085
      %v4087 = vpop.f32.mrb[0].mxu0
      %v4088 = vadd.f32 %v3895, %v4087
      %4089 = vmatprep.mubr.bf16.mxu0 0
      %4090 = vmatmul.mubr.bf16.gmra.mrb[0].mxu0 %v3383
      %v4091 = vpop.f32.mrb[0].mxu0
      %v4092 = vadd.f32 %v3899, %v4091
      %v4093 = vpop.f32.mrb[0].mxu0
      %v4094 = vadd.f32 %v3901, %v4093
      %v4095 = vpop.f32.mrb[0].mxu0
      %v4096 = vadd.f32 %v3903, %v4095
      %v4097 = vpop.f32.mrb[0].mxu0
      %v4098 = vadd.f32 %v3905, %v4097
      %4099 = vmatprep.mubr.bf16.mxu0 0
      %4100 = vmatmul.mubr.bf16.gmra.mrb[0].mxu0 %v3386
      %v4101 = vpop.f32.mrb[0].mxu0
      %v4102 = vadd.f32 %v3909, %v4101
      %v4103 = vpop.f32.mrb[0].mxu0
      %v4104 = vadd.f32 %v3911, %v4103
      %v4105 = vpop.f32.mrb[0].mxu0
      %v4106 = vadd.f32 %v3913, %v4105
      %v4107 = vpop.f32.mrb[0].mxu0
      %v4108 = vadd.f32 %v3915, %v4107
      %4109 = vmatprep.mubr.bf16.mxu0 0
      %4110 = vmatmul.mubr.bf16.gmra.mrb[0].mxu0 %v3389
      %v4111 = vpop.f32.mrb[0].mxu0
      %v4112 = vadd.f32 %v3919, %v4111
      %v4113 = vpop.f32.mrb[0].mxu0
      %v4114 = vadd.f32 %v3921, %v4113
      %v4115 = vpop.f32.mrb[0].mxu0
      %v4116 = vadd.f32 %v3923, %v4115
      %v4117 = vpop.f32.mrb[0].mxu0
      %v4118 = vadd.f32 %v3925, %v4117
      %4119 = vmatprep.mubr.bf16.mxu0 0
      %4120 = vmatmul.mubr.bf16.gmra.mrb[0].mxu0 %v3392
      %v4121 = vpop.f32.mrb[0].mxu0
      %v4122 = vadd.f32 %v3929, %v4121
      %v4123 = vpop.f32.mrb[0].mxu0
      %v4124 = vadd.f32 %v3931, %v4123
      %v4125 = vpop.f32.mrb[0].mxu0
      %v4126 = vadd.f32 %v3933, %v4125
      %v4127 = vpop.f32.mrb[0].mxu0
      %v4128 = vadd.f32 %v3935, %v4127
      %4129 = vmatprep.mubr.bf16.mxu0 0
      %4130 = vmatmul.mubr.bf16.gmra.mrb[0].mxu0 %v3395
      %v4131 = vpop.f32.mrb[0].mxu0
      %v4132 = vadd.f32 %v3939, %v4131
      %v4133 = vpop.f32.mrb[0].mxu0
      %v4134 = vadd.f32 %v3941, %v4133
      %v4135 = vpop.f32.mrb[0].mxu0
      %v4136 = vadd.f32 %v3943, %v4135
      %v4137 = vpop.f32.mrb[0].mxu0
      %v4138 = vadd.f32 %v3945, %v4137
      %4139 = vmatprep.mubr.bf16.mxu0 0
      %4140 = vmatmul.mubr.bf16.gmra.mrb[0].mxu0 %v3398
      %v4141 = vpop.f32.mrb[0].mxu0
      %v4142 = vadd.f32 %v3949, %v4141
      %v4143 = vpop.f32.mrb[0].mxu0
      %v4144 = vadd.f32 %v3951, %v4143
      %v4145 = vpop.f32.mrb[0].mxu0
      %v4146 = vadd.f32 %v3953, %v4145
      %v4147 = vpop.f32.mrb[0].mxu0
      %v4148 = vadd.f32 %v3955, %v4147
      %4149 = vmatprep.mubr.bf16.mxu0 0
      %4150 = vmatmul.mubr.bf16.gmra.mrb[0].mxu0 %v3401
      %v4151 = vpop.f32.mrb[0].mxu0
      %v4152 = vadd.f32 %v3959, %v4151
      %v4153 = vpop.f32.mrb[0].mxu0
      %v4154 = vadd.f32 %v3961, %v4153
      %v4155 = vpop.f32.mrb[0].mxu0
      %v4156 = vadd.f32 %v3963, %v4155
      %v4157 = vpop.f32.mrb[0].mxu0
      %v4158 = vadd.f32 %v3965, %v4157
      %4159 = vmatprep.mubr.bf16.mxu0 0
      %4160 = vmatmul.mubr.bf16.gmra.mrb[0].mxu0 %v3404
      %v4161 = vpop.f32.mrb[0].mxu0
      %v4162 = vadd.f32 %v3969, %v4161
      %v4163 = vpop.f32.mrb[0].mxu0
      %v4164 = vadd.f32 %v3971, %v4163
      %v4165 = vpop.f32.mrb[0].mxu0
      %v4166 = vadd.f32 %v3973, %v4165
      %v4167 = vpop.f32.mrb[0].mxu0
      %v4168 = vadd.f32 %v3975, %v4167
      %4169 = vmatprep.mubr.bf16.mxu0 0
      %4170 = vmatmul.mubr.bf16.gmra.mrb[0].mxu0 %v3407
      %v4171 = vpop.f32.mrb[0].mxu0
      %v4172 = vadd.f32 %v3979, %v4171
      %v4173 = vpop.f32.mrb[0].mxu0
      %v4174 = vadd.f32 %v3981, %v4173
      %v4175 = vpop.f32.mrb[0].mxu0
      %v4176 = vadd.f32 %v3983, %v4175
      %v4177 = vpop.f32.mrb[0].mxu0
      %v4178 = vadd.f32 %v3985, %v4177
      %4179 = vmatprep.mubr.bf16.mxu0 0
      %4180 = vmatmul.mubr.bf16.gmra.mrb[0].mxu0 %v3410
      %v4181 = vpop.f32.mrb[0].mxu0
      %v4182 = vadd.f32 %v3989, %v4181
      %v4183 = vpop.f32.mrb[0].mxu0
      %v4184 = vadd.f32 %v3991, %v4183
      %v4185 = vpop.f32.mrb[0].mxu0
      %v4186 = vadd.f32 %v3993, %v4185
      %v4187 = vpop.f32.mrb[0].mxu0
      %v4188 = vadd.f32 %v3995, %v4187
      %4189 = vmatprep.mubr.bf16.mxu0 0
      %4190 = vmatmul.mubr.bf16.gmra.mrb[0].mxu0 %v3413
      %v4191 = vpop.f32.mrb[0].mxu0
      %v4192 = vadd.f32 %v3999, %v4191
      %v4193 = vpop.f32.mrb[0].mxu0
      %v4194 = vadd.f32 %v4001, %v4193
      %v4195 = vpop.f32.mrb[0].mxu0
      %v4196 = vadd.f32 %v4003, %v4195
      %v4197 = vpop.f32.mrb[0].mxu0
      %v4198 = vadd.f32 %v4005, %v4197
      %4199 = vdwg.mxu0
      %4200 = vmatprep.subr.bf16.mxu0 %v2949
      %4201 = vmatpush1.bf16.msra.mxu0 %v2948
      %4202 = vmatprep.subr.bf16.mxu0 %v2953
      %4203 = vmatpush1.bf16.msra.mxu0 %v2952
      %4204 = vmatprep.subr.bf16.mxu0 %v2957
      %4205 = vmatpush1.bf16.msra.mxu0 %v2956
      %4206 = vmatprep.subr.bf16.mxu0 %v2961
      %4207 = vmatpush1.bf16.msra.mxu0 %v2960
      %4208 = vmatprep.subr.bf16.mxu0 %v2965
      %4209 = vmatpush1.bf16.msra.mxu0 %v2964
      %4210 = vmatprep.subr.bf16.mxu0 %v2969
      %4211 = vmatpush1.bf16.msra.mxu0 %v2968
      %4212 = vmatprep.subr.bf16.mxu0 %v2973
      %4213 = vmatpush1.bf16.msra.mxu0 %v2972
      %4214 = vmatprep.subr.bf16.mxu0 %v2977
      %4215 = vmatpush1.bf16.msra.mxu0 %v2976
      %4216 = vmatprep.subr.bf16.mxu0 %v2981
      %4217 = vmatpush1.bf16.msra.mxu0 %v2980
      %4218 = vmatprep.subr.bf16.mxu0 %v2985
      %4219 = vmatpush1.bf16.msra.mxu0 %v2984
      %4220 = vmatprep.subr.bf16.mxu0 %v2989
      %4221 = vmatpush1.bf16.msra.mxu0 %v2988
      %4222 = vmatprep.subr.bf16.mxu0 %v2993
      %4223 = vmatpush1.bf16.msra.mxu0 %v2992
      %4224 = vmatprep.subr.bf16.mxu0 %v2997
      %4225 = vmatpush1.bf16.msra.mxu0 %v2996
      %4226 = vmatprep.subr.bf16.mxu0 %v3001
      %4227 = vmatpush1.bf16.msra.mxu0 %v3000
      %4228 = vmatprep.subr.bf16.mxu0 %v3005
      %4229 = vmatpush1.bf16.msra.mxu0 %v3004
      %4230 = vmatprep.subr.bf16.mxu0 %v3009
      %4231 = vmatpush1.bf16.msra.mxu0 %v3008
      %4232 = vmatprep.mubr.bf16.mxu0 %v2182
      %4233 = vmatmul.mubr.bf16.gmra.mrb[0].mxu0 %v2181
      %v4234 = vpop.f32.mrb[0].mxu0
      %v4235 = vadd.f32 %v2307, %v4234
      %v4236 = vpop.f32.mrb[0].mxu0
      %v4237 = vadd.f32 %v2311, %v4236
      %v4238 = vpop.f32.mrb[0].mxu0
      %v4239 = vadd.f32 %v2307, %v4238
      %v4240 = vpop.f32.mrb[0].mxu0
      %v4241 = vadd.f32 %v2311, %v4240
      %4242 = vmatprep.mubr.bf16.mxu0 %v2189
      %4243 = vmatmul.mubr.bf16.gmra.mrb[0].mxu0 %v2188
      %v4244 = vpop.f32.mrb[0].mxu0
      %v4245 = vadd.f32 %v2307, %v4244
      %v4246 = vpop.f32.mrb[0].mxu0
      %v4247 = vadd.f32 %v2311, %v4246
      %v4248 = vpop.f32.mrb[0].mxu0
      %v4249 = vadd.f32 %v2307, %v4248
      %v4250 = vpop.f32.mrb[0].mxu0
      %v4251 = vadd.f32 %v2311, %v4250
      %4252 = vmatprep.mubr.bf16.mxu0 %v2196
      %4253 = vmatmul.mubr.bf16.gmra.mrb[0].mxu0 %v2195
      %v4254 = vpop.f32.mrb[0].mxu0
      %v4255 = vadd.f32 %v2307, %v4254
      %v4256 = vpop.f32.mrb[0].mxu0
      %v4257 = vadd.f32 %v2311, %v4256
      %v4258 = vpop.f32.mrb[0].mxu0
      %v4259 = vadd.f32 %v2307, %v4258
      %v4260 = vpop.f32.mrb[0].mxu0
      %v4261 = vadd.f32 %v2311, %v4260
      %4262 = vmatprep.mubr.bf16.mxu0 %v2203
      %4263 = vmatmul.mubr.bf16.gmra.mrb[0].mxu0 %v2202
      %v4264 = vpop.f32.mrb[0].mxu0
      %v4265 = vadd.f32 %v2307, %v4264
      %v4266 = vpop.f32.mrb[0].mxu0
      %v4267 = vadd.f32 %v2311, %v4266
      %v4268 = vpop.f32.mrb[0].mxu0
      %v4269 = vadd.f32 %v2307, %v4268
      %v4270 = vpop.f32.mrb[0].mxu0
      %v4271 = vadd.f32 %v2311, %v4270
      %4272 = vmatprep.mubr.bf16.mxu0 %v2210
      %4273 = vmatmul.mubr.bf16.gmra.mrb[0].mxu0 %v2209
      %v4274 = vpop.f32.mrb[0].mxu0
      %v4275 = vadd.f32 %v2307, %v4274
      %v4276 = vpop.f32.mrb[0].mxu0
      %v4277 = vadd.f32 %v2311, %v4276
      %v4278 = vpop.f32.mrb[0].mxu0
      %v4279 = vadd.f32 %v2307, %v4278
      %v4280 = vpop.f32.mrb[0].mxu0
      %v4281 = vadd.f32 %v2311, %v4280
      %4282 = vmatprep.mubr.bf16.mxu0 %v2217
      %4283 = vmatmul.mubr.bf16.gmra.mrb[0].mxu0 %v2216
      %v4284 = vpop.f32.mrb[0].mxu0
      %v4285 = vadd.f32 %v2307, %v4284
      %v4286 = vpop.f32.mrb[0].mxu0
      %v4287 = vadd.f32 %v2311, %v4286
      %v4288 = vpop.f32.mrb[0].mxu0
      %v4289 = vadd.f32 %v2307, %v4288
      %v4290 = vpop.f32.mrb[0].mxu0
      %v4291 = vadd.f32 %v2311, %v4290
      %4292 = vmatprep.mubr.bf16.mxu0 %v2224
      %4293 = vmatmul.mubr.bf16.gmra.mrb[0].mxu0 %v2223
      %v4294 = vpop.f32.mrb[0].mxu0
      %v4295 = vadd.f32 %v2307, %v4294
      %v4296 = vpop.f32.mrb[0].mxu0
      %v4297 = vadd.f32 %v2311, %v4296
      %v4298 = vpop.f32.mrb[0].mxu0
      %v4299 = vadd.f32 %v2307, %v4298
      %v4300 = vpop.f32.mrb[0].mxu0
      %v4301 = vadd.f32 %v2311, %v4300
      %4302 = vmatprep.mubr.bf16.mxu0 %v2231
      %4303 = vmatmul.mubr.bf16.gmra.mrb[0].mxu0 %v2230
      %v4304 = vpop.f32.mrb[0].mxu0
      %v4305 = vadd.f32 %v2307, %v4304
      %v4306 = vpop.f32.mrb[0].mxu0
      %v4307 = vadd.f32 %v2311, %v4306
      %v4308 = vpop.f32.mrb[0].mxu0
      %v4309 = vadd.f32 %v2307, %v4308
      %v4310 = vpop.f32.mrb[0].mxu0
      %v4311 = vadd.f32 %v2311, %v4310
      %4312 = vmatprep.mubr.bf16.mxu0 %v2238
      %4313 = vmatmul.mubr.bf16.gmra.mrb[0].mxu0 %v2237
      %v4314 = vpop.f32.mrb[0].mxu0
      %v4315 = vadd.f32 %v2307, %v4314
      %v4316 = vpop.f32.mrb[0].mxu0
      %v4317 = vadd.f32 %v2311, %v4316
      %v4318 = vpop.f32.mrb[0].mxu0
      %v4319 = vadd.f32 %v2307, %v4318
      %v4320 = vpop.f32.mrb[0].mxu0
      %v4321 = vadd.f32 %v2311, %v4320
      %4322 = vmatprep.mubr.bf16.mxu0 %v2245
      %4323 = vmatmul.mubr.bf16.gmra.mrb[0].mxu0 %v2244
      %v4324 = vpop.f32.mrb[0].mxu0
      %v4325 = vadd.f32 %v2307, %v4324
      %v4326 = vpop.f32.mrb[0].mxu0
      %v4327 = vadd.f32 %v2311, %v4326
      %v4328 = vpop.f32.mrb[0].mxu0
      %v4329 = vadd.f32 %v2307, %v4328
      %v4330 = vpop.f32.mrb[0].mxu0
      %v4331 = vadd.f32 %v2311, %v4330
      %4332 = vmatprep.mubr.bf16.mxu0 %v2252
      %4333 = vmatmul.mubr.bf16.gmra.mrb[0].mxu0 %v2251
      %v4334 = vpop.f32.mrb[0].mxu0
      %v4335 = vadd.f32 %v2307, %v4334
      %v4336 = vpop.f32.mrb[0].mxu0
      %v4337 = vadd.f32 %v2311, %v4336
      %v4338 = vpop.f32.mrb[0].mxu0
      %v4339 = vadd.f32 %v2307, %v4338
      %v4340 = vpop.f32.mrb[0].mxu0
      %v4341 = vadd.f32 %v2311, %v4340
      %4342 = vmatprep.mubr.bf16.mxu0 %v2259
      %4343 = vmatmul.mubr.bf16.gmra.mrb[0].mxu0 %v2258
      %v4344 = vpop.f32.mrb[0].mxu0
      %v4345 = vadd.f32 %v2307, %v4344
      %v4346 = vpop.f32.mrb[0].mxu0
      %v4347 = vadd.f32 %v2311, %v4346
      %v4348 = vpop.f32.mrb[0].mxu0
      %v4349 = vadd.f32 %v2307, %v4348
      %v4350 = vpop.f32.mrb[0].mxu0
      %v4351 = vadd.f32 %v2311, %v4350
      %4352 = vmatprep.mubr.bf16.mxu0 %v2266
      %4353 = vmatmul.mubr.bf16.gmra.mrb[0].mxu0 %v2265
      %v4354 = vpop.f32.mrb[0].mxu0
      %v4355 = vadd.f32 %v2307, %v4354
      %v4356 = vpop.f32.mrb[0].mxu0
      %v4357 = vadd.f32 %v2311, %v4356
      %v4358 = vpop.f32.mrb[0].mxu0
      %v4359 = vadd.f32 %v2307, %v4358
      %v4360 = vpop.f32.mrb[0].mxu0
      %v4361 = vadd.f32 %v2311, %v4360
      %4362 = vmatprep.mubr.bf16.mxu0 %v2273
      %4363 = vmatmul.mubr.bf16.gmra.mrb[0].mxu0 %v2272
      %v4364 = vpop.f32.mrb[0].mxu0
      %v4365 = vadd.f32 %v2307, %v4364
      %v4366 = vpop.f32.mrb[0].mxu0
      %v4367 = vadd.f32 %v2311, %v4366
      %v4368 = vpop.f32.mrb[0].mxu0
      %v4369 = vadd.f32 %v2307, %v4368
      %v4370 = vpop.f32.mrb[0].mxu0
      %v4371 = vadd.f32 %v2311, %v4370
      %4372 = vmatprep.mubr.bf16.mxu0 %v2280
      %4373 = vmatmul.mubr.bf16.gmra.mrb[0].mxu0 %v2279
      %v4374 = vpop.f32.mrb[0].mxu0
      %v4375 = vadd.f32 %v2307, %v4374
      %v4376 = vpop.f32.mrb[0].mxu0
      %v4377 = vadd.f32 %v2311, %v4376
      %v4378 = vpop.f32.mrb[0].mxu0
      %v4379 = vadd.f32 %v2307, %v4378
      %v4380 = vpop.f32.mrb[0].mxu0
      %v4381 = vadd.f32 %v2311, %v4380
      %4382 = vmatprep.mubr.bf16.mxu0 %v2287
      %4383 = vmatmul.mubr.bf16.gmra.mrb[0].mxu0 %v2286
      %v4384 = vpop.f32.mrb[0].mxu0
      %v4385 = vadd.f32 %v2307, %v4384
      %v4386 = vpop.f32.mrb[0].mxu0
      %v4387 = vadd.f32 %v2311, %v4386
      %v4388 = vpop.f32.mrb[0].mxu0
      %v4389 = vadd.f32 %v2307, %v4388
      %v4390 = vpop.f32.mrb[0].mxu0
      %v4391 = vadd.f32 %v2311, %v4390
      %4392 = vdwg.mxu0
      %4393 = vmatprep.subr.bf16.mxu0 %v3013
      %4394 = vmatpush1.bf16.msra.mxu0 %v3012
      %4395 = vmatprep.subr.bf16.mxu0 %v3017
      %4396 = vmatpush1.bf16.msra.mxu0 %v3016
      %4397 = vmatprep.subr.bf16.mxu0 %v3021
      %4398 = vmatpush1.bf16.msra.mxu0 %v3020
      %4399 = vmatprep.subr.bf16.mxu0 %v3025
      %4400 = vmatpush1.bf16.msra.mxu0 %v3024
      %4401 = vmatprep.subr.bf16.mxu0 %v3029
      %4402 = vmatpush1.bf16.msra.mxu0 %v3028
      %4403 = vmatprep.subr.bf16.mxu0 %v3033
      %4404 = vmatpush1.bf16.msra.mxu0 %v3032
      %4405 = vmatprep.subr.bf16.mxu0 %v3037
      %4406 = vmatpush1.bf16.msra.mxu0 %v3036
      %4407 = vmatprep.subr.bf16.mxu0 %v3041
      %4408 = vmatpush1.bf16.msra.mxu0 %v3040
      %4409 = vmatprep.subr.bf16.mxu0 %v3045
      %4410 = vmatpush1.bf16.msra.mxu0 %v3044
      %4411 = vmatprep.subr.bf16.mxu0 %v3049
      %4412 = vmatpush1.bf16.msra.mxu0 %v3048
      %4413 = vmatprep.subr.bf16.mxu0 %v3053
      %4414 = vmatpush1.bf16.msra.mxu0 %v3052
      %4415 = vmatprep.subr.bf16.mxu0 %v3057
      %4416 = vmatpush1.bf16.msra.mxu0 %v3056
      %4417 = vmatprep.subr.bf16.mxu0 %v3061
      %4418 = vmatpush1.bf16.msra.mxu0 %v3060
      %4419 = vmatprep.subr.bf16.mxu0 %v3065
      %4420 = vmatpush1.bf16.msra.mxu0 %v3064
      %4421 = vmatprep.subr.bf16.mxu0 %v3069
      %4422 = vmatpush1.bf16.msra.mxu0 %v3068
      %4423 = vmatprep.subr.bf16.mxu0 %v3073
      %4424 = vmatpush1.bf16.msra.mxu0 %v3072
      %4425 = vmatprep.mubr.bf16.mxu0 %v2184
      %4426 = vmatmul.mubr.bf16.gmra.mrb[0].mxu0 %v2183
      %v4427 = vpop.f32.mrb[0].mxu0
      %v4428 = vadd.f32 %v4235, %v4427
      %v4429 = vpop.f32.mrb[0].mxu0
      %v4430 = vadd.f32 %v4237, %v4429
      %v4431 = vpop.f32.mrb[0].mxu0
      %v4432 = vadd.f32 %v4239, %v4431
      %v4433 = vpop.f32.mrb[0].mxu0
      %v4434 = vadd.f32 %v4241, %v4433
      %4435 = vmatprep.mubr.bf16.mxu0 %v2191
      %4436 = vmatmul.mubr.bf16.gmra.mrb[0].mxu0 %v2190
      %v4437 = vpop.f32.mrb[0].mxu0
      %v4438 = vadd.f32 %v4245, %v4437
      %v4439 = vpop.f32.mrb[0].mxu0
      %v4440 = vadd.f32 %v4247, %v4439
      %v4441 = vpop.f32.mrb[0].mxu0
      %v4442 = vadd.f32 %v4249, %v4441
      %v4443 = vpop.f32.mrb[0].mxu0
      %v4444 = vadd.f32 %v4251, %v4443
      %4445 = vmatprep.mubr.bf16.mxu0 %v2198
      %4446 = vmatmul.mubr.bf16.gmra.mrb[0].mxu0 %v2197
      %v4447 = vpop.f32.mrb[0].mxu0
      %v4448 = vadd.f32 %v4255, %v4447
      %v4449 = vpop.f32.mrb[0].mxu0
      %v4450 = vadd.f32 %v4257, %v4449
      %v4451 = vpop.f32.mrb[0].mxu0
      %v4452 = vadd.f32 %v4259, %v4451
      %v4453 = vpop.f32.mrb[0].mxu0
      %v4454 = vadd.f32 %v4261, %v4453
      %4455 = vmatprep.mubr.bf16.mxu0 %v2205
      %4456 = vmatmul.mubr.bf16.gmra.mrb[0].mxu0 %v2204
      %v4457 = vpop.f32.mrb[0].mxu0
      %v4458 = vadd.f32 %v4265, %v4457
      %v4459 = vpop.f32.mrb[0].mxu0
      %v4460 = vadd.f32 %v4267, %v4459
      %v4461 = vpop.f32.mrb[0].mxu0
      %v4462 = vadd.f32 %v4269, %v4461
      %v4463 = vpop.f32.mrb[0].mxu0
      %v4464 = vadd.f32 %v4271, %v4463
      %4465 = vmatprep.mubr.bf16.mxu0 %v2212
      %4466 = vmatmul.mubr.bf16.gmra.mrb[0].mxu0 %v2211
      %v4467 = vpop.f32.mrb[0].mxu0
      %v4468 = vadd.f32 %v4275, %v4467
      %v4469 = vpop.f32.mrb[0].mxu0
      %v4470 = vadd.f32 %v4277, %v4469
      %v4471 = vpop.f32.mrb[0].mxu0
      %v4472 = vadd.f32 %v4279, %v4471
      %v4473 = vpop.f32.mrb[0].mxu0
      %v4474 = vadd.f32 %v4281, %v4473
      %4475 = vmatprep.mubr.bf16.mxu0 %v2219
      %4476 = vmatmul.mubr.bf16.gmra.mrb[0].mxu0 %v2218
      %v4477 = vpop.f32.mrb[0].mxu0
      %v4478 = vadd.f32 %v4285, %v4477
      %v4479 = vpop.f32.mrb[0].mxu0
      %v4480 = vadd.f32 %v4287, %v4479
      %v4481 = vpop.f32.mrb[0].mxu0
      %v4482 = vadd.f32 %v4289, %v4481
      %v4483 = vpop.f32.mrb[0].mxu0
      %v4484 = vadd.f32 %v4291, %v4483
      %4485 = vmatprep.mubr.bf16.mxu0 %v2226
      %4486 = vmatmul.mubr.bf16.gmra.mrb[0].mxu0 %v2225
      %v4487 = vpop.f32.mrb[0].mxu0
      %v4488 = vadd.f32 %v4295, %v4487
      %v4489 = vpop.f32.mrb[0].mxu0
      %v4490 = vadd.f32 %v4297, %v4489
      %v4491 = vpop.f32.mrb[0].mxu0
      %v4492 = vadd.f32 %v4299, %v4491
      %v4493 = vpop.f32.mrb[0].mxu0
      %v4494 = vadd.f32 %v4301, %v4493
      %4495 = vmatprep.mubr.bf16.mxu0 %v2233
      %4496 = vmatmul.mubr.bf16.gmra.mrb[0].mxu0 %v2232
      %v4497 = vpop.f32.mrb[0].mxu0
      %v4498 = vadd.f32 %v4305, %v4497
      %v4499 = vpop.f32.mrb[0].mxu0
      %v4500 = vadd.f32 %v4307, %v4499
      %v4501 = vpop.f32.mrb[0].mxu0
      %v4502 = vadd.f32 %v4309, %v4501
      %v4503 = vpop.f32.mrb[0].mxu0
      %v4504 = vadd.f32 %v4311, %v4503
      %4505 = vmatprep.mubr.bf16.mxu0 %v2240
      %4506 = vmatmul.mubr.bf16.gmra.mrb[0].mxu0 %v2239
      %v4507 = vpop.f32.mrb[0].mxu0
      %v4508 = vadd.f32 %v4315, %v4507
      %v4509 = vpop.f32.mrb[0].mxu0
      %v4510 = vadd.f32 %v4317, %v4509
      %v4511 = vpop.f32.mrb[0].mxu0
      %v4512 = vadd.f32 %v4319, %v4511
      %v4513 = vpop.f32.mrb[0].mxu0
      %v4514 = vadd.f32 %v4321, %v4513
      %4515 = vmatprep.mubr.bf16.mxu0 %v2247
      %4516 = vmatmul.mubr.bf16.gmra.mrb[0].mxu0 %v2246
      %v4517 = vpop.f32.mrb[0].mxu0
      %v4518 = vadd.f32 %v4325, %v4517
      %v4519 = vpop.f32.mrb[0].mxu0
      %v4520 = vadd.f32 %v4327, %v4519
      %v4521 = vpop.f32.mrb[0].mxu0
      %v4522 = vadd.f32 %v4329, %v4521
      %v4523 = vpop.f32.mrb[0].mxu0
      %v4524 = vadd.f32 %v4331, %v4523
      %4525 = vmatprep.mubr.bf16.mxu0 %v2254
      %4526 = vmatmul.mubr.bf16.gmra.mrb[0].mxu0 %v2253
      %v4527 = vpop.f32.mrb[0].mxu0
      %v4528 = vadd.f32 %v4335, %v4527
      %v4529 = vpop.f32.mrb[0].mxu0
      %v4530 = vadd.f32 %v4337, %v4529
      %v4531 = vpop.f32.mrb[0].mxu0
      %v4532 = vadd.f32 %v4339, %v4531
      %v4533 = vpop.f32.mrb[0].mxu0
      %v4534 = vadd.f32 %v4341, %v4533
      %4535 = vmatprep.mubr.bf16.mxu0 %v2261
      %4536 = vmatmul.mubr.bf16.gmra.mrb[0].mxu0 %v2260
      %v4537 = vpop.f32.mrb[0].mxu0
      %v4538 = vadd.f32 %v4345, %v4537
      %v4539 = vpop.f32.mrb[0].mxu0
      %v4540 = vadd.f32 %v4347, %v4539
      %v4541 = vpop.f32.mrb[0].mxu0
      %v4542 = vadd.f32 %v4349, %v4541
      %v4543 = vpop.f32.mrb[0].mxu0
      %v4544 = vadd.f32 %v4351, %v4543
      %4545 = vmatprep.mubr.bf16.mxu0 %v2268
      %4546 = vmatmul.mubr.bf16.gmra.mrb[0].mxu0 %v2267
      %v4547 = vpop.f32.mrb[0].mxu0
      %v4548 = vadd.f32 %v4355, %v4547
      %v4549 = vpop.f32.mrb[0].mxu0
      %v4550 = vadd.f32 %v4357, %v4549
      %v4551 = vpop.f32.mrb[0].mxu0
      %v4552 = vadd.f32 %v4359, %v4551
      %v4553 = vpop.f32.mrb[0].mxu0
      %v4554 = vadd.f32 %v4361, %v4553
      %4555 = vmatprep.mubr.bf16.mxu0 %v2275
      %4556 = vmatmul.mubr.bf16.gmra.mrb[0].mxu0 %v2274
      %v4557 = vpop.f32.mrb[0].mxu0
      %v4558 = vadd.f32 %v4365, %v4557
      %v4559 = vpop.f32.mrb[0].mxu0
      %v4560 = vadd.f32 %v4367, %v4559
      %v4561 = vpop.f32.mrb[0].mxu0
      %v4562 = vadd.f32 %v4369, %v4561
      %v4563 = vpop.f32.mrb[0].mxu0
      %v4564 = vadd.f32 %v4371, %v4563
      %4565 = vmatprep.mubr.bf16.mxu0 %v2282
      %4566 = vmatmul.mubr.bf16.gmra.mrb[0].mxu0 %v2281
      %v4567 = vpop.f32.mrb[0].mxu0
      %v4568 = vadd.f32 %v4375, %v4567
      %v4569 = vpop.f32.mrb[0].mxu0
      %v4570 = vadd.f32 %v4377, %v4569
      %v4571 = vpop.f32.mrb[0].mxu0
      %v4572 = vadd.f32 %v4379, %v4571
      %v4573 = vpop.f32.mrb[0].mxu0
      %v4574 = vadd.f32 %v4381, %v4573
      %4575 = vmatprep.mubr.bf16.mxu0 %v2289
      %4576 = vmatmul.mubr.bf16.gmra.mrb[0].mxu0 %v2288
      %v4577 = vpop.f32.mrb[0].mxu0
      %v4578 = vadd.f32 %v4385, %v4577
      %v4579 = vpop.f32.mrb[0].mxu0
      %v4580 = vadd.f32 %v4387, %v4579
      %v4581 = vpop.f32.mrb[0].mxu0
      %v4582 = vadd.f32 %v4389, %v4581
      %v4583 = vpop.f32.mrb[0].mxu0
      %v4584 = vadd.f32 %v4391, %v4583
      %4585 = vdwg.mxu0
      %4586 = vmatprep.subr.bf16.mxu0 %v3077
      %4587 = vmatpush1.bf16.msra.mxu0 %v3076
      %4588 = vmatprep.subr.bf16.mxu0 %v3081
      %4589 = vmatpush1.bf16.msra.mxu0 %v3080
      %4590 = vmatprep.subr.bf16.mxu0 %v3085
      %4591 = vmatpush1.bf16.msra.mxu0 %v3084
      %4592 = vmatprep.subr.bf16.mxu0 %v3089
      %4593 = vmatpush1.bf16.msra.mxu0 %v3088
      %4594 = vmatprep.subr.bf16.mxu0 %v3093
      %4595 = vmatpush1.bf16.msra.mxu0 %v3092
      %4596 = vmatprep.subr.bf16.mxu0 %v3097
      %4597 = vmatpush1.bf16.msra.mxu0 %v3096
      %4598 = vmatprep.subr.bf16.mxu0 %v3101
      %4599 = vmatpush1.bf16.msra.mxu0 %v3100
      %4600 = vmatprep.subr.bf16.mxu0 %v3105
      %4601 = vmatpush1.bf16.msra.mxu0 %v3104
      %4602 = vmatprep.subr.bf16.mxu0 %v3109
      %4603 = vmatpush1.bf16.msra.mxu0 %v3108
      %4604 = vmatprep.subr.bf16.mxu0 %v3113
      %4605 = vmatpush1.bf16.msra.mxu0 %v3112
      %4606 = vmatprep.subr.bf16.mxu0 %v3117
      %4607 = vmatpush1.bf16.msra.mxu0 %v3116
      %4608 = vmatprep.subr.bf16.mxu0 %v3121
      %4609 = vmatpush1.bf16.msra.mxu0 %v3120
      %4610 = vmatprep.subr.bf16.mxu0 %v3125
      %4611 = vmatpush1.bf16.msra.mxu0 %v3124
      %4612 = vmatprep.subr.bf16.mxu0 %v3129
      %4613 = vmatpush1.bf16.msra.mxu0 %v3128
      %4614 = vmatprep.subr.bf16.mxu0 %v3133
      %4615 = vmatpush1.bf16.msra.mxu0 %v3132
      %4616 = vmatprep.subr.bf16.mxu0 %v3137
      %4617 = vmatpush1.bf16.msra.mxu0 %v3136
      %4618 = vmatprep.mubr.bf16.mxu0 %v2186
      %4619 = vmatmul.mubr.bf16.gmra.mrb[0].mxu0 %v2185
      %v4620 = vpop.f32.mrb[0].mxu0
      %v4621 = vadd.f32 %v4428, %v4620
      %v4622 = vpop.f32.mrb[0].mxu0
      %v4623 = vadd.f32 %v4430, %v4622
      %v4624 = vpop.f32.mrb[0].mxu0
      %v4625 = vadd.f32 %v4432, %v4624
      %v4626 = vpop.f32.mrb[0].mxu0
      %v4627 = vadd.f32 %v4434, %v4626
      %4628 = vmatprep.mubr.bf16.mxu0 %v2193
      %4629 = vmatmul.mubr.bf16.gmra.mrb[0].mxu0 %v2192
      %v4630 = vpop.f32.mrb[0].mxu0
      %v4631 = vadd.f32 %v4438, %v4630
      %v4632 = vpop.f32.mrb[0].mxu0
      %v4633 = vadd.f32 %v4440, %v4632
      %v4634 = vpop.f32.mrb[0].mxu0
      %v4635 = vadd.f32 %v4442, %v4634
      %v4636 = vpop.f32.mrb[0].mxu0
      %v4637 = vadd.f32 %v4444, %v4636
      %4638 = vmatprep.mubr.bf16.mxu0 %v2200
      %4639 = vmatmul.mubr.bf16.gmra.mrb[0].mxu0 %v2199
      %v4640 = vpop.f32.mrb[0].mxu0
      %v4641 = vadd.f32 %v4448, %v4640
      %v4642 = vpop.f32.mrb[0].mxu0
      %v4643 = vadd.f32 %v4450, %v4642
      %v4644 = vpop.f32.mrb[0].mxu0
      %v4645 = vadd.f32 %v4452, %v4644
      %v4646 = vpop.f32.mrb[0].mxu0
      %v4647 = vadd.f32 %v4454, %v4646
      %4648 = vmatprep.mubr.bf16.mxu0 %v2207
      %4649 = vmatmul.mubr.bf16.gmra.mrb[0].mxu0 %v2206
      %v4650 = vpop.f32.mrb[0].mxu0
      %v4651 = vadd.f32 %v4458, %v4650
      %v4652 = vpop.f32.mrb[0].mxu0
      %v4653 = vadd.f32 %v4460, %v4652
      %v4654 = vpop.f32.mrb[0].mxu0
      %v4655 = vadd.f32 %v4462, %v4654
      %v4656 = vpop.f32.mrb[0].mxu0
      %v4657 = vadd.f32 %v4464, %v4656
      %4658 = vmatprep.mubr.bf16.mxu0 %v2214
      %4659 = vmatmul.mubr.bf16.gmra.mrb[0].mxu0 %v2213
      %v4660 = vpop.f32.mrb[0].mxu0
      %v4661 = vadd.f32 %v4468, %v4660
      %v4662 = vpop.f32.mrb[0].mxu0
      %v4663 = vadd.f32 %v4470, %v4662
      %v4664 = vpop.f32.mrb[0].mxu0
      %v4665 = vadd.f32 %v4472, %v4664
      %v4666 = vpop.f32.mrb[0].mxu0
      %v4667 = vadd.f32 %v4474, %v4666
      %4668 = vmatprep.mubr.bf16.mxu0 %v2221
      %4669 = vmatmul.mubr.bf16.gmra.mrb[0].mxu0 %v2220
      %v4670 = vpop.f32.mrb[0].mxu0
      %v4671 = vadd.f32 %v4478, %v4670
      %v4672 = vpop.f32.mrb[0].mxu0
      %v4673 = vadd.f32 %v4480, %v4672
      %v4674 = vpop.f32.mrb[0].mxu0
      %v4675 = vadd.f32 %v4482, %v4674
      %v4676 = vpop.f32.mrb[0].mxu0
      %v4677 = vadd.f32 %v4484, %v4676
      %4678 = vmatprep.mubr.bf16.mxu0 %v2228
      %4679 = vmatmul.mubr.bf16.gmra.mrb[0].mxu0 %v2227
      %v4680 = vpop.f32.mrb[0].mxu0
      %v4681 = vadd.f32 %v4488, %v4680
      %v4682 = vpop.f32.mrb[0].mxu0
      %v4683 = vadd.f32 %v4490, %v4682
      %v4684 = vpop.f32.mrb[0].mxu0
      %v4685 = vadd.f32 %v4492, %v4684
      %v4686 = vpop.f32.mrb[0].mxu0
      %v4687 = vadd.f32 %v4494, %v4686
      %4688 = vmatprep.mubr.bf16.mxu0 %v2235
      %4689 = vmatmul.mubr.bf16.gmra.mrb[0].mxu0 %v2234
      %v4690 = vpop.f32.mrb[0].mxu0
      %v4691 = vadd.f32 %v4498, %v4690
      %v4692 = vpop.f32.mrb[0].mxu0
      %v4693 = vadd.f32 %v4500, %v4692
      %v4694 = vpop.f32.mrb[0].mxu0
      %v4695 = vadd.f32 %v4502, %v4694
      %v4696 = vpop.f32.mrb[0].mxu0
      %v4697 = vadd.f32 %v4504, %v4696
      %4698 = vmatprep.mubr.bf16.mxu0 %v2242
      %4699 = vmatmul.mubr.bf16.gmra.mrb[0].mxu0 %v2241
      %v4700 = vpop.f32.mrb[0].mxu0
      %v4701 = vadd.f32 %v4508, %v4700
      %v4702 = vpop.f32.mrb[0].mxu0
      %v4703 = vadd.f32 %v4510, %v4702
      %v4704 = vpop.f32.mrb[0].mxu0
      %v4705 = vadd.f32 %v4512, %v4704
      %v4706 = vpop.f32.mrb[0].mxu0
      %v4707 = vadd.f32 %v4514, %v4706
      %4708 = vmatprep.mubr.bf16.mxu0 %v2249
      %4709 = vmatmul.mubr.bf16.gmra.mrb[0].mxu0 %v2248
      %v4710 = vpop.f32.mrb[0].mxu0
      %v4711 = vadd.f32 %v4518, %v4710
      %v4712 = vpop.f32.mrb[0].mxu0
      %v4713 = vadd.f32 %v4520, %v4712
      %v4714 = vpop.f32.mrb[0].mxu0
      %v4715 = vadd.f32 %v4522, %v4714
      %v4716 = vpop.f32.mrb[0].mxu0
      %v4717 = vadd.f32 %v4524, %v4716
      %4718 = vmatprep.mubr.bf16.mxu0 %v2256
      %4719 = vmatmul.mubr.bf16.gmra.mrb[0].mxu0 %v2255
      %v4720 = vpop.f32.mrb[0].mxu0
      %v4721 = vadd.f32 %v4528, %v4720
      %v4722 = vpop.f32.mrb[0].mxu0
      %v4723 = vadd.f32 %v4530, %v4722
      %v4724 = vpop.f32.mrb[0].mxu0
      %v4725 = vadd.f32 %v4532, %v4724
      %v4726 = vpop.f32.mrb[0].mxu0
      %v4727 = vadd.f32 %v4534, %v4726
      %4728 = vmatprep.mubr.bf16.mxu0 %v2263
      %4729 = vmatmul.mubr.bf16.gmra.mrb[0].mxu0 %v2262
      %v4730 = vpop.f32.mrb[0].mxu0
      %v4731 = vadd.f32 %v4538, %v4730
      %v4732 = vpop.f32.mrb[0].mxu0
      %v4733 = vadd.f32 %v4540, %v4732
      %v4734 = vpop.f32.mrb[0].mxu0
      %v4735 = vadd.f32 %v4542, %v4734
      %v4736 = vpop.f32.mrb[0].mxu0
      %v4737 = vadd.f32 %v4544, %v4736
      %4738 = vmatprep.mubr.bf16.mxu0 %v2270
      %4739 = vmatmul.mubr.bf16.gmra.mrb[0].mxu0 %v2269
      %v4740 = vpop.f32.mrb[0].mxu0
      %v4741 = vadd.f32 %v4548, %v4740
      %v4742 = vpop.f32.mrb[0].mxu0
      %v4743 = vadd.f32 %v4550, %v4742
      %v4744 = vpop.f32.mrb[0].mxu0
      %v4745 = vadd.f32 %v4552, %v4744
      %v4746 = vpop.f32.mrb[0].mxu0
      %v4747 = vadd.f32 %v4554, %v4746
      %4748 = vmatprep.mubr.bf16.mxu0 %v2277
      %4749 = vmatmul.mubr.bf16.gmra.mrb[0].mxu0 %v2276
      %v4750 = vpop.f32.mrb[0].mxu0
      %v4751 = vadd.f32 %v4558, %v4750
      %v4752 = vpop.f32.mrb[0].mxu0
      %v4753 = vadd.f32 %v4560, %v4752
      %v4754 = vpop.f32.mrb[0].mxu0
      %v4755 = vadd.f32 %v4562, %v4754
      %v4756 = vpop.f32.mrb[0].mxu0
      %v4757 = vadd.f32 %v4564, %v4756
      %4758 = vmatprep.mubr.bf16.mxu0 %v2284
      %4759 = vmatmul.mubr.bf16.gmra.mrb[0].mxu0 %v2283
      %v4760 = vpop.f32.mrb[0].mxu0
      %v4761 = vadd.f32 %v4568, %v4760
      %v4762 = vpop.f32.mrb[0].mxu0
      %v4763 = vadd.f32 %v4570, %v4762
      %v4764 = vpop.f32.mrb[0].mxu0
      %v4765 = vadd.f32 %v4572, %v4764
      %v4766 = vpop.f32.mrb[0].mxu0
      %v4767 = vadd.f32 %v4574, %v4766
      %4768 = vmatprep.mubr.bf16.mxu0 %v2291
      %4769 = vmatmul.mubr.bf16.gmra.mrb[0].mxu0 %v2290
      %v4770 = vpop.f32.mrb[0].mxu0
      %v4771 = vadd.f32 %v4578, %v4770
      %v4772 = vpop.f32.mrb[0].mxu0
      %v4773 = vadd.f32 %v4580, %v4772
      %v4774 = vpop.f32.mrb[0].mxu0
      %v4775 = vadd.f32 %v4582, %v4774
      %v4776 = vpop.f32.mrb[0].mxu0
      %v4777 = vadd.f32 %v4584, %v4776
      %4778 = vdwg.mxu0
      %4779 = vmatprep.subr.bf16.mxu0 %v3141
      %4780 = vmatpush1.bf16.msra.mxu0 %v3140
      %4781 = vmatprep.subr.bf16.mxu0 %v3145
      %4782 = vmatpush1.bf16.msra.mxu0 %v3144
      %4783 = vmatprep.subr.bf16.mxu0 %v3149
      %4784 = vmatpush1.bf16.msra.mxu0 %v3148
      %4785 = vmatprep.subr.bf16.mxu0 %v3153
      %4786 = vmatpush1.bf16.msra.mxu0 %v3152
      %4787 = vmatprep.subr.bf16.mxu0 %v3426
      %4788 = vmatpush1.bf16.msra.mxu0 %v3423
      %4789 = vmatprep.subr.bf16.mxu0 0
      %4790 = vmatpush1.bf16.msra.mxu0 0
      %4791 = vmatprep.subr.bf16.mxu0 0
      %4792 = vmatpush1.bf16.msra.mxu0 0
      %4793 = vmatprep.subr.bf16.mxu0 0
      %4794 = vmatpush1.bf16.msra.mxu0 0
      %4795 = vmatprep.subr.bf16.mxu0 0
      %4796 = vmatpush1.bf16.msra.mxu0 0
      %4797 = vmatprep.subr.bf16.mxu0 0
      %4798 = vmatpush1.bf16.msra.mxu0 0
      %4799 = vmatprep.subr.bf16.mxu0 0
      %4800 = vmatpush1.bf16.msra.mxu0 0
      %4801 = vmatprep.subr.bf16.mxu0 0
      %4802 = vmatpush1.bf16.msra.mxu0 0
      %4803 = vmatprep.subr.bf16.mxu0 0
      %4804 = vmatpush1.bf16.msra.mxu0 0
      %4805 = vmatprep.subr.bf16.mxu0 0
      %4806 = vmatpush1.bf16.msra.mxu0 0
      %4807 = vmatprep.subr.bf16.mxu0 0
      %4808 = vmatpush1.bf16.msra.mxu0 0
      %4809 = vmatprep.subr.bf16.mxu0 0
      %4810 = vmatpush1.bf16.msra.mxu0 0
      %4811 = vmatprep.mubr.bf16.mxu0 0
      %4812 = vmatmul.mubr.bf16.gmra.mrb[0].mxu0 %v3368
      %v4813 = vpop.f32.mrb[0].mxu0
      %v4814 = vadd.f32 %v4621, %v4813
      %v4815 = vpop.f32.mrb[0].mxu0
      %v4816 = vadd.f32 %v4623, %v4815
      %v4817 = vpop.f32.mrb[0].mxu0
      %v4818 = vadd.f32 %v4625, %v4817
      %v4819 = vpop.f32.mrb[0].mxu0
      %v4820 = vadd.f32 %v4627, %v4819
      %4821 = vmatprep.mubr.bf16.mxu0 0
      %4822 = vmatmul.mubr.bf16.gmra.mrb[0].mxu0 %v3371
      %v4823 = vpop.f32.mrb[0].mxu0
      %v4824 = vadd.f32 %v4631, %v4823
      %v4825 = vpop.f32.mrb[0].mxu0
      %v4826 = vadd.f32 %v4633, %v4825
      %v4827 = vpop.f32.mrb[0].mxu0
      %v4828 = vadd.f32 %v4635, %v4827
      %v4829 = vpop.f32.mrb[0].mxu0
      %v4830 = vadd.f32 %v4637, %v4829
      %4831 = vmatprep.mubr.bf16.mxu0 0
      %4832 = vmatmul.mubr.bf16.gmra.mrb[0].mxu0 %v3374
      %v4833 = vpop.f32.mrb[0].mxu0
      %v4834 = vadd.f32 %v4641, %v4833
      %v4835 = vpop.f32.mrb[0].mxu0
      %v4836 = vadd.f32 %v4643, %v4835
      %v4837 = vpop.f32.mrb[0].mxu0
      %v4838 = vadd.f32 %v4645, %v4837
      %v4839 = vpop.f32.mrb[0].mxu0
      %v4840 = vadd.f32 %v4647, %v4839
      %4841 = vmatprep.mubr.bf16.mxu0 0
      %4842 = vmatmul.mubr.bf16.gmra.mrb[0].mxu0 %v3377
      %v4843 = vpop.f32.mrb[0].mxu0
      %v4844 = vadd.f32 %v4651, %v4843
      %v4845 = vpop.f32.mrb[0].mxu0
      %v4846 = vadd.f32 %v4653, %v4845
      %v4847 = vpop.f32.mrb[0].mxu0
      %v4848 = vadd.f32 %v4655, %v4847
      %v4849 = vpop.f32.mrb[0].mxu0
      %v4850 = vadd.f32 %v4657, %v4849
      %4851 = vmatprep.mubr.bf16.mxu0 0
      %4852 = vmatmul.mubr.bf16.gmra.mrb[0].mxu0 %v3380
      %v4853 = vpop.f32.mrb[0].mxu0
      %v4854 = vadd.f32 %v4661, %v4853
      %v4855 = vpop.f32.mrb[0].mxu0
      %v4856 = vadd.f32 %v4663, %v4855
      %v4857 = vpop.f32.mrb[0].mxu0
      %v4858 = vadd.f32 %v4665, %v4857
      %v4859 = vpop.f32.mrb[0].mxu0
      %v4860 = vadd.f32 %v4667, %v4859
      %4861 = vmatprep.mubr.bf16.mxu0 0
      %4862 = vmatmul.mubr.bf16.gmra.mrb[0].mxu0 %v3383
      %v4863 = vpop.f32.mrb[0].mxu0
      %v4864 = vadd.f32 %v4671, %v4863
      %v4865 = vpop.f32.mrb[0].mxu0
      %v4866 = vadd.f32 %v4673, %v4865
      %v4867 = vpop.f32.mrb[0].mxu0
      %v4868 = vadd.f32 %v4675, %v4867
      %v4869 = vpop.f32.mrb[0].mxu0
      %v4870 = vadd.f32 %v4677, %v4869
      %4871 = vmatprep.mubr.bf16.mxu0 0
      %4872 = vmatmul.mubr.bf16.gmra.mrb[0].mxu0 %v3386
      %v4873 = vpop.f32.mrb[0].mxu0
      %v4874 = vadd.f32 %v4681, %v4873
      %v4875 = vpop.f32.mrb[0].mxu0
      %v4876 = vadd.f32 %v4683, %v4875
      %v4877 = vpop.f32.mrb[0].mxu0
      %v4878 = vadd.f32 %v4685, %v4877
      %v4879 = vpop.f32.mrb[0].mxu0
      %v4880 = vadd.f32 %v4687, %v4879
      %4881 = vmatprep.mubr.bf16.mxu0 0
      %4882 = vmatmul.mubr.bf16.gmra.mrb[0].mxu0 %v3389
      %v4883 = vpop.f32.mrb[0].mxu0
      %v4884 = vadd.f32 %v4691, %v4883
      %v4885 = vpop.f32.mrb[0].mxu0
      %v4886 = vadd.f32 %v4693, %v4885
      %v4887 = vpop.f32.mrb[0].mxu0
      %v4888 = vadd.f32 %v4695, %v4887
      %v4889 = vpop.f32.mrb[0].mxu0
      %v4890 = vadd.f32 %v4697, %v4889
      %4891 = vmatprep.mubr.bf16.mxu0 0
      %4892 = vmatmul.mubr.bf16.gmra.mrb[0].mxu0 %v3392
      %v4893 = vpop.f32.mrb[0].mxu0
      %v4894 = vadd.f32 %v4701, %v4893
      %v4895 = vpop.f32.mrb[0].mxu0
      %v4896 = vadd.f32 %v4703, %v4895
      %v4897 = vpop.f32.mrb[0].mxu0
      %v4898 = vadd.f32 %v4705, %v4897
      %v4899 = vpop.f32.mrb[0].mxu0
      %v4900 = vadd.f32 %v4707, %v4899
      %4901 = vmatprep.mubr.bf16.mxu0 0
      %4902 = vmatmul.mubr.bf16.gmra.mrb[0].mxu0 %v3395
      %v4903 = vpop.f32.mrb[0].mxu0
      %v4904 = vadd.f32 %v4711, %v4903
      %v4905 = vpop.f32.mrb[0].mxu0
      %v4906 = vadd.f32 %v4713, %v4905
      %v4907 = vpop.f32.mrb[0].mxu0
      %v4908 = vadd.f32 %v4715, %v4907
      %v4909 = vpop.f32.mrb[0].mxu0
      %v4910 = vadd.f32 %v4717, %v4909
      %4911 = vmatprep.mubr.bf16.mxu0 0
      %4912 = vmatmul.mubr.bf16.gmra.mrb[0].mxu0 %v3398
      %v4913 = vpop.f32.mrb[0].mxu0
      %v4914 = vadd.f32 %v4721, %v4913
      %v4915 = vpop.f32.mrb[0].mxu0
      %v4916 = vadd.f32 %v4723, %v4915
      %v4917 = vpop.f32.mrb[0].mxu0
      %v4918 = vadd.f32 %v4725, %v4917
      %v4919 = vpop.f32.mrb[0].mxu0
      %v4920 = vadd.f32 %v4727, %v4919
      %4921 = vmatprep.mubr.bf16.mxu0 0
      %4922 = vmatmul.mubr.bf16.gmra.mrb[0].mxu0 %v3401
      %v4923 = vpop.f32.mrb[0].mxu0
      %v4924 = vadd.f32 %v4731, %v4923
      %v4925 = vpop.f32.mrb[0].mxu0
      %v4926 = vadd.f32 %v4733, %v4925
      %v4927 = vpop.f32.mrb[0].mxu0
      %v4928 = vadd.f32 %v4735, %v4927
      %v4929 = vpop.f32.mrb[0].mxu0
      %v4930 = vadd.f32 %v4737, %v4929
      %4931 = vmatprep.mubr.bf16.mxu0 0
      %4932 = vmatmul.mubr.bf16.gmra.mrb[0].mxu0 %v3404
      %v4933 = vpop.f32.mrb[0].mxu0
      %v4934 = vadd.f32 %v4741, %v4933
      %v4935 = vpop.f32.mrb[0].mxu0
      %v4936 = vadd.f32 %v4743, %v4935
      %v4937 = vpop.f32.mrb[0].mxu0
      %v4938 = vadd.f32 %v4745, %v4937
      %v4939 = vpop.f32.mrb[0].mxu0
      %v4940 = vadd.f32 %v4747, %v4939
      %4941 = vmatprep.mubr.bf16.mxu0 0
      %4942 = vmatmul.mubr.bf16.gmra.mrb[0].mxu0 %v3407
      %v4943 = vpop.f32.mrb[0].mxu0
      %v4944 = vadd.f32 %v4751, %v4943
      %v4945 = vpop.f32.mrb[0].mxu0
      %v4946 = vadd.f32 %v4753, %v4945
      %v4947 = vpop.f32.mrb[0].mxu0
      %v4948 = vadd.f32 %v4755, %v4947
      %v4949 = vpop.f32.mrb[0].mxu0
      %v4950 = vadd.f32 %v4757, %v4949
      %4951 = vmatprep.mubr.bf16.mxu0 0
      %4952 = vmatmul.mubr.bf16.gmra.mrb[0].mxu0 %v3410
      %v4953 = vpop.f32.mrb[0].mxu0
      %v4954 = vadd.f32 %v4761, %v4953
      %v4955 = vpop.f32.mrb[0].mxu0
      %v4956 = vadd.f32 %v4763, %v4955
      %v4957 = vpop.f32.mrb[0].mxu0
      %v4958 = vadd.f32 %v4765, %v4957
      %v4959 = vpop.f32.mrb[0].mxu0
      %v4960 = vadd.f32 %v4767, %v4959
      %4961 = vmatprep.mubr.bf16.mxu0 0
      %4962 = vmatmul.mubr.bf16.gmra.mrb[0].mxu0 %v3413
      %v4963 = vpop.f32.mrb[0].mxu0
      %v4964 = vadd.f32 %v4771, %v4963
      %v4965 = vpop.f32.mrb[0].mxu0
      %v4966 = vadd.f32 %v4773, %v4965
      %v4967 = vpop.f32.mrb[0].mxu0
      %v4968 = vadd.f32 %v4775, %v4967
      %v4969 = vpop.f32.mrb[0].mxu0
      %v4970 = vadd.f32 %v4777, %v4969
      %4971 = vdwg.mxu0
      %vm4972 = vcmp.gt.f32.partialorder %v4042, 0.0
      %vm4973 = vcmp.gt.f32.partialorder %v4044, 0.0
      %vm4974 = vcmp.gt.f32.partialorder %v4814, 0.0
      %vm4975 = vcmp.gt.f32.partialorder %v4816, 0.0
      %vm4976 = vcmp.gt.f32.partialorder %v4046, 0.0
      %vm4977 = vcmp.gt.f32.partialorder %v4048, 0.0
      %vm4978 = vcmp.gt.f32.partialorder %v4818, 0.0
      %vm4979 = vcmp.gt.f32.partialorder %v4820, 0.0
      %vm4980 = vcmp.gt.f32.partialorder %v4052, 0.0
      %vm4981 = vcmp.gt.f32.partialorder %v4054, 0.0
      %vm4982 = vcmp.gt.f32.partialorder %v4824, 0.0
      %vm4983 = vcmp.gt.f32.partialorder %v4826, 0.0
      %vm4984 = vcmp.gt.f32.partialorder %v4056, 0.0
      %vm4985 = vcmp.gt.f32.partialorder %v4058, 0.0
      %vm4986 = vcmp.gt.f32.partialorder %v4828, 0.0
      %vm4987 = vcmp.gt.f32.partialorder %v4830, 0.0
      %vm4988 = vcmp.gt.f32.partialorder %v4062, 0.0
      %vm4989 = vcmp.gt.f32.partialorder %v4064, 0.0
      %vm4990 = vcmp.gt.f32.partialorder %v4834, 0.0
      %vm4991 = vcmp.gt.f32.partialorder %v4836, 0.0
      %vm4992 = vcmp.gt.f32.partialorder %v4066, 0.0
      %vm4993 = vcmp.gt.f32.partialorder %v4068, 0.0
      %vm4994 = vcmp.gt.f32.partialorder %v4838, 0.0
      %vm4995 = vcmp.gt.f32.partialorder %v4840, 0.0
      %vm4996 = vcmp.gt.f32.partialorder %v4072, 0.0
      %vm4997 = vcmp.gt.f32.partialorder %v4074, 0.0
      %vm4998 = vcmp.gt.f32.partialorder %v4844, 0.0
      %vm4999 = vcmp.gt.f32.partialorder %v4846, 0.0
      %vm5000 = vcmp.gt.f32.partialorder %v4076, 0.0
      %vm5001 = vcmp.gt.f32.partialorder %v4078, 0.0
      %vm5002 = vcmp.gt.f32.partialorder %v4848, 0.0
      %vm5003 = vcmp.gt.f32.partialorder %v4850, 0.0
      %vm5004 = vcmp.gt.f32.partialorder %v4082, 0.0
      %vm5005 = vcmp.gt.f32.partialorder %v4084, 0.0
      %vm5006 = vcmp.gt.f32.partialorder %v4854, 0.0
      %vm5007 = vcmp.gt.f32.partialorder %v4856, 0.0
      %vm5008 = vcmp.gt.f32.partialorder %v4086, 0.0
      %vm5009 = vcmp.gt.f32.partialorder %v4088, 0.0
      %vm5010 = vcmp.gt.f32.partialorder %v4858, 0.0
      %vm5011 = vcmp.gt.f32.partialorder %v4860, 0.0
      %vm5012 = vcmp.gt.f32.partialorder %v4092, 0.0
      %vm5013 = vcmp.gt.f32.partialorder %v4094, 0.0
      %vm5014 = vcmp.gt.f32.partialorder %v4864, 0.0
      %vm5015 = vcmp.gt.f32.partialorder %v4866, 0.0
      %vm5016 = vcmp.gt.f32.partialorder %v4096, 0.0
      %vm5017 = vcmp.gt.f32.partialorder %v4098, 0.0
      %vm5018 = vcmp.gt.f32.partialorder %v4868, 0.0
      %vm5019 = vcmp.gt.f32.partialorder %v4870, 0.0
      %vm5020 = vcmp.gt.f32.partialorder %v4102, 0.0
      %vm5021 = vcmp.gt.f32.partialorder %v4104, 0.0
      %vm5022 = vcmp.gt.f32.partialorder %v4874, 0.0
      %vm5023 = vcmp.gt.f32.partialorder %v4876, 0.0
      %vm5024 = vcmp.gt.f32.partialorder %v4106, 0.0
      %vm5025 = vcmp.gt.f32.partialorder %v4108, 0.0
      %vm5026 = vcmp.gt.f32.partialorder %v4878, 0.0
      %vm5027 = vcmp.gt.f32.partialorder %v4880, 0.0
      %vm5028 = vcmp.gt.f32.partialorder %v4112, 0.0
      %vm5029 = vcmp.gt.f32.partialorder %v4114, 0.0
      %vm5030 = vcmp.gt.f32.partialorder %v4884, 0.0
      %vm5031 = vcmp.gt.f32.partialorder %v4886, 0.0
      %vm5032 = vcmp.gt.f32.partialorder %v4116, 0.0
      %vm5033 = vcmp.gt.f32.partialorder %v4118, 0.0
      %vm5034 = vcmp.gt.f32.partialorder %v4888, 0.0
      %vm5035 = vcmp.gt.f32.partialorder %v4890, 0.0
      %vm5036 = vcmp.gt.f32.partialorder %v4122, 0.0
      %vm5037 = vcmp.gt.f32.partialorder %v4124, 0.0
      %vm5038 = vcmp.gt.f32.partialorder %v4894, 0.0
      %vm5039 = vcmp.gt.f32.partialorder %v4896, 0.0
      %vm5040 = vcmp.gt.f32.partialorder %v4126, 0.0
      %vm5041 = vcmp.gt.f32.partialorder %v4128, 0.0
      %vm5042 = vcmp.gt.f32.partialorder %v4898, 0.0
      %vm5043 = vcmp.gt.f32.partialorder %v4900, 0.0
      %vm5044 = vcmp.gt.f32.partialorder %v4132, 0.0
      %vm5045 = vcmp.gt.f32.partialorder %v4134, 0.0
      %vm5046 = vcmp.gt.f32.partialorder %v4904, 0.0
      %vm5047 = vcmp.gt.f32.partialorder %v4906, 0.0
      %vm5048 = vcmp.gt.f32.partialorder %v4136, 0.0
      %vm5049 = vcmp.gt.f32.partialorder %v4138, 0.0
      %vm5050 = vcmp.gt.f32.partialorder %v4908, 0.0
      %vm5051 = vcmp.gt.f32.partialorder %v4910, 0.0
      %vm5052 = vcmp.gt.f32.partialorder %v4142, 0.0
      %vm5053 = vcmp.gt.f32.partialorder %v4144, 0.0
      %vm5054 = vcmp.gt.f32.partialorder %v4914, 0.0
      %vm5055 = vcmp.gt.f32.partialorder %v4916, 0.0
      %vm5056 = vcmp.gt.f32.partialorder %v4146, 0.0
      %vm5057 = vcmp.gt.f32.partialorder %v4148, 0.0
      %vm5058 = vcmp.gt.f32.partialorder %v4918, 0.0
      %vm5059 = vcmp.gt.f32.partialorder %v4920, 0.0
      %vm5060 = vcmp.gt.f32.partialorder %v4152, 0.0
      %vm5061 = vcmp.gt.f32.partialorder %v4154, 0.0
      %vm5062 = vcmp.gt.f32.partialorder %v4924, 0.0
      %vm5063 = vcmp.gt.f32.partialorder %v4926, 0.0
      %vm5064 = vcmp.gt.f32.partialorder %v4156, 0.0
      %vm5065 = vcmp.gt.f32.partialorder %v4158, 0.0
      %vm5066 = vcmp.gt.f32.partialorder %v4928, 0.0
      %vm5067 = vcmp.gt.f32.partialorder %v4930, 0.0
      %vm5068 = vcmp.gt.f32.partialorder %v4162, 0.0
      %vm5069 = vcmp.gt.f32.partialorder %v4164, 0.0
      %vm5070 = vcmp.gt.f32.partialorder %v4934, 0.0
      %vm5071 = vcmp.gt.f32.partialorder %v4936, 0.0
      %vm5072 = vcmp.gt.f32.partialorder %v4166, 0.0
      %vm5073 = vcmp.gt.f32.partialorder %v4168, 0.0
      %vm5074 = vcmp.gt.f32.partialorder %v4938, 0.0
      %vm5075 = vcmp.gt.f32.partialorder %v4940, 0.0
      %vm5076 = vcmp.gt.f32.partialorder %v4172, 0.0
      %vm5077 = vcmp.gt.f32.partialorder %v4174, 0.0
      %vm5078 = vcmp.gt.f32.partialorder %v4944, 0.0
      %vm5079 = vcmp.gt.f32.partialorder %v4946, 0.0
      %vm5080 = vcmp.gt.f32.partialorder %v4176, 0.0
      %vm5081 = vcmp.gt.f32.partialorder %v4178, 0.0
      %vm5082 = vcmp.gt.f32.partialorder %v4948, 0.0
      %vm5083 = vcmp.gt.f32.partialorder %v4950, 0.0
      %vm5084 = vcmp.gt.f32.partialorder %v4182, 0.0
      %vm5085 = vcmp.gt.f32.partialorder %v4184, 0.0
      %vm5086 = vcmp.gt.f32.partialorder %v4954, 0.0
      %vm5087 = vcmp.gt.f32.partialorder %v4956, 0.0
      %vm5088 = vcmp.gt.f32.partialorder %v4186, 0.0
      %vm5089 = vcmp.gt.f32.partialorder %v4188, 0.0
      %vm5090 = vcmp.gt.f32.partialorder %v4958, 0.0
      %vm5091 = vcmp.gt.f32.partialorder %v4960, 0.0
      %vm5092 = vcmp.gt.f32.partialorder %v4192, 0.0
      %vm5093 = vcmp.gt.f32.partialorder %v4194, 0.0
      %vm5094 = vcmp.gt.f32.partialorder %v4964, 0.0
      %vm5095 = vcmp.gt.f32.partialorder %v4966, 0.0
      %vm5096 = vcmp.gt.f32.partialorder %v4196, 0.0
      %vm5097 = vcmp.gt.f32.partialorder %v4198, 0.0
      %vm5098 = vcmp.gt.f32.partialorder %v4968, 0.0
      %vm5099 = vcmp.gt.f32.partialorder %v4970, 0.0
      %v5100 = vmul.f32 %v4042, 0.01
      %v5101 = vmul.f32 %v4044, 0.01
      %v5102 = vmul.f32 %v4814, 0.01
      %v5103 = vmul.f32 %v4816, 0.01
      %v5104 = vmul.f32 %v4046, 0.01
      %v5105 = vmul.f32 %v4048, 0.01
      %v5106 = vmul.f32 %v4818, 0.01
      %v5107 = vmul.f32 %v4820, 0.01
      %v5108 = vmul.f32 %v4052, 0.01
      %v5109 = vmul.f32 %v4054, 0.01
      %v5110 = vmul.f32 %v4824, 0.01
      %v5111 = vmul.f32 %v4826, 0.01
      %v5112 = vmul.f32 %v4056, 0.01
      %v5113 = vmul.f32 %v4058, 0.01
      %v5114 = vmul.f32 %v4828, 0.01
      %v5115 = vmul.f32 %v4830, 0.01
      %v5116 = vmul.f32 %v4062, 0.01
      %v5117 = vmul.f32 %v4064, 0.01
      %v5118 = vmul.f32 %v4834, 0.01
      %v5119 = vmul.f32 %v4836, 0.01
      %v5120 = vmul.f32 %v4066, 0.01
      %v5121 = vmul.f32 %v4068, 0.01
      %v5122 = vmul.f32 %v4838, 0.01
      %v5123 = vmul.f32 %v4840, 0.01
      %v5124 = vmul.f32 %v4072, 0.01
      %v5125 = vmul.f32 %v4074, 0.01
      %v5126 = vmul.f32 %v4844, 0.01
      %v5127 = vmul.f32 %v4846, 0.01
      %v5128 = vmul.f32 %v4076, 0.01
      %v5129 = vmul.f32 %v4078, 0.01
      %v5130 = vmul.f32 %v4848, 0.01
      %v5131 = vmul.f32 %v4850, 0.01
      %v5132 = vmul.f32 %v4082, 0.01
      %v5133 = vmul.f32 %v4084, 0.01
      %v5134 = vmul.f32 %v4854, 0.01
      %v5135 = vmul.f32 %v4856, 0.01
      %v5136 = vmul.f32 %v4086, 0.01
      %v5137 = vmul.f32 %v4088, 0.01
      %v5138 = vmul.f32 %v4858, 0.01
      %v5139 = vmul.f32 %v4860, 0.01
      %v5140 = vmul.f32 %v4092, 0.01
      %v5141 = vmul.f32 %v4094, 0.01
      %v5142 = vmul.f32 %v4864, 0.01
      %v5143 = vmul.f32 %v4866, 0.01
      %v5144 = vmul.f32 %v4096, 0.01
      %v5145 = vmul.f32 %v4098, 0.01
      %v5146 = vmul.f32 %v4868, 0.01
      %v5147 = vmul.f32 %v4870, 0.01
      %v5148 = vmul.f32 %v4102, 0.01
      %v5149 = vmul.f32 %v4104, 0.01
      %v5150 = vmul.f32 %v4874, 0.01
      %v5151 = vmul.f32 %v4876, 0.01
      %v5152 = vmul.f32 %v4106, 0.01
      %v5153 = vmul.f32 %v4108, 0.01
      %v5154 = vmul.f32 %v4878, 0.01
      %v5155 = vmul.f32 %v4880, 0.01
      %v5156 = vmul.f32 %v4112, 0.01
      %v5157 = vmul.f32 %v4114, 0.01
      %v5158 = vmul.f32 %v4884, 0.01
      %v5159 = vmul.f32 %v4886, 0.01
      %v5160 = vmul.f32 %v4116, 0.01
      %v5161 = vmul.f32 %v4118, 0.01
      %v5162 = vmul.f32 %v4888, 0.01
      %v5163 = vmul.f32 %v4890, 0.01
      %v5164 = vmul.f32 %v4122, 0.01
      %v5165 = vmul.f32 %v4124, 0.01
      %v5166 = vmul.f32 %v4894, 0.01
      %v5167 = vmul.f32 %v4896, 0.01
      %v5168 = vmul.f32 %v4126, 0.01
      %v5169 = vmul.f32 %v4128, 0.01
      %v5170 = vmul.f32 %v4898, 0.01
      %v5171 = vmul.f32 %v4900, 0.01
      %v5172 = vmul.f32 %v4132, 0.01
      %v5173 = vmul.f32 %v4134, 0.01
      %v5174 = vmul.f32 %v4904, 0.01
      %v5175 = vmul.f32 %v4906, 0.01
      %v5176 = vmul.f32 %v4136, 0.01
      %v5177 = vmul.f32 %v4138, 0.01
      %v5178 = vmul.f32 %v4908, 0.01
      %v5179 = vmul.f32 %v4910, 0.01
      %v5180 = vmul.f32 %v4142, 0.01
      %v5181 = vmul.f32 %v4144, 0.01
      %v5182 = vmul.f32 %v4914, 0.01
      %v5183 = vmul.f32 %v4916, 0.01
      %v5184 = vmul.f32 %v4146, 0.01
      %v5185 = vmul.f32 %v4148, 0.01
      %v5186 = vmul.f32 %v4918, 0.01
      %v5187 = vmul.f32 %v4920, 0.01
      %v5188 = vmul.f32 %v4152, 0.01
      %v5189 = vmul.f32 %v4154, 0.01
      %v5190 = vmul.f32 %v4924, 0.01
      %v5191 = vmul.f32 %v4926, 0.01
      %v5192 = vmul.f32 %v4156, 0.01
      %v5193 = vmul.f32 %v4158, 0.01
      %v5194 = vmul.f32 %v4928, 0.01
      %v5195 = vmul.f32 %v4930, 0.01
      %v5196 = vmul.f32 %v4162, 0.01
      %v5197 = vmul.f32 %v4164, 0.01
      %v5198 = vmul.f32 %v4934, 0.01
      %v5199 = vmul.f32 %v4936, 0.01
      %v5200 = vmul.f32 %v4166, 0.01
      %v5201 = vmul.f32 %v4168, 0.01
      %v5202 = vmul.f32 %v4938, 0.01
      %v5203 = vmul.f32 %v4940, 0.01
      %v5204 = vmul.f32 %v4172, 0.01
      %v5205 = vmul.f32 %v4174, 0.01
      %v5206 = vmul.f32 %v4944, 0.01
      %v5207 = vmul.f32 %v4946, 0.01
      %v5208 = vmul.f32 %v4176, 0.01
      %v5209 = vmul.f32 %v4178, 0.01
      %v5210 = vmul.f32 %v4948, 0.01
      %v5211 = vmul.f32 %v4950, 0.01
      %v5212 = vmul.f32 %v4182, 0.01
      %v5213 = vmul.f32 %v4184, 0.01
      %v5214 = vmul.f32 %v4954, 0.01
      %v5215 = vmul.f32 %v4956, 0.01
      %v5216 = vmul.f32 %v4186, 0.01
      %v5217 = vmul.f32 %v4188, 0.01
      %v5218 = vmul.f32 %v4958, 0.01
      %v5219 = vmul.f32 %v4960, 0.01
      %v5220 = vmul.f32 %v4192, 0.01
      %v5221 = vmul.f32 %v4194, 0.01
      %v5222 = vmul.f32 %v4964, 0.01
      %v5223 = vmul.f32 %v4966, 0.01
      %v5224 = vmul.f32 %v4196, 0.01
      %v5225 = vmul.f32 %v4198, 0.01
      %v5226 = vmul.f32 %v4968, 0.01
      %v5227 = vmul.f32 %v4970, 0.01
      %v5228 = vsel %vm4972, %v4042, %v5100
      %v5229 = vsel %vm4973, %v4044, %v5101
      %v5230 = vsel %vm4974, %v4814, %v5102
      %v5231 = vsel %vm4975, %v4816, %v5103
      %v5232 = vsel %vm4976, %v4046, %v5104
      %v5233 = vsel %vm4977, %v4048, %v5105
      %v5234 = vsel %vm4978, %v4818, %v5106
      %v5235 = vsel %vm4979, %v4820, %v5107
      %v5236 = vsel %vm4980, %v4052, %v5108
      %v5237 = vsel %vm4981, %v4054, %v5109
      %v5238 = vsel %vm4982, %v4824, %v5110
      %v5239 = vsel %vm4983, %v4826, %v5111
      %v5240 = vsel %vm4984, %v4056, %v5112
      %v5241 = vsel %vm4985, %v4058, %v5113
      %v5242 = vsel %vm4986, %v4828, %v5114
      %v5243 = vsel %vm4987, %v4830, %v5115
      %v5244 = vsel %vm4988, %v4062, %v5116
      %v5245 = vsel %vm4989, %v4064, %v5117
      %v5246 = vsel %vm4990, %v4834, %v5118
      %v5247 = vsel %vm4991, %v4836, %v5119
      %v5248 = vsel %vm4992, %v4066, %v5120
      %v5249 = vsel %vm4993, %v4068, %v5121
      %v5250 = vsel %vm4994, %v4838, %v5122
      %v5251 = vsel %vm4995, %v4840, %v5123
      %v5252 = vsel %vm4996, %v4072, %v5124
      %v5253 = vsel %vm4997, %v4074, %v5125
      %v5254 = vsel %vm4998, %v4844, %v5126
      %v5255 = vsel %vm4999, %v4846, %v5127
      %v5256 = vsel %vm5000, %v4076, %v5128
      %v5257 = vsel %vm5001, %v4078, %v5129
      %v5258 = vsel %vm5002, %v4848, %v5130
      %v5259 = vsel %vm5003, %v4850, %v5131
      %v5260 = vsel %vm5004, %v4082, %v5132
      %v5261 = vsel %vm5005, %v4084, %v5133
      %v5262 = vsel %vm5006, %v4854, %v5134
      %v5263 = vsel %vm5007, %v4856, %v5135
      %v5264 = vsel %vm5008, %v4086, %v5136
      %v5265 = vsel %vm5009, %v4088, %v5137
      %v5266 = vsel %vm5010, %v4858, %v5138
      %v5267 = vsel %vm5011, %v4860, %v5139
      %v5268 = vsel %vm5012, %v4092, %v5140
      %v5269 = vsel %vm5013, %v4094, %v5141
      %v5270 = vsel %vm5014, %v4864, %v5142
      %v5271 = vsel %vm5015, %v4866, %v5143
      %v5272 = vsel %vm5016, %v4096, %v5144
      %v5273 = vsel %vm5017, %v4098, %v5145
      %v5274 = vsel %vm5018, %v4868, %v5146
      %v5275 = vsel %vm5019, %v4870, %v5147
      %v5276 = vsel %vm5020, %v4102, %v5148
      %v5277 = vsel %vm5021, %v4104, %v5149
      %v5278 = vsel %vm5022, %v4874, %v5150
      %v5279 = vsel %vm5023, %v4876, %v5151
      %v5280 = vsel %vm5024, %v4106, %v5152
      %v5281 = vsel %vm5025, %v4108, %v5153
      %v5282 = vsel %vm5026, %v4878, %v5154
      %v5283 = vsel %vm5027, %v4880, %v5155
      %v5284 = vsel %vm5028, %v4112, %v5156
      %v5285 = vsel %vm5029, %v4114, %v5157
      %v5286 = vsel %vm5030, %v4884, %v5158
      %v5287 = vsel %vm5031, %v4886, %v5159
      %v5288 = vsel %vm5032, %v4116, %v5160
      %v5289 = vsel %vm5033, %v4118, %v5161
      %v5290 = vsel %vm5034, %v4888, %v5162
      %v5291 = vsel %vm5035, %v4890, %v5163
      %v5292 = vsel %vm5036, %v4122, %v5164
      %v5293 = vsel %vm5037, %v4124, %v5165
      %v5294 = vsel %vm5038, %v4894, %v5166
      %v5295 = vsel %vm5039, %v4896, %v5167
      %v5296 = vsel %vm5040, %v4126, %v5168
      %v5297 = vsel %vm5041, %v4128, %v5169
      %v5298 = vsel %vm5042, %v4898, %v5170
      %v5299 = vsel %vm5043, %v4900, %v5171
      %v5300 = vsel %vm5044, %v4132, %v5172
      %v5301 = vsel %vm5045, %v4134, %v5173
      %v5302 = vsel %vm5046, %v4904, %v5174
      %v5303 = vsel %vm5047, %v4906, %v5175
      %v5304 = vsel %vm5048, %v4136, %v5176
      %v5305 = vsel %vm5049, %v4138, %v5177
      %v5306 = vsel %vm5050, %v4908, %v5178
      %v5307 = vsel %vm5051, %v4910, %v5179
      %v5308 = vsel %vm5052, %v4142, %v5180
      %v5309 = vsel %vm5053, %v4144, %v5181
      %v5310 = vsel %vm5054, %v4914, %v5182
      %v5311 = vsel %vm5055, %v4916, %v5183
      %v5312 = vsel %vm5056, %v4146, %v5184
      %v5313 = vsel %vm5057, %v4148, %v5185
      %v5314 = vsel %vm5058, %v4918, %v5186
      %v5315 = vsel %vm5059, %v4920, %v5187
      %v5316 = vsel %vm5060, %v4152, %v5188
      %v5317 = vsel %vm5061, %v4154, %v5189
      %v5318 = vsel %vm5062, %v4924, %v5190
      %v5319 = vsel %vm5063, %v4926, %v5191
      %v5320 = vsel %vm5064, %v4156, %v5192
      %v5321 = vsel %vm5065, %v4158, %v5193
      %v5322 = vsel %vm5066, %v4928, %v5194
      %v5323 = vsel %vm5067, %v4930, %v5195
      %v5324 = vsel %vm5068, %v4162, %v5196
      %v5325 = vsel %vm5069, %v4164, %v5197
      %v5326 = vsel %vm5070, %v4934, %v5198
      %v5327 = vsel %vm5071, %v4936, %v5199
      %v5328 = vsel %vm5072, %v4166, %v5200
      %v5329 = vsel %vm5073, %v4168, %v5201
      %v5330 = vsel %vm5074, %v4938, %v5202
      %v5331 = vsel %vm5075, %v4940, %v5203
      %v5332 = vsel %vm5076, %v4172, %v5204
      %v5333 = vsel %vm5077, %v4174, %v5205
      %v5334 = vsel %vm5078, %v4944, %v5206
      %v5335 = vsel %vm5079, %v4946, %v5207
      %v5336 = vsel %vm5080, %v4176, %v5208
      %v5337 = vsel %vm5081, %v4178, %v5209
      %v5338 = vsel %vm5082, %v4948, %v5210
      %v5339 = vsel %vm5083, %v4950, %v5211
      %v5340 = vsel %vm5084, %v4182, %v5212
      %v5341 = vsel %vm5085, %v4184, %v5213
      %v5342 = vsel %vm5086, %v4954, %v5214
      %v5343 = vsel %vm5087, %v4956, %v5215
      %v5344 = vsel %vm5088, %v4186, %v5216
      %v5345 = vsel %vm5089, %v4188, %v5217
      %v5346 = vsel %vm5090, %v4958, %v5218
      %v5347 = vsel %vm5091, %v4960, %v5219
      %v5348 = vsel %vm5092, %v4192, %v5220
      %v5349 = vsel %vm5093, %v4194, %v5221
      %v5350 = vsel %vm5094, %v4964, %v5222
      %v5351 = vsel %vm5095, %v4966, %v5223
      %v5352 = vsel %vm5096, %v4196, %v5224
      %v5353 = vsel %vm5097, %v4198, %v5225
      %v5354 = vsel %vm5098, %v4968, %v5226
      %v5355 = vsel %vm5099, %v4970, %v5227
      %v5356 = vld [vmem:[%s4] sm:$0xff]
      %v5357 = vld [vmem:[%s4 + $0x8] sm:$0xf]
      %v5358 = vld [vmem:[%s4 + $0xc] sm:$0xff]
      %v5359 = vld [vmem:[%s4 + $0x14] sm:$0xf]
      %v5360 = vld [vmem:[%s4 + $0x18] sm:$0xff]
      %v5361 = vld [vmem:[%s4 + $0x20] sm:$0xf]
      %v5362 = vld [vmem:[%s4 + $0x24] sm:$0xff]
      %v5363 = vld [vmem:[%s4 + $0x2c] sm:$0xf]
      %v5364 = vld [vmem:[%s4 + $0x30] sm:$0xff]
      %v5365 = vld [vmem:[%s4 + $0x38] sm:$0xf]
      %v5366 = vld [vmem:[%s4 + $0x3c] sm:$0xff]
      %v5367 = vld [vmem:[%s4 + $0x44] sm:$0xf]
      %v5368 = vld [vmem:[%s4 + $0x48] sm:$0xff]
      %v5369 = vld [vmem:[%s4 + $0x50] sm:$0xf]
      %v5370 = vld [vmem:[%s4 + $0x54] sm:$0xff]
      %v5371 = vld [vmem:[%s4 + $0x5c] sm:$0xf]
      %v5372 = vld [vmem:[%s4 + $0x60] sm:$0xff]
      %v5373 = vld [vmem:[%s4 + $0x68] sm:$0xf]
      %v5374 = vld [vmem:[%s4 + $0x6c] sm:$0xff]
      %v5375 = vld [vmem:[%s4 + $0x74] sm:$0xf]
      %v5376 = vld [vmem:[%s4 + $0x78] sm:$0xff]
      %v5377 = vld [vmem:[%s4 + $0x80] sm:$0xf]
      %v5378 = vld [vmem:[%s4 + $0x84] sm:$0xff]
      %v5379 = vld [vmem:[%s4 + $0x8c] sm:$0xf]
      %v5380 = vld [vmem:[%s4 + $0x90] sm:$0xff]
      %v5381 = vld [vmem:[%s4 + $0x98] sm:$0xf]
      %v5382 = vld [vmem:[%s4 + $0x9c] sm:$0xff]
      %v5383 = vld [vmem:[%s4 + $0xa4] sm:$0xf]
      %v5384 = vld [vmem:[%s4 + $0xa8] sm:$0xff]
      %v5385 = vld [vmem:[%s4 + $0xb0] sm:$0xf]
      %v5386 = vld [vmem:[%s4 + $0xb4] sm:$0xff]
      %v5387 = vld [vmem:[%s4 + $0xbc] sm:$0xf]
      %v5388 = vld [vmem:[%s4 + $0xc0] sm:$0xff]
      %v5389 = vld [vmem:[%s4 + $0xc8] sm:$0xf]
      %v5390 = vld [vmem:[%s4 + $0xcc] sm:$0xff]
      %v5391 = vld [vmem:[%s4 + $0xd4] sm:$0xf]
      %v5392 = vld [vmem:[%s4 + $0xd8] sm:$0xff]
      %v5393 = vld [vmem:[%s4 + $0xe0] sm:$0xf]
      %v5394 = vld [vmem:[%s4 + $0xe4] sm:$0xff]
      %v5395 = vld [vmem:[%s4 + $0xec] sm:$0xf]
      %v5396 = vld [vmem:[%s4 + $0xf0] sm:$0xff]
      %v5397 = vld [vmem:[%s4 + $0xf8] sm:$0xf]
      %v5398 = vld [vmem:[%s4 + $0xfc] sm:$0xff]
      %v5399 = vld [vmem:[%s4 + $0x104] sm:$0xf]
      %v5400 = vld [vmem:[%s4 + $0x108] sm:$0xff]
      %v5401 = vld [vmem:[%s4 + $0x110] sm:$0xf]
      %v5402 = vld [vmem:[%s4 + $0x114] sm:$0xff]
      %v5403 = vld [vmem:[%s4 + $0x11c] sm:$0xf]
      %v5404 = vld [vmem:[%s4 + $0x120] sm:$0xff]
      %v5405 = vld [vmem:[%s4 + $0x128] sm:$0xf]
      %v5406 = vld [vmem:[%s4 + $0x12c] sm:$0xff]
      %v5407 = vld [vmem:[%s4 + $0x134] sm:$0xf]
      %v5408 = vld [vmem:[%s4 + $0x138] sm:$0xff]
      %v5409 = vld [vmem:[%s4 + $0x140] sm:$0xf]
      %v5410 = vld [vmem:[%s4 + $0x144] sm:$0xff]
      %v5411 = vld [vmem:[%s4 + $0x14c] sm:$0xf]
      %v5412 = vld [vmem:[%s4 + $0x150] sm:$0xff]
      %v5413 = vld [vmem:[%s4 + $0x158] sm:$0xf]
      %v5414 = vld [vmem:[%s4 + $0x15c] sm:$0xff]
      %v5415 = vld [vmem:[%s4 + $0x164] sm:$0xf]
      %v5416 = vld [vmem:[%s4 + $0x168] sm:$0xff]
      %v5417 = vld [vmem:[%s4 + $0x170] sm:$0xf]
      %v5418 = vld [vmem:[%s4 + $0x174] sm:$0xff]
      %v5419 = vld [vmem:[%s4 + $0x17c] sm:$0xf]
      %v5420 = vld [vmem:[%s4 + $0x180] sm:$0xff]
      %v5421 = vld [vmem:[%s4 + $0x188] sm:$0xf]
      %v5422 = vld [vmem:[%s4 + $0x18c] sm:$0xff]
      %v5423 = vld [vmem:[%s4 + $0x194] sm:$0xf]
      %v5424 = vld [vmem:[%s4 + $0x198] sm:$0xff]
      %v5425 = vld [vmem:[%s4 + $0x1a0] sm:$0xf]
      %v5426 = vld [vmem:[%s4 + $0x1a4] sm:$0xff]
      %v5427 = vld [vmem:[%s4 + $0x1ac] sm:$0xf]
      %v5428 = vld [vmem:[%s4 + $0x1b0] sm:$0xff]
      %v5429 = vld [vmem:[%s4 + $0x1b8] sm:$0xf]
      %v5430 = vld [vmem:[%s4 + $0x1bc] sm:$0xff]
      %v5431 = vld [vmem:[%s4 + $0x1c4] sm:$0xf]
      %v5432 = vld [vmem:[%s4 + $0x1c8] sm:$0xff]
      %v5433 = vld [vmem:[%s4 + $0x1d0] sm:$0xf]
      %v5434 = vld [vmem:[%s4 + $0x1d4] sm:$0xff]
      %v5435 = vld [vmem:[%s4 + $0x1dc] sm:$0xf]
      %v5436 = vld [vmem:[%s4 + $0x1e0] sm:$0xff]
      %v5437 = vld [vmem:[%s4 + $0x1e8] sm:$0xf]
      %v5438 = vld [vmem:[%s4 + $0x1ec] sm:$0xff]
      %v5439 = vld [vmem:[%s4 + $0x1f4] sm:$0xf]
      %v5440 = vld [vmem:[%s4 + $0x1f8] sm:$0xff]
      %v5441 = vld [vmem:[%s4 + $0x200] sm:$0xf]
      %v5442 = vld [vmem:[%s4 + $0x204] sm:$0xff]
      %v5443 = vld [vmem:[%s4 + $0x20c] sm:$0xf]
      %v5444 = vld [vmem:[%s4 + $0x210] sm:$0xff]
      %v5445 = vld [vmem:[%s4 + $0x218] sm:$0xf]
      %v5446 = vld [vmem:[%s4 + $0x21c] sm:$0xff]
      %v5447 = vld [vmem:[%s4 + $0x224] sm:$0xf]
      %v5448 = vld [vmem:[%s4 + $0x228] sm:$0xff]
      %v5449 = vld [vmem:[%s4 + $0x230] sm:$0xf]
      %v5450 = vld [vmem:[%s4 + $0x234] sm:$0xff]
      %v5451 = vld [vmem:[%s4 + $0x23c] sm:$0xf]
      %v5452 = vld [vmem:[%s4 + $0x240] sm:$0xff]
      %v5453 = vld [vmem:[%s4 + $0x248] sm:$0xf]
      %v5454 = vld [vmem:[%s4 + $0x24c] sm:$0xff]
      %v5455 = vld [vmem:[%s4 + $0x254] sm:$0xf]
      %v5456 = vld [vmem:[%s4 + $0x258] sm:$0xff]
      %v5457 = vld [vmem:[%s4 + $0x260] sm:$0xf]
      %v5458 = vld [vmem:[%s4 + $0x264] sm:$0xff]
      %v5459 = vld [vmem:[%s4 + $0x26c] sm:$0xf]
      %v5460 = vld [vmem:[%s4 + $0x270] sm:$0x33]
      %v5461 = vld [vmem:[%s4 + $0x278] sm:$0x3]
      %v5462 = vpack.c.bf16 %v5232, %v5228
      %v5463 = vpack.c.bf16 %v5233, %v5229
      %v5464 = vpack.c.bf16 %v5234, %v5230
      %v5465 = vpack.c.bf16 %v5235, %v5231
      %v5466 = vpack.c.bf16 %v5240, %v5236
      %v5467 = vpack.c.bf16 %v5241, %v5237
      %v5468 = vpack.c.bf16 %v5242, %v5238
      %v5469 = vpack.c.bf16 %v5243, %v5239
      %v5470 = vpack.c.bf16 %v5248, %v5244
      %v5471 = vpack.c.bf16 %v5249, %v5245
      %v5472 = vpack.c.bf16 %v5250, %v5246
      %v5473 = vpack.c.bf16 %v5251, %v5247
      %v5474 = vpack.c.bf16 %v5256, %v5252
      %v5475 = vpack.c.bf16 %v5257, %v5253
      %v5476 = vpack.c.bf16 %v5258, %v5254
      %v5477 = vpack.c.bf16 %v5259, %v5255
      %v5478 = vpack.c.bf16 %v5264, %v5260
      %v5479 = vpack.c.bf16 %v5265, %v5261
      %v5480 = vpack.c.bf16 %v5266, %v5262
      %v5481 = vpack.c.bf16 %v5267, %v5263
      %v5482 = vpack.c.bf16 %v5272, %v5268
      %v5483 = vpack.c.bf16 %v5273, %v5269
      %v5484 = vpack.c.bf16 %v5274, %v5270
      %v5485 = vpack.c.bf16 %v5275, %v5271
      %v5486 = vpack.c.bf16 %v5280, %v5276
      %v5487 = vpack.c.bf16 %v5281, %v5277
      %v5488 = vpack.c.bf16 %v5282, %v5278
      %v5489 = vpack.c.bf16 %v5283, %v5279
      %v5490 = vpack.c.bf16 %v5288, %v5284
      %v5491 = vpack.c.bf16 %v5289, %v5285
      %v5492 = vpack.c.bf16 %v5290, %v5286
      %v5493 = vpack.c.bf16 %v5291, %v5287
      %v5494 = vpack.c.bf16 %v5296, %v5292
      %v5495 = vpack.c.bf16 %v5297, %v5293
      %v5496 = vpack.c.bf16 %v5298, %v5294
      %v5497 = vpack.c.bf16 %v5299, %v5295
      %v5498 = vpack.c.bf16 %v5304, %v5300
      %v5499 = vpack.c.bf16 %v5305, %v5301
      %v5500 = vpack.c.bf16 %v5306, %v5302
      %v5501 = vpack.c.bf16 %v5307, %v5303
      %v5502 = vpack.c.bf16 %v5312, %v5308
      %v5503 = vpack.c.bf16 %v5313, %v5309
      %v5504 = vpack.c.bf16 %v5314, %v5310
      %v5505 = vpack.c.bf16 %v5315, %v5311
      %v5506 = vpack.c.bf16 %v5320, %v5316
      %v5507 = vpack.c.bf16 %v5321, %v5317
      %v5508 = vpack.c.bf16 %v5322, %v5318
      %v5509 = vpack.c.bf16 %v5323, %v5319
      %v5510 = vpack.c.bf16 %v5328, %v5324
      %v5511 = vpack.c.bf16 %v5329, %v5325
      %v5512 = vpack.c.bf16 %v5330, %v5326
      %v5513 = vpack.c.bf16 %v5331, %v5327
      %v5514 = vpack.c.bf16 %v5336, %v5332
      %v5515 = vpack.c.bf16 %v5337, %v5333
      %v5516 = vpack.c.bf16 %v5338, %v5334
      %v5517 = vpack.c.bf16 %v5339, %v5335
      %v5518 = vpack.c.bf16 %v5344, %v5340
      %v5519 = vpack.c.bf16 %v5345, %v5341
      %v5520 = vpack.c.bf16 %v5346, %v5342
      %v5521 = vpack.c.bf16 %v5347, %v5343
      %v5522 = vpack.c.bf16 %v5352, %v5348
      %v5523 = vpack.c.bf16 %v5353, %v5349
      %v5524 = vpack.c.bf16 %v5354, %v5350
      %v5525 = vpack.c.bf16 %v5355, %v5351
      %s5526 = scalar_lea.vmem %s1, 2
      %v5527 = vld [vmem:[%s5526] ss:$8 sm:$0x7]
      %v5529 = vlaneseq
      %v5530 = vshrl.u32 %v5529, 7
      %v5531 = vsub.s32 0, %v5530
      %v5532 = vrot.slane %v5527, %v5531
      %v5533 = vlaneseq
      %v5534 = vshrl.u32 %v5533, 7
      %v5535 = vsub.s32 1, %v5534
      %v5536 = vrot.slane %v5527, %v5535
      %v5537 = vlaneseq
      %v5538 = vshrl.u32 %v5537, 7
      %v5539 = vsub.s32 2, %v5538
      %v5540 = vrot.slane %v5527, %v5539
      %v5650 = vunpack.c.l.b16 %v5356
      %v5651 = vunpack.c.h.b16 %v5356
      %v5652 = vunpack.c.l.b16 %v5357
      %v5653 = vunpack.c.l.b16 %v5358
      %v5654 = vunpack.c.h.b16 %v5358
      %v5655 = vunpack.c.l.b16 %v5359
      %v5656 = vunpack.c.l.b16 %v5360
      %v5657 = vunpack.c.h.b16 %v5360
      %v5658 = vunpack.c.l.b16 %v5361
      %v5659 = vunpack.c.l.b16 %v5362
      %v5660 = vunpack.c.h.b16 %v5362
      %v5661 = vunpack.c.l.b16 %v5363
      %v5662 = vunpack.c.l.b16 %v5364
      %v5663 = vunpack.c.h.b16 %v5364
      %v5664 = vunpack.c.l.b16 %v5365
      %v5665 = vunpack.c.l.b16 %v5366
      %v5666 = vunpack.c.h.b16 %v5366
      %v5667 = vunpack.c.l.b16 %v5367
      %v5668 = vunpack.c.l.b16 %v5368
      %v5669 = vunpack.c.h.b16 %v5368
      %v5670 = vunpack.c.l.b16 %v5369
      %v5671 = vunpack.c.l.b16 %v5370
      %v5672 = vunpack.c.h.b16 %v5370
      %v5673 = vunpack.c.l.b16 %v5371
      %v5674 = vunpack.c.l.b16 %v5372
      %v5675 = vunpack.c.h.b16 %v5372
      %v5676 = vunpack.c.l.b16 %v5373
      %v5677 = vunpack.c.l.b16 %v5374
      %v5678 = vunpack.c.h.b16 %v5374
      %v5679 = vunpack.c.l.b16 %v5375
      %v5680 = vunpack.c.l.b16 %v5376
      %v5681 = vunpack.c.h.b16 %v5376
      %v5682 = vunpack.c.l.b16 %v5377
      %v5683 = vunpack.c.l.b16 %v5378
      %v5684 = vunpack.c.h.b16 %v5378
      %v5685 = vunpack.c.l.b16 %v5379
      %v5686 = vunpack.c.l.b16 %v5380
      %v5687 = vunpack.c.h.b16 %v5380
      %v5688 = vunpack.c.l.b16 %v5381
      %v5689 = vunpack.c.l.b16 %v5382
      %v5690 = vunpack.c.h.b16 %v5382
      %v5691 = vunpack.c.l.b16 %v5383
      %v5692 = vunpack.c.l.b16 %v5384
      %v5693 = vunpack.c.h.b16 %v5384
      %v5694 = vunpack.c.l.b16 %v5385
      %v5695 = vunpack.c.l.b16 %v5386
      %v5696 = vunpack.c.h.b16 %v5386
      %v5697 = vunpack.c.l.b16 %v5387
      %v5698 = vunpack.c.l.b16 %v5388
      %v5699 = vunpack.c.h.b16 %v5388
      %v5700 = vunpack.c.l.b16 %v5389
      %v5701 = vunpack.c.l.b16 %v5390
      %v5702 = vunpack.c.h.b16 %v5390
      %v5703 = vunpack.c.l.b16 %v5391
      %v5704 = vunpack.c.l.b16 %v5392
      %v5705 = vunpack.c.h.b16 %v5392
      %v5706 = vunpack.c.l.b16 %v5393
      %v5707 = vunpack.c.l.b16 %v5394
      %v5708 = vunpack.c.h.b16 %v5394
      %v5709 = vunpack.c.l.b16 %v5395
      %v5710 = vunpack.c.l.b16 %v5396
      %v5711 = vunpack.c.h.b16 %v5396
      %v5712 = vunpack.c.l.b16 %v5397
      %v5713 = vunpack.c.l.b16 %v5398
      %v5714 = vunpack.c.h.b16 %v5398
      %v5715 = vunpack.c.l.b16 %v5399
      %v5716 = vunpack.c.l.b16 %v5400
      %v5717 = vunpack.c.h.b16 %v5400
      %v5718 = vunpack.c.l.b16 %v5401
      %v5719 = vunpack.c.l.b16 %v5402
      %v5720 = vunpack.c.h.b16 %v5402
      %v5721 = vunpack.c.l.b16 %v5403
      %v5722 = vunpack.c.l.b16 %v5404
      %v5723 = vunpack.c.h.b16 %v5404
      %v5724 = vunpack.c.l.b16 %v5405
      %v5725 = vunpack.c.l.b16 %v5406
      %v5726 = vunpack.c.h.b16 %v5406
      %v5727 = vunpack.c.l.b16 %v5407
      %v5728 = vunpack.c.l.b16 %v5408
      %v5729 = vunpack.c.h.b16 %v5408
      %v5730 = vunpack.c.l.b16 %v5409
      %v5731 = vunpack.c.l.b16 %v5410
      %v5732 = vunpack.c.h.b16 %v5410
      %v5733 = vunpack.c.l.b16 %v5411
      %v5734 = vunpack.c.l.b16 %v5412
      %v5735 = vunpack.c.h.b16 %v5412
      %v5736 = vunpack.c.l.b16 %v5413
      %v5737 = vunpack.c.l.b16 %v5414
      %v5738 = vunpack.c.h.b16 %v5414
      %v5739 = vunpack.c.l.b16 %v5415
      %v5740 = vunpack.c.l.b16 %v5416
      %v5741 = vunpack.c.h.b16 %v5416
      %v5742 = vunpack.c.l.b16 %v5417
      %v5743 = vunpack.c.l.b16 %v5418
      %v5744 = vunpack.c.h.b16 %v5418
      %v5745 = vunpack.c.l.b16 %v5419
      %v5746 = vunpack.c.l.b16 %v5420
      %v5747 = vunpack.c.h.b16 %v5420
      %v5748 = vunpack.c.l.b16 %v5421
      %v5749 = vunpack.c.l.b16 %v5422
      %v5750 = vunpack.c.h.b16 %v5422
      %v5751 = vunpack.c.l.b16 %v5423
      %v5752 = vunpack.c.l.b16 %v5424
      %v5753 = vunpack.c.h.b16 %v5424
      %v5754 = vunpack.c.l.b16 %v5425
      %v5755 = vunpack.c.l.b16 %v5426
      %v5756 = vunpack.c.h.b16 %v5426
      %v5757 = vunpack.c.l.b16 %v5427
      %v5758 = vunpack.c.l.b16 %v5428
      %v5759 = vunpack.c.h.b16 %v5428
      %v5760 = vunpack.c.l.b16 %v5429
      %v5761 = vunpack.c.l.b16 %v5430
      %v5762 = vunpack.c.h.b16 %v5430
      %v5763 = vunpack.c.l.b16 %v5431
      %v5764 = vunpack.c.l.b16 %v5432
      %v5765 = vunpack.c.h.b16 %v5432
      %v5766 = vunpack.c.l.b16 %v5433
      %v5767 = vunpack.c.l.b16 %v5434
      %v5768 = vunpack.c.h.b16 %v5434
      %v5769 = vunpack.c.l.b16 %v5435
      %v5770 = vunpack.c.l.b16 %v5436
      %v5771 = vunpack.c.h.b16 %v5436
      %v5772 = vunpack.c.l.b16 %v5437
      %v5773 = vunpack.c.l.b16 %v5438
      %v5774 = vunpack.c.h.b16 %v5438
      %v5775 = vunpack.c.l.b16 %v5439
      %v5776 = vunpack.c.l.b16 %v5440
      %v5777 = vunpack.c.h.b16 %v5440
      %v5778 = vunpack.c.l.b16 %v5441
      %v5779 = vunpack.c.l.b16 %v5442
      %v5780 = vunpack.c.h.b16 %v5442
      %v5781 = vunpack.c.l.b16 %v5443
      %v5782 = vunpack.c.l.b16 %v5444
      %v5783 = vunpack.c.h.b16 %v5444
      %v5784 = vunpack.c.l.b16 %v5445
      %v5785 = vunpack.c.l.b16 %v5446
      %v5786 = vunpack.c.h.b16 %v5446
      %v5787 = vunpack.c.l.b16 %v5447
      %v5788 = vunpack.c.l.b16 %v5448
      %v5789 = vunpack.c.h.b16 %v5448
      %v5790 = vunpack.c.l.b16 %v5449
      %v5791 = vunpack.c.l.b16 %v5450
      %v5792 = vunpack.c.h.b16 %v5450
      %v5793 = vunpack.c.l.b16 %v5451
      %v5794 = vunpack.c.l.b16 %v5452
      %v5795 = vunpack.c.h.b16 %v5452
      %v5796 = vunpack.c.l.b16 %v5453
      %v5797 = vunpack.c.l.b16 %v5454
      %v5798 = vunpack.c.h.b16 %v5454
      %v5799 = vunpack.c.l.b16 %v5455
      %v5800 = vunpack.c.l.b16 %v5456
      %v5801 = vunpack.c.h.b16 %v5456
      %v5802 = vunpack.c.l.b16 %v5457
      %v5803 = vunpack.c.l.b16 %v5458
      %v5804 = vunpack.c.h.b16 %v5458
      %v5805 = vunpack.c.l.b16 %v5459
      %v5806 = vunpack.c.l.b16 %v5460
      %v5807 = vunpack.c.h.b16 %v5460
      %v5808 = vunpack.c.l.b16 %v5461
      %v5809 = vpack.c.b16 %v5653, %v5650
      %v5810 = vpack.c.b16 %v5654, %v5651
      %v5811 = vpack.c.b16 %v5655, %v5652
      %v5812 = vpack.c.b16 %v5659, %v5656
      %v5813 = vpack.c.b16 %v5660, %v5657
      %v5814 = vpack.c.b16 %v5661, %v5658
      %v5815 = vpack.c.b16 %v5665, %v5662
      %v5816 = vpack.c.b16 %v5666, %v5663
      %v5817 = vpack.c.b16 %v5667, %v5664
      %v5818 = vpack.c.b16 %v5671, %v5668
      %v5819 = vpack.c.b16 %v5672, %v5669
      %v5820 = vpack.c.b16 %v5673, %v5670
      %v5821 = vpack.c.b16 %v5677, %v5674
      %v5822 = vpack.c.b16 %v5678, %v5675
      %v5823 = vpack.c.b16 %v5679, %v5676
      %v5824 = vpack.c.b16 %v5683, %v5680
      %v5825 = vpack.c.b16 %v5684, %v5681
      %v5826 = vpack.c.b16 %v5685, %v5682
      %v5827 = vpack.c.b16 %v5689, %v5686
      %v5828 = vpack.c.b16 %v5690, %v5687
      %v5829 = vpack.c.b16 %v5691, %v5688
      %v5830 = vpack.c.b16 %v5695, %v5692
      %v5831 = vpack.c.b16 %v5696, %v5693
      %v5832 = vpack.c.b16 %v5697, %v5694
      %v5833 = vpack.c.b16 %v5701, %v5698
      %v5834 = vpack.c.b16 %v5702, %v5699
      %v5835 = vpack.c.b16 %v5703, %v5700
      %v5836 = vpack.c.b16 %v5707, %v5704
      %v5837 = vpack.c.b16 %v5708, %v5705
      %v5838 = vpack.c.b16 %v5709, %v5706
      %v5839 = vpack.c.b16 %v5713, %v5710
      %v5840 = vpack.c.b16 %v5714, %v5711
      %v5841 = vpack.c.b16 %v5715, %v5712
      %v5842 = vpack.c.b16 %v5719, %v5716
      %v5843 = vpack.c.b16 %v5720, %v5717
      %v5844 = vpack.c.b16 %v5721, %v5718
      %v5845 = vpack.c.b16 %v5725, %v5722
      %v5846 = vpack.c.b16 %v5726, %v5723
      %v5847 = vpack.c.b16 %v5727, %v5724
      %v5848 = vpack.c.b16 %v5731, %v5728
      %v5849 = vpack.c.b16 %v5732, %v5729
      %v5850 = vpack.c.b16 %v5733, %v5730
      %v5851 = vpack.c.b16 %v5737, %v5734
      %v5852 = vpack.c.b16 %v5738, %v5735
      %v5853 = vpack.c.b16 %v5739, %v5736
      %v5854 = vpack.c.b16 %v5743, %v5740
      %v5855 = vpack.c.b16 %v5744, %v5741
      %v5856 = vpack.c.b16 %v5745, %v5742
      %v5857 = vpack.c.b16 %v5749, %v5746
      %v5858 = vpack.c.b16 %v5750, %v5747
      %v5859 = vpack.c.b16 %v5751, %v5748
      %v5860 = vpack.c.b16 %v5755, %v5752
      %v5861 = vpack.c.b16 %v5756, %v5753
      %v5862 = vpack.c.b16 %v5757, %v5754
      %v5863 = vpack.c.b16 %v5761, %v5758
      %v5864 = vpack.c.b16 %v5762, %v5759
      %v5865 = vpack.c.b16 %v5763, %v5760
      %v5866 = vpack.c.b16 %v5767, %v5764
      %v5867 = vpack.c.b16 %v5768, %v5765
      %v5868 = vpack.c.b16 %v5769, %v5766
      %v5869 = vpack.c.b16 %v5773, %v5770
      %v5870 = vpack.c.b16 %v5774, %v5771
      %v5871 = vpack.c.b16 %v5775, %v5772
      %v5872 = vpack.c.b16 %v5779, %v5776
      %v5873 = vpack.c.b16 %v5780, %v5777
      %v5874 = vpack.c.b16 %v5781, %v5778
      %v5875 = vpack.c.b16 %v5785, %v5782
      %v5876 = vpack.c.b16 %v5786, %v5783
      %v5877 = vpack.c.b16 %v5787, %v5784
      %v5878 = vpack.c.b16 %v5791, %v5788
      %v5879 = vpack.c.b16 %v5792, %v5789
      %v5880 = vpack.c.b16 %v5793, %v5790
      %v5881 = vpack.c.b16 %v5797, %v5794
      %v5882 = vpack.c.b16 %v5798, %v5795
      %v5883 = vpack.c.b16 %v5799, %v5796
      %v5884 = vpack.c.b16 %v5803, %v5800
      %v5885 = vpack.c.b16 %v5804, %v5801
      %v5886 = vpack.c.b16 %v5805, %v5802
      %v5887 = vpack.c.b16 %v5806, %v5806
      %v5888 = vpack.c.b16 %v5807, %v5807
      %v5889 = vpack.c.b16 %v5808, %v5808
      %vm5968 = vcmask 293888
      %v5970 = vsel %vm5968, %v5465, 0
      %v5973 = vsel %vm5968, %v5469, 0
      %v5976 = vsel %vm5968, %v5473, 0
      %v5979 = vsel %vm5968, %v5477, 0
      %v5982 = vsel %vm5968, %v5481, 0
      %v5985 = vsel %vm5968, %v5485, 0
      %v5988 = vsel %vm5968, %v5489, 0
      %v5991 = vsel %vm5968, %v5493, 0
      %v5994 = vsel %vm5968, %v5497, 0
      %v5997 = vsel %vm5968, %v5501, 0
      %v6000 = vsel %vm5968, %v5505, 0
      %v6003 = vsel %vm5968, %v5509, 0
      %v6006 = vsel %vm5968, %v5513, 0
      %v6009 = vsel %vm5968, %v5517, 0
      %v6012 = vsel %vm5968, %v5521, 0
      %v6015 = vsel %vm5968, %v5525, 0
      %vm6017 = vcmask 1041408
      %v6019 = vsel %vm6017, %v5887, 0
      %v6022 = vsel %vm6017, %v5888, 0
      %v6025 = vsel %vm6017, %v5889, 0
      %6027 = vmatprep.subr.bf16.mxu0 %v5810
      %6028 = vmatpush1.bf16.msra.mxu0 %v5809
      %6029 = vmatprep.subr.bf16.mxu0 %v5813
      %6030 = vmatpush1.bf16.msra.mxu0 %v5812
      %6031 = vmatprep.subr.bf16.mxu0 %v5816
      %6032 = vmatpush1.bf16.msra.mxu0 %v5815
      %6033 = vmatprep.subr.bf16.mxu0 %v5819
      %6034 = vmatpush1.bf16.msra.mxu0 %v5818
      %6035 = vmatprep.subr.bf16.mxu0 %v5822
      %6036 = vmatpush1.bf16.msra.mxu0 %v5821
      %6037 = vmatprep.subr.bf16.mxu0 %v5825
      %6038 = vmatpush1.bf16.msra.mxu0 %v5824
      %6039 = vmatprep.subr.bf16.mxu0 %v5828
      %6040 = vmatpush1.bf16.msra.mxu0 %v5827
      %6041 = vmatprep.subr.bf16.mxu0 %v5831
      %6042 = vmatpush1.bf16.msra.mxu0 %v5830
      %6043 = vmatprep.subr.bf16.mxu0 %v5834
      %6044 = vmatpush1.bf16.msra.mxu0 %v5833
      %6045 = vmatprep.subr.bf16.mxu0 %v5837
      %6046 = vmatpush1.bf16.msra.mxu0 %v5836
      %6047 = vmatprep.subr.bf16.mxu0 %v5840
      %6048 = vmatpush1.bf16.msra.mxu0 %v5839
      %6049 = vmatprep.subr.bf16.mxu0 %v5843
      %6050 = vmatpush1.bf16.msra.mxu0 %v5842
      %6051 = vmatprep.subr.bf16.mxu0 %v5846
      %6052 = vmatpush1.bf16.msra.mxu0 %v5845
      %6053 = vmatprep.subr.bf16.mxu0 %v5849
      %6054 = vmatpush1.bf16.msra.mxu0 %v5848
      %6055 = vmatprep.subr.bf16.mxu0 %v5852
      %6056 = vmatpush1.bf16.msra.mxu0 %v5851
      %6057 = vmatprep.subr.bf16.mxu0 %v5855
      %6058 = vmatpush1.bf16.msra.mxu0 %v5854
      %6059 = vmatprep.mubr.bf16.mxu0 %v5463
      %6060 = vmatmul.mubr.bf16.gmra.mrb[0].mxu0 %v5462
      %v6061 = vpop.f32.mrb[0].mxu0
      %v6062 = vadd.f32 %v5532, %v6061
      %v6063 = vpop.f32.mrb[0].mxu0
      %v6064 = vadd.f32 %v5536, %v6063
      %v6065 = vpop.f32.mrb[0].mxu0
      %v6066 = vadd.f32 %v5532, %v6065
      %v6067 = vpop.f32.mrb[0].mxu0
      %v6068 = vadd.f32 %v5536, %v6067
      %6069 = vmatprep.mubr.bf16.mxu0 %v5467
      %6070 = vmatmul.mubr.bf16.gmra.mrb[0].mxu0 %v5466
      %v6071 = vpop.f32.mrb[0].mxu0
      %v6072 = vadd.f32 %v5532, %v6071
      %v6073 = vpop.f32.mrb[0].mxu0
      %v6074 = vadd.f32 %v5536, %v6073
      %v6075 = vpop.f32.mrb[0].mxu0
      %v6076 = vadd.f32 %v5532, %v6075
      %v6077 = vpop.f32.mrb[0].mxu0
      %v6078 = vadd.f32 %v5536, %v6077
      %6079 = vmatprep.mubr.bf16.mxu0 %v5471
      %6080 = vmatmul.mubr.bf16.gmra.mrb[0].mxu0 %v5470
      %v6081 = vpop.f32.mrb[0].mxu0
      %v6082 = vadd.f32 %v5532, %v6081
      %v6083 = vpop.f32.mrb[0].mxu0
      %v6084 = vadd.f32 %v5536, %v6083
      %v6085 = vpop.f32.mrb[0].mxu0
      %v6086 = vadd.f32 %v5532, %v6085
      %v6087 = vpop.f32.mrb[0].mxu0
      %v6088 = vadd.f32 %v5536, %v6087
      %6089 = vmatprep.mubr.bf16.mxu0 %v5475
      %6090 = vmatmul.mubr.bf16.gmra.mrb[0].mxu0 %v5474
      %v6091 = vpop.f32.mrb[0].mxu0
      %v6092 = vadd.f32 %v5532, %v6091
      %v6093 = vpop.f32.mrb[0].mxu0
      %v6094 = vadd.f32 %v5536, %v6093
      %v6095 = vpop.f32.mrb[0].mxu0
      %v6096 = vadd.f32 %v5532, %v6095
      %v6097 = vpop.f32.mrb[0].mxu0
      %v6098 = vadd.f32 %v5536, %v6097
      %6099 = vmatprep.mubr.bf16.mxu0 %v5479
      %6100 = vmatmul.mubr.bf16.gmra.mrb[0].mxu0 %v5478
      %v6101 = vpop.f32.mrb[0].mxu0
      %v6102 = vadd.f32 %v5532, %v6101
      %v6103 = vpop.f32.mrb[0].mxu0
      %v6104 = vadd.f32 %v5536, %v6103
      %v6105 = vpop.f32.mrb[0].mxu0
      %v6106 = vadd.f32 %v5532, %v6105
      %v6107 = vpop.f32.mrb[0].mxu0
      %v6108 = vadd.f32 %v5536, %v6107
      %6109 = vmatprep.mubr.bf16.mxu0 %v5483
      %6110 = vmatmul.mubr.bf16.gmra.mrb[0].mxu0 %v5482
      %v6111 = vpop.f32.mrb[0].mxu0
      %v6112 = vadd.f32 %v5532, %v6111
      %v6113 = vpop.f32.mrb[0].mxu0
      %v6114 = vadd.f32 %v5536, %v6113
      %v6115 = vpop.f32.mrb[0].mxu0
      %v6116 = vadd.f32 %v5532, %v6115
      %v6117 = vpop.f32.mrb[0].mxu0
      %v6118 = vadd.f32 %v5536, %v6117
      %6119 = vmatprep.mubr.bf16.mxu0 %v5487
      %6120 = vmatmul.mubr.bf16.gmra.mrb[0].mxu0 %v5486
      %v6121 = vpop.f32.mrb[0].mxu0
      %v6122 = vadd.f32 %v5532, %v6121
      %v6123 = vpop.f32.mrb[0].mxu0
      %v6124 = vadd.f32 %v5536, %v6123
      %v6125 = vpop.f32.mrb[0].mxu0
      %v6126 = vadd.f32 %v5532, %v6125
      %v6127 = vpop.f32.mrb[0].mxu0
      %v6128 = vadd.f32 %v5536, %v6127
      %6129 = vmatprep.mubr.bf16.mxu0 %v5491
      %6130 = vmatmul.mubr.bf16.gmra.mrb[0].mxu0 %v5490
      %v6131 = vpop.f32.mrb[0].mxu0
      %v6132 = vadd.f32 %v5532, %v6131
      %v6133 = vpop.f32.mrb[0].mxu0
      %v6134 = vadd.f32 %v5536, %v6133
      %v6135 = vpop.f32.mrb[0].mxu0
      %v6136 = vadd.f32 %v5532, %v6135
      %v6137 = vpop.f32.mrb[0].mxu0
      %v6138 = vadd.f32 %v5536, %v6137
      %6139 = vmatprep.mubr.bf16.mxu0 %v5495
      %6140 = vmatmul.mubr.bf16.gmra.mrb[0].mxu0 %v5494
      %v6141 = vpop.f32.mrb[0].mxu0
      %v6142 = vadd.f32 %v5532, %v6141
      %v6143 = vpop.f32.mrb[0].mxu0
      %v6144 = vadd.f32 %v5536, %v6143
      %v6145 = vpop.f32.mrb[0].mxu0
      %v6146 = vadd.f32 %v5532, %v6145
      %v6147 = vpop.f32.mrb[0].mxu0
      %v6148 = vadd.f32 %v5536, %v6147
      %6149 = vmatprep.mubr.bf16.mxu0 %v5499
      %6150 = vmatmul.mubr.bf16.gmra.mrb[0].mxu0 %v5498
      %v6151 = vpop.f32.mrb[0].mxu0
      %v6152 = vadd.f32 %v5532, %v6151
      %v6153 = vpop.f32.mrb[0].mxu0
      %v6154 = vadd.f32 %v5536, %v6153
      %v6155 = vpop.f32.mrb[0].mxu0
      %v6156 = vadd.f32 %v5532, %v6155
      %v6157 = vpop.f32.mrb[0].mxu0
      %v6158 = vadd.f32 %v5536, %v6157
      %6159 = vmatprep.mubr.bf16.mxu0 %v5503
      %6160 = vmatmul.mubr.bf16.gmra.mrb[0].mxu0 %v5502
      %v6161 = vpop.f32.mrb[0].mxu0
      %v6162 = vadd.f32 %v5532, %v6161
      %v6163 = vpop.f32.mrb[0].mxu0
      %v6164 = vadd.f32 %v5536, %v6163
      %v6165 = vpop.f32.mrb[0].mxu0
      %v6166 = vadd.f32 %v5532, %v6165
      %v6167 = vpop.f32.mrb[0].mxu0
      %v6168 = vadd.f32 %v5536, %v6167
      %6169 = vmatprep.mubr.bf16.mxu0 %v5507
      %6170 = vmatmul.mubr.bf16.gmra.mrb[0].mxu0 %v5506
      %v6171 = vpop.f32.mrb[0].mxu0
      %v6172 = vadd.f32 %v5532, %v6171
      %v6173 = vpop.f32.mrb[0].mxu0
      %v6174 = vadd.f32 %v5536, %v6173
      %v6175 = vpop.f32.mrb[0].mxu0
      %v6176 = vadd.f32 %v5532, %v6175
      %v6177 = vpop.f32.mrb[0].mxu0
      %v6178 = vadd.f32 %v5536, %v6177
      %6179 = vmatprep.mubr.bf16.mxu0 %v5511
      %6180 = vmatmul.mubr.bf16.gmra.mrb[0].mxu0 %v5510
      %v6181 = vpop.f32.mrb[0].mxu0
      %v6182 = vadd.f32 %v5532, %v6181
      %v6183 = vpop.f32.mrb[0].mxu0
      %v6184 = vadd.f32 %v5536, %v6183
      %v6185 = vpop.f32.mrb[0].mxu0
      %v6186 = vadd.f32 %v5532, %v6185
      %v6187 = vpop.f32.mrb[0].mxu0
      %v6188 = vadd.f32 %v5536, %v6187
      %6189 = vmatprep.mubr.bf16.mxu0 %v5515
      %6190 = vmatmul.mubr.bf16.gmra.mrb[0].mxu0 %v5514
      %v6191 = vpop.f32.mrb[0].mxu0
      %v6192 = vadd.f32 %v5532, %v6191
      %v6193 = vpop.f32.mrb[0].mxu0
      %v6194 = vadd.f32 %v5536, %v6193
      %v6195 = vpop.f32.mrb[0].mxu0
      %v6196 = vadd.f32 %v5532, %v6195
      %v6197 = vpop.f32.mrb[0].mxu0
      %v6198 = vadd.f32 %v5536, %v6197
      %6199 = vmatprep.mubr.bf16.mxu0 %v5519
      %6200 = vmatmul.mubr.bf16.gmra.mrb[0].mxu0 %v5518
      %v6201 = vpop.f32.mrb[0].mxu0
      %v6202 = vadd.f32 %v5532, %v6201
      %v6203 = vpop.f32.mrb[0].mxu0
      %v6204 = vadd.f32 %v5536, %v6203
      %v6205 = vpop.f32.mrb[0].mxu0
      %v6206 = vadd.f32 %v5532, %v6205
      %v6207 = vpop.f32.mrb[0].mxu0
      %v6208 = vadd.f32 %v5536, %v6207
      %6209 = vmatprep.mubr.bf16.mxu0 %v5523
      %6210 = vmatmul.mubr.bf16.gmra.mrb[0].mxu0 %v5522
      %v6211 = vpop.f32.mrb[0].mxu0
      %v6212 = vadd.f32 %v5532, %v6211
      %v6213 = vpop.f32.mrb[0].mxu0
      %v6214 = vadd.f32 %v5536, %v6213
      %v6215 = vpop.f32.mrb[0].mxu0
      %v6216 = vadd.f32 %v5532, %v6215
      %v6217 = vpop.f32.mrb[0].mxu0
      %v6218 = vadd.f32 %v5536, %v6217
      %6219 = vdwg.mxu0
      %6220 = vmatprep.subr.bf16.mxu0 %v5858
      %6221 = vmatpush1.bf16.msra.mxu0 %v5857
      %6222 = vmatprep.subr.bf16.mxu0 %v5861
      %6223 = vmatpush1.bf16.msra.mxu0 %v5860
      %6224 = vmatprep.subr.bf16.mxu0 %v5864
      %6225 = vmatpush1.bf16.msra.mxu0 %v5863
      %6226 = vmatprep.subr.bf16.mxu0 %v5867
      %6227 = vmatpush1.bf16.msra.mxu0 %v5866
      %6228 = vmatprep.subr.bf16.mxu0 %v5870
      %6229 = vmatpush1.bf16.msra.mxu0 %v5869
      %6230 = vmatprep.subr.bf16.mxu0 %v5873
      %6231 = vmatpush1.bf16.msra.mxu0 %v5872
      %6232 = vmatprep.subr.bf16.mxu0 %v5876
      %6233 = vmatpush1.bf16.msra.mxu0 %v5875
      %6234 = vmatprep.subr.bf16.mxu0 %v5879
      %6235 = vmatpush1.bf16.msra.mxu0 %v5878
      %6236 = vmatprep.subr.bf16.mxu0 %v5882
      %6237 = vmatpush1.bf16.msra.mxu0 %v5881
      %6238 = vmatprep.subr.bf16.mxu0 %v5885
      %6239 = vmatpush1.bf16.msra.mxu0 %v5884
      %6240 = vmatprep.subr.bf16.mxu0 %v6022
      %6241 = vmatpush1.bf16.msra.mxu0 %v6019
      %6242 = vmatprep.subr.bf16.mxu0 0
      %6243 = vmatpush1.bf16.msra.mxu0 0
      %6244 = vmatprep.subr.bf16.mxu0 0
      %6245 = vmatpush1.bf16.msra.mxu0 0
      %6246 = vmatprep.subr.bf16.mxu0 0
      %6247 = vmatpush1.bf16.msra.mxu0 0
      %6248 = vmatprep.subr.bf16.mxu0 0
      %6249 = vmatpush1.bf16.msra.mxu0 0
      %6250 = vmatprep.subr.bf16.mxu0 0
      %6251 = vmatpush1.bf16.msra.mxu0 0
      %6252 = vmatprep.mubr.bf16.mxu0 %v5970
      %6253 = vmatmul.mubr.bf16.gmra.mrb[0].mxu0 %v5464
      %v6254 = vpop.f32.mrb[0].mxu0
      %v6255 = vadd.f32 %v6062, %v6254
      %v6256 = vpop.f32.mrb[0].mxu0
      %v6257 = vadd.f32 %v6064, %v6256
      %v6258 = vpop.f32.mrb[0].mxu0
      %v6259 = vadd.f32 %v6066, %v6258
      %v6260 = vpop.f32.mrb[0].mxu0
      %v6261 = vadd.f32 %v6068, %v6260
      %6262 = vmatprep.mubr.bf16.mxu0 %v5973
      %6263 = vmatmul.mubr.bf16.gmra.mrb[0].mxu0 %v5468
      %v6264 = vpop.f32.mrb[0].mxu0
      %v6265 = vadd.f32 %v6072, %v6264
      %v6266 = vpop.f32.mrb[0].mxu0
      %v6267 = vadd.f32 %v6074, %v6266
      %v6268 = vpop.f32.mrb[0].mxu0
      %v6269 = vadd.f32 %v6076, %v6268
      %v6270 = vpop.f32.mrb[0].mxu0
      %v6271 = vadd.f32 %v6078, %v6270
      %6272 = vmatprep.mubr.bf16.mxu0 %v5976
      %6273 = vmatmul.mubr.bf16.gmra.mrb[0].mxu0 %v5472
      %v6274 = vpop.f32.mrb[0].mxu0
      %v6275 = vadd.f32 %v6082, %v6274
      %v6276 = vpop.f32.mrb[0].mxu0
      %v6277 = vadd.f32 %v6084, %v6276
      %v6278 = vpop.f32.mrb[0].mxu0
      %v6279 = vadd.f32 %v6086, %v6278
      %v6280 = vpop.f32.mrb[0].mxu0
      %v6281 = vadd.f32 %v6088, %v6280
      %6282 = vmatprep.mubr.bf16.mxu0 %v5979
      %6283 = vmatmul.mubr.bf16.gmra.mrb[0].mxu0 %v5476
      %v6284 = vpop.f32.mrb[0].mxu0
      %v6285 = vadd.f32 %v6092, %v6284
      %v6286 = vpop.f32.mrb[0].mxu0
      %v6287 = vadd.f32 %v6094, %v6286
      %v6288 = vpop.f32.mrb[0].mxu0
      %v6289 = vadd.f32 %v6096, %v6288
      %v6290 = vpop.f32.mrb[0].mxu0
      %v6291 = vadd.f32 %v6098, %v6290
      %6292 = vmatprep.mubr.bf16.mxu0 %v5982
      %6293 = vmatmul.mubr.bf16.gmra.mrb[0].mxu0 %v5480
      %v6294 = vpop.f32.mrb[0].mxu0
      %v6295 = vadd.f32 %v6102, %v6294
      %v6296 = vpop.f32.mrb[0].mxu0
      %v6297 = vadd.f32 %v6104, %v6296
      %v6298 = vpop.f32.mrb[0].mxu0
      %v6299 = vadd.f32 %v6106, %v6298
      %v6300 = vpop.f32.mrb[0].mxu0
      %v6301 = vadd.f32 %v6108, %v6300
      %6302 = vmatprep.mubr.bf16.mxu0 %v5985
      %6303 = vmatmul.mubr.bf16.gmra.mrb[0].mxu0 %v5484
      %v6304 = vpop.f32.mrb[0].mxu0
      %v6305 = vadd.f32 %v6112, %v6304
      %v6306 = vpop.f32.mrb[0].mxu0
      %v6307 = vadd.f32 %v6114, %v6306
      %v6308 = vpop.f32.mrb[0].mxu0
      %v6309 = vadd.f32 %v6116, %v6308
      %v6310 = vpop.f32.mrb[0].mxu0
      %v6311 = vadd.f32 %v6118, %v6310
      %6312 = vmatprep.mubr.bf16.mxu0 %v5988
      %6313 = vmatmul.mubr.bf16.gmra.mrb[0].mxu0 %v5488
      %v6314 = vpop.f32.mrb[0].mxu0
      %v6315 = vadd.f32 %v6122, %v6314
      %v6316 = vpop.f32.mrb[0].mxu0
      %v6317 = vadd.f32 %v6124, %v6316
      %v6318 = vpop.f32.mrb[0].mxu0
      %v6319 = vadd.f32 %v6126, %v6318
      %v6320 = vpop.f32.mrb[0].mxu0
      %v6321 = vadd.f32 %v6128, %v6320
      %6322 = vmatprep.mubr.bf16.mxu0 %v5991
      %6323 = vmatmul.mubr.bf16.gmra.mrb[0].mxu0 %v5492
      %v6324 = vpop.f32.mrb[0].mxu0
      %v6325 = vadd.f32 %v6132, %v6324
      %v6326 = vpop.f32.mrb[0].mxu0
      %v6327 = vadd.f32 %v6134, %v6326
      %v6328 = vpop.f32.mrb[0].mxu0
      %v6329 = vadd.f32 %v6136, %v6328
      %v6330 = vpop.f32.mrb[0].mxu0
      %v6331 = vadd.f32 %v6138, %v6330
      %6332 = vmatprep.mubr.bf16.mxu0 %v5994
      %6333 = vmatmul.mubr.bf16.gmra.mrb[0].mxu0 %v5496
      %v6334 = vpop.f32.mrb[0].mxu0
      %v6335 = vadd.f32 %v6142, %v6334
      %v6336 = vpop.f32.mrb[0].mxu0
      %v6337 = vadd.f32 %v6144, %v6336
      %v6338 = vpop.f32.mrb[0].mxu0
      %v6339 = vadd.f32 %v6146, %v6338
      %v6340 = vpop.f32.mrb[0].mxu0
      %v6341 = vadd.f32 %v6148, %v6340
      %6342 = vmatprep.mubr.bf16.mxu0 %v5997
      %6343 = vmatmul.mubr.bf16.gmra.mrb[0].mxu0 %v5500
      %v6344 = vpop.f32.mrb[0].mxu0
      %v6345 = vadd.f32 %v6152, %v6344
      %v6346 = vpop.f32.mrb[0].mxu0
      %v6347 = vadd.f32 %v6154, %v6346
      %v6348 = vpop.f32.mrb[0].mxu0
      %v6349 = vadd.f32 %v6156, %v6348
      %v6350 = vpop.f32.mrb[0].mxu0
      %v6351 = vadd.f32 %v6158, %v6350
      %6352 = vmatprep.mubr.bf16.mxu0 %v6000
      %6353 = vmatmul.mubr.bf16.gmra.mrb[0].mxu0 %v5504
      %v6354 = vpop.f32.mrb[0].mxu0
      %v6355 = vadd.f32 %v6162, %v6354
      %v6356 = vpop.f32.mrb[0].mxu0
      %v6357 = vadd.f32 %v6164, %v6356
      %v6358 = vpop.f32.mrb[0].mxu0
      %v6359 = vadd.f32 %v6166, %v6358
      %v6360 = vpop.f32.mrb[0].mxu0
      %v6361 = vadd.f32 %v6168, %v6360
      %6362 = vmatprep.mubr.bf16.mxu0 %v6003
      %6363 = vmatmul.mubr.bf16.gmra.mrb[0].mxu0 %v5508
      %v6364 = vpop.f32.mrb[0].mxu0
      %v6365 = vadd.f32 %v6172, %v6364
      %v6366 = vpop.f32.mrb[0].mxu0
      %v6367 = vadd.f32 %v6174, %v6366
      %v6368 = vpop.f32.mrb[0].mxu0
      %v6369 = vadd.f32 %v6176, %v6368
      %v6370 = vpop.f32.mrb[0].mxu0
      %v6371 = vadd.f32 %v6178, %v6370
      %6372 = vmatprep.mubr.bf16.mxu0 %v6006
      %6373 = vmatmul.mubr.bf16.gmra.mrb[0].mxu0 %v5512
      %v6374 = vpop.f32.mrb[0].mxu0
      %v6375 = vadd.f32 %v6182, %v6374
      %v6376 = vpop.f32.mrb[0].mxu0
      %v6377 = vadd.f32 %v6184, %v6376
      %v6378 = vpop.f32.mrb[0].mxu0
      %v6379 = vadd.f32 %v6186, %v6378
      %v6380 = vpop.f32.mrb[0].mxu0
      %v6381 = vadd.f32 %v6188, %v6380
      %6382 = vmatprep.mubr.bf16.mxu0 %v6009
      %6383 = vmatmul.mubr.bf16.gmra.mrb[0].mxu0 %v5516
      %v6384 = vpop.f32.mrb[0].mxu0
      %v6385 = vadd.f32 %v6192, %v6384
      %v6386 = vpop.f32.mrb[0].mxu0
      %v6387 = vadd.f32 %v6194, %v6386
      %v6388 = vpop.f32.mrb[0].mxu0
      %v6389 = vadd.f32 %v6196, %v6388
      %v6390 = vpop.f32.mrb[0].mxu0
      %v6391 = vadd.f32 %v6198, %v6390
      %6392 = vmatprep.mubr.bf16.mxu0 %v6012
      %6393 = vmatmul.mubr.bf16.gmra.mrb[0].mxu0 %v5520
      %v6394 = vpop.f32.mrb[0].mxu0
      %v6395 = vadd.f32 %v6202, %v6394
      %v6396 = vpop.f32.mrb[0].mxu0
      %v6397 = vadd.f32 %v6204, %v6396
      %v6398 = vpop.f32.mrb[0].mxu0
      %v6399 = vadd.f32 %v6206, %v6398
      %v6400 = vpop.f32.mrb[0].mxu0
      %v6401 = vadd.f32 %v6208, %v6400
      %6402 = vmatprep.mubr.bf16.mxu0 %v6015
      %6403 = vmatmul.mubr.bf16.gmra.mrb[0].mxu0 %v5524
      %v6404 = vpop.f32.mrb[0].mxu0
      %v6405 = vadd.f32 %v6212, %v6404
      %v6406 = vpop.f32.mrb[0].mxu0
      %v6407 = vadd.f32 %v6214, %v6406
      %v6408 = vpop.f32.mrb[0].mxu0
      %v6409 = vadd.f32 %v6216, %v6408
      %v6410 = vpop.f32.mrb[0].mxu0
      %v6411 = vadd.f32 %v6218, %v6410
      %6412 = vdwg.mxu0
      %6413 = vmatprep.subr.bf16.mxu0 0
      %6414 = vmatpush1.bf16.msra.mxu0 %v5811
      %6415 = vmatprep.subr.bf16.mxu0 0
      %6416 = vmatpush1.bf16.msra.mxu0 %v5814
      %6417 = vmatprep.subr.bf16.mxu0 0
      %6418 = vmatpush1.bf16.msra.mxu0 %v5817
      %6419 = vmatprep.subr.bf16.mxu0 0
      %6420 = vmatpush1.bf16.msra.mxu0 %v5820
      %6421 = vmatprep.subr.bf16.mxu0 0
      %6422 = vmatpush1.bf16.msra.mxu0 %v5823
      %6423 = vmatprep.subr.bf16.mxu0 0
      %6424 = vmatpush1.bf16.msra.mxu0 %v5826
      %6425 = vmatprep.subr.bf16.mxu0 0
      %6426 = vmatpush1.bf16.msra.mxu0 %v5829
      %6427 = vmatprep.subr.bf16.mxu0 0
      %6428 = vmatpush1.bf16.msra.mxu0 %v5832
      %6429 = vmatprep.subr.bf16.mxu0 0
      %6430 = vmatpush1.bf16.msra.mxu0 %v5835
      %6431 = vmatprep.subr.bf16.mxu0 0
      %6432 = vmatpush1.bf16.msra.mxu0 %v5838
      %6433 = vmatprep.subr.bf16.mxu0 0
      %6434 = vmatpush1.bf16.msra.mxu0 %v5841
      %6435 = vmatprep.subr.bf16.mxu0 0
      %6436 = vmatpush1.bf16.msra.mxu0 %v5844
      %6437 = vmatprep.subr.bf16.mxu0 0
      %6438 = vmatpush1.bf16.msra.mxu0 %v5847
      %6439 = vmatprep.subr.bf16.mxu0 0
      %6440 = vmatpush1.bf16.msra.mxu0 %v5850
      %6441 = vmatprep.subr.bf16.mxu0 0
      %6442 = vmatpush1.bf16.msra.mxu0 %v5853
      %6443 = vmatprep.subr.bf16.mxu0 0
      %6444 = vmatpush1.bf16.msra.mxu0 %v5856
      %6445 = vmatprep.mubr.bf16.mxu0 %v5463
      %6446 = vmatmul.mubr.bf16.gmra.mrb[0].mxu0 %v5462
      %v6447 = vpop.f32.mrb[0].mxu0
      %v6448 = vadd.f32 %v5540, %v6447
      %v6449 = vpop.f32.mrb[0].mxu0
      %v6450 = vpop.f32.mrb[0].mxu0
      %v6451 = vadd.f32 %v5540, %v6450
      %v6452 = vpop.f32.mrb[0].mxu0
      %6453 = vmatprep.mubr.bf16.mxu0 %v5467
      %6454 = vmatmul.mubr.bf16.gmra.mrb[0].mxu0 %v5466
      %v6455 = vpop.f32.mrb[0].mxu0
      %v6456 = vadd.f32 %v5540, %v6455
      %v6457 = vpop.f32.mrb[0].mxu0
      %v6458 = vpop.f32.mrb[0].mxu0
      %v6459 = vadd.f32 %v5540, %v6458
      %v6460 = vpop.f32.mrb[0].mxu0
      %6461 = vmatprep.mubr.bf16.mxu0 %v5471
      %6462 = vmatmul.mubr.bf16.gmra.mrb[0].mxu0 %v5470
      %v6463 = vpop.f32.mrb[0].mxu0
      %v6464 = vadd.f32 %v5540, %v6463
      %v6465 = vpop.f32.mrb[0].mxu0
      %v6466 = vpop.f32.mrb[0].mxu0
      %v6467 = vadd.f32 %v5540, %v6466
      %v6468 = vpop.f32.mrb[0].mxu0
      %6469 = vmatprep.mubr.bf16.mxu0 %v5475
      %6470 = vmatmul.mubr.bf16.gmra.mrb[0].mxu0 %v5474
      %v6471 = vpop.f32.mrb[0].mxu0
      %v6472 = vadd.f32 %v5540, %v6471
      %v6473 = vpop.f32.mrb[0].mxu0
      %v6474 = vpop.f32.mrb[0].mxu0
      %v6475 = vadd.f32 %v5540, %v6474
      %v6476 = vpop.f32.mrb[0].mxu0
      %6477 = vmatprep.mubr.bf16.mxu0 %v5479
      %6478 = vmatmul.mubr.bf16.gmra.mrb[0].mxu0 %v5478
      %v6479 = vpop.f32.mrb[0].mxu0
      %v6480 = vadd.f32 %v5540, %v6479
      %v6481 = vpop.f32.mrb[0].mxu0
      %v6482 = vpop.f32.mrb[0].mxu0
      %v6483 = vadd.f32 %v5540, %v6482
      %v6484 = vpop.f32.mrb[0].mxu0
      %6485 = vmatprep.mubr.bf16.mxu0 %v5483
      %6486 = vmatmul.mubr.bf16.gmra.mrb[0].mxu0 %v5482
      %v6487 = vpop.f32.mrb[0].mxu0
      %v6488 = vadd.f32 %v5540, %v6487
      %v6489 = vpop.f32.mrb[0].mxu0
      %v6490 = vpop.f32.mrb[0].mxu0
      %v6491 = vadd.f32 %v5540, %v6490
      %v6492 = vpop.f32.mrb[0].mxu0
      %6493 = vmatprep.mubr.bf16.mxu0 %v5487
      %6494 = vmatmul.mubr.bf16.gmra.mrb[0].mxu0 %v5486
      %v6495 = vpop.f32.mrb[0].mxu0
      %v6496 = vadd.f32 %v5540, %v6495
      %v6497 = vpop.f32.mrb[0].mxu0
      %v6498 = vpop.f32.mrb[0].mxu0
      %v6499 = vadd.f32 %v5540, %v6498
      %v6500 = vpop.f32.mrb[0].mxu0
      %6501 = vmatprep.mubr.bf16.mxu0 %v5491
      %6502 = vmatmul.mubr.bf16.gmra.mrb[0].mxu0 %v5490
      %v6503 = vpop.f32.mrb[0].mxu0
      %v6504 = vadd.f32 %v5540, %v6503
      %v6505 = vpop.f32.mrb[0].mxu0
      %v6506 = vpop.f32.mrb[0].mxu0
      %v6507 = vadd.f32 %v5540, %v6506
      %v6508 = vpop.f32.mrb[0].mxu0
      %6509 = vmatprep.mubr.bf16.mxu0 %v5495
      %6510 = vmatmul.mubr.bf16.gmra.mrb[0].mxu0 %v5494
      %v6511 = vpop.f32.mrb[0].mxu0
      %v6512 = vadd.f32 %v5540, %v6511
      %v6513 = vpop.f32.mrb[0].mxu0
      %v6514 = vpop.f32.mrb[0].mxu0
      %v6515 = vadd.f32 %v5540, %v6514
      %v6516 = vpop.f32.mrb[0].mxu0
      %6517 = vmatprep.mubr.bf16.mxu0 %v5499
      %6518 = vmatmul.mubr.bf16.gmra.mrb[0].mxu0 %v5498
      %v6519 = vpop.f32.mrb[0].mxu0
      %v6520 = vadd.f32 %v5540, %v6519
      %v6521 = vpop.f32.mrb[0].mxu0
      %v6522 = vpop.f32.mrb[0].mxu0
      %v6523 = vadd.f32 %v5540, %v6522
      %v6524 = vpop.f32.mrb[0].mxu0
      %6525 = vmatprep.mubr.bf16.mxu0 %v5503
      %6526 = vmatmul.mubr.bf16.gmra.mrb[0].mxu0 %v5502
      %v6527 = vpop.f32.mrb[0].mxu0
      %v6528 = vadd.f32 %v5540, %v6527
      %v6529 = vpop.f32.mrb[0].mxu0
      %v6530 = vpop.f32.mrb[0].mxu0
      %v6531 = vadd.f32 %v5540, %v6530
      %v6532 = vpop.f32.mrb[0].mxu0
      %6533 = vmatprep.mubr.bf16.mxu0 %v5507
      %6534 = vmatmul.mubr.bf16.gmra.mrb[0].mxu0 %v5506
      %v6535 = vpop.f32.mrb[0].mxu0
      %v6536 = vadd.f32 %v5540, %v6535
      %v6537 = vpop.f32.mrb[0].mxu0
      %v6538 = vpop.f32.mrb[0].mxu0
      %v6539 = vadd.f32 %v5540, %v6538
      %v6540 = vpop.f32.mrb[0].mxu0
      %6541 = vmatprep.mubr.bf16.mxu0 %v5511
      %6542 = vmatmul.mubr.bf16.gmra.mrb[0].mxu0 %v5510
      %v6543 = vpop.f32.mrb[0].mxu0
      %v6544 = vadd.f32 %v5540, %v6543
      %v6545 = vpop.f32.mrb[0].mxu0
      %v6546 = vpop.f32.mrb[0].mxu0
      %v6547 = vadd.f32 %v5540, %v6546
      %v6548 = vpop.f32.mrb[0].mxu0
      %6549 = vmatprep.mubr.bf16.mxu0 %v5515
      %6550 = vmatmul.mubr.bf16.gmra.mrb[0].mxu0 %v5514
      %v6551 = vpop.f32.mrb[0].mxu0
      %v6552 = vadd.f32 %v5540, %v6551
      %v6553 = vpop.f32.mrb[0].mxu0
      %v6554 = vpop.f32.mrb[0].mxu0
      %v6555 = vadd.f32 %v5540, %v6554
      %v6556 = vpop.f32.mrb[0].mxu0
      %6557 = vmatprep.mubr.bf16.mxu0 %v5519
      %6558 = vmatmul.mubr.bf16.gmra.mrb[0].mxu0 %v5518
      %v6559 = vpop.f32.mrb[0].mxu0
      %v6560 = vadd.f32 %v5540, %v6559
      %v6561 = vpop.f32.mrb[0].mxu0
      %v6562 = vpop.f32.mrb[0].mxu0
      %v6563 = vadd.f32 %v5540, %v6562
      %v6564 = vpop.f32.mrb[0].mxu0
      %6565 = vmatprep.mubr.bf16.mxu0 %v5523
      %6566 = vmatmul.mubr.bf16.gmra.mrb[0].mxu0 %v5522
      %v6567 = vpop.f32.mrb[0].mxu0
      %v6568 = vadd.f32 %v5540, %v6567
      %v6569 = vpop.f32.mrb[0].mxu0
      %v6570 = vpop.f32.mrb[0].mxu0
      %v6571 = vadd.f32 %v5540, %v6570
      %v6572 = vpop.f32.mrb[0].mxu0
      %6573 = vdwg.mxu0
      %6574 = vmatprep.subr.bf16.mxu0 0
      %6575 = vmatpush1.bf16.msra.mxu0 %v5859
      %6576 = vmatprep.subr.bf16.mxu0 0
      %6577 = vmatpush1.bf16.msra.mxu0 %v5862
      %6578 = vmatprep.subr.bf16.mxu0 0
      %6579 = vmatpush1.bf16.msra.mxu0 %v5865
      %6580 = vmatprep.subr.bf16.mxu0 0
      %6581 = vmatpush1.bf16.msra.mxu0 %v5868
      %6582 = vmatprep.subr.bf16.mxu0 0
      %6583 = vmatpush1.bf16.msra.mxu0 %v5871
      %6584 = vmatprep.subr.bf16.mxu0 0
      %6585 = vmatpush1.bf16.msra.mxu0 %v5874
      %6586 = vmatprep.subr.bf16.mxu0 0
      %6587 = vmatpush1.bf16.msra.mxu0 %v5877
      %6588 = vmatprep.subr.bf16.mxu0 0
      %6589 = vmatpush1.bf16.msra.mxu0 %v5880
      %6590 = vmatprep.subr.bf16.mxu0 0
      %6591 = vmatpush1.bf16.msra.mxu0 %v5883
      %6592 = vmatprep.subr.bf16.mxu0 0
      %6593 = vmatpush1.bf16.msra.mxu0 %v5886
      %6594 = vmatprep.subr.bf16.mxu0 0
      %6595 = vmatpush1.bf16.msra.mxu0 %v6025
      %6596 = vmatprep.subr.bf16.mxu0 0
      %6597 = vmatpush1.bf16.msra.mxu0 0
      %6598 = vmatprep.subr.bf16.mxu0 0
      %6599 = vmatpush1.bf16.msra.mxu0 0
      %6600 = vmatprep.subr.bf16.mxu0 0
      %6601 = vmatpush1.bf16.msra.mxu0 0
      %6602 = vmatprep.subr.bf16.mxu0 0
      %6603 = vmatpush1.bf16.msra.mxu0 0
      %6604 = vmatprep.subr.bf16.mxu0 0
      %6605 = vmatpush1.bf16.msra.mxu0 0
      %6606 = vmatprep.mubr.bf16.mxu0 %v5970
      %6607 = vmatmul.mubr.bf16.gmra.mrb[0].mxu0 %v5464
      %v6608 = vpop.f32.mrb[0].mxu0
      %v6609 = vadd.f32 %v6448, %v6608
      %v6610 = vpop.f32.mrb[0].mxu0
      %v6611 = vpop.f32.mrb[0].mxu0
      %v6612 = vadd.f32 %v6451, %v6611
      %v6613 = vpop.f32.mrb[0].mxu0
      %6614 = vmatprep.mubr.bf16.mxu0 %v5973
      %6615 = vmatmul.mubr.bf16.gmra.mrb[0].mxu0 %v5468
      %v6616 = vpop.f32.mrb[0].mxu0
      %v6617 = vadd.f32 %v6456, %v6616
      %v6618 = vpop.f32.mrb[0].mxu0
      %v6619 = vpop.f32.mrb[0].mxu0
      %v6620 = vadd.f32 %v6459, %v6619
      %v6621 = vpop.f32.mrb[0].mxu0
      %6622 = vmatprep.mubr.bf16.mxu0 %v5976
      %6623 = vmatmul.mubr.bf16.gmra.mrb[0].mxu0 %v5472
      %v6624 = vpop.f32.mrb[0].mxu0
      %v6625 = vadd.f32 %v6464, %v6624
      %v6626 = vpop.f32.mrb[0].mxu0
      %v6627 = vpop.f32.mrb[0].mxu0
      %v6628 = vadd.f32 %v6467, %v6627
      %v6629 = vpop.f32.mrb[0].mxu0
      %6630 = vmatprep.mubr.bf16.mxu0 %v5979
      %6631 = vmatmul.mubr.bf16.gmra.mrb[0].mxu0 %v5476
      %v6632 = vpop.f32.mrb[0].mxu0
      %v6633 = vadd.f32 %v6472, %v6632
      %v6634 = vpop.f32.mrb[0].mxu0
      %v6635 = vpop.f32.mrb[0].mxu0
      %v6636 = vadd.f32 %v6475, %v6635
      %v6637 = vpop.f32.mrb[0].mxu0
      %6638 = vmatprep.mubr.bf16.mxu0 %v5982
      %6639 = vmatmul.mubr.bf16.gmra.mrb[0].mxu0 %v5480
      %v6640 = vpop.f32.mrb[0].mxu0
      %v6641 = vadd.f32 %v6480, %v6640
      %v6642 = vpop.f32.mrb[0].mxu0
      %v6643 = vpop.f32.mrb[0].mxu0
      %v6644 = vadd.f32 %v6483, %v6643
      %v6645 = vpop.f32.mrb[0].mxu0
      %6646 = vmatprep.mubr.bf16.mxu0 %v5985
      %6647 = vmatmul.mubr.bf16.gmra.mrb[0].mxu0 %v5484
      %v6648 = vpop.f32.mrb[0].mxu0
      %v6649 = vadd.f32 %v6488, %v6648
      %v6650 = vpop.f32.mrb[0].mxu0
      %v6651 = vpop.f32.mrb[0].mxu0
      %v6652 = vadd.f32 %v6491, %v6651
      %v6653 = vpop.f32.mrb[0].mxu0
      %6654 = vmatprep.mubr.bf16.mxu0 %v5988
      %6655 = vmatmul.mubr.bf16.gmra.mrb[0].mxu0 %v5488
      %v6656 = vpop.f32.mrb[0].mxu0
      %v6657 = vadd.f32 %v6496, %v6656
      %v6658 = vpop.f32.mrb[0].mxu0
      %v6659 = vpop.f32.mrb[0].mxu0
      %v6660 = vadd.f32 %v6499, %v6659
      %v6661 = vpop.f32.mrb[0].mxu0
      %6662 = vmatprep.mubr.bf16.mxu0 %v5991
      %6663 = vmatmul.mubr.bf16.gmra.mrb[0].mxu0 %v5492
      %v6664 = vpop.f32.mrb[0].mxu0
      %v6665 = vadd.f32 %v6504, %v6664
      %v6666 = vpop.f32.mrb[0].mxu0
      %v6667 = vpop.f32.mrb[0].mxu0
      %v6668 = vadd.f32 %v6507, %v6667
      %v6669 = vpop.f32.mrb[0].mxu0
      %6670 = vmatprep.mubr.bf16.mxu0 %v5994
      %6671 = vmatmul.mubr.bf16.gmra.mrb[0].mxu0 %v5496
      %v6672 = vpop.f32.mrb[0].mxu0
      %v6673 = vadd.f32 %v6512, %v6672
      %v6674 = vpop.f32.mrb[0].mxu0
      %v6675 = vpop.f32.mrb[0].mxu0
      %v6676 = vadd.f32 %v6515, %v6675
      %v6677 = vpop.f32.mrb[0].mxu0
      %6678 = vmatprep.mubr.bf16.mxu0 %v5997
      %6679 = vmatmul.mubr.bf16.gmra.mrb[0].mxu0 %v5500
      %v6680 = vpop.f32.mrb[0].mxu0
      %v6681 = vadd.f32 %v6520, %v6680
      %v6682 = vpop.f32.mrb[0].mxu0
      %v6683 = vpop.f32.mrb[0].mxu0
      %v6684 = vadd.f32 %v6523, %v6683
      %v6685 = vpop.f32.mrb[0].mxu0
      %6686 = vmatprep.mubr.bf16.mxu0 %v6000
      %6687 = vmatmul.mubr.bf16.gmra.mrb[0].mxu0 %v5504
      %v6688 = vpop.f32.mrb[0].mxu0
      %v6689 = vadd.f32 %v6528, %v6688
      %v6690 = vpop.f32.mrb[0].mxu0
      %v6691 = vpop.f32.mrb[0].mxu0
      %v6692 = vadd.f32 %v6531, %v6691
      %v6693 = vpop.f32.mrb[0].mxu0
      %6694 = vmatprep.mubr.bf16.mxu0 %v6003
      %6695 = vmatmul.mubr.bf16.gmra.mrb[0].mxu0 %v5508
      %v6696 = vpop.f32.mrb[0].mxu0
      %v6697 = vadd.f32 %v6536, %v6696
      %v6698 = vpop.f32.mrb[0].mxu0
      %v6699 = vpop.f32.mrb[0].mxu0
      %v6700 = vadd.f32 %v6539, %v6699
      %v6701 = vpop.f32.mrb[0].mxu0
      %6702 = vmatprep.mubr.bf16.mxu0 %v6006
      %6703 = vmatmul.mubr.bf16.gmra.mrb[0].mxu0 %v5512
      %v6704 = vpop.f32.mrb[0].mxu0
      %v6705 = vadd.f32 %v6544, %v6704
      %v6706 = vpop.f32.mrb[0].mxu0
      %v6707 = vpop.f32.mrb[0].mxu0
      %v6708 = vadd.f32 %v6547, %v6707
      %v6709 = vpop.f32.mrb[0].mxu0
      %6710 = vmatprep.mubr.bf16.mxu0 %v6009
      %6711 = vmatmul.mubr.bf16.gmra.mrb[0].mxu0 %v5516
      %v6712 = vpop.f32.mrb[0].mxu0
      %v6713 = vadd.f32 %v6552, %v6712
      %v6714 = vpop.f32.mrb[0].mxu0
      %v6715 = vpop.f32.mrb[0].mxu0
      %v6716 = vadd.f32 %v6555, %v6715
      %v6717 = vpop.f32.mrb[0].mxu0
      %6718 = vmatprep.mubr.bf16.mxu0 %v6012
      %6719 = vmatmul.mubr.bf16.gmra.mrb[0].mxu0 %v5520
      %v6720 = vpop.f32.mrb[0].mxu0
      %v6721 = vadd.f32 %v6560, %v6720
      %v6722 = vpop.f32.mrb[0].mxu0
      %v6723 = vpop.f32.mrb[0].mxu0
      %v6724 = vadd.f32 %v6563, %v6723
      %v6725 = vpop.f32.mrb[0].mxu0
      %6726 = vmatprep.mubr.bf16.mxu0 %v6015
      %6727 = vmatmul.mubr.bf16.gmra.mrb[0].mxu0 %v5524
      %v6728 = vpop.f32.mrb[0].mxu0
      %v6729 = vadd.f32 %v6568, %v6728
      %v6730 = vpop.f32.mrb[0].mxu0
      %v6731 = vpop.f32.mrb[0].mxu0
      %v6732 = vadd.f32 %v6571, %v6731
      %v6733 = vpop.f32.mrb[0].mxu0
      %6734 = vdwg.mxu0
      %vm6735 = vcmp.gt.f32.partialorder %v6255, 0.0
      %vm6736 = vcmp.gt.f32.partialorder %v6257, 0.0
      %vm6737 = vcmp.gt.f32.partialorder %v6609, 0.0
      %vm6738 = vcmp.gt.f32.partialorder %v6259, 0.0
      %vm6739 = vcmp.gt.f32.partialorder %v6261, 0.0
      %vm6740 = vcmp.gt.f32.partialorder %v6612, 0.0
      %vm6741 = vcmp.gt.f32.partialorder %v6265, 0.0
      %vm6742 = vcmp.gt.f32.partialorder %v6267, 0.0
      %vm6743 = vcmp.gt.f32.partialorder %v6617, 0.0
      %vm6744 = vcmp.gt.f32.partialorder %v6269, 0.0
      %vm6745 = vcmp.gt.f32.partialorder %v6271, 0.0
      %vm6746 = vcmp.gt.f32.partialorder %v6620, 0.0
      %vm6747 = vcmp.gt.f32.partialorder %v6275, 0.0
      %vm6748 = vcmp.gt.f32.partialorder %v6277, 0.0
      %vm6749 = vcmp.gt.f32.partialorder %v6625, 0.0
      %vm6750 = vcmp.gt.f32.partialorder %v6279, 0.0
      %vm6751 = vcmp.gt.f32.partialorder %v6281, 0.0
      %vm6752 = vcmp.gt.f32.partialorder %v6628, 0.0
      %vm6753 = vcmp.gt.f32.partialorder %v6285, 0.0
      %vm6754 = vcmp.gt.f32.partialorder %v6287, 0.0
      %vm6755 = vcmp.gt.f32.partialorder %v6633, 0.0
      %vm6756 = vcmp.gt.f32.partialorder %v6289, 0.0
      %vm6757 = vcmp.gt.f32.partialorder %v6291, 0.0
      %vm6758 = vcmp.gt.f32.partialorder %v6636, 0.0
      %vm6759 = vcmp.gt.f32.partialorder %v6295, 0.0
      %vm6760 = vcmp.gt.f32.partialorder %v6297, 0.0
      %vm6761 = vcmp.gt.f32.partialorder %v6641, 0.0
      %vm6762 = vcmp.gt.f32.partialorder %v6299, 0.0
      %vm6763 = vcmp.gt.f32.partialorder %v6301, 0.0
      %vm6764 = vcmp.gt.f32.partialorder %v6644, 0.0
      %vm6765 = vcmp.gt.f32.partialorder %v6305, 0.0
      %vm6766 = vcmp.gt.f32.partialorder %v6307, 0.0
      %vm6767 = vcmp.gt.f32.partialorder %v6649, 0.0
      %vm6768 = vcmp.gt.f32.partialorder %v6309, 0.0
      %vm6769 = vcmp.gt.f32.partialorder %v6311, 0.0
      %vm6770 = vcmp.gt.f32.partialorder %v6652, 0.0
      %vm6771 = vcmp.gt.f32.partialorder %v6315, 0.0
      %vm6772 = vcmp.gt.f32.partialorder %v6317, 0.0
      %vm6773 = vcmp.gt.f32.partialorder %v6657, 0.0
      %vm6774 = vcmp.gt.f32.partialorder %v6319, 0.0
      %vm6775 = vcmp.gt.f32.partialorder %v6321, 0.0
      %vm6776 = vcmp.gt.f32.partialorder %v6660, 0.0
      %vm6777 = vcmp.gt.f32.partialorder %v6325, 0.0
      %vm6778 = vcmp.gt.f32.partialorder %v6327, 0.0
      %vm6779 = vcmp.gt.f32.partialorder %v6665, 0.0
      %vm6780 = vcmp.gt.f32.partialorder %v6329, 0.0
      %vm6781 = vcmp.gt.f32.partialorder %v6331, 0.0
      %vm6782 = vcmp.gt.f32.partialorder %v6668, 0.0
      %vm6783 = vcmp.gt.f32.partialorder %v6335, 0.0
      %vm6784 = vcmp.gt.f32.partialorder %v6337, 0.0
      %vm6785 = vcmp.gt.f32.partialorder %v6673, 0.0
      %vm6786 = vcmp.gt.f32.partialorder %v6339, 0.0
      %vm6787 = vcmp.gt.f32.partialorder %v6341, 0.0
      %vm6788 = vcmp.gt.f32.partialorder %v6676, 0.0
      %vm6789 = vcmp.gt.f32.partialorder %v6345, 0.0
      %vm6790 = vcmp.gt.f32.partialorder %v6347, 0.0
      %vm6791 = vcmp.gt.f32.partialorder %v6681, 0.0
      %vm6792 = vcmp.gt.f32.partialorder %v6349, 0.0
      %vm6793 = vcmp.gt.f32.partialorder %v6351, 0.0
      %vm6794 = vcmp.gt.f32.partialorder %v6684, 0.0
      %vm6795 = vcmp.gt.f32.partialorder %v6355, 0.0
      %vm6796 = vcmp.gt.f32.partialorder %v6357, 0.0
      %vm6797 = vcmp.gt.f32.partialorder %v6689, 0.0
      %vm6798 = vcmp.gt.f32.partialorder %v6359, 0.0
      %vm6799 = vcmp.gt.f32.partialorder %v6361, 0.0
      %vm6800 = vcmp.gt.f32.partialorder %v6692, 0.0
      %vm6801 = vcmp.gt.f32.partialorder %v6365, 0.0
      %vm6802 = vcmp.gt.f32.partialorder %v6367, 0.0
      %vm6803 = vcmp.gt.f32.partialorder %v6697, 0.0
      %vm6804 = vcmp.gt.f32.partialorder %v6369, 0.0
      %vm6805 = vcmp.gt.f32.partialorder %v6371, 0.0
      %vm6806 = vcmp.gt.f32.partialorder %v6700, 0.0
      %vm6807 = vcmp.gt.f32.partialorder %v6375, 0.0
      %vm6808 = vcmp.gt.f32.partialorder %v6377, 0.0
      %vm6809 = vcmp.gt.f32.partialorder %v6705, 0.0
      %vm6810 = vcmp.gt.f32.partialorder %v6379, 0.0
      %vm6811 = vcmp.gt.f32.partialorder %v6381, 0.0
      %vm6812 = vcmp.gt.f32.partialorder %v6708, 0.0
      %vm6813 = vcmp.gt.f32.partialorder %v6385, 0.0
      %vm6814 = vcmp.gt.f32.partialorder %v6387, 0.0
      %vm6815 = vcmp.gt.f32.partialorder %v6713, 0.0
      %vm6816 = vcmp.gt.f32.partialorder %v6389, 0.0
      %vm6817 = vcmp.gt.f32.partialorder %v6391, 0.0
      %vm6818 = vcmp.gt.f32.partialorder %v6716, 0.0
      %vm6819 = vcmp.gt.f32.partialorder %v6395, 0.0
      %vm6820 = vcmp.gt.f32.partialorder %v6397, 0.0
      %vm6821 = vcmp.gt.f32.partialorder %v6721, 0.0
      %vm6822 = vcmp.gt.f32.partialorder %v6399, 0.0
      %vm6823 = vcmp.gt.f32.partialorder %v6401, 0.0
      %vm6824 = vcmp.gt.f32.partialorder %v6724, 0.0
      %vm6825 = vcmp.gt.f32.partialorder %v6405, 0.0
      %vm6826 = vcmp.gt.f32.partialorder %v6407, 0.0
      %vm6827 = vcmp.gt.f32.partialorder %v6729, 0.0
      %vm6828 = vcmp.gt.f32.partialorder %v6409, 0.0
      %vm6829 = vcmp.gt.f32.partialorder %v6411, 0.0
      %vm6830 = vcmp.gt.f32.partialorder %v6732, 0.0
      %v6831 = vmul.f32 %v6255, 0.01
      %v6832 = vmul.f32 %v6257, 0.01
      %v6833 = vmul.f32 %v6609, 0.01
      %v6834 = vmul.f32 %v6259, 0.01
      %v6835 = vmul.f32 %v6261, 0.01
      %v6836 = vmul.f32 %v6612, 0.01
      %v6837 = vmul.f32 %v6265, 0.01
      %v6838 = vmul.f32 %v6267, 0.01
      %v6839 = vmul.f32 %v6617, 0.01
      %v6840 = vmul.f32 %v6269, 0.01
      %v6841 = vmul.f32 %v6271, 0.01
      %v6842 = vmul.f32 %v6620, 0.01
      %v6843 = vmul.f32 %v6275, 0.01
      %v6844 = vmul.f32 %v6277, 0.01
      %v6845 = vmul.f32 %v6625, 0.01
      %v6846 = vmul.f32 %v6279, 0.01
      %v6847 = vmul.f32 %v6281, 0.01
      %v6848 = vmul.f32 %v6628, 0.01
      %v6849 = vmul.f32 %v6285, 0.01
      %v6850 = vmul.f32 %v6287, 0.01
      %v6851 = vmul.f32 %v6633, 0.01
      %v6852 = vmul.f32 %v6289, 0.01
      %v6853 = vmul.f32 %v6291, 0.01
      %v6854 = vmul.f32 %v6636, 0.01
      %v6855 = vmul.f32 %v6295, 0.01
      %v6856 = vmul.f32 %v6297, 0.01
      %v6857 = vmul.f32 %v6641, 0.01
      %v6858 = vmul.f32 %v6299, 0.01
      %v6859 = vmul.f32 %v6301, 0.01
      %v6860 = vmul.f32 %v6644, 0.01
      %v6861 = vmul.f32 %v6305, 0.01
      %v6862 = vmul.f32 %v6307, 0.01
      %v6863 = vmul.f32 %v6649, 0.01
      %v6864 = vmul.f32 %v6309, 0.01
      %v6865 = vmul.f32 %v6311, 0.01
      %v6866 = vmul.f32 %v6652, 0.01
      %v6867 = vmul.f32 %v6315, 0.01
      %v6868 = vmul.f32 %v6317, 0.01
      %v6869 = vmul.f32 %v6657, 0.01
      %v6870 = vmul.f32 %v6319, 0.01
      %v6871 = vmul.f32 %v6321, 0.01
      %v6872 = vmul.f32 %v6660, 0.01
      %v6873 = vmul.f32 %v6325, 0.01
      %v6874 = vmul.f32 %v6327, 0.01
      %v6875 = vmul.f32 %v6665, 0.01
      %v6876 = vmul.f32 %v6329, 0.01
      %v6877 = vmul.f32 %v6331, 0.01
      %v6878 = vmul.f32 %v6668, 0.01
      %v6879 = vmul.f32 %v6335, 0.01
      %v6880 = vmul.f32 %v6337, 0.01
      %v6881 = vmul.f32 %v6673, 0.01
      %v6882 = vmul.f32 %v6339, 0.01
      %v6883 = vmul.f32 %v6341, 0.01
      %v6884 = vmul.f32 %v6676, 0.01
      %v6885 = vmul.f32 %v6345, 0.01
      %v6886 = vmul.f32 %v6347, 0.01
      %v6887 = vmul.f32 %v6681, 0.01
      %v6888 = vmul.f32 %v6349, 0.01
      %v6889 = vmul.f32 %v6351, 0.01
      %v6890 = vmul.f32 %v6684, 0.01
      %v6891 = vmul.f32 %v6355, 0.01
      %v6892 = vmul.f32 %v6357, 0.01
      %v6893 = vmul.f32 %v6689, 0.01
      %v6894 = vmul.f32 %v6359, 0.01
      %v6895 = vmul.f32 %v6361, 0.01
      %v6896 = vmul.f32 %v6692, 0.01
      %v6897 = vmul.f32 %v6365, 0.01
      %v6898 = vmul.f32 %v6367, 0.01
      %v6899 = vmul.f32 %v6697, 0.01
      %v6900 = vmul.f32 %v6369, 0.01
      %v6901 = vmul.f32 %v6371, 0.01
      %v6902 = vmul.f32 %v6700, 0.01
      %v6903 = vmul.f32 %v6375, 0.01
      %v6904 = vmul.f32 %v6377, 0.01
      %v6905 = vmul.f32 %v6705, 0.01
      %v6906 = vmul.f32 %v6379, 0.01
      %v6907 = vmul.f32 %v6381, 0.01
      %v6908 = vmul.f32 %v6708, 0.01
      %v6909 = vmul.f32 %v6385, 0.01
      %v6910 = vmul.f32 %v6387, 0.01
      %v6911 = vmul.f32 %v6713, 0.01
      %v6912 = vmul.f32 %v6389, 0.01
      %v6913 = vmul.f32 %v6391, 0.01
      %v6914 = vmul.f32 %v6716, 0.01
      %v6915 = vmul.f32 %v6395, 0.01
      %v6916 = vmul.f32 %v6397, 0.01
      %v6917 = vmul.f32 %v6721, 0.01
      %v6918 = vmul.f32 %v6399, 0.01
      %v6919 = vmul.f32 %v6401, 0.01
      %v6920 = vmul.f32 %v6724, 0.01
      %v6921 = vmul.f32 %v6405, 0.01
      %v6922 = vmul.f32 %v6407, 0.01
      %v6923 = vmul.f32 %v6729, 0.01
      %v6924 = vmul.f32 %v6409, 0.01
      %v6925 = vmul.f32 %v6411, 0.01
      %v6926 = vmul.f32 %v6732, 0.01
      %v6927 = vsel %vm6735, %v6255, %v6831
      %v6928 = vsel %vm6736, %v6257, %v6832
      %v6929 = vsel %vm6737, %v6609, %v6833
      %v6930 = vsel %vm6738, %v6259, %v6834
      %v6931 = vsel %vm6739, %v6261, %v6835
      %v6932 = vsel %vm6740, %v6612, %v6836
      %v6933 = vsel %vm6741, %v6265, %v6837
      %v6934 = vsel %vm6742, %v6267, %v6838
      %v6935 = vsel %vm6743, %v6617, %v6839
      %v6936 = vsel %vm6744, %v6269, %v6840
      %v6937 = vsel %vm6745, %v6271, %v6841
      %v6938 = vsel %vm6746, %v6620, %v6842
      %v6939 = vsel %vm6747, %v6275, %v6843
      %v6940 = vsel %vm6748, %v6277, %v6844
      %v6941 = vsel %vm6749, %v6625, %v6845
      %v6942 = vsel %vm6750, %v6279, %v6846
      %v6943 = vsel %vm6751, %v6281, %v6847
      %v6944 = vsel %vm6752, %v6628, %v6848
      %v6945 = vsel %vm6753, %v6285, %v6849
      %v6946 = vsel %vm6754, %v6287, %v6850
      %v6947 = vsel %vm6755, %v6633, %v6851
      %v6948 = vsel %vm6756, %v6289, %v6852
      %v6949 = vsel %vm6757, %v6291, %v6853
      %v6950 = vsel %vm6758, %v6636, %v6854
      %v6951 = vsel %vm6759, %v6295, %v6855
      %v6952 = vsel %vm6760, %v6297, %v6856
      %v6953 = vsel %vm6761, %v6641, %v6857
      %v6954 = vsel %vm6762, %v6299, %v6858
      %v6955 = vsel %vm6763, %v6301, %v6859
      %v6956 = vsel %vm6764, %v6644, %v6860
      %v6957 = vsel %vm6765, %v6305, %v6861
      %v6958 = vsel %vm6766, %v6307, %v6862
      %v6959 = vsel %vm6767, %v6649, %v6863
      %v6960 = vsel %vm6768, %v6309, %v6864
      %v6961 = vsel %vm6769, %v6311, %v6865
      %v6962 = vsel %vm6770, %v6652, %v6866
      %v6963 = vsel %vm6771, %v6315, %v6867
      %v6964 = vsel %vm6772, %v6317, %v6868
      %v6965 = vsel %vm6773, %v6657, %v6869
      %v6966 = vsel %vm6774, %v6319, %v6870
      %v6967 = vsel %vm6775, %v6321, %v6871
      %v6968 = vsel %vm6776, %v6660, %v6872
      %v6969 = vsel %vm6777, %v6325, %v6873
      %v6970 = vsel %vm6778, %v6327, %v6874
      %v6971 = vsel %vm6779, %v6665, %v6875
      %v6972 = vsel %vm6780, %v6329, %v6876
      %v6973 = vsel %vm6781, %v6331, %v6877
      %v6974 = vsel %vm6782, %v6668, %v6878
      %v6975 = vsel %vm6783, %v6335, %v6879
      %v6976 = vsel %vm6784, %v6337, %v6880
      %v6977 = vsel %vm6785, %v6673, %v6881
      %v6978 = vsel %vm6786, %v6339, %v6882
      %v6979 = vsel %vm6787, %v6341, %v6883
      %v6980 = vsel %vm6788, %v6676, %v6884
      %v6981 = vsel %vm6789, %v6345, %v6885
      %v6982 = vsel %vm6790, %v6347, %v6886
      %v6983 = vsel %vm6791, %v6681, %v6887
      %v6984 = vsel %vm6792, %v6349, %v6888
      %v6985 = vsel %vm6793, %v6351, %v6889
      %v6986 = vsel %vm6794, %v6684, %v6890
      %v6987 = vsel %vm6795, %v6355, %v6891
      %v6988 = vsel %vm6796, %v6357, %v6892
      %v6989 = vsel %vm6797, %v6689, %v6893
      %v6990 = vsel %vm6798, %v6359, %v6894
      %v6991 = vsel %vm6799, %v6361, %v6895
      %v6992 = vsel %vm6800, %v6692, %v6896
      %v6993 = vsel %vm6801, %v6365, %v6897
      %v6994 = vsel %vm6802, %v6367, %v6898
      %v6995 = vsel %vm6803, %v6697, %v6899
      %v6996 = vsel %vm6804, %v6369, %v6900
      %v6997 = vsel %vm6805, %v6371, %v6901
      %v6998 = vsel %vm6806, %v6700, %v6902
      %v6999 = vsel %vm6807, %v6375, %v6903
      %v7000 = vsel %vm6808, %v6377, %v6904
      %v7001 = vsel %vm6809, %v6705, %v6905
      %v7002 = vsel %vm6810, %v6379, %v6906
      %v7003 = vsel %vm6811, %v6381, %v6907
      %v7004 = vsel %vm6812, %v6708, %v6908
      %v7005 = vsel %vm6813, %v6385, %v6909
      %v7006 = vsel %vm6814, %v6387, %v6910
      %v7007 = vsel %vm6815, %v6713, %v6911
      %v7008 = vsel %vm6816, %v6389, %v6912
      %v7009 = vsel %vm6817, %v6391, %v6913
      %v7010 = vsel %vm6818, %v6716, %v6914
      %v7011 = vsel %vm6819, %v6395, %v6915
      %v7012 = vsel %vm6820, %v6397, %v6916
      %v7013 = vsel %vm6821, %v6721, %v6917
      %v7014 = vsel %vm6822, %v6399, %v6918
      %v7015 = vsel %vm6823, %v6401, %v6919
      %v7016 = vsel %vm6824, %v6724, %v6920
      %v7017 = vsel %vm6825, %v6405, %v6921
      %v7018 = vsel %vm6826, %v6407, %v6922
      %v7019 = vsel %vm6827, %v6729, %v6923
      %v7020 = vsel %vm6828, %v6409, %v6924
      %v7021 = vsel %vm6829, %v6411, %v6925
      %v7022 = vsel %vm6830, %v6732, %v6926
      %v7023 = vld [vmem:[%s5] sm:$0xff]
      %v7024 = vld [vmem:[%s5 + $0x8] sm:$0xff]
      %v7025 = vld [vmem:[%s5 + $0x10] sm:$0xff]
      %v7026 = vld [vmem:[%s5 + $0x18] sm:$0xff]
      %v7027 = vld [vmem:[%s5 + $0x20] sm:$0xff]
      %v7028 = vld [vmem:[%s5 + $0x28] sm:$0xff]
      %v7029 = vld [vmem:[%s5 + $0x30] sm:$0xff]
      %v7030 = vld [vmem:[%s5 + $0x38] sm:$0xff]
      %v7031 = vld [vmem:[%s5 + $0x40] sm:$0xff]
      %v7032 = vld [vmem:[%s5 + $0x48] sm:$0xff]
      %v7033 = vld [vmem:[%s5 + $0x50] sm:$0xff]
      %v7034 = vld [vmem:[%s5 + $0x58] sm:$0xff]
      %v7035 = vld [vmem:[%s5 + $0x60] sm:$0xff]
      %v7036 = vld [vmem:[%s5 + $0x68] sm:$0xff]
      %v7037 = vld [vmem:[%s5 + $0x70] sm:$0xff]
      %v7038 = vld [vmem:[%s5 + $0x78] sm:$0xff]
      %v7039 = vld [vmem:[%s5 + $0x80] sm:$0xff]
      %v7040 = vld [vmem:[%s5 + $0x88] sm:$0xff]
      %v7041 = vld [vmem:[%s5 + $0x90] sm:$0xff]
      %v7042 = vld [vmem:[%s5 + $0x98] sm:$0xff]
      %v7043 = vld [vmem:[%s5 + $0xa0] sm:$0xff]
      %v7044 = vld [vmem:[%s5 + $0xa8] sm:$0xff]
      %v7045 = vld [vmem:[%s5 + $0xb0] sm:$0xff]
      %v7046 = vld [vmem:[%s5 + $0xb8] sm:$0xff]
      %v7047 = vld [vmem:[%s5 + $0xc0] sm:$0xff]
      %v7048 = vld [vmem:[%s5 + $0xc8] sm:$0xff]
      %v7049 = vld [vmem:[%s5 + $0xd0] sm:$0xff]
      %v7050 = vld [vmem:[%s5 + $0xd8] sm:$0xff]
      %v7051 = vld [vmem:[%s5 + $0xe0] sm:$0xff]
      %v7052 = vld [vmem:[%s5 + $0xe8] sm:$0xff]
      %v7053 = vld [vmem:[%s5 + $0xf0] sm:$0xff]
      %v7054 = vld [vmem:[%s5 + $0xf8] sm:$0xff]
      %v7055 = vld [vmem:[%s5 + $0x100] sm:$0xff]
      %v7056 = vld [vmem:[%s5 + $0x108] sm:$0xff]
      %v7057 = vld [vmem:[%s5 + $0x110] sm:$0xff]
      %v7058 = vpack.c.bf16 %v6930, %v6927
      %v7059 = vpack.c.bf16 %v6931, %v6928
      %v7060 = vpack.c.bf16 %v6932, %v6929
      %v7061 = vpack.c.bf16 %v6936, %v6933
      %v7062 = vpack.c.bf16 %v6937, %v6934
      %v7063 = vpack.c.bf16 %v6938, %v6935
      %v7064 = vpack.c.bf16 %v6942, %v6939
      %v7065 = vpack.c.bf16 %v6943, %v6940
      %v7066 = vpack.c.bf16 %v6944, %v6941
      %v7067 = vpack.c.bf16 %v6948, %v6945
      %v7068 = vpack.c.bf16 %v6949, %v6946
      %v7069 = vpack.c.bf16 %v6950, %v6947
      %v7070 = vpack.c.bf16 %v6954, %v6951
      %v7071 = vpack.c.bf16 %v6955, %v6952
      %v7072 = vpack.c.bf16 %v6956, %v6953
      %v7073 = vpack.c.bf16 %v6960, %v6957
      %v7074 = vpack.c.bf16 %v6961, %v6958
      %v7075 = vpack.c.bf16 %v6962, %v6959
      %v7076 = vpack.c.bf16 %v6966, %v6963
      %v7077 = vpack.c.bf16 %v6967, %v6964
      %v7078 = vpack.c.bf16 %v6968, %v6965
      %v7079 = vpack.c.bf16 %v6972, %v6969
      %v7080 = vpack.c.bf16 %v6973, %v6970
      %v7081 = vpack.c.bf16 %v6974, %v6971
      %v7082 = vpack.c.bf16 %v6978, %v6975
      %v7083 = vpack.c.bf16 %v6979, %v6976
      %v7084 = vpack.c.bf16 %v6980, %v6977
      %v7085 = vpack.c.bf16 %v6984, %v6981
      %v7086 = vpack.c.bf16 %v6985, %v6982
      %v7087 = vpack.c.bf16 %v6986, %v6983
      %v7088 = vpack.c.bf16 %v6990, %v6987
      %v7089 = vpack.c.bf16 %v6991, %v6988
      %v7090 = vpack.c.bf16 %v6992, %v6989
      %v7091 = vpack.c.bf16 %v6996, %v6993
      %v7092 = vpack.c.bf16 %v6997, %v6994
      %v7093 = vpack.c.bf16 %v6998, %v6995
      %v7094 = vpack.c.bf16 %v7002, %v6999
      %v7095 = vpack.c.bf16 %v7003, %v7000
      %v7096 = vpack.c.bf16 %v7004, %v7001
      %v7097 = vpack.c.bf16 %v7008, %v7005
      %v7098 = vpack.c.bf16 %v7009, %v7006
      %v7099 = vpack.c.bf16 %v7010, %v7007
      %v7100 = vpack.c.bf16 %v7014, %v7011
      %v7101 = vpack.c.bf16 %v7015, %v7012
      %v7102 = vpack.c.bf16 %v7016, %v7013
      %v7103 = vpack.c.bf16 %v7020, %v7017
      %v7104 = vpack.c.bf16 %v7021, %v7018
      %v7105 = vpack.c.bf16 %v7022, %v7019
      %s7106 = scalar_lea.vmem %s1, 3
      %v7107 = vld [vmem:[%s7106] ss:$8 sm:$0x3]
      %v7109 = vlaneseq
      %v7110 = vshrl.u32 %v7109, 7
      %v7111 = vsub.s32 0, %v7110
      %v7112 = vrot.slane %v7107, %v7111
      %v7113 = vlaneseq
      %v7114 = vshrl.u32 %v7113, 7
      %v7115 = vsub.s32 1, %v7114
      %v7116 = vrot.slane %v7107, %v7115
      %v7154 = vunpack.c.l.b16 %v7023
      %v7155 = vunpack.c.h.b16 %v7023
      %v7156 = vunpack.c.l.b16 %v7024
      %v7157 = vunpack.c.h.b16 %v7024
      %v7158 = vunpack.c.l.b16 %v7025
      %v7159 = vunpack.c.h.b16 %v7025
      %v7160 = vunpack.c.l.b16 %v7026
      %v7161 = vunpack.c.h.b16 %v7026
      %v7162 = vunpack.c.l.b16 %v7027
      %v7163 = vunpack.c.h.b16 %v7027
      %v7164 = vunpack.c.l.b16 %v7028
      %v7165 = vunpack.c.h.b16 %v7028
      %v7166 = vunpack.c.l.b16 %v7029
      %v7167 = vunpack.c.h.b16 %v7029
      %v7168 = vunpack.c.l.b16 %v7030
      %v7169 = vunpack.c.h.b16 %v7030
      %v7170 = vunpack.c.l.b16 %v7031
      %v7171 = vunpack.c.h.b16 %v7031
      %v7172 = vunpack.c.l.b16 %v7032
      %v7173 = vunpack.c.h.b16 %v7032
      %v7174 = vunpack.c.l.b16 %v7033
      %v7175 = vunpack.c.h.b16 %v7033
      %v7176 = vunpack.c.l.b16 %v7034
      %v7177 = vunpack.c.h.b16 %v7034
      %v7178 = vunpack.c.l.b16 %v7035
      %v7179 = vunpack.c.h.b16 %v7035
      %v7180 = vunpack.c.l.b16 %v7036
      %v7181 = vunpack.c.h.b16 %v7036
      %v7182 = vunpack.c.l.b16 %v7037
      %v7183 = vunpack.c.h.b16 %v7037
      %v7184 = vunpack.c.l.b16 %v7038
      %v7185 = vunpack.c.h.b16 %v7038
      %v7186 = vunpack.c.l.b16 %v7039
      %v7187 = vunpack.c.h.b16 %v7039
      %v7188 = vunpack.c.l.b16 %v7040
      %v7189 = vunpack.c.h.b16 %v7040
      %v7190 = vunpack.c.l.b16 %v7041
      %v7191 = vunpack.c.h.b16 %v7041
      %v7192 = vunpack.c.l.b16 %v7042
      %v7193 = vunpack.c.h.b16 %v7042
      %v7194 = vunpack.c.l.b16 %v7043
      %v7195 = vunpack.c.h.b16 %v7043
      %v7196 = vunpack.c.l.b16 %v7044
      %v7197 = vunpack.c.h.b16 %v7044
      %v7198 = vunpack.c.l.b16 %v7045
      %v7199 = vunpack.c.h.b16 %v7045
      %v7200 = vunpack.c.l.b16 %v7046
      %v7201 = vunpack.c.h.b16 %v7046
      %v7202 = vunpack.c.l.b16 %v7047
      %v7203 = vunpack.c.h.b16 %v7047
      %v7204 = vunpack.c.l.b16 %v7048
      %v7205 = vunpack.c.h.b16 %v7048
      %v7206 = vunpack.c.l.b16 %v7049
      %v7207 = vunpack.c.h.b16 %v7049
      %v7208 = vunpack.c.l.b16 %v7050
      %v7209 = vunpack.c.h.b16 %v7050
      %v7210 = vunpack.c.l.b16 %v7051
      %v7211 = vunpack.c.h.b16 %v7051
      %v7212 = vunpack.c.l.b16 %v7052
      %v7213 = vunpack.c.h.b16 %v7052
      %v7214 = vunpack.c.l.b16 %v7053
      %v7215 = vunpack.c.h.b16 %v7053
      %v7216 = vunpack.c.l.b16 %v7054
      %v7217 = vunpack.c.h.b16 %v7054
      %v7218 = vunpack.c.l.b16 %v7055
      %v7219 = vunpack.c.h.b16 %v7055
      %v7220 = vunpack.c.l.b16 %v7056
      %v7221 = vunpack.c.h.b16 %v7056
      %v7222 = vunpack.c.l.b16 %v7057
      %v7223 = vunpack.c.h.b16 %v7057
      %v7224 = vpack.c.b16 %v7156, %v7154
      %v7225 = vpack.c.b16 %v7157, %v7155
      %v7226 = vpack.c.b16 %v7160, %v7158
      %v7227 = vpack.c.b16 %v7161, %v7159
      %v7228 = vpack.c.b16 %v7164, %v7162
      %v7229 = vpack.c.b16 %v7165, %v7163
      %v7230 = vpack.c.b16 %v7168, %v7166
      %v7231 = vpack.c.b16 %v7169, %v7167
      %v7232 = vpack.c.b16 %v7172, %v7170
      %v7233 = vpack.c.b16 %v7173, %v7171
      %v7234 = vpack.c.b16 %v7176, %v7174
      %v7235 = vpack.c.b16 %v7177, %v7175
      %v7236 = vpack.c.b16 %v7180, %v7178
      %v7237 = vpack.c.b16 %v7181, %v7179
      %v7238 = vpack.c.b16 %v7184, %v7182
      %v7239 = vpack.c.b16 %v7185, %v7183
      %v7240 = vpack.c.b16 %v7188, %v7186
      %v7241 = vpack.c.b16 %v7189, %v7187
      %v7242 = vpack.c.b16 %v7192, %v7190
      %v7243 = vpack.c.b16 %v7193, %v7191
      %v7244 = vpack.c.b16 %v7196, %v7194
      %v7245 = vpack.c.b16 %v7197, %v7195
      %v7246 = vpack.c.b16 %v7200, %v7198
      %v7247 = vpack.c.b16 %v7201, %v7199
      %v7248 = vpack.c.b16 %v7204, %v7202
      %v7249 = vpack.c.b16 %v7205, %v7203
      %v7250 = vpack.c.b16 %v7208, %v7206
      %v7251 = vpack.c.b16 %v7209, %v7207
      %v7252 = vpack.c.b16 %v7212, %v7210
      %v7253 = vpack.c.b16 %v7213, %v7211
      %v7254 = vpack.c.b16 %v7216, %v7214
      %v7255 = vpack.c.b16 %v7217, %v7215
      %v7256 = vpack.c.b16 %v7220, %v7218
      %v7257 = vpack.c.b16 %v7221, %v7219
      %v7258 = vpack.c.b16 %v7222, %v7222
      %v7259 = vpack.c.b16 %v7223, %v7223
      %vm7294 = vcmask 195584
      %v7296 = vsel %vm7294, %v7060, 0
      %v7299 = vsel %vm7294, %v7063, 0
      %v7302 = vsel %vm7294, %v7066, 0
      %v7305 = vsel %vm7294, %v7069, 0
      %v7308 = vsel %vm7294, %v7072, 0
      %v7311 = vsel %vm7294, %v7075, 0
      %v7314 = vsel %vm7294, %v7078, 0
      %v7317 = vsel %vm7294, %v7081, 0
      %v7320 = vsel %vm7294, %v7084, 0
      %v7323 = vsel %vm7294, %v7087, 0
      %v7326 = vsel %vm7294, %v7090, 0
      %v7329 = vsel %vm7294, %v7093, 0
      %v7332 = vsel %vm7294, %v7096, 0
      %v7335 = vsel %vm7294, %v7099, 0
      %v7338 = vsel %vm7294, %v7102, 0
      %v7341 = vsel %vm7294, %v7105, 0
      %v7344 = vsel %vm3415, %v7258, 0
      %v7347 = vsel %vm3415, %v7259, 0
      %7349 = vmatprep.subr.bf16.mxu0 %v7225
      %7350 = vmatpush1.bf16.msra.mxu0 %v7224
      %7351 = vmatprep.subr.bf16.mxu0 %v7227
      %7352 = vmatpush1.bf16.msra.mxu0 %v7226
      %7353 = vmatprep.subr.bf16.mxu0 %v7229
      %7354 = vmatpush1.bf16.msra.mxu0 %v7228
      %7355 = vmatprep.subr.bf16.mxu0 %v7231
      %7356 = vmatpush1.bf16.msra.mxu0 %v7230
      %7357 = vmatprep.subr.bf16.mxu0 %v7233
      %7358 = vmatpush1.bf16.msra.mxu0 %v7232
      %7359 = vmatprep.subr.bf16.mxu0 %v7235
      %7360 = vmatpush1.bf16.msra.mxu0 %v7234
      %7361 = vmatprep.subr.bf16.mxu0 %v7237
      %7362 = vmatpush1.bf16.msra.mxu0 %v7236
      %7363 = vmatprep.subr.bf16.mxu0 %v7239
      %7364 = vmatpush1.bf16.msra.mxu0 %v7238
      %7365 = vmatprep.subr.bf16.mxu0 %v7241
      %7366 = vmatpush1.bf16.msra.mxu0 %v7240
      %7367 = vmatprep.subr.bf16.mxu0 %v7243
      %7368 = vmatpush1.bf16.msra.mxu0 %v7242
      %7369 = vmatprep.subr.bf16.mxu0 %v7245
      %7370 = vmatpush1.bf16.msra.mxu0 %v7244
      %7371 = vmatprep.subr.bf16.mxu0 %v7247
      %7372 = vmatpush1.bf16.msra.mxu0 %v7246
      %7373 = vmatprep.subr.bf16.mxu0 %v7249
      %7374 = vmatpush1.bf16.msra.mxu0 %v7248
      %7375 = vmatprep.subr.bf16.mxu0 %v7251
      %7376 = vmatpush1.bf16.msra.mxu0 %v7250
      %7377 = vmatprep.subr.bf16.mxu0 %v7253
      %7378 = vmatpush1.bf16.msra.mxu0 %v7252
      %7379 = vmatprep.subr.bf16.mxu0 %v7255
      %7380 = vmatpush1.bf16.msra.mxu0 %v7254
      %7381 = vmatprep.mubr.bf16.mxu0 %v7059
      %7382 = vmatmul.mubr.bf16.gmra.mrb[0].mxu0 %v7058
      %v7383 = vpop.f32.mrb[0].mxu0
      %v7384 = vadd.f32 %v7112, %v7383
      %v7385 = vpop.f32.mrb[0].mxu0
      %v7386 = vadd.f32 %v7116, %v7385
      %v7387 = vpop.f32.mrb[0].mxu0
      %v7388 = vadd.f32 %v7112, %v7387
      %v7389 = vpop.f32.mrb[0].mxu0
      %v7390 = vadd.f32 %v7116, %v7389
      %7391 = vmatprep.mubr.bf16.mxu0 %v7062
      %7392 = vmatmul.mubr.bf16.gmra.mrb[0].mxu0 %v7061
      %v7393 = vpop.f32.mrb[0].mxu0
      %v7394 = vadd.f32 %v7112, %v7393
      %v7395 = vpop.f32.mrb[0].mxu0
      %v7396 = vadd.f32 %v7116, %v7395
      %v7397 = vpop.f32.mrb[0].mxu0
      %v7398 = vadd.f32 %v7112, %v7397
      %v7399 = vpop.f32.mrb[0].mxu0
      %v7400 = vadd.f32 %v7116, %v7399
      %7401 = vmatprep.mubr.bf16.mxu0 %v7065
      %7402 = vmatmul.mubr.bf16.gmra.mrb[0].mxu0 %v7064
      %v7403 = vpop.f32.mrb[0].mxu0
      %v7404 = vadd.f32 %v7112, %v7403
      %v7405 = vpop.f32.mrb[0].mxu0
      %v7406 = vadd.f32 %v7116, %v7405
      %v7407 = vpop.f32.mrb[0].mxu0
      %v7408 = vadd.f32 %v7112, %v7407
      %v7409 = vpop.f32.mrb[0].mxu0
      %v7410 = vadd.f32 %v7116, %v7409
      %7411 = vmatprep.mubr.bf16.mxu0 %v7068
      %7412 = vmatmul.mubr.bf16.gmra.mrb[0].mxu0 %v7067
      %v7413 = vpop.f32.mrb[0].mxu0
      %v7414 = vadd.f32 %v7112, %v7413
      %v7415 = vpop.f32.mrb[0].mxu0
      %v7416 = vadd.f32 %v7116, %v7415
      %v7417 = vpop.f32.mrb[0].mxu0
      %v7418 = vadd.f32 %v7112, %v7417
      %v7419 = vpop.f32.mrb[0].mxu0
      %v7420 = vadd.f32 %v7116, %v7419
      %7421 = vmatprep.mubr.bf16.mxu0 %v7071
      %7422 = vmatmul.mubr.bf16.gmra.mrb[0].mxu0 %v7070
      %v7423 = vpop.f32.mrb[0].mxu0
      %v7424 = vadd.f32 %v7112, %v7423
      %v7425 = vpop.f32.mrb[0].mxu0
      %v7426 = vadd.f32 %v7116, %v7425
      %v7427 = vpop.f32.mrb[0].mxu0
      %v7428 = vadd.f32 %v7112, %v7427
      %v7429 = vpop.f32.mrb[0].mxu0
      %v7430 = vadd.f32 %v7116, %v7429
      %7431 = vmatprep.mubr.bf16.mxu0 %v7074
      %7432 = vmatmul.mubr.bf16.gmra.mrb[0].mxu0 %v7073
      %v7433 = vpop.f32.mrb[0].mxu0
      %v7434 = vadd.f32 %v7112, %v7433
      %v7435 = vpop.f32.mrb[0].mxu0
      %v7436 = vadd.f32 %v7116, %v7435
      %v7437 = vpop.f32.mrb[0].mxu0
      %v7438 = vadd.f32 %v7112, %v7437
      %v7439 = vpop.f32.mrb[0].mxu0
      %v7440 = vadd.f32 %v7116, %v7439
      %7441 = vmatprep.mubr.bf16.mxu0 %v7077
      %7442 = vmatmul.mubr.bf16.gmra.mrb[0].mxu0 %v7076
      %v7443 = vpop.f32.mrb[0].mxu0
      %v7444 = vadd.f32 %v7112, %v7443
      %v7445 = vpop.f32.mrb[0].mxu0
      %v7446 = vadd.f32 %v7116, %v7445
      %v7447 = vpop.f32.mrb[0].mxu0
      %v7448 = vadd.f32 %v7112, %v7447
      %v7449 = vpop.f32.mrb[0].mxu0
      %v7450 = vadd.f32 %v7116, %v7449
      %7451 = vmatprep.mubr.bf16.mxu0 %v7080
      %7452 = vmatmul.mubr.bf16.gmra.mrb[0].mxu0 %v7079
      %v7453 = vpop.f32.mrb[0].mxu0
      %v7454 = vadd.f32 %v7112, %v7453
      %v7455 = vpop.f32.mrb[0].mxu0
      %v7456 = vadd.f32 %v7116, %v7455
      %v7457 = vpop.f32.mrb[0].mxu0
      %v7458 = vadd.f32 %v7112, %v7457
      %v7459 = vpop.f32.mrb[0].mxu0
      %v7460 = vadd.f32 %v7116, %v7459
      %7461 = vmatprep.mubr.bf16.mxu0 %v7083
      %7462 = vmatmul.mubr.bf16.gmra.mrb[0].mxu0 %v7082
      %v7463 = vpop.f32.mrb[0].mxu0
      %v7464 = vadd.f32 %v7112, %v7463
      %v7465 = vpop.f32.mrb[0].mxu0
      %v7466 = vadd.f32 %v7116, %v7465
      %v7467 = vpop.f32.mrb[0].mxu0
      %v7468 = vadd.f32 %v7112, %v7467
      %v7469 = vpop.f32.mrb[0].mxu0
      %v7470 = vadd.f32 %v7116, %v7469
      %7471 = vmatprep.mubr.bf16.mxu0 %v7086
      %7472 = vmatmul.mubr.bf16.gmra.mrb[0].mxu0 %v7085
      %v7473 = vpop.f32.mrb[0].mxu0
      %v7474 = vadd.f32 %v7112, %v7473
      %v7475 = vpop.f32.mrb[0].mxu0
      %v7476 = vadd.f32 %v7116, %v7475
      %v7477 = vpop.f32.mrb[0].mxu0
      %v7478 = vadd.f32 %v7112, %v7477
      %v7479 = vpop.f32.mrb[0].mxu0
      %v7480 = vadd.f32 %v7116, %v7479
      %7481 = vmatprep.mubr.bf16.mxu0 %v7089
      %7482 = vmatmul.mubr.bf16.gmra.mrb[0].mxu0 %v7088
      %v7483 = vpop.f32.mrb[0].mxu0
      %v7484 = vadd.f32 %v7112, %v7483
      %v7485 = vpop.f32.mrb[0].mxu0
      %v7486 = vadd.f32 %v7116, %v7485
      %v7487 = vpop.f32.mrb[0].mxu0
      %v7488 = vadd.f32 %v7112, %v7487
      %v7489 = vpop.f32.mrb[0].mxu0
      %v7490 = vadd.f32 %v7116, %v7489
      %7491 = vmatprep.mubr.bf16.mxu0 %v7092
      %7492 = vmatmul.mubr.bf16.gmra.mrb[0].mxu0 %v7091
      %v7493 = vpop.f32.mrb[0].mxu0
      %v7494 = vadd.f32 %v7112, %v7493
      %v7495 = vpop.f32.mrb[0].mxu0
      %v7496 = vadd.f32 %v7116, %v7495
      %v7497 = vpop.f32.mrb[0].mxu0
      %v7498 = vadd.f32 %v7112, %v7497
      %v7499 = vpop.f32.mrb[0].mxu0
      %v7500 = vadd.f32 %v7116, %v7499
      %7501 = vmatprep.mubr.bf16.mxu0 %v7095
      %7502 = vmatmul.mubr.bf16.gmra.mrb[0].mxu0 %v7094
      %v7503 = vpop.f32.mrb[0].mxu0
      %v7504 = vadd.f32 %v7112, %v7503
      %v7505 = vpop.f32.mrb[0].mxu0
      %v7506 = vadd.f32 %v7116, %v7505
      %v7507 = vpop.f32.mrb[0].mxu0
      %v7508 = vadd.f32 %v7112, %v7507
      %v7509 = vpop.f32.mrb[0].mxu0
      %v7510 = vadd.f32 %v7116, %v7509
      %7511 = vmatprep.mubr.bf16.mxu0 %v7098
      %7512 = vmatmul.mubr.bf16.gmra.mrb[0].mxu0 %v7097
      %v7513 = vpop.f32.mrb[0].mxu0
      %v7514 = vadd.f32 %v7112, %v7513
      %v7515 = vpop.f32.mrb[0].mxu0
      %v7516 = vadd.f32 %v7116, %v7515
      %v7517 = vpop.f32.mrb[0].mxu0
      %v7518 = vadd.f32 %v7112, %v7517
      %v7519 = vpop.f32.mrb[0].mxu0
      %v7520 = vadd.f32 %v7116, %v7519
      %7521 = vmatprep.mubr.bf16.mxu0 %v7101
      %7522 = vmatmul.mubr.bf16.gmra.mrb[0].mxu0 %v7100
      %v7523 = vpop.f32.mrb[0].mxu0
      %v7524 = vadd.f32 %v7112, %v7523
      %v7525 = vpop.f32.mrb[0].mxu0
      %v7526 = vadd.f32 %v7116, %v7525
      %v7527 = vpop.f32.mrb[0].mxu0
      %v7528 = vadd.f32 %v7112, %v7527
      %v7529 = vpop.f32.mrb[0].mxu0
      %v7530 = vadd.f32 %v7116, %v7529
      %7531 = vmatprep.mubr.bf16.mxu0 %v7104
      %7532 = vmatmul.mubr.bf16.gmra.mrb[0].mxu0 %v7103
      %v7533 = vpop.f32.mrb[0].mxu0
      %v7534 = vadd.f32 %v7112, %v7533
      %v7535 = vpop.f32.mrb[0].mxu0
      %v7536 = vadd.f32 %v7116, %v7535
      %v7537 = vpop.f32.mrb[0].mxu0
      %v7538 = vadd.f32 %v7112, %v7537
      %v7539 = vpop.f32.mrb[0].mxu0
      %v7540 = vadd.f32 %v7116, %v7539
      %7541 = vdwg.mxu0
      %7542 = vmatprep.subr.bf16.mxu0 %v7257
      %7543 = vmatpush1.bf16.msra.mxu0 %v7256
      %7544 = vmatprep.subr.bf16.mxu0 %v7347
      %7545 = vmatpush1.bf16.msra.mxu0 %v7344
      %7546 = vmatprep.subr.bf16.mxu0 0
      %7547 = vmatpush1.bf16.msra.mxu0 0
      %7548 = vmatprep.subr.bf16.mxu0 0
      %7549 = vmatpush1.bf16.msra.mxu0 0
      %7550 = vmatprep.subr.bf16.mxu0 0
      %7551 = vmatpush1.bf16.msra.mxu0 0
      %7552 = vmatprep.subr.bf16.mxu0 0
      %7553 = vmatpush1.bf16.msra.mxu0 0
      %7554 = vmatprep.subr.bf16.mxu0 0
      %7555 = vmatpush1.bf16.msra.mxu0 0
      %7556 = vmatprep.subr.bf16.mxu0 0
      %7557 = vmatpush1.bf16.msra.mxu0 0
      %7558 = vmatprep.subr.bf16.mxu0 0
      %7559 = vmatpush1.bf16.msra.mxu0 0
      %7560 = vmatprep.subr.bf16.mxu0 0
      %7561 = vmatpush1.bf16.msra.mxu0 0
      %7562 = vmatprep.subr.bf16.mxu0 0
      %7563 = vmatpush1.bf16.msra.mxu0 0
      %7564 = vmatprep.subr.bf16.mxu0 0
      %7565 = vmatpush1.bf16.msra.mxu0 0
      %7566 = vmatprep.subr.bf16.mxu0 0
      %7567 = vmatpush1.bf16.msra.mxu0 0
      %7568 = vmatprep.subr.bf16.mxu0 0
      %7569 = vmatpush1.bf16.msra.mxu0 0
      %7570 = vmatprep.subr.bf16.mxu0 0
      %7571 = vmatpush1.bf16.msra.mxu0 0
      %7572 = vmatprep.subr.bf16.mxu0 0
      %7573 = vmatpush1.bf16.msra.mxu0 0
      %7574 = vmatprep.mubr.bf16.mxu0 0
      %7575 = vmatmul.mubr.bf16.gmra.mrb[0].mxu0 %v7296
      %v7576 = vpop.f32.mrb[0].mxu0
      %v7577 = vadd.f32 %v7384, %v7576
      %v7578 = vpop.f32.mrb[0].mxu0
      %v7579 = vadd.f32 %v7386, %v7578
      %v7580 = vpop.f32.mrb[0].mxu0
      %v7581 = vadd.f32 %v7388, %v7580
      %v7582 = vpop.f32.mrb[0].mxu0
      %v7583 = vadd.f32 %v7390, %v7582
      %7584 = vmatprep.mubr.bf16.mxu0 0
      %7585 = vmatmul.mubr.bf16.gmra.mrb[0].mxu0 %v7299
      %v7586 = vpop.f32.mrb[0].mxu0
      %v7587 = vadd.f32 %v7394, %v7586
      %v7588 = vpop.f32.mrb[0].mxu0
      %v7589 = vadd.f32 %v7396, %v7588
      %v7590 = vpop.f32.mrb[0].mxu0
      %v7591 = vadd.f32 %v7398, %v7590
      %v7592 = vpop.f32.mrb[0].mxu0
      %v7593 = vadd.f32 %v7400, %v7592
      %7594 = vmatprep.mubr.bf16.mxu0 0
      %7595 = vmatmul.mubr.bf16.gmra.mrb[0].mxu0 %v7302
      %v7596 = vpop.f32.mrb[0].mxu0
      %v7597 = vadd.f32 %v7404, %v7596
      %v7598 = vpop.f32.mrb[0].mxu0
      %v7599 = vadd.f32 %v7406, %v7598
      %v7600 = vpop.f32.mrb[0].mxu0
      %v7601 = vadd.f32 %v7408, %v7600
      %v7602 = vpop.f32.mrb[0].mxu0
      %v7603 = vadd.f32 %v7410, %v7602
      %7604 = vmatprep.mubr.bf16.mxu0 0
      %7605 = vmatmul.mubr.bf16.gmra.mrb[0].mxu0 %v7305
      %v7606 = vpop.f32.mrb[0].mxu0
      %v7607 = vadd.f32 %v7414, %v7606
      %v7608 = vpop.f32.mrb[0].mxu0
      %v7609 = vadd.f32 %v7416, %v7608
      %v7610 = vpop.f32.mrb[0].mxu0
      %v7611 = vadd.f32 %v7418, %v7610
      %v7612 = vpop.f32.mrb[0].mxu0
      %v7613 = vadd.f32 %v7420, %v7612
      %7614 = vmatprep.mubr.bf16.mxu0 0
      %7615 = vmatmul.mubr.bf16.gmra.mrb[0].mxu0 %v7308
      %v7616 = vpop.f32.mrb[0].mxu0
      %v7617 = vadd.f32 %v7424, %v7616
      %v7618 = vpop.f32.mrb[0].mxu0
      %v7619 = vadd.f32 %v7426, %v7618
      %v7620 = vpop.f32.mrb[0].mxu0
      %v7621 = vadd.f32 %v7428, %v7620
      %v7622 = vpop.f32.mrb[0].mxu0
      %v7623 = vadd.f32 %v7430, %v7622
      %7624 = vmatprep.mubr.bf16.mxu0 0
      %7625 = vmatmul.mubr.bf16.gmra.mrb[0].mxu0 %v7311
      %v7626 = vpop.f32.mrb[0].mxu0
      %v7627 = vadd.f32 %v7434, %v7626
      %v7628 = vpop.f32.mrb[0].mxu0
      %v7629 = vadd.f32 %v7436, %v7628
      %v7630 = vpop.f32.mrb[0].mxu0
      %v7631 = vadd.f32 %v7438, %v7630
      %v7632 = vpop.f32.mrb[0].mxu0
      %v7633 = vadd.f32 %v7440, %v7632
      %7634 = vmatprep.mubr.bf16.mxu0 0
      %7635 = vmatmul.mubr.bf16.gmra.mrb[0].mxu0 %v7314
      %v7636 = vpop.f32.mrb[0].mxu0
      %v7637 = vadd.f32 %v7444, %v7636
      %v7638 = vpop.f32.mrb[0].mxu0
      %v7639 = vadd.f32 %v7446, %v7638
      %v7640 = vpop.f32.mrb[0].mxu0
      %v7641 = vadd.f32 %v7448, %v7640
      %v7642 = vpop.f32.mrb[0].mxu0
      %v7643 = vadd.f32 %v7450, %v7642
      %7644 = vmatprep.mubr.bf16.mxu0 0
      %7645 = vmatmul.mubr.bf16.gmra.mrb[0].mxu0 %v7317
      %v7646 = vpop.f32.mrb[0].mxu0
      %v7647 = vadd.f32 %v7454, %v7646
      %v7648 = vpop.f32.mrb[0].mxu0
      %v7649 = vadd.f32 %v7456, %v7648
      %v7650 = vpop.f32.mrb[0].mxu0
      %v7651 = vadd.f32 %v7458, %v7650
      %v7652 = vpop.f32.mrb[0].mxu0
      %v7653 = vadd.f32 %v7460, %v7652
      %7654 = vmatprep.mubr.bf16.mxu0 0
      %7655 = vmatmul.mubr.bf16.gmra.mrb[0].mxu0 %v7320
      %v7656 = vpop.f32.mrb[0].mxu0
      %v7657 = vadd.f32 %v7464, %v7656
      %v7658 = vpop.f32.mrb[0].mxu0
      %v7659 = vadd.f32 %v7466, %v7658
      %v7660 = vpop.f32.mrb[0].mxu0
      %v7661 = vadd.f32 %v7468, %v7660
      %v7662 = vpop.f32.mrb[0].mxu0
      %v7663 = vadd.f32 %v7470, %v7662
      %7664 = vmatprep.mubr.bf16.mxu0 0
      %7665 = vmatmul.mubr.bf16.gmra.mrb[0].mxu0 %v7323
      %v7666 = vpop.f32.mrb[0].mxu0
      %v7667 = vadd.f32 %v7474, %v7666
      %v7668 = vpop.f32.mrb[0].mxu0
      %v7669 = vadd.f32 %v7476, %v7668
      %v7670 = vpop.f32.mrb[0].mxu0
      %v7671 = vadd.f32 %v7478, %v7670
      %v7672 = vpop.f32.mrb[0].mxu0
      %v7673 = vadd.f32 %v7480, %v7672
      %7674 = vmatprep.mubr.bf16.mxu0 0
      %7675 = vmatmul.mubr.bf16.gmra.mrb[0].mxu0 %v7326
      %v7676 = vpop.f32.mrb[0].mxu0
      %v7677 = vadd.f32 %v7484, %v7676
      %v7678 = vpop.f32.mrb[0].mxu0
      %v7679 = vadd.f32 %v7486, %v7678
      %v7680 = vpop.f32.mrb[0].mxu0
      %v7681 = vadd.f32 %v7488, %v7680
      %v7682 = vpop.f32.mrb[0].mxu0
      %v7683 = vadd.f32 %v7490, %v7682
      %7684 = vmatprep.mubr.bf16.mxu0 0
      %7685 = vmatmul.mubr.bf16.gmra.mrb[0].mxu0 %v7329
      %v7686 = vpop.f32.mrb[0].mxu0
      %v7687 = vadd.f32 %v7494, %v7686
      %v7688 = vpop.f32.mrb[0].mxu0
      %v7689 = vadd.f32 %v7496, %v7688
      %v7690 = vpop.f32.mrb[0].mxu0
      %v7691 = vadd.f32 %v7498, %v7690
      %v7692 = vpop.f32.mrb[0].mxu0
      %v7693 = vadd.f32 %v7500, %v7692
      %7694 = vmatprep.mubr.bf16.mxu0 0
      %7695 = vmatmul.mubr.bf16.gmra.mrb[0].mxu0 %v7332
      %v7696 = vpop.f32.mrb[0].mxu0
      %v7697 = vadd.f32 %v7504, %v7696
      %v7698 = vpop.f32.mrb[0].mxu0
      %v7699 = vadd.f32 %v7506, %v7698
      %v7700 = vpop.f32.mrb[0].mxu0
      %v7701 = vadd.f32 %v7508, %v7700
      %v7702 = vpop.f32.mrb[0].mxu0
      %v7703 = vadd.f32 %v7510, %v7702
      %7704 = vmatprep.mubr.bf16.mxu0 0
      %7705 = vmatmul.mubr.bf16.gmra.mrb[0].mxu0 %v7335
      %v7706 = vpop.f32.mrb[0].mxu0
      %v7707 = vadd.f32 %v7514, %v7706
      %v7708 = vpop.f32.mrb[0].mxu0
      %v7709 = vadd.f32 %v7516, %v7708
      %v7710 = vpop.f32.mrb[0].mxu0
      %v7711 = vadd.f32 %v7518, %v7710
      %v7712 = vpop.f32.mrb[0].mxu0
      %v7713 = vadd.f32 %v7520, %v7712
      %7714 = vmatprep.mubr.bf16.mxu0 0
      %7715 = vmatmul.mubr.bf16.gmra.mrb[0].mxu0 %v7338
      %v7716 = vpop.f32.mrb[0].mxu0
      %v7717 = vadd.f32 %v7524, %v7716
      %v7718 = vpop.f32.mrb[0].mxu0
      %v7719 = vadd.f32 %v7526, %v7718
      %v7720 = vpop.f32.mrb[0].mxu0
      %v7721 = vadd.f32 %v7528, %v7720
      %v7722 = vpop.f32.mrb[0].mxu0
      %v7723 = vadd.f32 %v7530, %v7722
      %7724 = vmatprep.mubr.bf16.mxu0 0
      %7725 = vmatmul.mubr.bf16.gmra.mrb[0].mxu0 %v7341
      %v7726 = vpop.f32.mrb[0].mxu0
      %v7727 = vadd.f32 %v7534, %v7726
      %v7728 = vpop.f32.mrb[0].mxu0
      %v7729 = vadd.f32 %v7536, %v7728
      %v7730 = vpop.f32.mrb[0].mxu0
      %v7731 = vadd.f32 %v7538, %v7730
      %v7732 = vpop.f32.mrb[0].mxu0
      %v7733 = vadd.f32 %v7540, %v7732
      %7734 = vdwg.mxu0
      %vm7735 = vcmp.gt.f32.partialorder %v7577, 0.0
      %vm7736 = vcmp.gt.f32.partialorder %v7579, 0.0
      %vm7737 = vcmp.gt.f32.partialorder %v7581, 0.0
      %vm7738 = vcmp.gt.f32.partialorder %v7583, 0.0
      %vm7739 = vcmp.gt.f32.partialorder %v7587, 0.0
      %vm7740 = vcmp.gt.f32.partialorder %v7589, 0.0
      %vm7741 = vcmp.gt.f32.partialorder %v7591, 0.0
      %vm7742 = vcmp.gt.f32.partialorder %v7593, 0.0
      %vm7743 = vcmp.gt.f32.partialorder %v7597, 0.0
      %vm7744 = vcmp.gt.f32.partialorder %v7599, 0.0
      %vm7745 = vcmp.gt.f32.partialorder %v7601, 0.0
      %vm7746 = vcmp.gt.f32.partialorder %v7603, 0.0
      %vm7747 = vcmp.gt.f32.partialorder %v7607, 0.0
      %vm7748 = vcmp.gt.f32.partialorder %v7609, 0.0
      %vm7749 = vcmp.gt.f32.partialorder %v7611, 0.0
      %vm7750 = vcmp.gt.f32.partialorder %v7613, 0.0
      %vm7751 = vcmp.gt.f32.partialorder %v7617, 0.0
      %vm7752 = vcmp.gt.f32.partialorder %v7619, 0.0
      %vm7753 = vcmp.gt.f32.partialorder %v7621, 0.0
      %vm7754 = vcmp.gt.f32.partialorder %v7623, 0.0
      %vm7755 = vcmp.gt.f32.partialorder %v7627, 0.0
      %vm7756 = vcmp.gt.f32.partialorder %v7629, 0.0
      %vm7757 = vcmp.gt.f32.partialorder %v7631, 0.0
      %vm7758 = vcmp.gt.f32.partialorder %v7633, 0.0
      %vm7759 = vcmp.gt.f32.partialorder %v7637, 0.0
      %vm7760 = vcmp.gt.f32.partialorder %v7639, 0.0
      %vm7761 = vcmp.gt.f32.partialorder %v7641, 0.0
      %vm7762 = vcmp.gt.f32.partialorder %v7643, 0.0
      %vm7763 = vcmp.gt.f32.partialorder %v7647, 0.0
      %vm7764 = vcmp.gt.f32.partialorder %v7649, 0.0
      %vm7765 = vcmp.gt.f32.partialorder %v7651, 0.0
      %vm7766 = vcmp.gt.f32.partialorder %v7653, 0.0
      %vm7767 = vcmp.gt.f32.partialorder %v7657, 0.0
      %vm7768 = vcmp.gt.f32.partialorder %v7659, 0.0
      %vm7769 = vcmp.gt.f32.partialorder %v7661, 0.0
      %vm7770 = vcmp.gt.f32.partialorder %v7663, 0.0
      %vm7771 = vcmp.gt.f32.partialorder %v7667, 0.0
      %vm7772 = vcmp.gt.f32.partialorder %v7669, 0.0
      %vm7773 = vcmp.gt.f32.partialorder %v7671, 0.0
      %vm7774 = vcmp.gt.f32.partialorder %v7673, 0.0
      %vm7775 = vcmp.gt.f32.partialorder %v7677, 0.0
      %vm7776 = vcmp.gt.f32.partialorder %v7679, 0.0
      %vm7777 = vcmp.gt.f32.partialorder %v7681, 0.0
      %vm7778 = vcmp.gt.f32.partialorder %v7683, 0.0
      %vm7779 = vcmp.gt.f32.partialorder %v7687, 0.0
      %vm7780 = vcmp.gt.f32.partialorder %v7689, 0.0
      %vm7781 = vcmp.gt.f32.partialorder %v7691, 0.0
      %vm7782 = vcmp.gt.f32.partialorder %v7693, 0.0
      %vm7783 = vcmp.gt.f32.partialorder %v7697, 0.0
      %vm7784 = vcmp.gt.f32.partialorder %v7699, 0.0
      %vm7785 = vcmp.gt.f32.partialorder %v7701, 0.0
      %vm7786 = vcmp.gt.f32.partialorder %v7703, 0.0
      %vm7787 = vcmp.gt.f32.partialorder %v7707, 0.0
      %vm7788 = vcmp.gt.f32.partialorder %v7709, 0.0
      %vm7789 = vcmp.gt.f32.partialorder %v7711, 0.0
      %vm7790 = vcmp.gt.f32.partialorder %v7713, 0.0
      %vm7791 = vcmp.gt.f32.partialorder %v7717, 0.0
      %vm7792 = vcmp.gt.f32.partialorder %v7719, 0.0
      %vm7793 = vcmp.gt.f32.partialorder %v7721, 0.0
      %vm7794 = vcmp.gt.f32.partialorder %v7723, 0.0
      %vm7795 = vcmp.gt.f32.partialorder %v7727, 0.0
      %vm7796 = vcmp.gt.f32.partialorder %v7729, 0.0
      %vm7797 = vcmp.gt.f32.partialorder %v7731, 0.0
      %vm7798 = vcmp.gt.f32.partialorder %v7733, 0.0
      %v7799 = vmul.f32 %v7577, 0.01
      %v7800 = vmul.f32 %v7579, 0.01
      %v7801 = vmul.f32 %v7581, 0.01
      %v7802 = vmul.f32 %v7583, 0.01
      %v7803 = vmul.f32 %v7587, 0.01
      %v7804 = vmul.f32 %v7589, 0.01
      %v7805 = vmul.f32 %v7591, 0.01
      %v7806 = vmul.f32 %v7593, 0.01
      %v7807 = vmul.f32 %v7597, 0.01
      %v7808 = vmul.f32 %v7599, 0.01
      %v7809 = vmul.f32 %v7601, 0.01
      %v7810 = vmul.f32 %v7603, 0.01
      %v7811 = vmul.f32 %v7607, 0.01
      %v7812 = vmul.f32 %v7609, 0.01
      %v7813 = vmul.f32 %v7611, 0.01
      %v7814 = vmul.f32 %v7613, 0.01
      %v7815 = vmul.f32 %v7617, 0.01
      %v7816 = vmul.f32 %v7619, 0.01
      %v7817 = vmul.f32 %v7621, 0.01
      %v7818 = vmul.f32 %v7623, 0.01
      %v7819 = vmul.f32 %v7627, 0.01
      %v7820 = vmul.f32 %v7629, 0.01
      %v7821 = vmul.f32 %v7631, 0.01
      %v7822 = vmul.f32 %v7633, 0.01
      %v7823 = vmul.f32 %v7637, 0.01
      %v7824 = vmul.f32 %v7639, 0.01
      %v7825 = vmul.f32 %v7641, 0.01
      %v7826 = vmul.f32 %v7643, 0.01
      %v7827 = vmul.f32 %v7647, 0.01
      %v7828 = vmul.f32 %v7649, 0.01
      %v7829 = vmul.f32 %v7651, 0.01
      %v7830 = vmul.f32 %v7653, 0.01
      %v7831 = vmul.f32 %v7657, 0.01
      %v7832 = vmul.f32 %v7659, 0.01
      %v7833 = vmul.f32 %v7661, 0.01
      %v7834 = vmul.f32 %v7663, 0.01
      %v7835 = vmul.f32 %v7667, 0.01
      %v7836 = vmul.f32 %v7669, 0.01
      %v7837 = vmul.f32 %v7671, 0.01
      %v7838 = vmul.f32 %v7673, 0.01
      %v7839 = vmul.f32 %v7677, 0.01
      %v7840 = vmul.f32 %v7679, 0.01
      %v7841 = vmul.f32 %v7681, 0.01
      %v7842 = vmul.f32 %v7683, 0.01
      %v7843 = vmul.f32 %v7687, 0.01
      %v7844 = vmul.f32 %v7689, 0.01
      %v7845 = vmul.f32 %v7691, 0.01
      %v7846 = vmul.f32 %v7693, 0.01
      %v7847 = vmul.f32 %v7697, 0.01
      %v7848 = vmul.f32 %v7699, 0.01
      %v7849 = vmul.f32 %v7701, 0.01
      %v7850 = vmul.f32 %v7703, 0.01
      %v7851 = vmul.f32 %v7707, 0.01
      %v7852 = vmul.f32 %v7709, 0.01
      %v7853 = vmul.f32 %v7711, 0.01
      %v7854 = vmul.f32 %v7713, 0.01
      %v7855 = vmul.f32 %v7717, 0.01
      %v7856 = vmul.f32 %v7719, 0.01
      %v7857 = vmul.f32 %v7721, 0.01
      %v7858 = vmul.f32 %v7723, 0.01
      %v7859 = vmul.f32 %v7727, 0.01
      %v7860 = vmul.f32 %v7729, 0.01
      %v7861 = vmul.f32 %v7731, 0.01
      %v7862 = vmul.f32 %v7733, 0.01
      %v7863 = vsel %vm7735, %v7577, %v7799
      %v7864 = vsel %vm7736, %v7579, %v7800
      %v7865 = vsel %vm7737, %v7581, %v7801
      %v7866 = vsel %vm7738, %v7583, %v7802
      %v7867 = vsel %vm7739, %v7587, %v7803
      %v7868 = vsel %vm7740, %v7589, %v7804
      %v7869 = vsel %vm7741, %v7591, %v7805
      %v7870 = vsel %vm7742, %v7593, %v7806
      %v7871 = vsel %vm7743, %v7597, %v7807
      %v7872 = vsel %vm7744, %v7599, %v7808
      %v7873 = vsel %vm7745, %v7601, %v7809
      %v7874 = vsel %vm7746, %v7603, %v7810
      %v7875 = vsel %vm7747, %v7607, %v7811
      %v7876 = vsel %vm7748, %v7609, %v7812
      %v7877 = vsel %vm7749, %v7611, %v7813
      %v7878 = vsel %vm7750, %v7613, %v7814
      %v7879 = vsel %vm7751, %v7617, %v7815
      %v7880 = vsel %vm7752, %v7619, %v7816
      %v7881 = vsel %vm7753, %v7621, %v7817
      %v7882 = vsel %vm7754, %v7623, %v7818
      %v7883 = vsel %vm7755, %v7627, %v7819
      %v7884 = vsel %vm7756, %v7629, %v7820
      %v7885 = vsel %vm7757, %v7631, %v7821
      %v7886 = vsel %vm7758, %v7633, %v7822
      %v7887 = vsel %vm7759, %v7637, %v7823
      %v7888 = vsel %vm7760, %v7639, %v7824
      %v7889 = vsel %vm7761, %v7641, %v7825
      %v7890 = vsel %vm7762, %v7643, %v7826
      %v7891 = vsel %vm7763, %v7647, %v7827
      %v7892 = vsel %vm7764, %v7649, %v7828
      %v7893 = vsel %vm7765, %v7651, %v7829
      %v7894 = vsel %vm7766, %v7653, %v7830
      %v7895 = vsel %vm7767, %v7657, %v7831
      %v7896 = vsel %vm7768, %v7659, %v7832
      %v7897 = vsel %vm7769, %v7661, %v7833
      %v7898 = vsel %vm7770, %v7663, %v7834
      %v7899 = vsel %vm7771, %v7667, %v7835
      %v7900 = vsel %vm7772, %v7669, %v7836
      %v7901 = vsel %vm7773, %v7671, %v7837
      %v7902 = vsel %vm7774, %v7673, %v7838
      %v7903 = vsel %vm7775, %v7677, %v7839
      %v7904 = vsel %vm7776, %v7679, %v7840
      %v7905 = vsel %vm7777, %v7681, %v7841
      %v7906 = vsel %vm7778, %v7683, %v7842
      %v7907 = vsel %vm7779, %v7687, %v7843
      %v7908 = vsel %vm7780, %v7689, %v7844
      %v7909 = vsel %vm7781, %v7691, %v7845
      %v7910 = vsel %vm7782, %v7693, %v7846
      %v7911 = vsel %vm7783, %v7697, %v7847
      %v7912 = vsel %vm7784, %v7699, %v7848
      %v7913 = vsel %vm7785, %v7701, %v7849
      %v7914 = vsel %vm7786, %v7703, %v7850
      %v7915 = vsel %vm7787, %v7707, %v7851
      %v7916 = vsel %vm7788, %v7709, %v7852
      %v7917 = vsel %vm7789, %v7711, %v7853
      %v7918 = vsel %vm7790, %v7713, %v7854
      %v7919 = vsel %vm7791, %v7717, %v7855
      %v7920 = vsel %vm7792, %v7719, %v7856
      %v7921 = vsel %vm7793, %v7721, %v7857
      %v7922 = vsel %vm7794, %v7723, %v7858
      %v7923 = vsel %vm7795, %v7727, %v7859
      %v7924 = vsel %vm7796, %v7729, %v7860
      %v7925 = vsel %vm7797, %v7731, %v7861
      %v7926 = vsel %vm7798, %v7733, %v7862
      %v7927 = vld [vmem:[%s6] sm:$0xff]
      %v7928 = vld [vmem:[%s6 + $0x8] sm:$0xff]
      %v7929 = vld [vmem:[%s6 + $0x10] sm:$0xff]
      %v7930 = vld [vmem:[%s6 + $0x18] sm:$0xff]
      %v7931 = vld [vmem:[%s6 + $0x20] sm:$0xff]
      %v7932 = vld [vmem:[%s6 + $0x28] sm:$0xff]
      %v7933 = vld [vmem:[%s6 + $0x30] sm:$0xff]
      %v7934 = vld [vmem:[%s6 + $0x38] sm:$0xff]
      %v7935 = vld [vmem:[%s6 + $0x40] sm:$0xff]
      %v7936 = vld [vmem:[%s6 + $0x48] sm:$0xff]
      %v7937 = vld [vmem:[%s6 + $0x50] sm:$0xff]
      %v7938 = vld [vmem:[%s6 + $0x58] sm:$0xff]
      %v7939 = vld [vmem:[%s6 + $0x60] sm:$0xff]
      %v7940 = vld [vmem:[%s6 + $0x68] sm:$0xff]
      %v7941 = vld [vmem:[%s6 + $0x70] sm:$0xff]
      %v7942 = vld [vmem:[%s6 + $0x78] sm:$0xff]
      %v7943 = vld [vmem:[%s6 + $0x80] sm:$0xff]
      %v7944 = vld [vmem:[%s6 + $0x88] sm:$0xff]
      %v7945 = vld [vmem:[%s6 + $0x90] sm:$0xff]
      %v7946 = vld [vmem:[%s6 + $0x98] sm:$0xff]
      %v7947 = vld [vmem:[%s6 + $0xa0] sm:$0xff]
      %v7948 = vld [vmem:[%s6 + $0xa8] sm:$0xff]
      %v7949 = vld [vmem:[%s6 + $0xb0] sm:$0xff]
      %v7950 = vld [vmem:[%s6 + $0xb8] sm:$0xff]
      %v7951 = vld [vmem:[%s6 + $0xc0] sm:$0xff]
      %v7952 = vld [vmem:[%s6 + $0xc8] sm:$0xff]
      %v7953 = vld [vmem:[%s6 + $0xd0] sm:$0x11]
      %v7954 = vpack.c.bf16 %v7865, %v7863
      %v7955 = vpack.c.bf16 %v7866, %v7864
      %v7956 = vpack.c.bf16 %v7869, %v7867
      %v7957 = vpack.c.bf16 %v7870, %v7868
      %v7958 = vpack.c.bf16 %v7873, %v7871
      %v7959 = vpack.c.bf16 %v7874, %v7872
      %v7960 = vpack.c.bf16 %v7877, %v7875
      %v7961 = vpack.c.bf16 %v7878, %v7876
      %v7962 = vpack.c.bf16 %v7881, %v7879
      %v7963 = vpack.c.bf16 %v7882, %v7880
      %v7964 = vpack.c.bf16 %v7885, %v7883
      %v7965 = vpack.c.bf16 %v7886, %v7884
      %v7966 = vpack.c.bf16 %v7889, %v7887
      %v7967 = vpack.c.bf16 %v7890, %v7888
      %v7968 = vpack.c.bf16 %v7893, %v7891
      %v7969 = vpack.c.bf16 %v7894, %v7892
      %v7970 = vpack.c.bf16 %v7897, %v7895
      %v7971 = vpack.c.bf16 %v7898, %v7896
      %v7972 = vpack.c.bf16 %v7901, %v7899
      %v7973 = vpack.c.bf16 %v7902, %v7900
      %v7974 = vpack.c.bf16 %v7905, %v7903
      %v7975 = vpack.c.bf16 %v7906, %v7904
      %v7976 = vpack.c.bf16 %v7909, %v7907
      %v7977 = vpack.c.bf16 %v7910, %v7908
      %v7978 = vpack.c.bf16 %v7913, %v7911
      %v7979 = vpack.c.bf16 %v7914, %v7912
      %v7980 = vpack.c.bf16 %v7917, %v7915
      %v7981 = vpack.c.bf16 %v7918, %v7916
      %v7982 = vpack.c.bf16 %v7921, %v7919
      %v7983 = vpack.c.bf16 %v7922, %v7920
      %v7984 = vpack.c.bf16 %v7925, %v7923
      %v7985 = vpack.c.bf16 %v7926, %v7924
      %s7986 = scalar_lea.vmem %s1, 4
      %v7987 = vld [vmem:[%s7986] ss:$8 sm:$0x3]
      %v7989 = vlaneseq
      %v7990 = vshrl.u32 %v7989, 7
      %v7991 = vsub.s32 0, %v7990
      %v7992 = vrot.slane %v7987, %v7991
      %v7993 = vlaneseq
      %v7994 = vshrl.u32 %v7993, 7
      %v7995 = vsub.s32 1, %v7994
      %v7996 = vrot.slane %v7987, %v7995
      %v8026 = vunpack.c.l.b16 %v7927
      %v8027 = vunpack.c.h.b16 %v7927
      %v8028 = vunpack.c.l.b16 %v7928
      %v8029 = vunpack.c.h.b16 %v7928
      %v8030 = vunpack.c.l.b16 %v7929
      %v8031 = vunpack.c.h.b16 %v7929
      %v8032 = vunpack.c.l.b16 %v7930
      %v8033 = vunpack.c.h.b16 %v7930
      %v8034 = vunpack.c.l.b16 %v7931
      %v8035 = vunpack.c.h.b16 %v7931
      %v8036 = vunpack.c.l.b16 %v7932
      %v8037 = vunpack.c.h.b16 %v7932
      %v8038 = vunpack.c.l.b16 %v7933
      %v8039 = vunpack.c.h.b16 %v7933
      %v8040 = vunpack.c.l.b16 %v7934
      %v8041 = vunpack.c.h.b16 %v7934
      %v8042 = vunpack.c.l.b16 %v7935
      %v8043 = vunpack.c.h.b16 %v7935
      %v8044 = vunpack.c.l.b16 %v7936
      %v8045 = vunpack.c.h.b16 %v7936
      %v8046 = vunpack.c.l.b16 %v7937
      %v8047 = vunpack.c.h.b16 %v7937
      %v8048 = vunpack.c.l.b16 %v7938
      %v8049 = vunpack.c.h.b16 %v7938
      %v8050 = vunpack.c.l.b16 %v7939
      %v8051 = vunpack.c.h.b16 %v7939
      %v8052 = vunpack.c.l.b16 %v7940
      %v8053 = vunpack.c.h.b16 %v7940
      %v8054 = vunpack.c.l.b16 %v7941
      %v8055 = vunpack.c.h.b16 %v7941
      %v8056 = vunpack.c.l.b16 %v7942
      %v8057 = vunpack.c.h.b16 %v7942
      %v8058 = vunpack.c.l.b16 %v7943
      %v8059 = vunpack.c.h.b16 %v7943
      %v8060 = vunpack.c.l.b16 %v7944
      %v8061 = vunpack.c.h.b16 %v7944
      %v8062 = vunpack.c.l.b16 %v7945
      %v8063 = vunpack.c.h.b16 %v7945
      %v8064 = vunpack.c.l.b16 %v7946
      %v8065 = vunpack.c.h.b16 %v7946
      %v8066 = vunpack.c.l.b16 %v7947
      %v8067 = vunpack.c.h.b16 %v7947
      %v8068 = vunpack.c.l.b16 %v7948
      %v8069 = vunpack.c.h.b16 %v7948
      %v8070 = vunpack.c.l.b16 %v7949
      %v8071 = vunpack.c.h.b16 %v7949
      %v8072 = vunpack.c.l.b16 %v7950
      %v8073 = vunpack.c.h.b16 %v7950
      %v8074 = vunpack.c.l.b16 %v7951
      %v8075 = vunpack.c.h.b16 %v7951
      %v8076 = vunpack.c.l.b16 %v7952
      %v8077 = vunpack.c.h.b16 %v7952
      %v8078 = vunpack.c.l.b16 %v7953
      %v8079 = vunpack.c.h.b16 %v7953
      %v8080 = vpack.c.b16 %v8028, %v8026
      %v8081 = vpack.c.b16 %v8029, %v8027
      %v8082 = vpack.c.b16 %v8032, %v8030
      %v8083 = vpack.c.b16 %v8033, %v8031
      %v8084 = vpack.c.b16 %v8036, %v8034
      %v8085 = vpack.c.b16 %v8037, %v8035
      %v8086 = vpack.c.b16 %v8040, %v8038
      %v8087 = vpack.c.b16 %v8041, %v8039
      %v8088 = vpack.c.b16 %v8044, %v8042
      %v8089 = vpack.c.b16 %v8045, %v8043
      %v8090 = vpack.c.b16 %v8048, %v8046
      %v8091 = vpack.c.b16 %v8049, %v8047
      %v8092 = vpack.c.b16 %v8052, %v8050
      %v8093 = vpack.c.b16 %v8053, %v8051
      %v8094 = vpack.c.b16 %v8056, %v8054
      %v8095 = vpack.c.b16 %v8057, %v8055
      %v8096 = vpack.c.b16 %v8060, %v8058
      %v8097 = vpack.c.b16 %v8061, %v8059
      %v8098 = vpack.c.b16 %v8064, %v8062
      %v8099 = vpack.c.b16 %v8065, %v8063
      %v8100 = vpack.c.b16 %v8068, %v8066
      %v8101 = vpack.c.b16 %v8069, %v8067
      %v8102 = vpack.c.b16 %v8072, %v8070
      %v8103 = vpack.c.b16 %v8073, %v8071
      %v8104 = vpack.c.b16 %v8076, %v8074
      %v8105 = vpack.c.b16 %v8077, %v8075
      %v8106 = vpack.c.b16 %v8078, %v8078
      %v8107 = vpack.c.b16 %v8079, %v8079
      %vm8134 = vcmask 670720
      %v8136 = vsel %vm8134, %v7955, 0
      %v8139 = vsel %vm8134, %v7957, 0
      %v8142 = vsel %vm8134, %v7959, 0
      %v8145 = vsel %vm8134, %v7961, 0
      %v8148 = vsel %vm8134, %v7963, 0
      %v8151 = vsel %vm8134, %v7965, 0
      %v8154 = vsel %vm8134, %v7967, 0
      %v8157 = vsel %vm8134, %v7969, 0
      %v8160 = vsel %vm8134, %v7971, 0
      %v8163 = vsel %vm8134, %v7973, 0
      %v8166 = vsel %vm8134, %v7975, 0
      %v8169 = vsel %vm8134, %v7977, 0
      %v8172 = vsel %vm8134, %v7979, 0
      %v8175 = vsel %vm8134, %v7981, 0
      %v8178 = vsel %vm8134, %v7983, 0
      %v8181 = vsel %vm8134, %v7985, 0
      %vm8183 = vcmask 1040384
      %v8185 = vsel %vm8183, %v8106, 0
      %v8188 = vsel %vm8183, %v8107, 0
      %8190 = vmatprep.subr.bf16.mxu0 %v8081
      %8191 = vmatpush1.bf16.msra.mxu0 %v8080
      %8192 = vmatprep.subr.bf16.mxu0 %v8083
      %8193 = vmatpush1.bf16.msra.mxu0 %v8082
      %8194 = vmatprep.subr.bf16.mxu0 %v8085
      %8195 = vmatpush1.bf16.msra.mxu0 %v8084
      %8196 = vmatprep.subr.bf16.mxu0 %v8087
      %8197 = vmatpush1.bf16.msra.mxu0 %v8086
      %8198 = vmatprep.subr.bf16.mxu0 %v8089
      %8199 = vmatpush1.bf16.msra.mxu0 %v8088
      %8200 = vmatprep.subr.bf16.mxu0 %v8091
      %8201 = vmatpush1.bf16.msra.mxu0 %v8090
      %8202 = vmatprep.subr.bf16.mxu0 %v8093
      %8203 = vmatpush1.bf16.msra.mxu0 %v8092
      %8204 = vmatprep.subr.bf16.mxu0 %v8095
      %8205 = vmatpush1.bf16.msra.mxu0 %v8094
      %8206 = vmatprep.subr.bf16.mxu0 %v8097
      %8207 = vmatpush1.bf16.msra.mxu0 %v8096
      %8208 = vmatprep.subr.bf16.mxu0 %v8099
      %8209 = vmatpush1.bf16.msra.mxu0 %v8098
      %8210 = vmatprep.subr.bf16.mxu0 %v8101
      %8211 = vmatpush1.bf16.msra.mxu0 %v8100
      %8212 = vmatprep.subr.bf16.mxu0 %v8103
      %8213 = vmatpush1.bf16.msra.mxu0 %v8102
      %8214 = vmatprep.subr.bf16.mxu0 %v8105
      %8215 = vmatpush1.bf16.msra.mxu0 %v8104
      %8216 = vmatprep.subr.bf16.mxu0 %v8188
      %8217 = vmatpush1.bf16.msra.mxu0 %v8185
      %8218 = vmatprep.subr.bf16.mxu0 0
      %8219 = vmatpush1.bf16.msra.mxu0 0
      %8220 = vmatprep.subr.bf16.mxu0 0
      %8221 = vmatpush1.bf16.msra.mxu0 0
      %8222 = vmatprep.mubr.bf16.mxu0 %v8136
      %8223 = vmatmul.mubr.bf16.gmra.mrb[0].mxu0 %v7954
      %v8224 = vpop.f32.mrb[0].mxu0
      %v8225 = vadd.f32 %v7992, %v8224
      %v8226 = vpop.f32.mrb[0].mxu0
      %v8227 = vadd.f32 %v7996, %v8226
      %v8228 = vpop.f32.mrb[0].mxu0
      %v8229 = vadd.f32 %v7992, %v8228
      %v8230 = vpop.f32.mrb[0].mxu0
      %v8231 = vadd.f32 %v7996, %v8230
      %8232 = vmatprep.mubr.bf16.mxu0 %v8139
      %8233 = vmatmul.mubr.bf16.gmra.mrb[0].mxu0 %v7956
      %v8234 = vpop.f32.mrb[0].mxu0
      %v8235 = vadd.f32 %v7992, %v8234
      %v8236 = vpop.f32.mrb[0].mxu0
      %v8237 = vadd.f32 %v7996, %v8236
      %v8238 = vpop.f32.mrb[0].mxu0
      %v8239 = vadd.f32 %v7992, %v8238
      %v8240 = vpop.f32.mrb[0].mxu0
      %v8241 = vadd.f32 %v7996, %v8240
      %8242 = vmatprep.mubr.bf16.mxu0 %v8142
      %8243 = vmatmul.mubr.bf16.gmra.mrb[0].mxu0 %v7958
      %v8244 = vpop.f32.mrb[0].mxu0
      %v8245 = vadd.f32 %v7992, %v8244
      %v8246 = vpop.f32.mrb[0].mxu0
      %v8247 = vadd.f32 %v7996, %v8246
      %v8248 = vpop.f32.mrb[0].mxu0
      %v8249 = vadd.f32 %v7992, %v8248
      %v8250 = vpop.f32.mrb[0].mxu0
      %v8251 = vadd.f32 %v7996, %v8250
      %8252 = vmatprep.mubr.bf16.mxu0 %v8145
      %8253 = vmatmul.mubr.bf16.gmra.mrb[0].mxu0 %v7960
      %v8254 = vpop.f32.mrb[0].mxu0
      %v8255 = vadd.f32 %v7992, %v8254
      %v8256 = vpop.f32.mrb[0].mxu0
      %v8257 = vadd.f32 %v7996, %v8256
      %v8258 = vpop.f32.mrb[0].mxu0
      %v8259 = vadd.f32 %v7992, %v8258
      %v8260 = vpop.f32.mrb[0].mxu0
      %v8261 = vadd.f32 %v7996, %v8260
      %8262 = vmatprep.mubr.bf16.mxu0 %v8148
      %8263 = vmatmul.mubr.bf16.gmra.mrb[0].mxu0 %v7962
      %v8264 = vpop.f32.mrb[0].mxu0
      %v8265 = vadd.f32 %v7992, %v8264
      %v8266 = vpop.f32.mrb[0].mxu0
      %v8267 = vadd.f32 %v7996, %v8266
      %v8268 = vpop.f32.mrb[0].mxu0
      %v8269 = vadd.f32 %v7992, %v8268
      %v8270 = vpop.f32.mrb[0].mxu0
      %v8271 = vadd.f32 %v7996, %v8270
      %8272 = vmatprep.mubr.bf16.mxu0 %v8151
      %8273 = vmatmul.mubr.bf16.gmra.mrb[0].mxu0 %v7964
      %v8274 = vpop.f32.mrb[0].mxu0
      %v8275 = vadd.f32 %v7992, %v8274
      %v8276 = vpop.f32.mrb[0].mxu0
      %v8277 = vadd.f32 %v7996, %v8276
      %v8278 = vpop.f32.mrb[0].mxu0
      %v8279 = vadd.f32 %v7992, %v8278
      %v8280 = vpop.f32.mrb[0].mxu0
      %v8281 = vadd.f32 %v7996, %v8280
      %8282 = vmatprep.mubr.bf16.mxu0 %v8154
      %8283 = vmatmul.mubr.bf16.gmra.mrb[0].mxu0 %v7966
      %v8284 = vpop.f32.mrb[0].mxu0
      %v8285 = vadd.f32 %v7992, %v8284
      %v8286 = vpop.f32.mrb[0].mxu0
      %v8287 = vadd.f32 %v7996, %v8286
      %v8288 = vpop.f32.mrb[0].mxu0
      %v8289 = vadd.f32 %v7992, %v8288
      %v8290 = vpop.f32.mrb[0].mxu0
      %v8291 = vadd.f32 %v7996, %v8290
      %8292 = vmatprep.mubr.bf16.mxu0 %v8157
      %8293 = vmatmul.mubr.bf16.gmra.mrb[0].mxu0 %v7968
      %v8294 = vpop.f32.mrb[0].mxu0
      %v8295 = vadd.f32 %v7992, %v8294
      %v8296 = vpop.f32.mrb[0].mxu0
      %v8297 = vadd.f32 %v7996, %v8296
      %v8298 = vpop.f32.mrb[0].mxu0
      %v8299 = vadd.f32 %v7992, %v8298
      %v8300 = vpop.f32.mrb[0].mxu0
      %v8301 = vadd.f32 %v7996, %v8300
      %8302 = vmatprep.mubr.bf16.mxu0 %v8160
      %8303 = vmatmul.mubr.bf16.gmra.mrb[0].mxu0 %v7970
      %v8304 = vpop.f32.mrb[0].mxu0
      %v8305 = vadd.f32 %v7992, %v8304
      %v8306 = vpop.f32.mrb[0].mxu0
      %v8307 = vadd.f32 %v7996, %v8306
      %v8308 = vpop.f32.mrb[0].mxu0
      %v8309 = vadd.f32 %v7992, %v8308
      %v8310 = vpop.f32.mrb[0].mxu0
      %v8311 = vadd.f32 %v7996, %v8310
      %8312 = vmatprep.mubr.bf16.mxu0 %v8163
      %8313 = vmatmul.mubr.bf16.gmra.mrb[0].mxu0 %v7972
      %v8314 = vpop.f32.mrb[0].mxu0
      %v8315 = vadd.f32 %v7992, %v8314
      %v8316 = vpop.f32.mrb[0].mxu0
      %v8317 = vadd.f32 %v7996, %v8316
      %v8318 = vpop.f32.mrb[0].mxu0
      %v8319 = vadd.f32 %v7992, %v8318
      %v8320 = vpop.f32.mrb[0].mxu0
      %v8321 = vadd.f32 %v7996, %v8320
      %8322 = vmatprep.mubr.bf16.mxu0 %v8166
      %8323 = vmatmul.mubr.bf16.gmra.mrb[0].mxu0 %v7974
      %v8324 = vpop.f32.mrb[0].mxu0
      %v8325 = vadd.f32 %v7992, %v8324
      %v8326 = vpop.f32.mrb[0].mxu0
      %v8327 = vadd.f32 %v7996, %v8326
      %v8328 = vpop.f32.mrb[0].mxu0
      %v8329 = vadd.f32 %v7992, %v8328
      %v8330 = vpop.f32.mrb[0].mxu0
      %v8331 = vadd.f32 %v7996, %v8330
      %8332 = vmatprep.mubr.bf16.mxu0 %v8169
      %8333 = vmatmul.mubr.bf16.gmra.mrb[0].mxu0 %v7976
      %v8334 = vpop.f32.mrb[0].mxu0
      %v8335 = vadd.f32 %v7992, %v8334
      %v8336 = vpop.f32.mrb[0].mxu0
      %v8337 = vadd.f32 %v7996, %v8336
      %v8338 = vpop.f32.mrb[0].mxu0
      %v8339 = vadd.f32 %v7992, %v8338
      %v8340 = vpop.f32.mrb[0].mxu0
      %v8341 = vadd.f32 %v7996, %v8340
      %8342 = vmatprep.mubr.bf16.mxu0 %v8172
      %8343 = vmatmul.mubr.bf16.gmra.mrb[0].mxu0 %v7978
      %v8344 = vpop.f32.mrb[0].mxu0
      %v8345 = vadd.f32 %v7992, %v8344
      %v8346 = vpop.f32.mrb[0].mxu0
      %v8347 = vadd.f32 %v7996, %v8346
      %v8348 = vpop.f32.mrb[0].mxu0
      %v8349 = vadd.f32 %v7992, %v8348
      %v8350 = vpop.f32.mrb[0].mxu0
      %v8351 = vadd.f32 %v7996, %v8350
      %8352 = vmatprep.mubr.bf16.mxu0 %v8175
      %8353 = vmatmul.mubr.bf16.gmra.mrb[0].mxu0 %v7980
      %v8354 = vpop.f32.mrb[0].mxu0
      %v8355 = vadd.f32 %v7992, %v8354
      %v8356 = vpop.f32.mrb[0].mxu0
      %v8357 = vadd.f32 %v7996, %v8356
      %v8358 = vpop.f32.mrb[0].mxu0
      %v8359 = vadd.f32 %v7992, %v8358
      %v8360 = vpop.f32.mrb[0].mxu0
      %v8361 = vadd.f32 %v7996, %v8360
      %8362 = vmatprep.mubr.bf16.mxu0 %v8178
      %8363 = vmatmul.mubr.bf16.gmra.mrb[0].mxu0 %v7982
      %v8364 = vpop.f32.mrb[0].mxu0
      %v8365 = vadd.f32 %v7992, %v8364
      %v8366 = vpop.f32.mrb[0].mxu0
      %v8367 = vadd.f32 %v7996, %v8366
      %v8368 = vpop.f32.mrb[0].mxu0
      %v8369 = vadd.f32 %v7992, %v8368
      %v8370 = vpop.f32.mrb[0].mxu0
      %v8371 = vadd.f32 %v7996, %v8370
      %8372 = vmatprep.mubr.bf16.mxu0 %v8181
      %8373 = vmatmul.mubr.bf16.gmra.mrb[0].mxu0 %v7984
      %v8374 = vpop.f32.mrb[0].mxu0
      %v8375 = vadd.f32 %v7992, %v8374
      %v8376 = vpop.f32.mrb[0].mxu0
      %v8377 = vadd.f32 %v7996, %v8376
      %v8378 = vpop.f32.mrb[0].mxu0
      %v8379 = vadd.f32 %v7992, %v8378
      %v8380 = vpop.f32.mrb[0].mxu0
      %v8381 = vadd.f32 %v7996, %v8380
      %8382 = vdwg.mxu0
      %vm8383 = vcmp.gt.f32.partialorder %v8225, 0.0
      %vm8384 = vcmp.gt.f32.partialorder %v8227, 0.0
      %vm8385 = vcmp.gt.f32.partialorder %v8229, 0.0
      %vm8386 = vcmp.gt.f32.partialorder %v8231, 0.0
      %vm8387 = vcmp.gt.f32.partialorder %v8235, 0.0
      %vm8388 = vcmp.gt.f32.partialorder %v8237, 0.0
      %vm8389 = vcmp.gt.f32.partialorder %v8239, 0.0
      %vm8390 = vcmp.gt.f32.partialorder %v8241, 0.0
      %vm8391 = vcmp.gt.f32.partialorder %v8245, 0.0
      %vm8392 = vcmp.gt.f32.partialorder %v8247, 0.0
      %vm8393 = vcmp.gt.f32.partialorder %v8249, 0.0
      %vm8394 = vcmp.gt.f32.partialorder %v8251, 0.0
      %vm8395 = vcmp.gt.f32.partialorder %v8255, 0.0
      %vm8396 = vcmp.gt.f32.partialorder %v8257, 0.0
      %vm8397 = vcmp.gt.f32.partialorder %v8259, 0.0
      %vm8398 = vcmp.gt.f32.partialorder %v8261, 0.0
      %vm8399 = vcmp.gt.f32.partialorder %v8265, 0.0
      %vm8400 = vcmp.gt.f32.partialorder %v8267, 0.0
      %vm8401 = vcmp.gt.f32.partialorder %v8269, 0.0
      %vm8402 = vcmp.gt.f32.partialorder %v8271, 0.0
      %vm8403 = vcmp.gt.f32.partialorder %v8275, 0.0
      %vm8404 = vcmp.gt.f32.partialorder %v8277, 0.0
      %vm8405 = vcmp.gt.f32.partialorder %v8279, 0.0
      %vm8406 = vcmp.gt.f32.partialorder %v8281, 0.0
      %vm8407 = vcmp.gt.f32.partialorder %v8285, 0.0
      %vm8408 = vcmp.gt.f32.partialorder %v8287, 0.0
      %vm8409 = vcmp.gt.f32.partialorder %v8289, 0.0
      %vm8410 = vcmp.gt.f32.partialorder %v8291, 0.0
      %vm8411 = vcmp.gt.f32.partialorder %v8295, 0.0
      %vm8412 = vcmp.gt.f32.partialorder %v8297, 0.0
      %vm8413 = vcmp.gt.f32.partialorder %v8299, 0.0
      %vm8414 = vcmp.gt.f32.partialorder %v8301, 0.0
      %vm8415 = vcmp.gt.f32.partialorder %v8305, 0.0
      %vm8416 = vcmp.gt.f32.partialorder %v8307, 0.0
      %vm8417 = vcmp.gt.f32.partialorder %v8309, 0.0
      %vm8418 = vcmp.gt.f32.partialorder %v8311, 0.0
      %vm8419 = vcmp.gt.f32.partialorder %v8315, 0.0
      %vm8420 = vcmp.gt.f32.partialorder %v8317, 0.0
      %vm8421 = vcmp.gt.f32.partialorder %v8319, 0.0
      %vm8422 = vcmp.gt.f32.partialorder %v8321, 0.0
      %vm8423 = vcmp.gt.f32.partialorder %v8325, 0.0
      %vm8424 = vcmp.gt.f32.partialorder %v8327, 0.0
      %vm8425 = vcmp.gt.f32.partialorder %v8329, 0.0
      %vm8426 = vcmp.gt.f32.partialorder %v8331, 0.0
      %vm8427 = vcmp.gt.f32.partialorder %v8335, 0.0
      %vm8428 = vcmp.gt.f32.partialorder %v8337, 0.0
      %vm8429 = vcmp.gt.f32.partialorder %v8339, 0.0
      %vm8430 = vcmp.gt.f32.partialorder %v8341, 0.0
      %vm8431 = vcmp.gt.f32.partialorder %v8345, 0.0
      %vm8432 = vcmp.gt.f32.partialorder %v8347, 0.0
      %vm8433 = vcmp.gt.f32.partialorder %v8349, 0.0
      %vm8434 = vcmp.gt.f32.partialorder %v8351, 0.0
      %vm8435 = vcmp.gt.f32.partialorder %v8355, 0.0
      %vm8436 = vcmp.gt.f32.partialorder %v8357, 0.0
      %vm8437 = vcmp.gt.f32.partialorder %v8359, 0.0
      %vm8438 = vcmp.gt.f32.partialorder %v8361, 0.0
      %vm8439 = vcmp.gt.f32.partialorder %v8365, 0.0
      %vm8440 = vcmp.gt.f32.partialorder %v8367, 0.0
      %vm8441 = vcmp.gt.f32.partialorder %v8369, 0.0
      %vm8442 = vcmp.gt.f32.partialorder %v8371, 0.0
      %vm8443 = vcmp.gt.f32.partialorder %v8375, 0.0
      %vm8444 = vcmp.gt.f32.partialorder %v8377, 0.0
      %vm8445 = vcmp.gt.f32.partialorder %v8379, 0.0
      %vm8446 = vcmp.gt.f32.partialorder %v8381, 0.0
      %v8447 = vmul.f32 %v8225, 0.01
      %v8448 = vmul.f32 %v8227, 0.01
      %v8449 = vmul.f32 %v8229, 0.01
      %v8450 = vmul.f32 %v8231, 0.01
      %v8451 = vmul.f32 %v8235, 0.01
      %v8452 = vmul.f32 %v8237, 0.01
      %v8453 = vmul.f32 %v8239, 0.01
      %v8454 = vmul.f32 %v8241, 0.01
      %v8455 = vmul.f32 %v8245, 0.01
      %v8456 = vmul.f32 %v8247, 0.01
      %v8457 = vmul.f32 %v8249, 0.01
      %v8458 = vmul.f32 %v8251, 0.01
      %v8459 = vmul.f32 %v8255, 0.01
      %v8460 = vmul.f32 %v8257, 0.01
      %v8461 = vmul.f32 %v8259, 0.01
      %v8462 = vmul.f32 %v8261, 0.01
      %v8463 = vmul.f32 %v8265, 0.01
      %v8464 = vmul.f32 %v8267, 0.01
      %v8465 = vmul.f32 %v8269, 0.01
      %v8466 = vmul.f32 %v8271, 0.01
      %v8467 = vmul.f32 %v8275, 0.01
      %v8468 = vmul.f32 %v8277, 0.01
      %v8469 = vmul.f32 %v8279, 0.01
      %v8470 = vmul.f32 %v8281, 0.01
      %v8471 = vmul.f32 %v8285, 0.01
      %v8472 = vmul.f32 %v8287, 0.01
      %v8473 = vmul.f32 %v8289, 0.01
      %v8474 = vmul.f32 %v8291, 0.01
      %v8475 = vmul.f32 %v8295, 0.01
      %v8476 = vmul.f32 %v8297, 0.01
      %v8477 = vmul.f32 %v8299, 0.01
      %v8478 = vmul.f32 %v8301, 0.01
      %v8479 = vmul.f32 %v8305, 0.01
      %v8480 = vmul.f32 %v8307, 0.01
      %v8481 = vmul.f32 %v8309, 0.01
      %v8482 = vmul.f32 %v8311, 0.01
      %v8483 = vmul.f32 %v8315, 0.01
      %v8484 = vmul.f32 %v8317, 0.01
      %v8485 = vmul.f32 %v8319, 0.01
      %v8486 = vmul.f32 %v8321, 0.01
      %v8487 = vmul.f32 %v8325, 0.01
      %v8488 = vmul.f32 %v8327, 0.01
      %v8489 = vmul.f32 %v8329, 0.01
      %v8490 = vmul.f32 %v8331, 0.01
      %v8491 = vmul.f32 %v8335, 0.01
      %v8492 = vmul.f32 %v8337, 0.01
      %v8493 = vmul.f32 %v8339, 0.01
      %v8494 = vmul.f32 %v8341, 0.01
      %v8495 = vmul.f32 %v8345, 0.01
      %v8496 = vmul.f32 %v8347, 0.01
      %v8497 = vmul.f32 %v8349, 0.01
      %v8498 = vmul.f32 %v8351, 0.01
      %v8499 = vmul.f32 %v8355, 0.01
      %v8500 = vmul.f32 %v8357, 0.01
      %v8501 = vmul.f32 %v8359, 0.01
      %v8502 = vmul.f32 %v8361, 0.01
      %v8503 = vmul.f32 %v8365, 0.01
      %v8504 = vmul.f32 %v8367, 0.01
      %v8505 = vmul.f32 %v8369, 0.01
      %v8506 = vmul.f32 %v8371, 0.01
      %v8507 = vmul.f32 %v8375, 0.01
      %v8508 = vmul.f32 %v8377, 0.01
      %v8509 = vmul.f32 %v8379, 0.01
      %v8510 = vmul.f32 %v8381, 0.01
      %v8511 = vsel %vm8383, %v8225, %v8447
      %v8512 = vsel %vm8384, %v8227, %v8448
      %v8513 = vsel %vm8385, %v8229, %v8449
      %v8514 = vsel %vm8386, %v8231, %v8450
      %v8515 = vsel %vm8387, %v8235, %v8451
      %v8516 = vsel %vm8388, %v8237, %v8452
      %v8517 = vsel %vm8389, %v8239, %v8453
      %v8518 = vsel %vm8390, %v8241, %v8454
      %v8519 = vsel %vm8391, %v8245, %v8455
      %v8520 = vsel %vm8392, %v8247, %v8456
      %v8521 = vsel %vm8393, %v8249, %v8457
      %v8522 = vsel %vm8394, %v8251, %v8458
      %v8523 = vsel %vm8395, %v8255, %v8459
      %v8524 = vsel %vm8396, %v8257, %v8460
      %v8525 = vsel %vm8397, %v8259, %v8461
      %v8526 = vsel %vm8398, %v8261, %v8462
      %v8527 = vsel %vm8399, %v8265, %v8463
      %v8528 = vsel %vm8400, %v8267, %v8464
      %v8529 = vsel %vm8401, %v8269, %v8465
      %v8530 = vsel %vm8402, %v8271, %v8466
      %v8531 = vsel %vm8403, %v8275, %v8467
      %v8532 = vsel %vm8404, %v8277, %v8468
      %v8533 = vsel %vm8405, %v8279, %v8469
      %v8534 = vsel %vm8406, %v8281, %v8470
      %v8535 = vsel %vm8407, %v8285, %v8471
      %v8536 = vsel %vm8408, %v8287, %v8472
      %v8537 = vsel %vm8409, %v8289, %v8473
      %v8538 = vsel %vm8410, %v8291, %v8474
      %v8539 = vsel %vm8411, %v8295, %v8475
      %v8540 = vsel %vm8412, %v8297, %v8476
      %v8541 = vsel %vm8413, %v8299, %v8477
      %v8542 = vsel %vm8414, %v8301, %v8478
      %v8543 = vsel %vm8415, %v8305, %v8479
      %v8544 = vsel %vm8416, %v8307, %v8480
      %v8545 = vsel %vm8417, %v8309, %v8481
      %v8546 = vsel %vm8418, %v8311, %v8482
      %v8547 = vsel %vm8419, %v8315, %v8483
      %v8548 = vsel %vm8420, %v8317, %v8484
      %v8549 = vsel %vm8421, %v8319, %v8485
      %v8550 = vsel %vm8422, %v8321, %v8486
      %v8551 = vsel %vm8423, %v8325, %v8487
      %v8552 = vsel %vm8424, %v8327, %v8488
      %v8553 = vsel %vm8425, %v8329, %v8489
      %v8554 = vsel %vm8426, %v8331, %v8490
      %v8555 = vsel %vm8427, %v8335, %v8491
      %v8556 = vsel %vm8428, %v8337, %v8492
      %v8557 = vsel %vm8429, %v8339, %v8493
      %v8558 = vsel %vm8430, %v8341, %v8494
      %v8559 = vsel %vm8431, %v8345, %v8495
      %v8560 = vsel %vm8432, %v8347, %v8496
      %v8561 = vsel %vm8433, %v8349, %v8497
      %v8562 = vsel %vm8434, %v8351, %v8498
      %v8563 = vsel %vm8435, %v8355, %v8499
      %v8564 = vsel %vm8436, %v8357, %v8500
      %v8565 = vsel %vm8437, %v8359, %v8501
      %v8566 = vsel %vm8438, %v8361, %v8502
      %v8567 = vsel %vm8439, %v8365, %v8503
      %v8568 = vsel %vm8440, %v8367, %v8504
      %v8569 = vsel %vm8441, %v8369, %v8505
      %v8570 = vsel %vm8442, %v8371, %v8506
      %v8571 = vsel %vm8443, %v8375, %v8507
      %v8572 = vsel %vm8444, %v8377, %v8508
      %v8573 = vsel %vm8445, %v8379, %v8509
      %v8574 = vsel %vm8446, %v8381, %v8510
      %v8575 = vld [vmem:[%s7] sm:$0xff]
      %v8576 = vld [vmem:[%s7 + $0x8] sm:$0xff]
      %v8577 = vld [vmem:[%s7 + $0x10] sm:$0xff]
      %v8578 = vld [vmem:[%s7 + $0x18] sm:$0xff]
      %v8579 = vld [vmem:[%s7 + $0x20] sm:$0xff]
      %v8580 = vld [vmem:[%s7 + $0x28] sm:$0xff]
      %v8581 = vld [vmem:[%s7 + $0x30] sm:$0xff]
      %v8582 = vld [vmem:[%s7 + $0x38] sm:$0xff]
      %v8583 = vld [vmem:[%s7 + $0x40] sm:$0xff]
      %v8584 = vld [vmem:[%s7 + $0x48] sm:$0xff]
      %v8585 = vld [vmem:[%s7 + $0x50] sm:$0xff]
      %v8586 = vld [vmem:[%s7 + $0x58] sm:$0xff]
      %v8587 = vld [vmem:[%s7 + $0x60] sm:$0xff]
      %v8588 = vld [vmem:[%s7 + $0x68] sm:$0xff]
      %v8589 = vld [vmem:[%s7 + $0x70] sm:$0xff]
      %v8590 = vld [vmem:[%s7 + $0x78] sm:$0xff]
      %v8591 = vld [vmem:[%s7 + $0x80] sm:$0xff]
      %v8592 = vld [vmem:[%s7 + $0x88] sm:$0xff]
      %v8593 = vld [vmem:[%s7 + $0x90] sm:$0xff]
      %v8594 = vld [vmem:[%s7 + $0x98] sm:$0xff]
      %v8595 = vld [vmem:[%s7 + $0xa0] sm:$0xff]
      %v8596 = vpack.c.bf16 %v8513, %v8511
      %v8597 = vpack.c.bf16 %v8514, %v8512
      %v8598 = vpack.c.bf16 %v8517, %v8515
      %v8599 = vpack.c.bf16 %v8518, %v8516
      %v8600 = vpack.c.bf16 %v8521, %v8519
      %v8601 = vpack.c.bf16 %v8522, %v8520
      %v8602 = vpack.c.bf16 %v8525, %v8523
      %v8603 = vpack.c.bf16 %v8526, %v8524
      %v8604 = vpack.c.bf16 %v8529, %v8527
      %v8605 = vpack.c.bf16 %v8530, %v8528
      %v8606 = vpack.c.bf16 %v8533, %v8531
      %v8607 = vpack.c.bf16 %v8534, %v8532
      %v8608 = vpack.c.bf16 %v8537, %v8535
      %v8609 = vpack.c.bf16 %v8538, %v8536
      %v8610 = vpack.c.bf16 %v8541, %v8539
      %v8611 = vpack.c.bf16 %v8542, %v8540
      %v8612 = vpack.c.bf16 %v8545, %v8543
      %v8613 = vpack.c.bf16 %v8546, %v8544
      %v8614 = vpack.c.bf16 %v8549, %v8547
      %v8615 = vpack.c.bf16 %v8550, %v8548
      %v8616 = vpack.c.bf16 %v8553, %v8551
      %v8617 = vpack.c.bf16 %v8554, %v8552
      %v8618 = vpack.c.bf16 %v8557, %v8555
      %v8619 = vpack.c.bf16 %v8558, %v8556
      %v8620 = vpack.c.bf16 %v8561, %v8559
      %v8621 = vpack.c.bf16 %v8562, %v8560
      %v8622 = vpack.c.bf16 %v8565, %v8563
      %v8623 = vpack.c.bf16 %v8566, %v8564
      %v8624 = vpack.c.bf16 %v8569, %v8567
      %v8625 = vpack.c.bf16 %v8570, %v8568
      %v8626 = vpack.c.bf16 %v8573, %v8571
      %v8627 = vpack.c.bf16 %v8574, %v8572
      %s8628 = scalar_lea.vmem %s1, 5
      %v8629 = vld [vmem:[%s8628] ss:$8 sm:$0x3]
      %v8631 = vlaneseq
      %v8632 = vshrl.u32 %v8631, 7
      %v8633 = vsub.s32 0, %v8632
      %v8634 = vrot.slane %v8629, %v8633
      %v8635 = vlaneseq
      %v8636 = vshrl.u32 %v8635, 7
      %v8637 = vsub.s32 1, %v8636
      %v8638 = vrot.slane %v8629, %v8637
      %v8662 = vunpack.c.l.b16 %v8575
      %v8663 = vunpack.c.h.b16 %v8575
      %v8664 = vunpack.c.l.b16 %v8576
      %v8665 = vunpack.c.h.b16 %v8576
      %v8666 = vunpack.c.l.b16 %v8577
      %v8667 = vunpack.c.h.b16 %v8577
      %v8668 = vunpack.c.l.b16 %v8578
      %v8669 = vunpack.c.h.b16 %v8578
      %v8670 = vunpack.c.l.b16 %v8579
      %v8671 = vunpack.c.h.b16 %v8579
      %v8672 = vunpack.c.l.b16 %v8580
      %v8673 = vunpack.c.h.b16 %v8580
      %v8674 = vunpack.c.l.b16 %v8581
      %v8675 = vunpack.c.h.b16 %v8581
      %v8676 = vunpack.c.l.b16 %v8582
      %v8677 = vunpack.c.h.b16 %v8582
      %v8678 = vunpack.c.l.b16 %v8583
      %v8679 = vunpack.c.h.b16 %v8583
      %v8680 = vunpack.c.l.b16 %v8584
      %v8681 = vunpack.c.h.b16 %v8584
      %v8682 = vunpack.c.l.b16 %v8585
      %v8683 = vunpack.c.h.b16 %v8585
      %v8684 = vunpack.c.l.b16 %v8586
      %v8685 = vunpack.c.h.b16 %v8586
      %v8686 = vunpack.c.l.b16 %v8587
      %v8687 = vunpack.c.h.b16 %v8587
      %v8688 = vunpack.c.l.b16 %v8588
      %v8689 = vunpack.c.h.b16 %v8588
      %v8690 = vunpack.c.l.b16 %v8589
      %v8691 = vunpack.c.h.b16 %v8589
      %v8692 = vunpack.c.l.b16 %v8590
      %v8693 = vunpack.c.h.b16 %v8590
      %v8694 = vunpack.c.l.b16 %v8591
      %v8695 = vunpack.c.h.b16 %v8591
      %v8696 = vunpack.c.l.b16 %v8592
      %v8697 = vunpack.c.h.b16 %v8592
      %v8698 = vunpack.c.l.b16 %v8593
      %v8699 = vunpack.c.h.b16 %v8593
      %v8700 = vunpack.c.l.b16 %v8594
      %v8701 = vunpack.c.h.b16 %v8594
      %v8702 = vunpack.c.l.b16 %v8595
      %v8703 = vunpack.c.h.b16 %v8595
      %v8704 = vpack.c.b16 %v8664, %v8662
      %v8705 = vpack.c.b16 %v8665, %v8663
      %v8706 = vpack.c.b16 %v8668, %v8666
      %v8707 = vpack.c.b16 %v8669, %v8667
      %v8708 = vpack.c.b16 %v8672, %v8670
      %v8709 = vpack.c.b16 %v8673, %v8671
      %v8710 = vpack.c.b16 %v8676, %v8674
      %v8711 = vpack.c.b16 %v8677, %v8675
      %v8712 = vpack.c.b16 %v8680, %v8678
      %v8713 = vpack.c.b16 %v8681, %v8679
      %v8714 = vpack.c.b16 %v8684, %v8682
      %v8715 = vpack.c.b16 %v8685, %v8683
      %v8716 = vpack.c.b16 %v8688, %v8686
      %v8717 = vpack.c.b16 %v8689, %v8687
      %v8718 = vpack.c.b16 %v8692, %v8690
      %v8719 = vpack.c.b16 %v8693, %v8691
      %v8720 = vpack.c.b16 %v8696, %v8694
      %v8721 = vpack.c.b16 %v8697, %v8695
      %v8722 = vpack.c.b16 %v8700, %v8698
      %v8723 = vpack.c.b16 %v8701, %v8699
      %v8724 = vpack.c.b16 %v8702, %v8702
      %v8725 = vpack.c.b16 %v8703, %v8703
      %vm8746 = vcmask 326656
      %v8748 = vsel %vm8746, %v8597, 0
      %v8751 = vsel %vm8746, %v8599, 0
      %v8754 = vsel %vm8746, %v8601, 0
      %v8757 = vsel %vm8746, %v8603, 0
      %v8760 = vsel %vm8746, %v8605, 0
      %v8763 = vsel %vm8746, %v8607, 0
      %v8766 = vsel %vm8746, %v8609, 0
      %v8769 = vsel %vm8746, %v8611, 0
      %v8772 = vsel %vm8746, %v8613, 0
      %v8775 = vsel %vm8746, %v8615, 0
      %v8778 = vsel %vm8746, %v8617, 0
      %v8781 = vsel %vm8746, %v8619, 0
      %v8784 = vsel %vm8746, %v8621, 0
      %v8787 = vsel %vm8746, %v8623, 0
      %v8790 = vsel %vm8746, %v8625, 0
      %v8793 = vsel %vm8746, %v8627, 0
      %v8796 = vsel %vm3415, %v8724, 0
      %v8799 = vsel %vm3415, %v8725, 0
      %8801 = vmatprep.subr.bf16.mxu0 %v8705
      %8802 = vmatpush1.bf16.msra.mxu0 %v8704
      %8803 = vmatprep.subr.bf16.mxu0 %v8707
      %8804 = vmatpush1.bf16.msra.mxu0 %v8706
      %8805 = vmatprep.subr.bf16.mxu0 %v8709
      %8806 = vmatpush1.bf16.msra.mxu0 %v8708
      %8807 = vmatprep.subr.bf16.mxu0 %v8711
      %8808 = vmatpush1.bf16.msra.mxu0 %v8710
      %8809 = vmatprep.subr.bf16.mxu0 %v8713
      %8810 = vmatpush1.bf16.msra.mxu0 %v8712
      %8811 = vmatprep.subr.bf16.mxu0 %v8715
      %8812 = vmatpush1.bf16.msra.mxu0 %v8714
      %8813 = vmatprep.subr.bf16.mxu0 %v8717
      %8814 = vmatpush1.bf16.msra.mxu0 %v8716
      %8815 = vmatprep.subr.bf16.mxu0 %v8719
      %8816 = vmatpush1.bf16.msra.mxu0 %v8718
      %8817 = vmatprep.subr.bf16.mxu0 %v8721
      %8818 = vmatpush1.bf16.msra.mxu0 %v8720
      %8819 = vmatprep.subr.bf16.mxu0 %v8723
      %8820 = vmatpush1.bf16.msra.mxu0 %v8722
      %8821 = vmatprep.subr.bf16.mxu0 %v8799
      %8822 = vmatpush1.bf16.msra.mxu0 %v8796
      %8823 = vmatprep.subr.bf16.mxu0 0
      %8824 = vmatpush1.bf16.msra.mxu0 0
      %8825 = vmatprep.subr.bf16.mxu0 0
      %8826 = vmatpush1.bf16.msra.mxu0 0
      %8827 = vmatprep.subr.bf16.mxu0 0
      %8828 = vmatpush1.bf16.msra.mxu0 0
      %8829 = vmatprep.subr.bf16.mxu0 0
      %8830 = vmatpush1.bf16.msra.mxu0 0
      %8831 = vmatprep.subr.bf16.mxu0 0
      %8832 = vmatpush1.bf16.msra.mxu0 0
      %8833 = vmatprep.mubr.bf16.mxu0 %v8748
      %8834 = vmatmul.mubr.bf16.gmra.mrb[0].mxu0 %v8596
      %v8835 = vpop.f32.mrb[0].mxu0
      %v8836 = vadd.f32 %v8634, %v8835
      %v8837 = vpop.f32.mrb[0].mxu0
      %v8838 = vadd.f32 %v8638, %v8837
      %v8839 = vpop.f32.mrb[0].mxu0
      %v8840 = vadd.f32 %v8634, %v8839
      %v8841 = vpop.f32.mrb[0].mxu0
      %v8842 = vadd.f32 %v8638, %v8841
      %8843 = vmatprep.mubr.bf16.mxu0 %v8751
      %8844 = vmatmul.mubr.bf16.gmra.mrb[0].mxu0 %v8598
      %v8845 = vpop.f32.mrb[0].mxu0
      %v8846 = vadd.f32 %v8634, %v8845
      %v8847 = vpop.f32.mrb[0].mxu0
      %v8848 = vadd.f32 %v8638, %v8847
      %v8849 = vpop.f32.mrb[0].mxu0
      %v8850 = vadd.f32 %v8634, %v8849
      %v8851 = vpop.f32.mrb[0].mxu0
      %v8852 = vadd.f32 %v8638, %v8851
      %8853 = vmatprep.mubr.bf16.mxu0 %v8754
      %8854 = vmatmul.mubr.bf16.gmra.mrb[0].mxu0 %v8600
      %v8855 = vpop.f32.mrb[0].mxu0
      %v8856 = vadd.f32 %v8634, %v8855
      %v8857 = vpop.f32.mrb[0].mxu0
      %v8858 = vadd.f32 %v8638, %v8857
      %v8859 = vpop.f32.mrb[0].mxu0
      %v8860 = vadd.f32 %v8634, %v8859
      %v8861 = vpop.f32.mrb[0].mxu0
      %v8862 = vadd.f32 %v8638, %v8861
      %8863 = vmatprep.mubr.bf16.mxu0 %v8757
      %8864 = vmatmul.mubr.bf16.gmra.mrb[0].mxu0 %v8602
      %v8865 = vpop.f32.mrb[0].mxu0
      %v8866 = vadd.f32 %v8634, %v8865
      %v8867 = vpop.f32.mrb[0].mxu0
      %v8868 = vadd.f32 %v8638, %v8867
      %v8869 = vpop.f32.mrb[0].mxu0
      %v8870 = vadd.f32 %v8634, %v8869
      %v8871 = vpop.f32.mrb[0].mxu0
      %v8872 = vadd.f32 %v8638, %v8871
      %8873 = vmatprep.mubr.bf16.mxu0 %v8760
      %8874 = vmatmul.mubr.bf16.gmra.mrb[0].mxu0 %v8604
      %v8875 = vpop.f32.mrb[0].mxu0
      %v8876 = vadd.f32 %v8634, %v8875
      %v8877 = vpop.f32.mrb[0].mxu0
      %v8878 = vadd.f32 %v8638, %v8877
      %v8879 = vpop.f32.mrb[0].mxu0
      %v8880 = vadd.f32 %v8634, %v8879
      %v8881 = vpop.f32.mrb[0].mxu0
      %v8882 = vadd.f32 %v8638, %v8881
      %8883 = vmatprep.mubr.bf16.mxu0 %v8763
      %8884 = vmatmul.mubr.bf16.gmra.mrb[0].mxu0 %v8606
      %v8885 = vpop.f32.mrb[0].mxu0
      %v8886 = vadd.f32 %v8634, %v8885
      %v8887 = vpop.f32.mrb[0].mxu0
      %v8888 = vadd.f32 %v8638, %v8887
      %v8889 = vpop.f32.mrb[0].mxu0
      %v8890 = vadd.f32 %v8634, %v8889
      %v8891 = vpop.f32.mrb[0].mxu0
      %v8892 = vadd.f32 %v8638, %v8891
      %8893 = vmatprep.mubr.bf16.mxu0 %v8766
      %8894 = vmatmul.mubr.bf16.gmra.mrb[0].mxu0 %v8608
      %v8895 = vpop.f32.mrb[0].mxu0
      %v8896 = vadd.f32 %v8634, %v8895
      %v8897 = vpop.f32.mrb[0].mxu0
      %v8898 = vadd.f32 %v8638, %v8897
      %v8899 = vpop.f32.mrb[0].mxu0
      %v8900 = vadd.f32 %v8634, %v8899
      %v8901 = vpop.f32.mrb[0].mxu0
      %v8902 = vadd.f32 %v8638, %v8901
      %8903 = vmatprep.mubr.bf16.mxu0 %v8769
      %8904 = vmatmul.mubr.bf16.gmra.mrb[0].mxu0 %v8610
      %v8905 = vpop.f32.mrb[0].mxu0
      %v8906 = vadd.f32 %v8634, %v8905
      %v8907 = vpop.f32.mrb[0].mxu0
      %v8908 = vadd.f32 %v8638, %v8907
      %v8909 = vpop.f32.mrb[0].mxu0
      %v8910 = vadd.f32 %v8634, %v8909
      %v8911 = vpop.f32.mrb[0].mxu0
      %v8912 = vadd.f32 %v8638, %v8911
      %8913 = vmatprep.mubr.bf16.mxu0 %v8772
      %8914 = vmatmul.mubr.bf16.gmra.mrb[0].mxu0 %v8612
      %v8915 = vpop.f32.mrb[0].mxu0
      %v8916 = vadd.f32 %v8634, %v8915
      %v8917 = vpop.f32.mrb[0].mxu0
      %v8918 = vadd.f32 %v8638, %v8917
      %v8919 = vpop.f32.mrb[0].mxu0
      %v8920 = vadd.f32 %v8634, %v8919
      %v8921 = vpop.f32.mrb[0].mxu0
      %v8922 = vadd.f32 %v8638, %v8921
      %8923 = vmatprep.mubr.bf16.mxu0 %v8775
      %8924 = vmatmul.mubr.bf16.gmra.mrb[0].mxu0 %v8614
      %v8925 = vpop.f32.mrb[0].mxu0
      %v8926 = vadd.f32 %v8634, %v8925
      %v8927 = vpop.f32.mrb[0].mxu0
      %v8928 = vadd.f32 %v8638, %v8927
      %v8929 = vpop.f32.mrb[0].mxu0
      %v8930 = vadd.f32 %v8634, %v8929
      %v8931 = vpop.f32.mrb[0].mxu0
      %v8932 = vadd.f32 %v8638, %v8931
      %8933 = vmatprep.mubr.bf16.mxu0 %v8778
      %8934 = vmatmul.mubr.bf16.gmra.mrb[0].mxu0 %v8616
      %v8935 = vpop.f32.mrb[0].mxu0
      %v8936 = vadd.f32 %v8634, %v8935
      %v8937 = vpop.f32.mrb[0].mxu0
      %v8938 = vadd.f32 %v8638, %v8937
      %v8939 = vpop.f32.mrb[0].mxu0
      %v8940 = vadd.f32 %v8634, %v8939
      %v8941 = vpop.f32.mrb[0].mxu0
      %v8942 = vadd.f32 %v8638, %v8941
      %8943 = vmatprep.mubr.bf16.mxu0 %v8781
      %8944 = vmatmul.mubr.bf16.gmra.mrb[0].mxu0 %v8618
      %v8945 = vpop.f32.mrb[0].mxu0
      %v8946 = vadd.f32 %v8634, %v8945
      %v8947 = vpop.f32.mrb[0].mxu0
      %v8948 = vadd.f32 %v8638, %v8947
      %v8949 = vpop.f32.mrb[0].mxu0
      %v8950 = vadd.f32 %v8634, %v8949
      %v8951 = vpop.f32.mrb[0].mxu0
      %v8952 = vadd.f32 %v8638, %v8951
      %8953 = vmatprep.mubr.bf16.mxu0 %v8784
      %8954 = vmatmul.mubr.bf16.gmra.mrb[0].mxu0 %v8620
      %v8955 = vpop.f32.mrb[0].mxu0
      %v8956 = vadd.f32 %v8634, %v8955
      %v8957 = vpop.f32.mrb[0].mxu0
      %v8958 = vadd.f32 %v8638, %v8957
      %v8959 = vpop.f32.mrb[0].mxu0
      %v8960 = vadd.f32 %v8634, %v8959
      %v8961 = vpop.f32.mrb[0].mxu0
      %v8962 = vadd.f32 %v8638, %v8961
      %8963 = vmatprep.mubr.bf16.mxu0 %v8787
      %8964 = vmatmul.mubr.bf16.gmra.mrb[0].mxu0 %v8622
      %v8965 = vpop.f32.mrb[0].mxu0
      %v8966 = vadd.f32 %v8634, %v8965
      %v8967 = vpop.f32.mrb[0].mxu0
      %v8968 = vadd.f32 %v8638, %v8967
      %v8969 = vpop.f32.mrb[0].mxu0
      %v8970 = vadd.f32 %v8634, %v8969
      %v8971 = vpop.f32.mrb[0].mxu0
      %v8972 = vadd.f32 %v8638, %v8971
      %8973 = vmatprep.mubr.bf16.mxu0 %v8790
      %8974 = vmatmul.mubr.bf16.gmra.mrb[0].mxu0 %v8624
      %v8975 = vpop.f32.mrb[0].mxu0
      %v8976 = vadd.f32 %v8634, %v8975
      %v8977 = vpop.f32.mrb[0].mxu0
      %v8978 = vadd.f32 %v8638, %v8977
      %v8979 = vpop.f32.mrb[0].mxu0
      %v8980 = vadd.f32 %v8634, %v8979
      %v8981 = vpop.f32.mrb[0].mxu0
      %v8982 = vadd.f32 %v8638, %v8981
      %8983 = vmatprep.mubr.bf16.mxu0 %v8793
      %8984 = vmatmul.mubr.bf16.gmra.mrb[0].mxu0 %v8626
      %v8985 = vpop.f32.mrb[0].mxu0
      %v8986 = vadd.f32 %v8634, %v8985
      %v8987 = vpop.f32.mrb[0].mxu0
      %v8988 = vadd.f32 %v8638, %v8987
      %v8989 = vpop.f32.mrb[0].mxu0
      %v8990 = vadd.f32 %v8634, %v8989
      %v8991 = vpop.f32.mrb[0].mxu0
      %v8992 = vadd.f32 %v8638, %v8991
      %8993 = vdwg.mxu0
      %vm8994 = vcmp.gt.f32.partialorder %v8836, 0.0
      %vm8995 = vcmp.gt.f32.partialorder %v8838, 0.0
      %vm8996 = vcmp.gt.f32.partialorder %v8840, 0.0
      %vm8997 = vcmp.gt.f32.partialorder %v8842, 0.0
      %vm8998 = vcmp.gt.f32.partialorder %v8846, 0.0
      %vm8999 = vcmp.gt.f32.partialorder %v8848, 0.0
      %vm9000 = vcmp.gt.f32.partialorder %v8850, 0.0
      %vm9001 = vcmp.gt.f32.partialorder %v8852, 0.0
      %vm9002 = vcmp.gt.f32.partialorder %v8856, 0.0
      %vm9003 = vcmp.gt.f32.partialorder %v8858, 0.0
      %vm9004 = vcmp.gt.f32.partialorder %v8860, 0.0
      %vm9005 = vcmp.gt.f32.partialorder %v8862, 0.0
      %vm9006 = vcmp.gt.f32.partialorder %v8866, 0.0
      %vm9007 = vcmp.gt.f32.partialorder %v8868, 0.0
      %vm9008 = vcmp.gt.f32.partialorder %v8870, 0.0
      %vm9009 = vcmp.gt.f32.partialorder %v8872, 0.0
      %vm9010 = vcmp.gt.f32.partialorder %v8876, 0.0
      %vm9011 = vcmp.gt.f32.partialorder %v8878, 0.0
      %vm9012 = vcmp.gt.f32.partialorder %v8880, 0.0
      %vm9013 = vcmp.gt.f32.partialorder %v8882, 0.0
      %vm9014 = vcmp.gt.f32.partialorder %v8886, 0.0
      %vm9015 = vcmp.gt.f32.partialorder %v8888, 0.0
      %vm9016 = vcmp.gt.f32.partialorder %v8890, 0.0
      %vm9017 = vcmp.gt.f32.partialorder %v8892, 0.0
      %vm9018 = vcmp.gt.f32.partialorder %v8896, 0.0
      %vm9019 = vcmp.gt.f32.partialorder %v8898, 0.0
      %vm9020 = vcmp.gt.f32.partialorder %v8900, 0.0
      %vm9021 = vcmp.gt.f32.partialorder %v8902, 0.0
      %vm9022 = vcmp.gt.f32.partialorder %v8906, 0.0
      %vm9023 = vcmp.gt.f32.partialorder %v8908, 0.0
      %vm9024 = vcmp.gt.f32.partialorder %v8910, 0.0
      %vm9025 = vcmp.gt.f32.partialorder %v8912, 0.0
      %vm9026 = vcmp.gt.f32.partialorder %v8916, 0.0
      %vm9027 = vcmp.gt.f32.partialorder %v8918, 0.0
      %vm9028 = vcmp.gt.f32.partialorder %v8920, 0.0
      %vm9029 = vcmp.gt.f32.partialorder %v8922, 0.0
      %vm9030 = vcmp.gt.f32.partialorder %v8926, 0.0
      %vm9031 = vcmp.gt.f32.partialorder %v8928, 0.0
      %vm9032 = vcmp.gt.f32.partialorder %v8930, 0.0
      %vm9033 = vcmp.gt.f32.partialorder %v8932, 0.0
      %vm9034 = vcmp.gt.f32.partialorder %v8936, 0.0
      %vm9035 = vcmp.gt.f32.partialorder %v8938, 0.0
      %vm9036 = vcmp.gt.f32.partialorder %v8940, 0.0
      %vm9037 = vcmp.gt.f32.partialorder %v8942, 0.0
      %vm9038 = vcmp.gt.f32.partialorder %v8946, 0.0
      %vm9039 = vcmp.gt.f32.partialorder %v8948, 0.0
      %vm9040 = vcmp.gt.f32.partialorder %v8950, 0.0
      %vm9041 = vcmp.gt.f32.partialorder %v8952, 0.0
      %vm9042 = vcmp.gt.f32.partialorder %v8956, 0.0
      %vm9043 = vcmp.gt.f32.partialorder %v8958, 0.0
      %vm9044 = vcmp.gt.f32.partialorder %v8960, 0.0
      %vm9045 = vcmp.gt.f32.partialorder %v8962, 0.0
      %vm9046 = vcmp.gt.f32.partialorder %v8966, 0.0
      %vm9047 = vcmp.gt.f32.partialorder %v8968, 0.0
      %vm9048 = vcmp.gt.f32.partialorder %v8970, 0.0
      %vm9049 = vcmp.gt.f32.partialorder %v8972, 0.0
      %vm9050 = vcmp.gt.f32.partialorder %v8976, 0.0
      %vm9051 = vcmp.gt.f32.partialorder %v8978, 0.0
      %vm9052 = vcmp.gt.f32.partialorder %v8980, 0.0
      %vm9053 = vcmp.gt.f32.partialorder %v8982, 0.0
      %vm9054 = vcmp.gt.f32.partialorder %v8986, 0.0
      %vm9055 = vcmp.gt.f32.partialorder %v8988, 0.0
      %vm9056 = vcmp.gt.f32.partialorder %v8990, 0.0
      %vm9057 = vcmp.gt.f32.partialorder %v8992, 0.0
      %v9058 = vmul.f32 %v8836, 0.01
      %v9059 = vmul.f32 %v8838, 0.01
      %v9060 = vmul.f32 %v8840, 0.01
      %v9061 = vmul.f32 %v8842, 0.01
      %v9062 = vmul.f32 %v8846, 0.01
      %v9063 = vmul.f32 %v8848, 0.01
      %v9064 = vmul.f32 %v8850, 0.01
      %v9065 = vmul.f32 %v8852, 0.01
      %v9066 = vmul.f32 %v8856, 0.01
      %v9067 = vmul.f32 %v8858, 0.01
      %v9068 = vmul.f32 %v8860, 0.01
      %v9069 = vmul.f32 %v8862, 0.01
      %v9070 = vmul.f32 %v8866, 0.01
      %v9071 = vmul.f32 %v8868, 0.01
      %v9072 = vmul.f32 %v8870, 0.01
      %v9073 = vmul.f32 %v8872, 0.01
      %v9074 = vmul.f32 %v8876, 0.01
      %v9075 = vmul.f32 %v8878, 0.01
      %v9076 = vmul.f32 %v8880, 0.01
      %v9077 = vmul.f32 %v8882, 0.01
      %v9078 = vmul.f32 %v8886, 0.01
      %v9079 = vmul.f32 %v8888, 0.01
      %v9080 = vmul.f32 %v8890, 0.01
      %v9081 = vmul.f32 %v8892, 0.01
      %v9082 = vmul.f32 %v8896, 0.01
      %v9083 = vmul.f32 %v8898, 0.01
      %v9084 = vmul.f32 %v8900, 0.01
      %v9085 = vmul.f32 %v8902, 0.01
      %v9086 = vmul.f32 %v8906, 0.01
      %v9087 = vmul.f32 %v8908, 0.01
      %v9088 = vmul.f32 %v8910, 0.01
      %v9089 = vmul.f32 %v8912, 0.01
      %v9090 = vmul.f32 %v8916, 0.01
      %v9091 = vmul.f32 %v8918, 0.01
      %v9092 = vmul.f32 %v8920, 0.01
      %v9093 = vmul.f32 %v8922, 0.01
      %v9094 = vmul.f32 %v8926, 0.01
      %v9095 = vmul.f32 %v8928, 0.01
      %v9096 = vmul.f32 %v8930, 0.01
      %v9097 = vmul.f32 %v8932, 0.01
      %v9098 = vmul.f32 %v8936, 0.01
      %v9099 = vmul.f32 %v8938, 0.01
      %v9100 = vmul.f32 %v8940, 0.01
      %v9101 = vmul.f32 %v8942, 0.01
      %v9102 = vmul.f32 %v8946, 0.01
      %v9103 = vmul.f32 %v8948, 0.01
      %v9104 = vmul.f32 %v8950, 0.01
      %v9105 = vmul.f32 %v8952, 0.01
      %v9106 = vmul.f32 %v8956, 0.01
      %v9107 = vmul.f32 %v8958, 0.01
      %v9108 = vmul.f32 %v8960, 0.01
      %v9109 = vmul.f32 %v8962, 0.01
      %v9110 = vmul.f32 %v8966, 0.01
      %v9111 = vmul.f32 %v8968, 0.01
      %v9112 = vmul.f32 %v8970, 0.01
      %v9113 = vmul.f32 %v8972, 0.01
      %v9114 = vmul.f32 %v8976, 0.01
      %v9115 = vmul.f32 %v8978, 0.01
      %v9116 = vmul.f32 %v8980, 0.01
      %v9117 = vmul.f32 %v8982, 0.01
      %v9118 = vmul.f32 %v8986, 0.01
      %v9119 = vmul.f32 %v8988, 0.01
      %v9120 = vmul.f32 %v8990, 0.01
      %v9121 = vmul.f32 %v8992, 0.01
      %v9122 = vsel %vm8994, %v8836, %v9058
      %v9123 = vsel %vm8995, %v8838, %v9059
      %v9124 = vsel %vm8996, %v8840, %v9060
      %v9125 = vsel %vm8997, %v8842, %v9061
      %v9126 = vsel %vm8998, %v8846, %v9062
      %v9127 = vsel %vm8999, %v8848, %v9063
      %v9128 = vsel %vm9000, %v8850, %v9064
      %v9129 = vsel %vm9001, %v8852, %v9065
      %v9130 = vsel %vm9002, %v8856, %v9066
      %v9131 = vsel %vm9003, %v8858, %v9067
      %v9132 = vsel %vm9004, %v8860, %v9068
      %v9133 = vsel %vm9005, %v8862, %v9069
      %v9134 = vsel %vm9006, %v8866, %v9070
      %v9135 = vsel %vm9007, %v8868, %v9071
      %v9136 = vsel %vm9008, %v8870, %v9072
      %v9137 = vsel %vm9009, %v8872, %v9073
      %v9138 = vsel %vm9010, %v8876, %v9074
      %v9139 = vsel %vm9011, %v8878, %v9075
      %v9140 = vsel %vm9012, %v8880, %v9076
      %v9141 = vsel %vm9013, %v8882, %v9077
      %v9142 = vsel %vm9014, %v8886, %v9078
      %v9143 = vsel %vm9015, %v8888, %v9079
      %v9144 = vsel %vm9016, %v8890, %v9080
      %v9145 = vsel %vm9017, %v8892, %v9081
      %v9146 = vsel %vm9018, %v8896, %v9082
      %v9147 = vsel %vm9019, %v8898, %v9083
      %v9148 = vsel %vm9020, %v8900, %v9084
      %v9149 = vsel %vm9021, %v8902, %v9085
      %v9150 = vsel %vm9022, %v8906, %v9086
      %v9151 = vsel %vm9023, %v8908, %v9087
      %v9152 = vsel %vm9024, %v8910, %v9088
      %v9153 = vsel %vm9025, %v8912, %v9089
      %v9154 = vsel %vm9026, %v8916, %v9090
      %v9155 = vsel %vm9027, %v8918, %v9091
      %v9156 = vsel %vm9028, %v8920, %v9092
      %v9157 = vsel %vm9029, %v8922, %v9093
      %v9158 = vsel %vm9030, %v8926, %v9094
      %v9159 = vsel %vm9031, %v8928, %v9095
      %v9160 = vsel %vm9032, %v8930, %v9096
      %v9161 = vsel %vm9033, %v8932, %v9097
      %v9162 = vsel %vm9034, %v8936, %v9098
      %v9163 = vsel %vm9035, %v8938, %v9099
      %v9164 = vsel %vm9036, %v8940, %v9100
      %v9165 = vsel %vm9037, %v8942, %v9101
      %v9166 = vsel %vm9038, %v8946, %v9102
      %v9167 = vsel %vm9039, %v8948, %v9103
      %v9168 = vsel %vm9040, %v8950, %v9104
      %v9169 = vsel %vm9041, %v8952, %v9105
      %v9170 = vsel %vm9042, %v8956, %v9106
      %v9171 = vsel %vm9043, %v8958, %v9107
      %v9172 = vsel %vm9044, %v8960, %v9108
      %v9173 = vsel %vm9045, %v8962, %v9109
      %v9174 = vsel %vm9046, %v8966, %v9110
      %v9175 = vsel %vm9047, %v8968, %v9111
      %v9176 = vsel %vm9048, %v8970, %v9112
      %v9177 = vsel %vm9049, %v8972, %v9113
      %v9178 = vsel %vm9050, %v8976, %v9114
      %v9179 = vsel %vm9051, %v8978, %v9115
      %v9180 = vsel %vm9052, %v8980, %v9116
      %v9181 = vsel %vm9053, %v8982, %v9117
      %v9182 = vsel %vm9054, %v8986, %v9118
      %v9183 = vsel %vm9055, %v8988, %v9119
      %v9184 = vsel %vm9056, %v8990, %v9120
      %v9185 = vsel %vm9057, %v8992, %v9121
      %v9186 = vld [vmem:[%s8] sm:$0xf]
      %v9187 = vld [vmem:[%s8 + $0x4] sm:$0xf]
      %v9188 = vld [vmem:[%s8 + $0x8] sm:$0xf]
      %v9189 = vld [vmem:[%s8 + $0xc] sm:$0xf]
      %v9190 = vld [vmem:[%s8 + $0x10] sm:$0xf]
      %v9191 = vld [vmem:[%s8 + $0x14] sm:$0xf]
      %v9192 = vld [vmem:[%s8 + $0x18] sm:$0xf]
      %v9193 = vld [vmem:[%s8 + $0x1c] sm:$0xf]
      %v9194 = vld [vmem:[%s8 + $0x20] sm:$0xf]
      %v9195 = vld [vmem:[%s8 + $0x24] sm:$0xf]
      %v9196 = vld [vmem:[%s8 + $0x28] sm:$0xf]
      %v9197 = vld [vmem:[%s8 + $0x2c] sm:$0xf]
      %v9198 = vld [vmem:[%s8 + $0x30] sm:$0xf]
      %v9199 = vld [vmem:[%s8 + $0x34] sm:$0xf]
      %v9200 = vld [vmem:[%s8 + $0x38] sm:$0xf]
      %v9201 = vld [vmem:[%s8 + $0x3c] sm:$0xf]
      %v9202 = vld [vmem:[%s8 + $0x40] sm:$0xf]
      %v9203 = vld [vmem:[%s8 + $0x44] sm:$0x3]
      %v9204 = vpack.c.bf16 %v9124, %v9122
      %v9205 = vpack.c.bf16 %v9125, %v9123
      %v9206 = vpack.c.bf16 %v9128, %v9126
      %v9207 = vpack.c.bf16 %v9129, %v9127
      %v9208 = vpack.c.bf16 %v9132, %v9130
      %v9209 = vpack.c.bf16 %v9133, %v9131
      %v9210 = vpack.c.bf16 %v9136, %v9134
      %v9211 = vpack.c.bf16 %v9137, %v9135
      %v9212 = vpack.c.bf16 %v9140, %v9138
      %v9213 = vpack.c.bf16 %v9141, %v9139
      %v9214 = vpack.c.bf16 %v9144, %v9142
      %v9215 = vpack.c.bf16 %v9145, %v9143
      %v9216 = vpack.c.bf16 %v9148, %v9146
      %v9217 = vpack.c.bf16 %v9149, %v9147
      %v9218 = vpack.c.bf16 %v9152, %v9150
      %v9219 = vpack.c.bf16 %v9153, %v9151
      %v9220 = vpack.c.bf16 %v9156, %v9154
      %v9221 = vpack.c.bf16 %v9157, %v9155
      %v9222 = vpack.c.bf16 %v9160, %v9158
      %v9223 = vpack.c.bf16 %v9161, %v9159
      %v9224 = vpack.c.bf16 %v9164, %v9162
      %v9225 = vpack.c.bf16 %v9165, %v9163
      %v9226 = vpack.c.bf16 %v9168, %v9166
      %v9227 = vpack.c.bf16 %v9169, %v9167
      %v9228 = vpack.c.bf16 %v9172, %v9170
      %v9229 = vpack.c.bf16 %v9173, %v9171
      %v9230 = vpack.c.bf16 %v9176, %v9174
      %v9231 = vpack.c.bf16 %v9177, %v9175
      %v9232 = vpack.c.bf16 %v9180, %v9178
      %v9233 = vpack.c.bf16 %v9181, %v9179
      %v9234 = vpack.c.bf16 %v9184, %v9182
      %v9235 = vpack.c.bf16 %v9185, %v9183
      %v9236 = vld [vmem:[%s1 + $0x6] ss:$0 sm:$0xff]
      %v9255 = vunpack.c.l.b16 %v9186
      %v9256 = vunpack.c.l.b16 %v9187
      %v9257 = vunpack.c.l.b16 %v9188
      %v9258 = vunpack.c.l.b16 %v9189
      %v9259 = vunpack.c.l.b16 %v9190
      %v9260 = vunpack.c.l.b16 %v9191
      %v9261 = vunpack.c.l.b16 %v9192
      %v9262 = vunpack.c.l.b16 %v9193
      %v9263 = vunpack.c.l.b16 %v9194
      %v9264 = vunpack.c.l.b16 %v9195
      %v9265 = vunpack.c.l.b16 %v9196
      %v9266 = vunpack.c.l.b16 %v9197
      %v9267 = vunpack.c.l.b16 %v9198
      %v9268 = vunpack.c.l.b16 %v9199
      %v9269 = vunpack.c.l.b16 %v9200
      %v9270 = vunpack.c.l.b16 %v9201
      %v9271 = vunpack.c.l.b16 %v9202
      %v9272 = vunpack.c.l.b16 %v9203
      %v9273 = vpack.c.b16 %v9256, %v9255
      %v9274 = vpack.c.b16 %v9258, %v9257
      %v9275 = vpack.c.b16 %v9260, %v9259
      %v9276 = vpack.c.b16 %v9262, %v9261
      %v9277 = vpack.c.b16 %v9264, %v9263
      %v9278 = vpack.c.b16 %v9266, %v9265
      %v9279 = vpack.c.b16 %v9268, %v9267
      %v9280 = vpack.c.b16 %v9270, %v9269
      %v9281 = vpack.c.b16 %v9272, %v9271
      %vm9290 = vcmask 97280
      %v9292 = vsel %vm9290, %v9205, 0
      %v9295 = vsel %vm9290, %v9207, 0
      %v9298 = vsel %vm9290, %v9209, 0
      %v9301 = vsel %vm9290, %v9211, 0
      %v9304 = vsel %vm9290, %v9213, 0
      %v9307 = vsel %vm9290, %v9215, 0
      %v9310 = vsel %vm9290, %v9217, 0
      %v9313 = vsel %vm9290, %v9219, 0
      %v9316 = vsel %vm9290, %v9221, 0
      %v9319 = vsel %vm9290, %v9223, 0
      %v9322 = vsel %vm9290, %v9225, 0
      %v9325 = vsel %vm9290, %v9227, 0
      %v9328 = vsel %vm9290, %v9229, 0
      %v9331 = vsel %vm9290, %v9231, 0
      %v9334 = vsel %vm9290, %v9233, 0
      %v9337 = vsel %vm9290, %v9235, 0
      %vm9339 = vcmask 1045504
      %v9341 = vsel %vm9339, %v9281, 0
      %9343 = vmatprep.subr.bf16.mxu0 0
      %9344 = vmatpush1.bf16.msra.mxu0 %v9273
      %9345 = vmatprep.subr.bf16.mxu0 0
      %9346 = vmatpush1.bf16.msra.mxu0 %v9274
      %9347 = vmatprep.subr.bf16.mxu0 0
      %9348 = vmatpush1.bf16.msra.mxu0 %v9275
      %9349 = vmatprep.subr.bf16.mxu0 0
      %9350 = vmatpush1.bf16.msra.mxu0 %v9276
      %9351 = vmatprep.subr.bf16.mxu0 0
      %9352 = vmatpush1.bf16.msra.mxu0 %v9277
      %9353 = vmatprep.subr.bf16.mxu0 0
      %9354 = vmatpush1.bf16.msra.mxu0 %v9278
      %9355 = vmatprep.subr.bf16.mxu0 0
      %9356 = vmatpush1.bf16.msra.mxu0 %v9279
      %9357 = vmatprep.subr.bf16.mxu0 0
      %9358 = vmatpush1.bf16.msra.mxu0 %v9280
      %9359 = vmatprep.subr.bf16.mxu0 0
      %9360 = vmatpush1.bf16.msra.mxu0 %v9341
      %9361 = vmatprep.subr.bf16.mxu0 0
      %9362 = vmatpush1.bf16.msra.mxu0 0
      %9363 = vmatprep.subr.bf16.mxu0 0
      %9364 = vmatpush1.bf16.msra.mxu0 0
      %9365 = vmatprep.subr.bf16.mxu0 0
      %9366 = vmatpush1.bf16.msra.mxu0 0
      %9367 = vmatprep.subr.bf16.mxu0 0
      %9368 = vmatpush1.bf16.msra.mxu0 0
      %9369 = vmatprep.subr.bf16.mxu0 0
      %9370 = vmatpush1.bf16.msra.mxu0 0
      %9371 = vmatprep.subr.bf16.mxu0 0
      %9372 = vmatpush1.bf16.msra.mxu0 0
      %9373 = vmatprep.subr.bf16.mxu0 0
      %9374 = vmatpush1.bf16.msra.mxu0 0
      %9375 = vmatprep.mubr.bf16.mxu0 %v9292
      %9376 = vmatmul.mubr.bf16.gmra.mrb[0].mxu0 %v9204
      %v9377 = vpop.f32.mrb[0].mxu0
      %v9378 = vadd.f32 %v9236, %v9377
      %v9379 = vpop.f32.mrb[0].mxu0
      %v9380 = vpop.f32.mrb[0].mxu0
      %v9381 = vadd.f32 %v9236, %v9380
      %v9382 = vpop.f32.mrb[0].mxu0
      %9383 = vmatprep.mubr.bf16.mxu0 %v9295
      %9384 = vmatmul.mubr.bf16.gmra.mrb[0].mxu0 %v9206
      %v9385 = vpop.f32.mrb[0].mxu0
      %v9386 = vadd.f32 %v9236, %v9385
      %v9387 = vpop.f32.mrb[0].mxu0
      %v9388 = vpop.f32.mrb[0].mxu0
      %v9389 = vadd.f32 %v9236, %v9388
      %v9390 = vpop.f32.mrb[0].mxu0
      %9391 = vmatprep.mubr.bf16.mxu0 %v9298
      %9392 = vmatmul.mubr.bf16.gmra.mrb[0].mxu0 %v9208
      %v9393 = vpop.f32.mrb[0].mxu0
      %v9394 = vadd.f32 %v9236, %v9393
      %v9395 = vpop.f32.mrb[0].mxu0
      %v9396 = vpop.f32.mrb[0].mxu0
      %v9397 = vadd.f32 %v9236, %v9396
      %v9398 = vpop.f32.mrb[0].mxu0
      %9399 = vmatprep.mubr.bf16.mxu0 %v9301
      %9400 = vmatmul.mubr.bf16.gmra.mrb[0].mxu0 %v9210
      %v9401 = vpop.f32.mrb[0].mxu0
      %v9402 = vadd.f32 %v9236, %v9401
      %v9403 = vpop.f32.mrb[0].mxu0
      %v9404 = vpop.f32.mrb[0].mxu0
      %v9405 = vadd.f32 %v9236, %v9404
      %v9406 = vpop.f32.mrb[0].mxu0
      %9407 = vmatprep.mubr.bf16.mxu0 %v9304
      %9408 = vmatmul.mubr.bf16.gmra.mrb[0].mxu0 %v9212
      %v9409 = vpop.f32.mrb[0].mxu0
      %v9410 = vadd.f32 %v9236, %v9409
      %v9411 = vpop.f32.mrb[0].mxu0
      %v9412 = vpop.f32.mrb[0].mxu0
      %v9413 = vadd.f32 %v9236, %v9412
      %v9414 = vpop.f32.mrb[0].mxu0
      %9415 = vmatprep.mubr.bf16.mxu0 %v9307
      %9416 = vmatmul.mubr.bf16.gmra.mrb[0].mxu0 %v9214
      %v9417 = vpop.f32.mrb[0].mxu0
      %v9418 = vadd.f32 %v9236, %v9417
      %v9419 = vpop.f32.mrb[0].mxu0
      %v9420 = vpop.f32.mrb[0].mxu0
      %v9421 = vadd.f32 %v9236, %v9420
      %v9422 = vpop.f32.mrb[0].mxu0
      %9423 = vmatprep.mubr.bf16.mxu0 %v9310
      %9424 = vmatmul.mubr.bf16.gmra.mrb[0].mxu0 %v9216
      %v9425 = vpop.f32.mrb[0].mxu0
      %v9426 = vadd.f32 %v9236, %v9425
      %v9427 = vpop.f32.mrb[0].mxu0
      %v9428 = vpop.f32.mrb[0].mxu0
      %v9429 = vadd.f32 %v9236, %v9428
      %v9430 = vpop.f32.mrb[0].mxu0
      %9431 = vmatprep.mubr.bf16.mxu0 %v9313
      %9432 = vmatmul.mubr.bf16.gmra.mrb[0].mxu0 %v9218
      %v9433 = vpop.f32.mrb[0].mxu0
      %v9434 = vadd.f32 %v9236, %v9433
      %v9435 = vpop.f32.mrb[0].mxu0
      %v9436 = vpop.f32.mrb[0].mxu0
      %v9437 = vadd.f32 %v9236, %v9436
      %v9438 = vpop.f32.mrb[0].mxu0
      %9439 = vmatprep.mubr.bf16.mxu0 %v9316
      %9440 = vmatmul.mubr.bf16.gmra.mrb[0].mxu0 %v9220
      %v9441 = vpop.f32.mrb[0].mxu0
      %v9442 = vadd.f32 %v9236, %v9441
      %v9443 = vpop.f32.mrb[0].mxu0
      %v9444 = vpop.f32.mrb[0].mxu0
      %v9445 = vadd.f32 %v9236, %v9444
      %v9446 = vpop.f32.mrb[0].mxu0
      %9447 = vmatprep.mubr.bf16.mxu0 %v9319
      %9448 = vmatmul.mubr.bf16.gmra.mrb[0].mxu0 %v9222
      %v9449 = vpop.f32.mrb[0].mxu0
      %v9450 = vadd.f32 %v9236, %v9449
      %v9451 = vpop.f32.mrb[0].mxu0
      %v9452 = vpop.f32.mrb[0].mxu0
      %v9453 = vadd.f32 %v9236, %v9452
      %v9454 = vpop.f32.mrb[0].mxu0
      %9455 = vmatprep.mubr.bf16.mxu0 %v9322
      %9456 = vmatmul.mubr.bf16.gmra.mrb[0].mxu0 %v9224
      %v9457 = vpop.f32.mrb[0].mxu0
      %v9458 = vadd.f32 %v9236, %v9457
      %v9459 = vpop.f32.mrb[0].mxu0
      %v9460 = vpop.f32.mrb[0].mxu0
      %v9461 = vadd.f32 %v9236, %v9460
      %v9462 = vpop.f32.mrb[0].mxu0
      %9463 = vmatprep.mubr.bf16.mxu0 %v9325
      %9464 = vmatmul.mubr.bf16.gmra.mrb[0].mxu0 %v9226
      %v9465 = vpop.f32.mrb[0].mxu0
      %v9466 = vadd.f32 %v9236, %v9465
      %v9467 = vpop.f32.mrb[0].mxu0
      %v9468 = vpop.f32.mrb[0].mxu0
      %v9469 = vadd.f32 %v9236, %v9468
      %v9470 = vpop.f32.mrb[0].mxu0
      %9471 = vmatprep.mubr.bf16.mxu0 %v9328
      %9472 = vmatmul.mubr.bf16.gmra.mrb[0].mxu0 %v9228
      %v9473 = vpop.f32.mrb[0].mxu0
      %v9474 = vadd.f32 %v9236, %v9473
      %v9475 = vpop.f32.mrb[0].mxu0
      %v9476 = vpop.f32.mrb[0].mxu0
      %v9477 = vadd.f32 %v9236, %v9476
      %v9478 = vpop.f32.mrb[0].mxu0
      %9479 = vmatprep.mubr.bf16.mxu0 %v9331
      %9480 = vmatmul.mubr.bf16.gmra.mrb[0].mxu0 %v9230
      %v9481 = vpop.f32.mrb[0].mxu0
      %v9482 = vadd.f32 %v9236, %v9481
      %v9483 = vpop.f32.mrb[0].mxu0
      %v9484 = vpop.f32.mrb[0].mxu0
      %v9485 = vadd.f32 %v9236, %v9484
      %v9486 = vpop.f32.mrb[0].mxu0
      %9487 = vmatprep.mubr.bf16.mxu0 %v9334
      %9488 = vmatmul.mubr.bf16.gmra.mrb[0].mxu0 %v9232
      %v9489 = vpop.f32.mrb[0].mxu0
      %v9490 = vadd.f32 %v9236, %v9489
      %v9491 = vpop.f32.mrb[0].mxu0
      %v9492 = vpop.f32.mrb[0].mxu0
      %v9493 = vadd.f32 %v9236, %v9492
      %v9494 = vpop.f32.mrb[0].mxu0
      %9495 = vmatprep.mubr.bf16.mxu0 %v9337
      %9496 = vmatmul.mubr.bf16.gmra.mrb[0].mxu0 %v9234
      %v9497 = vpop.f32.mrb[0].mxu0
      %v9498 = vadd.f32 %v9236, %v9497
      %v9499 = vpop.f32.mrb[0].mxu0
      %v9500 = vpop.f32.mrb[0].mxu0
      %v9501 = vadd.f32 %v9236, %v9500
      %v9502 = vpop.f32.mrb[0].mxu0
      %9503 = vdwg.mxu0
      %vm9504 = vcmp.gt.f32.partialorder %v9378, 0.0
      %vm9505 = vcmp.gt.f32.partialorder %v9381, 0.0
      %vm9506 = vcmp.gt.f32.partialorder %v9386, 0.0
      %vm9507 = vcmp.gt.f32.partialorder %v9389, 0.0
      %vm9508 = vcmp.gt.f32.partialorder %v9394, 0.0
      %vm9509 = vcmp.gt.f32.partialorder %v9397, 0.0
      %vm9510 = vcmp.gt.f32.partialorder %v9402, 0.0
      %vm9511 = vcmp.gt.f32.partialorder %v9405, 0.0
      %vm9512 = vcmp.gt.f32.partialorder %v9410, 0.0
      %vm9513 = vcmp.gt.f32.partialorder %v9413, 0.0
      %vm9514 = vcmp.gt.f32.partialorder %v9418, 0.0
      %vm9515 = vcmp.gt.f32.partialorder %v9421, 0.0
      %vm9516 = vcmp.gt.f32.partialorder %v9426, 0.0
      %vm9517 = vcmp.gt.f32.partialorder %v9429, 0.0
      %vm9518 = vcmp.gt.f32.partialorder %v9434, 0.0
      %vm9519 = vcmp.gt.f32.partialorder %v9437, 0.0
      %vm9520 = vcmp.gt.f32.partialorder %v9442, 0.0
      %vm9521 = vcmp.gt.f32.partialorder %v9445, 0.0
      %vm9522 = vcmp.gt.f32.partialorder %v9450, 0.0
      %vm9523 = vcmp.gt.f32.partialorder %v9453, 0.0
      %vm9524 = vcmp.gt.f32.partialorder %v9458, 0.0
      %vm9525 = vcmp.gt.f32.partialorder %v9461, 0.0
      %vm9526 = vcmp.gt.f32.partialorder %v9466, 0.0
      %vm9527 = vcmp.gt.f32.partialorder %v9469, 0.0
      %vm9528 = vcmp.gt.f32.partialorder %v9474, 0.0
      %vm9529 = vcmp.gt.f32.partialorder %v9477, 0.0
      %vm9530 = vcmp.gt.f32.partialorder %v9482, 0.0
      %vm9531 = vcmp.gt.f32.partialorder %v9485, 0.0
      %vm9532 = vcmp.gt.f32.partialorder %v9490, 0.0
      %vm9533 = vcmp.gt.f32.partialorder %v9493, 0.0
      %vm9534 = vcmp.gt.f32.partialorder %v9498, 0.0
      %vm9535 = vcmp.gt.f32.partialorder %v9501, 0.0
      %v9536 = vmul.f32 %v9378, 0.01
      %v9537 = vmul.f32 %v9381, 0.01
      %v9538 = vmul.f32 %v9386, 0.01
      %v9539 = vmul.f32 %v9389, 0.01
      %v9540 = vmul.f32 %v9394, 0.01
      %v9541 = vmul.f32 %v9397, 0.01
      %v9542 = vmul.f32 %v9402, 0.01
      %v9543 = vmul.f32 %v9405, 0.01
      %v9544 = vmul.f32 %v9410, 0.01
      %v9545 = vmul.f32 %v9413, 0.01
      %v9546 = vmul.f32 %v9418, 0.01
      %v9547 = vmul.f32 %v9421, 0.01
      %v9548 = vmul.f32 %v9426, 0.01
      %v9549 = vmul.f32 %v9429, 0.01
      %v9550 = vmul.f32 %v9434, 0.01
      %v9551 = vmul.f32 %v9437, 0.01
      %v9552 = vmul.f32 %v9442, 0.01
      %v9553 = vmul.f32 %v9445, 0.01
      %v9554 = vmul.f32 %v9450, 0.01
      %v9555 = vmul.f32 %v9453, 0.01
      %v9556 = vmul.f32 %v9458, 0.01
      %v9557 = vmul.f32 %v9461, 0.01
      %v9558 = vmul.f32 %v9466, 0.01
      %v9559 = vmul.f32 %v9469, 0.01
      %v9560 = vmul.f32 %v9474, 0.01
      %v9561 = vmul.f32 %v9477, 0.01
      %v9562 = vmul.f32 %v9482, 0.01
      %v9563 = vmul.f32 %v9485, 0.01
      %v9564 = vmul.f32 %v9490, 0.01
      %v9565 = vmul.f32 %v9493, 0.01
      %v9566 = vmul.f32 %v9498, 0.01
      %v9567 = vmul.f32 %v9501, 0.01
      %v9568 = vsel %vm9504, %v9378, %v9536
      %v9569 = vsel %vm9505, %v9381, %v9537
      %v9570 = vsel %vm9506, %v9386, %v9538
      %v9571 = vsel %vm9507, %v9389, %v9539
      %v9572 = vsel %vm9508, %v9394, %v9540
      %v9573 = vsel %vm9509, %v9397, %v9541
      %v9574 = vsel %vm9510, %v9402, %v9542
      %v9575 = vsel %vm9511, %v9405, %v9543
      %v9576 = vsel %vm9512, %v9410, %v9544
      %v9577 = vsel %vm9513, %v9413, %v9545
      %v9578 = vsel %vm9514, %v9418, %v9546
      %v9579 = vsel %vm9515, %v9421, %v9547
      %v9580 = vsel %vm9516, %v9426, %v9548
      %v9581 = vsel %vm9517, %v9429, %v9549
      %v9582 = vsel %vm9518, %v9434, %v9550
      %v9583 = vsel %vm9519, %v9437, %v9551
      %v9584 = vsel %vm9520, %v9442, %v9552
      %v9585 = vsel %vm9521, %v9445, %v9553
      %v9586 = vsel %vm9522, %v9450, %v9554
      %v9587 = vsel %vm9523, %v9453, %v9555
      %v9588 = vsel %vm9524, %v9458, %v9556
      %v9589 = vsel %vm9525, %v9461, %v9557
      %v9590 = vsel %vm9526, %v9466, %v9558
      %v9591 = vsel %vm9527, %v9469, %v9559
      %v9592 = vsel %vm9528, %v9474, %v9560
      %v9593 = vsel %vm9529, %v9477, %v9561
      %v9594 = vsel %vm9530, %v9482, %v9562
      %v9595 = vsel %vm9531, %v9485, %v9563
      %v9596 = vsel %vm9532, %v9490, %v9564
      %v9597 = vsel %vm9533, %v9493, %v9565
      %v9598 = vsel %vm9534, %v9498, %v9566
      %v9599 = vsel %vm9535, %v9501, %v9567
      %v9600 = vld [vmem:[%s9] sm:$0xf]
      %v9601 = vld [vmem:[%s9 + $0x4] sm:$0xf]
      %v9602 = vld [vmem:[%s9 + $0x8] sm:$0xf]
      %v9603 = vld [vmem:[%s9 + $0xc] sm:$0xf]
      %v9604 = vld [vmem:[%s9 + $0x10] sm:$0xf]
      %v9605 = vld [vmem:[%s9 + $0x14] sm:$0xf]
      %v9606 = vld [vmem:[%s9 + $0x18] sm:$0xf]
      %v9607 = vld [vmem:[%s9 + $0x1c] sm:$0xf]
      %v9608 = vld [vmem:[%s9 + $0x20] sm:$0xf]
      %v9609 = vld [vmem:[%s9 + $0x24] sm:$0xf]
      %v9610 = vld [vmem:[%s9 + $0x28] sm:$0xf]
      %v9611 = vld [vmem:[%s9 + $0x2c] sm:$0xf]
      %v9612 = vld [vmem:[%s9 + $0x30] sm:$0xf]
      %v9613 = vld [vmem:[%s9 + $0x34] sm:$0xf]
      %v9614 = vld [vmem:[%s9 + $0x38] sm:$0xf]
      %v9615 = vpack.c.bf16 %v9569, %v9568
      %v9616 = vpack.c.bf16 %v9571, %v9570
      %v9617 = vpack.c.bf16 %v9573, %v9572
      %v9618 = vpack.c.bf16 %v9575, %v9574
      %v9619 = vpack.c.bf16 %v9577, %v9576
      %v9620 = vpack.c.bf16 %v9579, %v9578
      %v9621 = vpack.c.bf16 %v9581, %v9580
      %v9622 = vpack.c.bf16 %v9583, %v9582
      %v9623 = vpack.c.bf16 %v9585, %v9584
      %v9624 = vpack.c.bf16 %v9587, %v9586
      %v9625 = vpack.c.bf16 %v9589, %v9588
      %v9626 = vpack.c.bf16 %v9591, %v9590
      %v9627 = vpack.c.bf16 %v9593, %v9592
      %v9628 = vpack.c.bf16 %v9595, %v9594
      %v9629 = vpack.c.bf16 %v9597, %v9596
      %v9630 = vpack.c.bf16 %v9599, %v9598
      %v9631 = vld [vmem:[%s1 + $0x7] ss:$0 sm:$0xff]
      %v9647 = vunpack.c.l.b16 %v9600
      %v9648 = vunpack.c.l.b16 %v9601
      %v9649 = vunpack.c.l.b16 %v9602
      %v9650 = vunpack.c.l.b16 %v9603
      %v9651 = vunpack.c.l.b16 %v9604
      %v9652 = vunpack.c.l.b16 %v9605
      %v9653 = vunpack.c.l.b16 %v9606
      %v9654 = vunpack.c.l.b16 %v9607
      %v9655 = vunpack.c.l.b16 %v9608
      %v9656 = vunpack.c.l.b16 %v9609
      %v9657 = vunpack.c.l.b16 %v9610
      %v9658 = vunpack.c.l.b16 %v9611
      %v9659 = vunpack.c.l.b16 %v9612
      %v9660 = vunpack.c.l.b16 %v9613
      %v9661 = vunpack.c.l.b16 %v9614
      %v9662 = vpack.c.b16 %v9648, %v9647
      %v9663 = vpack.c.b16 %v9650, %v9649
      %v9664 = vpack.c.b16 %v9652, %v9651
      %v9665 = vpack.c.b16 %v9654, %v9653
      %v9666 = vpack.c.b16 %v9656, %v9655
      %v9667 = vpack.c.b16 %v9658, %v9657
      %v9668 = vpack.c.b16 %v9660, %v9659
      %v9669 = vpack.c.b16 %v9661, %v9661
      %vm9677 = vcmask 982016
      %v9679 = vsel %vm9677, %v9615, 0
      %v9682 = vsel %vm9677, %v9616, 0
      %v9685 = vsel %vm9677, %v9617, 0
      %v9688 = vsel %vm9677, %v9618, 0
      %v9691 = vsel %vm9677, %v9619, 0
      %v9694 = vsel %vm9677, %v9620, 0
      %v9697 = vsel %vm9677, %v9621, 0
      %v9700 = vsel %vm9677, %v9622, 0
      %v9703 = vsel %vm9677, %v9623, 0
      %v9706 = vsel %vm9677, %v9624, 0
      %v9709 = vsel %vm9677, %v9625, 0
      %v9712 = vsel %vm9677, %v9626, 0
      %v9715 = vsel %vm9677, %v9627, 0
      %v9718 = vsel %vm9677, %v9628, 0
      %v9721 = vsel %vm9677, %v9629, 0
      %v9724 = vsel %vm9677, %v9630, 0
      %v9727 = vsel %vm3415, %v9669, 0
      %9729 = vmatprep.subr.bf16.mxu0 0
      %9730 = vmatpush1.bf16.msra.mxu0 %v9662
      %9731 = vmatprep.subr.bf16.mxu0 0
      %9732 = vmatpush1.bf16.msra.mxu0 %v9663
      %9733 = vmatprep.subr.bf16.mxu0 0
      %9734 = vmatpush1.bf16.msra.mxu0 %v9664
      %9735 = vmatprep.subr.bf16.mxu0 0
      %9736 = vmatpush1.bf16.msra.mxu0 %v9665
      %9737 = vmatprep.subr.bf16.mxu0 0
      %9738 = vmatpush1.bf16.msra.mxu0 %v9666
      %9739 = vmatprep.subr.bf16.mxu0 0
      %9740 = vmatpush1.bf16.msra.mxu0 %v9667
      %9741 = vmatprep.subr.bf16.mxu0 0
      %9742 = vmatpush1.bf16.msra.mxu0 %v9668
      %9743 = vmatprep.subr.bf16.mxu0 0
      %9744 = vmatpush1.bf16.msra.mxu0 %v9727
      %9745 = vmatprep.subr.bf16.mxu0 0
      %9746 = vmatpush1.bf16.msra.mxu0 0
      %9747 = vmatprep.subr.bf16.mxu0 0
      %9748 = vmatpush1.bf16.msra.mxu0 0
      %9749 = vmatprep.subr.bf16.mxu0 0
      %9750 = vmatpush1.bf16.msra.mxu0 0
      %9751 = vmatprep.subr.bf16.mxu0 0
      %9752 = vmatpush1.bf16.msra.mxu0 0
      %9753 = vmatprep.subr.bf16.mxu0 0
      %9754 = vmatpush1.bf16.msra.mxu0 0
      %9755 = vmatprep.subr.bf16.mxu0 0
      %9756 = vmatpush1.bf16.msra.mxu0 0
      %9757 = vmatprep.subr.bf16.mxu0 0
      %9758 = vmatpush1.bf16.msra.mxu0 0
      %9759 = vmatprep.subr.bf16.mxu0 0
      %9760 = vmatpush1.bf16.msra.mxu0 0
      %9761 = vmatprep.mubr.bf16.mxu0 0
      %9762 = vmatmul.mubr.bf16.gmra.mrb[0].mxu0 %v9679
      %v9763 = vpop.f32.mrb[0].mxu0
      %v9764 = vadd.f32 %v9631, %v9763
      %v9765 = vpop.f32.mrb[0].mxu0
      %v9766 = vpop.f32.mrb[0].mxu0
      %v9767 = vadd.f32 %v9631, %v9766
      %v9768 = vpop.f32.mrb[0].mxu0
      %9769 = vmatprep.mubr.bf16.mxu0 0
      %9770 = vmatmul.mubr.bf16.gmra.mrb[0].mxu0 %v9682
      %v9771 = vpop.f32.mrb[0].mxu0
      %v9772 = vadd.f32 %v9631, %v9771
      %v9773 = vpop.f32.mrb[0].mxu0
      %v9774 = vpop.f32.mrb[0].mxu0
      %v9775 = vadd.f32 %v9631, %v9774
      %v9776 = vpop.f32.mrb[0].mxu0
      %9777 = vmatprep.mubr.bf16.mxu0 0
      %9778 = vmatmul.mubr.bf16.gmra.mrb[0].mxu0 %v9685
      %v9779 = vpop.f32.mrb[0].mxu0
      %v9780 = vadd.f32 %v9631, %v9779
      %v9781 = vpop.f32.mrb[0].mxu0
      %v9782 = vpop.f32.mrb[0].mxu0
      %v9783 = vadd.f32 %v9631, %v9782
      %v9784 = vpop.f32.mrb[0].mxu0
      %9785 = vmatprep.mubr.bf16.mxu0 0
      %9786 = vmatmul.mubr.bf16.gmra.mrb[0].mxu0 %v9688
      %v9787 = vpop.f32.mrb[0].mxu0
      %v9788 = vadd.f32 %v9631, %v9787
      %v9789 = vpop.f32.mrb[0].mxu0
      %v9790 = vpop.f32.mrb[0].mxu0
      %v9791 = vadd.f32 %v9631, %v9790
      %v9792 = vpop.f32.mrb[0].mxu0
      %9793 = vmatprep.mubr.bf16.mxu0 0
      %9794 = vmatmul.mubr.bf16.gmra.mrb[0].mxu0 %v9691
      %v9795 = vpop.f32.mrb[0].mxu0
      %v9796 = vadd.f32 %v9631, %v9795
      %v9797 = vpop.f32.mrb[0].mxu0
      %v9798 = vpop.f32.mrb[0].mxu0
      %v9799 = vadd.f32 %v9631, %v9798
      %v9800 = vpop.f32.mrb[0].mxu0
      %9801 = vmatprep.mubr.bf16.mxu0 0
      %9802 = vmatmul.mubr.bf16.gmra.mrb[0].mxu0 %v9694
      %v9803 = vpop.f32.mrb[0].mxu0
      %v9804 = vadd.f32 %v9631, %v9803
      %v9805 = vpop.f32.mrb[0].mxu0
      %v9806 = vpop.f32.mrb[0].mxu0
      %v9807 = vadd.f32 %v9631, %v9806
      %v9808 = vpop.f32.mrb[0].mxu0
      %9809 = vmatprep.mubr.bf16.mxu0 0
      %9810 = vmatmul.mubr.bf16.gmra.mrb[0].mxu0 %v9697
      %v9811 = vpop.f32.mrb[0].mxu0
      %v9812 = vadd.f32 %v9631, %v9811
      %v9813 = vpop.f32.mrb[0].mxu0
      %v9814 = vpop.f32.mrb[0].mxu0
      %v9815 = vadd.f32 %v9631, %v9814
      %v9816 = vpop.f32.mrb[0].mxu0
      %9817 = vmatprep.mubr.bf16.mxu0 0
      %9818 = vmatmul.mubr.bf16.gmra.mrb[0].mxu0 %v9700
      %v9819 = vpop.f32.mrb[0].mxu0
      %v9820 = vadd.f32 %v9631, %v9819
      %v9821 = vpop.f32.mrb[0].mxu0
      %v9822 = vpop.f32.mrb[0].mxu0
      %v9823 = vadd.f32 %v9631, %v9822
      %v9824 = vpop.f32.mrb[0].mxu0
      %9825 = vmatprep.mubr.bf16.mxu0 0
      %9826 = vmatmul.mubr.bf16.gmra.mrb[0].mxu0 %v9703
      %v9827 = vpop.f32.mrb[0].mxu0
      %v9828 = vadd.f32 %v9631, %v9827
      %v9829 = vpop.f32.mrb[0].mxu0
      %v9830 = vpop.f32.mrb[0].mxu0
      %v9831 = vadd.f32 %v9631, %v9830
      %v9832 = vpop.f32.mrb[0].mxu0
      %9833 = vmatprep.mubr.bf16.mxu0 0
      %9834 = vmatmul.mubr.bf16.gmra.mrb[0].mxu0 %v9706
      %v9835 = vpop.f32.mrb[0].mxu0
      %v9836 = vadd.f32 %v9631, %v9835
      %v9837 = vpop.f32.mrb[0].mxu0
      %v9838 = vpop.f32.mrb[0].mxu0
      %v9839 = vadd.f32 %v9631, %v9838
      %v9840 = vpop.f32.mrb[0].mxu0
      %9841 = vmatprep.mubr.bf16.mxu0 0
      %9842 = vmatmul.mubr.bf16.gmra.mrb[0].mxu0 %v9709
      %v9843 = vpop.f32.mrb[0].mxu0
      %v9844 = vadd.f32 %v9631, %v9843
      %v9845 = vpop.f32.mrb[0].mxu0
      %v9846 = vpop.f32.mrb[0].mxu0
      %v9847 = vadd.f32 %v9631, %v9846
      %v9848 = vpop.f32.mrb[0].mxu0
      %9849 = vmatprep.mubr.bf16.mxu0 0
      %9850 = vmatmul.mubr.bf16.gmra.mrb[0].mxu0 %v9712
      %v9851 = vpop.f32.mrb[0].mxu0
      %v9852 = vadd.f32 %v9631, %v9851
      %v9853 = vpop.f32.mrb[0].mxu0
      %v9854 = vpop.f32.mrb[0].mxu0
      %v9855 = vadd.f32 %v9631, %v9854
      %v9856 = vpop.f32.mrb[0].mxu0
      %9857 = vmatprep.mubr.bf16.mxu0 0
      %9858 = vmatmul.mubr.bf16.gmra.mrb[0].mxu0 %v9715
      %v9859 = vpop.f32.mrb[0].mxu0
      %v9860 = vadd.f32 %v9631, %v9859
      %v9861 = vpop.f32.mrb[0].mxu0
      %v9862 = vpop.f32.mrb[0].mxu0
      %v9863 = vadd.f32 %v9631, %v9862
      %v9864 = vpop.f32.mrb[0].mxu0
      %9865 = vmatprep.mubr.bf16.mxu0 0
      %9866 = vmatmul.mubr.bf16.gmra.mrb[0].mxu0 %v9718
      %v9867 = vpop.f32.mrb[0].mxu0
      %v9868 = vadd.f32 %v9631, %v9867
      %v9869 = vpop.f32.mrb[0].mxu0
      %v9870 = vpop.f32.mrb[0].mxu0
      %v9871 = vadd.f32 %v9631, %v9870
      %v9872 = vpop.f32.mrb[0].mxu0
      %9873 = vmatprep.mubr.bf16.mxu0 0
      %9874 = vmatmul.mubr.bf16.gmra.mrb[0].mxu0 %v9721
      %v9875 = vpop.f32.mrb[0].mxu0
      %v9876 = vadd.f32 %v9631, %v9875
      %v9877 = vpop.f32.mrb[0].mxu0
      %v9878 = vpop.f32.mrb[0].mxu0
      %v9879 = vadd.f32 %v9631, %v9878
      %v9880 = vpop.f32.mrb[0].mxu0
      %9881 = vmatprep.mubr.bf16.mxu0 0
      %9882 = vmatmul.mubr.bf16.gmra.mrb[0].mxu0 %v9724
      %v9883 = vpop.f32.mrb[0].mxu0
      %v9884 = vadd.f32 %v9631, %v9883
      %v9885 = vpop.f32.mrb[0].mxu0
      %v9886 = vpop.f32.mrb[0].mxu0
      %v9887 = vadd.f32 %v9631, %v9886
      %v9888 = vpop.f32.mrb[0].mxu0
      %9889 = vdwg.mxu0
      %vm9890 = vcmask 7168
      %9891 = vst.msk [vmem:[%s361] sm:$0xff] %vm9890, %v9764
      %9892 = vst.msk [vmem:[%s361 + $0x8] sm:$0xff] %vm9890, %v9767
      %9893 = vst.msk [vmem:[%s361 + $0x10] sm:$0xff] %vm9890, %v9772
      %9894 = vst.msk [vmem:[%s361 + $0x18] sm:$0xff] %vm9890, %v9775
      %9895 = vst.msk [vmem:[%s361 + $0x20] sm:$0xff] %vm9890, %v9780
      %9896 = vst.msk [vmem:[%s361 + $0x28] sm:$0xff] %vm9890, %v9783
      %9897 = vst.msk [vmem:[%s361 + $0x30] sm:$0xff] %vm9890, %v9788
      %9898 = vst.msk [vmem:[%s361 + $0x38] sm:$0xff] %vm9890, %v9791
      %9899 = vst.msk [vmem:[%s361 + $0x40] sm:$0xff] %vm9890, %v9796
      %9900 = vst.msk [vmem:[%s361 + $0x48] sm:$0xff] %vm9890, %v9799
      %9901 = vst.msk [vmem:[%s361 + $0x50] sm:$0xff] %vm9890, %v9804
      %9902 = vst.msk [vmem:[%s361 + $0x58] sm:$0xff] %vm9890, %v9807
      %9903 = vst.msk [vmem:[%s361 + $0x60] sm:$0xff] %vm9890, %v9812
      %9904 = vst.msk [vmem:[%s361 + $0x68] sm:$0xff] %vm9890, %v9815
      %9905 = vst.msk [vmem:[%s361 + $0x70] sm:$0xff] %vm9890, %v9820
      %9906 = vst.msk [vmem:[%s361 + $0x78] sm:$0xff] %vm9890, %v9823
      %9907 = vst.msk [vmem:[%s361 + $0x80] sm:$0xff] %vm9890, %v9828
      %9908 = vst.msk [vmem:[%s361 + $0x88] sm:$0xff] %vm9890, %v9831
      %9909 = vst.msk [vmem:[%s361 + $0x90] sm:$0xff] %vm9890, %v9836
      %9910 = vst.msk [vmem:[%s361 + $0x98] sm:$0xff] %vm9890, %v9839
      %9911 = vst.msk [vmem:[%s361 + $0xa0] sm:$0xff] %vm9890, %v9844
      %9912 = vst.msk [vmem:[%s361 + $0xa8] sm:$0xff] %vm9890, %v9847
      %9913 = vst.msk [vmem:[%s361 + $0xb0] sm:$0xff] %vm9890, %v9852
      %9914 = vst.msk [vmem:[%s361 + $0xb8] sm:$0xff] %vm9890, %v9855
      %9915 = vst.msk [vmem:[%s361 + $0xc0] sm:$0xff] %vm9890, %v9860
      %9916 = vst.msk [vmem:[%s361 + $0xc8] sm:$0xff] %vm9890, %v9863
      %9917 = vst.msk [vmem:[%s361 + $0xd0] sm:$0xff] %vm9890, %v9868
      %9918 = vst.msk [vmem:[%s361 + $0xd8] sm:$0xff] %vm9890, %v9871
      %9919 = vst.msk [vmem:[%s361 + $0xe0] sm:$0xff] %vm9890, %v9876
      %9920 = vst.msk [vmem:[%s361 + $0xe8] sm:$0xff] %vm9890, %v9879
      %9921 = vst.msk [vmem:[%s361 + $0xf0] sm:$0xff] %vm9890, %v9884
      %9922 = vst.msk [vmem:[%s361 + $0xf8] sm:$0xff] %vm9890, %v9887
      %s9923 = smul.u32 32, %s21
      %p9924 = scmp.lt.s32.totalorder %s9923, 63
      %s9925 = scalar_select %p9924, %s9923, 63
      %s9926 = smul.addr %s9925, 8
      %s9927 = scalar_lea.vmem %s10, %s9926
      // Predicated region
      $region61: #{critic_forward.1} parent=59 // pred_check
        %p9928 = pneg %p254
      $region62: #{critic_forward.1} parent=59 // pred_check_branch
        %9930 = sbr.rel (%p9928) target = $region64
      $region63: #{critic_forward.1} parent=59 // pred_region
        %s9931 = smul.u32 32, %s21
      $region64: #{critic_forward.1} parent=59 // pred_fallthru
        _
    $region60: #{critic_forward.1} parent=5 // pred_fallthru
      _
    %p9932 = scmp.le.s32.totalorder 2, %s16
    // Predicated region
    $region65: #{critic_forward.1} parent=5 // pred_check
      %p9933 = pneg %p9932
    $region66: #{critic_forward.1} parent=5 // pred_check_branch
      %9935 = sbr.rel (%p9933) target = $region68
    $region67: #{critic_forward.1} parent=5 // pred_region
      %s9936 = ssub.s32 %s16, 2
      // Predicated region
      $region69: #{critic_forward.1} parent=67 // pred_check
        %p9937 = pneg %p260
      $region70: #{critic_forward.1} parent=67 // pred_check_branch
        %9939 = sbr.rel (%p9937) target = $region72
      $region71: #{critic_forward.1} parent=67 // pred_region
        %s9940 = smul.u32 32, %s22
        %p9941 = scmp.lt.s32.totalorder %s9940, 63
        %s9942 = scalar_select %p9941, %s9940, 63
        %s9943 = smul.addr %s9942, 8
        %s9944 = scalar_lea.vmem %s10, %s9943
      $region72: #{critic_forward.1} parent=67 // pred_fallthru
        _
    $region68: #{critic_forward.1} parent=5 // pred_fallthru
      _
  $region6: #{critic_forward.1} parent=0 // loop_footer
    %s20 = sadd.s32 1, %s16
  $region7: #{critic_forward.1} parent=0 // loop_footer_branch
    %15 = sbr.rel target = $region3
  $region8: #{critic_forward.1} parent=0 // loop_exit
    _

</llo_original>
